<compile_context>
chip_gen: v7x
topology: tpu7x:2x2x1
jax: 0.10.0
libtpu: 0.0.40
codegen_flags: <defaults>
</compile_context>

<pallas_src>
import functools

import jax
import jax.numpy as jnp
from jax.experimental import pallas as pl
from jax.experimental.pallas import tpu as pltpu


def _round_up(x, m):
    return (x + m - 1) // m * m


def weight_standardize(w, eps=1e-6):
    """StdConv3d weight standardization. w: (Cout, Cin, KD, KH, KW) (torch layout).

    Matches F.batch_norm(w.view(1, Cout, -1), None, None, training=True, eps=1e-6):
    per-output-channel zero mean / unit (biased) variance.
    """
    c_out = w.shape[0]
    wv = w.reshape(c_out, -1)
    mean = jnp.mean(wv, axis=1, keepdims=True)
    var = jnp.var(wv, axis=1, keepdims=True)  # biased
    return ((wv - mean) * jax.lax.rsqrt(var + eps)).reshape(w.shape)


# -----------------------------------------------------------------------------
# Fused kernel: conv (k^3 shifted matmuls) + GroupNorm + affine + ReLU
# -----------------------------------------------------------------------------
def _conv_gn_act_kernel(x_ref, w_ref, gamma_ref, beta_ref, mask_ref, o_ref, *,
                        k, hp, wp, sp, groups, cpg, n_valid, apply_act, eps):
    """One batch sample per grid step.

    x_ref     : (1, Cin, L)       bf16  flattened zero-padded input (+ lane tail pad)
    w_ref     : (k^3, Cout, Cin)  bf16  weight-standardized per-tap matrices
    gamma_ref : (Cout, 1)         f32   GroupNorm scale
    beta_ref  : (Cout, 1)         f32   GroupNorm shift
    mask_ref  : (1, SP)           f32   1.0 at flattened padded positions that are
                                        valid conv outputs, 0.0 elsewhere
    o_ref     : (1, Cout, SP)     f32   output at padded coordinates (lane-dense)
    """
    c_out = o_ref.shape[1]

    # --- convolution: accumulate k^3 lane-shifted matmuls on the MXU -----------
    # result[c_out, j] = sum_taps W_tap @ x_flat[:, j + off_tap]; for valid output
    # positions j this equals the 'same'-padded 3D conv (no wraparound can occur
    # inside the valid region because the input is already spatially padded).
    acc = jnp.zeros((c_out, sp), jnp.float32)
    t = 0
    for kd in range(k):
        for kh in range(k):
            for kw in range(k):
                off = kd * hp * wp + kh * wp + kw
                x_t = x_ref[0, :, pl.ds(off, sp)]      # (Cin, SP) bf16
                w_t = w_ref[t]                         # (Cout, Cin) bf16
                acc = acc + jnp.dot(w_t, x_t, preferred_element_type=jnp.float32)
                t += 1

    # --- GroupNorm over the valid positions (two-pass, f32) --------------------
    mask = mask_ref[...]                               # (1, SP) f32
    inv_cnt = 1.0 / float(n_valid * cpg)

    a3 = acc.reshape(groups, cpg, sp)                  # split channel dim by group
    m3 = mask.reshape(1, 1, sp)

    s1 = jnp.sum(jnp.sum(a3 * m3, axis=2, keepdims=True), axis=1, keepdims=True)
    mean = s1 * inv_cnt                                # (groups, 1, 1)
    d3 = a3 - mean                                     # centered (unmasked, for output)
    dm = d3 * m3                                       # centered & masked (for stats)
    s2 = jnp.sum(jnp.sum(dm * dm, axis=2, keepdims=True), axis=1, keepdims=True)
    inv = jax.lax.rsqrt(s2 * inv_cnt + eps)            # (groups, 1, 1)

    yn = (d3 * inv).reshape(c_out, sp)                 # normalized, (Cout, SP)
    y = yn * gamma_ref[...] + beta_ref[...]            # per-channel affine
    if apply_act:
        y = jnp.maximum(y, 0.0)
    o_ref[...] = y[None].astype(o_ref.dtype)


# -----------------------------------------------------------------------------
# Wrapper: ConvBlock.forward
# -----------------------------------------------------------------------------
def conv_block(x, w, gamma, beta, *, groups, kernel_size=3, stride=1, dilation=1,
               apply_act=True, gn_eps=1e-5):
    """ConvBlock forward: StdConv3d (bias=False, pad=k//2) -> GroupNorm -> ReLU.

    x     : (N, Cin, D, H, W) f32   (NCDHW, same as PyTorch)
    w     : (Cout, Cin, k, k, k) f32 (torch conv weight layout)
    gamma : (Cout,) f32   GroupNorm weight
    beta  : (Cout,) f32   GroupNorm bias
    returns (N, Cout, D, H, W) f32
    """
    if stride != 1 or dilation != 1:
        raise NotImplementedError("Pallas path supports stride=1, dilation=1 only")

    n, c_in, d, h, wd = x.shape
    c_out = w.shape[0]
    k = w.shape[2]
    assert w.shape == (c_out, c_in, k, k, k)
    assert k == kernel_size and k % 2 == 1
    assert c_out % groups == 0
    cpg = c_out // groups

    p = k // 2
    dp, hp, wp = d + 2 * p, h + 2 * p, wd + 2 * p
    s_pad = dp * hp * wp                        # flattened padded-volume size
    sp = _round_up(s_pad, 128)                  # lane-dense compute/store width
    off_max = (k - 1) * (hp * wp + wp + 1)      # largest tap offset
    l_in = _round_up(sp + off_max, 128)         # input slab lane length

    # Weight standardization in f32, then per-tap (Cout, Cin) matrices in bf16.
    w_std = weight_standardize(w)
    w_taps = jnp.transpose(w_std, (2, 3, 4, 0, 1)).reshape(k * k * k, c_out, c_in)
    w_taps = w_taps.astype(jnp.bfloat16)

    # Zero-pad spatially, flatten, pad the lane tail; bf16 for the MXU.
    xp = jnp.pad(x, ((0, 0), (0, 0), (p, p), (p, p), (p, p)))
    xf = xp.reshape(n, c_in, s_pad)
    xf = jnp.pad(xf, ((0, 0), (0, 0), (0, l_in - s_pad))).astype(jnp.bfloat16)

    # Valid-output mask over flattened padded coordinates (d', h', w') < (D, H, W).
    pos = jnp.arange(sp, dtype=jnp.int32)
    dd = pos // (hp * wp)
    rr = pos % (hp * wp)
    hh = rr // wp
    ww = rr % wp
    mask = ((dd < d) & (hh < h) & (ww < wd)).astype(jnp.float32).reshape(1, sp)

    gamma2 = gamma.reshape(c_out, 1).astype(jnp.float32)
    beta2 = beta.reshape(c_out, 1).astype(jnp.float32)

    kern = functools.partial(
        _conv_gn_act_kernel, k=k, hp=hp, wp=wp, sp=sp, groups=groups, cpg=cpg,
        n_valid=d * h * wd, apply_act=apply_act, eps=gn_eps)

    out = pl.pallas_call(
        kern,
        out_shape=jax.ShapeDtypeStruct((n, c_out, sp), jnp.float32),
        grid_spec=pltpu.PrefetchScalarGridSpec(
            num_scalar_prefetch=0,
            grid=(n,),
            in_specs=[
                pl.BlockSpec((1, c_in, l_in), lambda i: (i, 0, 0)),
                pl.BlockSpec((k * k * k, c_out, c_in), lambda i: (0, 0, 0)),
                pl.BlockSpec((c_out, 1), lambda i: (0, 0)),
                pl.BlockSpec((c_out, 1), lambda i: (0, 0)),
                pl.BlockSpec((1, sp), lambda i: (0, 0)),
            ],
            out_specs=pl.BlockSpec((1, c_out, sp), lambda i: (i, 0, 0)),
        ),
        compiler_params=pltpu.CompilerParams(
            dimension_semantics=("parallel",),          # shard batch over v7x's 2 TCs
            vmem_limit_bytes=48 * 1024 * 1024,          # safe on v7x's 64 MiB VMEM
        ),
    )(xf, w_taps, gamma2, beta2, mask)

    # Drop padded / invalid positions: valid outputs live in the (:D, :H, :W) corner
    # of the padded coordinate grid.
    out = out[:, :, :s_pad].reshape(n, c_out, dp, hp, wp)[:, :, :d, :h, :wd]
    return out


# -----------------------------------------------------------------------------
# Pure-JAX reference (lax.conv) for verification
# -----------------------------------------------------------------------------
def _ref_conv_block(x, w, gamma, beta, *, groups, apply_act=True, gn_eps=1e-5):
    w_std = weight_standardize(w)
    p = w.shape[-1] // 2
    y = jax.lax.conv_general_dilated(
        x, w_std, window_strides=(1, 1, 1), padding=[(p, p)] * 3,
        dimension_numbers=("NCDHW", "OIDHW", "NCDHW"),
        precision=jax.lax.Precision.HIGHEST)
    n, c, d, h, wd = y.shape
    yg = y.reshape(n, groups, c // groups, d, h, wd)
    mean = jnp.mean(yg, axis=(2, 3, 4, 5), keepdims=True)
    var = jnp.var(yg, axis=(2, 3, 4, 5), keepdims=True)
    yn = ((yg - mean) * jax.lax.rsqrt(var + gn_eps)).reshape(n, c, d, h, wd)
    yn = yn * gamma.reshape(1, c, 1, 1, 1) + beta.reshape(1, c, 1, 1, 1)
    if apply_act:
        yn = jnp.maximum(yn, 0.0)
    return yn


if __name__ == "__main__":
    # ConvBlock(in_channels=4, out_channels=8): GroupNorm groups = 8 // 4 = 2, ReLU.
    N, Cin, Cout, D = 2, 4, 8, 8
    GROUPS = Cout // 4

    key = jax.random.PRNGKey(0)
    kx, kw, kg, kb = jax.random.split(key, 4)
    x = jax.random.normal(kx, (N, Cin, D, D, D), dtype=jnp.float32)
    w = 0.1 * jax.random.normal(kw, (Cout, Cin, 3, 3, 3), dtype=jnp.float32)
    gamma = 1.0 + 0.1 * jax.random.normal(kg, (Cout,), dtype=jnp.float32)
    beta = 0.1 * jax.random.normal(kb, (Cout,), dtype=jnp.float32)

    fwd = jax.jit(functools.partial(conv_block, groups=GROUPS, kernel_size=3))
    out = jax.block_until_ready(fwd(x, w, gamma, beta))

    ref = jax.block_until_ready(_ref_conv_block(x, w, gamma, beta, groups=GROUPS))
    assert out.shape == (N, Cout, D, D, D), out.shape
    max_err = float(jnp.max(jnp.abs(out - ref)))
    # bf16 matmul operands vs full-f32 reference: allow a few 1e-2 of slack.
    assert jnp.allclose(out, ref, atol=5e-2, rtol=5e-2), max_err

    print("KERNEL_OK")
</pallas_src>

<mosaic_0001>
module attributes {stable_mosaic.version = 11 : i64} {
  func.func @_conv_gn_act_kernel(%arg0: i32, %arg1: memref<1x4x1280xbf16, #tpu.memory_space<vmem>>, %arg2: memref<27x8x4xbf16, #tpu.memory_space<vmem>>, %arg3: memref<8x1xf32, #tpu.memory_space<vmem>>, %arg4: memref<8x1xf32, #tpu.memory_space<vmem>>, %arg5: memref<1x1024xf32, #tpu.memory_space<vmem>>, %arg6: memref<1x8x1024xf32, #tpu.memory_space<vmem>>) attributes {dimension_semantics = [#tpu.dimension_semantics<parallel>], iteration_bounds = array<i64: 2>, scalar_prefetch = 0 : i64, scratch_operands = 0 : i64, tpu.core_type = #tpu.core_type<tc>, window_params = [{transform_indices = @transform_0, window_bounds = array<i64: 1, 4, 1280>}, {pipeline_mode = #tpu.pipeline_mode<synchronous>, transform_indices = @transform_1, window_bounds = array<i64: 27, 8, 4>}, {pipeline_mode = #tpu.pipeline_mode<synchronous>, transform_indices = @transform_2, window_bounds = array<i64: 8, 1>}, {pipeline_mode = #tpu.pipeline_mode<synchronous>, transform_indices = @transform_3, window_bounds = array<i64: 8, 1>}, {pipeline_mode = #tpu.pipeline_mode<synchronous>, transform_indices = @transform_4, window_bounds = array<i64: 1, 1024>}, {transform_indices = @transform_5, window_bounds = array<i64: 1, 8, 1024>}]} {
    %cst = arith.constant 0.000000e+00 : f32
    %0 = vector.broadcast %cst : f32 to vector<8x1024xf32>
    %c0 = arith.constant 0 : index
    %c0_0 = arith.constant 0 : index
    %c0_1 = arith.constant 0 : index
    %1 = vector.load %arg1[%c0, %c0_0, %c0_1] : memref<1x4x1280xbf16, #tpu.memory_space<vmem>>, vector<1x4x1024xbf16>
    %2 = vector.shape_cast %1 : vector<1x4x1024xbf16> to vector<4x1024xbf16>
    %c0_2 = arith.constant 0 : index
    %c0_3 = arith.constant 0 : index
    %c0_4 = arith.constant 0 : index
    %3 = vector.load %arg2[%c0_2, %c0_3, %c0_4] : memref<27x8x4xbf16, #tpu.memory_space<vmem>>, vector<1x8x4xbf16>
    %4 = vector.shape_cast %3 : vector<1x8x4xbf16> to vector<8x4xbf16>
    %cst_5 = arith.constant dense<0.000000e+00> : vector<8x1024xf32>
    %5 = tpu.matmul %4, %2, %cst_5 {dimension_numbers = #tpu.dot_dimension_numbers<[1], [0], [0], [1], [0, 0, 1, 1], [], []>} : vector<8x4xbf16>, vector<4x1024xbf16>, vector<8x1024xf32> -> vector<8x1024xf32>
    %6 = arith.addf %0, %5 : vector<8x1024xf32>
    %c0_6 = arith.constant 0 : index
    %c0_7 = arith.constant 0 : index
    %c1 = arith.constant 1 : index
    %7 = vector.load %arg1[%c0_6, %c0_7, %c1] : memref<1x4x1280xbf16, #tpu.memory_space<vmem>>, vector<1x4x1024xbf16>
    %8 = vector.shape_cast %7 : vector<1x4x1024xbf16> to vector<4x1024xbf16>
    %c1_8 = arith.constant 1 : index
    %c0_9 = arith.constant 0 : index
    %c0_10 = arith.constant 0 : index
    %9 = vector.load %arg2[%c1_8, %c0_9, %c0_10] : memref<27x8x4xbf16, #tpu.memory_space<vmem>>, vector<1x8x4xbf16>
    %10 = vector.shape_cast %9 : vector<1x8x4xbf16> to vector<8x4xbf16>
    %cst_11 = arith.constant dense<0.000000e+00> : vector<8x1024xf32>
    %11 = tpu.matmul %10, %8, %cst_11 {dimension_numbers = #tpu.dot_dimension_numbers<[1], [0], [0], [1], [0, 0, 1, 1], [], []>} : vector<8x4xbf16>, vector<4x1024xbf16>, vector<8x1024xf32> -> vector<8x1024xf32>
    %12 = arith.addf %6, %11 : vector<8x1024xf32>
    %c0_12 = arith.constant 0 : index
    %c0_13 = arith.constant 0 : index
    %c2 = arith.constant 2 : index
    %13 = vector.load %arg1[%c0_12, %c0_13, %c2] : memref<1x4x1280xbf16, #tpu.memory_space<vmem>>, vector<1x4x1024xbf16>
    %14 = vector.shape_cast %13 : vector<1x4x1024xbf16> to vector<4x1024xbf16>
    %c2_14 = arith.constant 2 : index
    %c0_15 = arith.constant 0 : index
    %c0_16 = arith.constant 0 : index
    %15 = vector.load %arg2[%c2_14, %c0_15, %c0_16] : memref<27x8x4xbf16, #tpu.memory_space<vmem>>, vector<1x8x4xbf16>
    %16 = vector.shape_cast %15 : vector<1x8x4xbf16> to vector<8x4xbf16>
    %cst_17 = arith.constant dense<0.000000e+00> : vector<8x1024xf32>
    %17 = tpu.matmul %16, %14, %cst_17 {dimension_numbers = #tpu.dot_dimension_numbers<[1], [0], [0], [1], [0, 0, 1, 1], [], []>} : vector<8x4xbf16>, vector<4x1024xbf16>, vector<8x1024xf32> -> vector<8x1024xf32>
    %18 = arith.addf %12, %17 : vector<8x1024xf32>
    %c0_18 = arith.constant 0 : index
    %c0_19 = arith.constant 0 : index
    %c10 = arith.constant 10 : index
    %19 = vector.load %arg1[%c0_18, %c0_19, %c10] : memref<1x4x1280xbf16, #tpu.memory_space<vmem>>, vector<1x4x1024xbf16>
    %20 = vector.shape_cast %19 : vector<1x4x1024xbf16> to vector<4x1024xbf16>
    %c3 = arith.constant 3 : index
    %c0_20 = arith.constant 0 : index
    %c0_21 = arith.constant 0 : index
    %21 = vector.load %arg2[%c3, %c0_20, %c0_21] : memref<27x8x4xbf16, #tpu.memory_space<vmem>>, vector<1x8x4xbf16>
    %22 = vector.shape_cast %21 : vector<1x8x4xbf16> to vector<8x4xbf16>
    %cst_22 = arith.constant dense<0.000000e+00> : vector<8x1024xf32>
    %23 = tpu.matmul %22, %20, %cst_22 {dimension_numbers = #tpu.dot_dimension_numbers<[1], [0], [0], [1], [0, 0, 1, 1], [], []>} : vector<8x4xbf16>, vector<4x1024xbf16>, vector<8x1024xf32> -> vector<8x1024xf32>
    %24 = arith.addf %18, %23 : vector<8x1024xf32>
    %c0_23 = arith.constant 0 : index
    %c0_24 = arith.constant 0 : index
    %c11 = arith.constant 11 : index
    %25 = vector.load %arg1[%c0_23, %c0_24, %c11] : memref<1x4x1280xbf16, #tpu.memory_space<vmem>>, vector<1x4x1024xbf16>
    %26 = vector.shape_cast %25 : vector<1x4x1024xbf16> to vector<4x1024xbf16>
    %c4 = arith.constant 4 : index
    %c0_25 = arith.constant 0 : index
    %c0_26 = arith.constant 0 : index
    %27 = vector.load %arg2[%c4, %c0_25, %c0_26] : memref<27x8x4xbf16, #tpu.memory_space<vmem>>, vector<1x8x4xbf16>
    %28 = vector.shape_cast %27 : vector<1x8x4xbf16> to vector<8x4xbf16>
    %cst_27 = arith.constant dense<0.000000e+00> : vector<8x1024xf32>
    %29 = tpu.matmul %28, %26, %cst_27 {dimension_numbers = #tpu.dot_dimension_numbers<[1], [0], [0], [1], [0, 0, 1, 1], [], []>} : vector<8x4xbf16>, vector<4x1024xbf16>, vector<8x1024xf32> -> vector<8x1024xf32>
    %30 = arith.addf %24, %29 : vector<8x1024xf32>
    %c0_28 = arith.constant 0 : index
    %c0_29 = arith.constant 0 : index
    %c12 = arith.constant 12 : index
    %31 = vector.load %arg1[%c0_28, %c0_29, %c12] : memref<1x4x1280xbf16, #tpu.memory_space<vmem>>, vector<1x4x1024xbf16>
    %32 = vector.shape_cast %31 : vector<1x4x1024xbf16> to vector<4x1024xbf16>
    %c5 = arith.constant 5 : index
    %c0_30 = arith.constant 0 : index
    %c0_31 = arith.constant 0 : index
    %33 = vector.load %arg2[%c5, %c0_30, %c0_31] : memref<27x8x4xbf16, #tpu.memory_space<vmem>>, vector<1x8x4xbf16>
    %34 = vector.shape_cast %33 : vector<1x8x4xbf16> to vector<8x4xbf16>
    %cst_32 = arith.constant dense<0.000000e+00> : vector<8x1024xf32>
    %35 = tpu.matmul %34, %32, %cst_32 {dimension_numbers = #tpu.dot_dimension_numbers<[1], [0], [0], [1], [0, 0, 1, 1], [], []>} : vector<8x4xbf16>, vector<4x1024xbf16>, vector<8x1024xf32> -> vector<8x1024xf32>
    %36 = arith.addf %30, %35 : vector<8x1024xf32>
    %c0_33 = arith.constant 0 : index
    %c0_34 = arith.constant 0 : index
    %c20 = arith.constant 20 : index
    %37 = vector.load %arg1[%c0_33, %c0_34, %c20] : memref<1x4x1280xbf16, #tpu.memory_space<vmem>>, vector<1x4x1024xbf16>
    %38 = vector.shape_cast %37 : vector<1x4x1024xbf16> to vector<4x1024xbf16>
    %c6 = arith.constant 6 : index
    %c0_35 = arith.constant 0 : index
    %c0_36 = arith.constant 0 : index
    %39 = vector.load %arg2[%c6, %c0_35, %c0_36] : memref<27x8x4xbf16, #tpu.memory_space<vmem>>, vector<1x8x4xbf16>
    %40 = vector.shape_cast %39 : vector<1x8x4xbf16> to vector<8x4xbf16>
    %cst_37 = arith.constant dense<0.000000e+00> : vector<8x1024xf32>
    %41 = tpu.matmul %40, %38, %cst_37 {dimension_numbers = #tpu.dot_dimension_numbers<[1], [0], [0], [1], [0, 0, 1, 1], [], []>} : vector<8x4xbf16>, vector<4x1024xbf16>, vector<8x1024xf32> -> vector<8x1024xf32>
    %42 = arith.addf %36, %41 : vector<8x1024xf32>
    %c0_38 = arith.constant 0 : index
    %c0_39 = arith.constant 0 : index
    %c21 = arith.constant 21 : index
    %43 = vector.load %arg1[%c0_38, %c0_39, %c21] : memref<1x4x1280xbf16, #tpu.memory_space<vmem>>, vector<1x4x1024xbf16>
    %44 = vector.shape_cast %43 : vector<1x4x1024xbf16> to vector<4x1024xbf16>
    %c7 = arith.constant 7 : index
    %c0_40 = arith.constant 0 : index
    %c0_41 = arith.constant 0 : index
    %45 = vector.load %arg2[%c7, %c0_40, %c0_41] : memref<27x8x4xbf16, #tpu.memory_space<vmem>>, vector<1x8x4xbf16>
    %46 = vector.shape_cast %45 : vector<1x8x4xbf16> to vector<8x4xbf16>
    %cst_42 = arith.constant dense<0.000000e+00> : vector<8x1024xf32>
    %47 = tpu.matmul %46, %44, %cst_42 {dimension_numbers = #tpu.dot_dimension_numbers<[1], [0], [0], [1], [0, 0, 1, 1], [], []>} : vector<8x4xbf16>, vector<4x1024xbf16>, vector<8x1024xf32> -> vector<8x1024xf32>
    %48 = arith.addf %42, %47 : vector<8x1024xf32>
    %c0_43 = arith.constant 0 : index
    %c0_44 = arith.constant 0 : index
    %c22 = arith.constant 22 : index
    %49 = vector.load %arg1[%c0_43, %c0_44, %c22] : memref<1x4x1280xbf16, #tpu.memory_space<vmem>>, vector<1x4x1024xbf16>
    %50 = vector.shape_cast %49 : vector<1x4x1024xbf16> to vector<4x1024xbf16>
    %c8 = arith.constant 8 : index
    %c0_45 = arith.constant 0 : index
    %c0_46 = arith.constant 0 : index
    %51 = vector.load %arg2[%c8, %c0_45, %c0_46] : memref<27x8x4xbf16, #tpu.memory_space<vmem>>, vector<1x8x4xbf16>
    %52 = vector.shape_cast %51 : vector<1x8x4xbf16> to vector<8x4xbf16>
    %cst_47 = arith.constant dense<0.000000e+00> : vector<8x1024xf32>
    %53 = tpu.matmul %52, %50, %cst_47 {dimension_numbers = #tpu.dot_dimension_numbers<[1], [0], [0], [1], [0, 0, 1, 1], [], []>} : vector<8x4xbf16>, vector<4x1024xbf16>, vector<8x1024xf32> -> vector<8x1024xf32>
    %54 = arith.addf %48, %53 : vector<8x1024xf32>
    %c0_48 = arith.constant 0 : index
    %c0_49 = arith.constant 0 : index
    %c100 = arith.constant 100 : index
    %55 = vector.load %arg1[%c0_48, %c0_49, %c100] : memref<1x4x1280xbf16, #tpu.memory_space<vmem>>, vector<1x4x1024xbf16>
    %56 = vector.shape_cast %55 : vector<1x4x1024xbf16> to vector<4x1024xbf16>
    %c9 = arith.constant 9 : index
    %c0_50 = arith.constant 0 : index
    %c0_51 = arith.constant 0 : index
    %57 = vector.load %arg2[%c9, %c0_50, %c0_51] : memref<27x8x4xbf16, #tpu.memory_space<vmem>>, vector<1x8x4xbf16>
    %58 = vector.shape_cast %57 : vector<1x8x4xbf16> to vector<8x4xbf16>
    %cst_52 = arith.constant dense<0.000000e+00> : vector<8x1024xf32>
    %59 = tpu.matmul %58, %56, %cst_52 {dimension_numbers = #tpu.dot_dimension_numbers<[1], [0], [0], [1], [0, 0, 1, 1], [], []>} : vector<8x4xbf16>, vector<4x1024xbf16>, vector<8x1024xf32> -> vector<8x1024xf32>
    %60 = arith.addf %54, %59 : vector<8x1024xf32>
    %c0_53 = arith.constant 0 : index
    %c0_54 = arith.constant 0 : index
    %c101 = arith.constant 101 : index
    %61 = vector.load %arg1[%c0_53, %c0_54, %c101] : memref<1x4x1280xbf16, #tpu.memory_space<vmem>>, vector<1x4x1024xbf16>
    %62 = vector.shape_cast %61 : vector<1x4x1024xbf16> to vector<4x1024xbf16>
    %c10_55 = arith.constant 10 : index
    %c0_56 = arith.constant 0 : index
    %c0_57 = arith.constant 0 : index
    %63 = vector.load %arg2[%c10_55, %c0_56, %c0_57] : memref<27x8x4xbf16, #tpu.memory_space<vmem>>, vector<1x8x4xbf16>
    %64 = vector.shape_cast %63 : vector<1x8x4xbf16> to vector<8x4xbf16>
    %cst_58 = arith.constant dense<0.000000e+00> : vector<8x1024xf32>
    %65 = tpu.matmul %64, %62, %cst_58 {dimension_numbers = #tpu.dot_dimension_numbers<[1], [0], [0], [1], [0, 0, 1, 1], [], []>} : vector<8x4xbf16>, vector<4x1024xbf16>, vector<8x1024xf32> -> vector<8x1024xf32>
    %66 = arith.addf %60, %65 : vector<8x1024xf32>
    %c0_59 = arith.constant 0 : index
    %c0_60 = arith.constant 0 : index
    %c102 = arith.constant 102 : index
    %67 = vector.load %arg1[%c0_59, %c0_60, %c102] : memref<1x4x1280xbf16, #tpu.memory_space<vmem>>, vector<1x4x1024xbf16>
    %68 = vector.shape_cast %67 : vector<1x4x1024xbf16> to vector<4x1024xbf16>
    %c11_61 = arith.constant 11 : index
    %c0_62 = arith.constant 0 : index
    %c0_63 = arith.constant 0 : index
    %69 = vector.load %arg2[%c11_61, %c0_62, %c0_63] : memref<27x8x4xbf16, #tpu.memory_space<vmem>>, vector<1x8x4xbf16>
    %70 = vector.shape_cast %69 : vector<1x8x4xbf16> to vector<8x4xbf16>
    %cst_64 = arith.constant dense<0.000000e+00> : vector<8x1024xf32>
    %71 = tpu.matmul %70, %68, %cst_64 {dimension_numbers = #tpu.dot_dimension_numbers<[1], [0], [0], [1], [0, 0, 1, 1], [], []>} : vector<8x4xbf16>, vector<4x1024xbf16>, vector<8x1024xf32> -> vector<8x1024xf32>
    %72 = arith.addf %66, %71 : vector<8x1024xf32>
    %c0_65 = arith.constant 0 : index
    %c0_66 = arith.constant 0 : index
    %c110 = arith.constant 110 : index
    %73 = vector.load %arg1[%c0_65, %c0_66, %c110] : memref<1x4x1280xbf16, #tpu.memory_space<vmem>>, vector<1x4x1024xbf16>
    %74 = vector.shape_cast %73 : vector<1x4x1024xbf16> to vector<4x1024xbf16>
    %c12_67 = arith.constant 12 : index
    %c0_68 = arith.constant 0 : index
    %c0_69 = arith.constant 0 : index
    %75 = vector.load %arg2[%c12_67, %c0_68, %c0_69] : memref<27x8x4xbf16, #tpu.memory_space<vmem>>, vector<1x8x4xbf16>
    %76 = vector.shape_cast %75 : vector<1x8x4xbf16> to vector<8x4xbf16>
    %cst_70 = arith.constant dense<0.000000e+00> : vector<8x1024xf32>
    %77 = tpu.matmul %76, %74, %cst_70 {dimension_numbers = #tpu.dot_dimension_numbers<[1], [0], [0], [1], [0, 0, 1, 1], [], []>} : vector<8x4xbf16>, vector<4x1024xbf16>, vector<8x1024xf32> -> vector<8x1024xf32>
    %78 = arith.addf %72, %77 : vector<8x1024xf32>
    %c0_71 = arith.constant 0 : index
    %c0_72 = arith.constant 0 : index
    %c111 = arith.constant 111 : index
    %79 = vector.load %arg1[%c0_71, %c0_72, %c111] : memref<1x4x1280xbf16, #tpu.memory_space<vmem>>, vector<1x4x1024xbf16>
    %80 = vector.shape_cast %79 : vector<1x4x1024xbf16> to vector<4x1024xbf16>
    %c13 = arith.constant 13 : index
    %c0_73 = arith.constant 0 : index
    %c0_74 = arith.constant 0 : index
    %81 = vector.load %arg2[%c13, %c0_73, %c0_74] : memref<27x8x4xbf16, #tpu.memory_space<vmem>>, vector<1x8x4xbf16>
    %82 = vector.shape_cast %81 : vector<1x8x4xbf16> to vector<8x4xbf16>
    %cst_75 = arith.constant dense<0.000000e+00> : vector<8x1024xf32>
    %83 = tpu.matmul %82, %80, %cst_75 {dimension_numbers = #tpu.dot_dimension_numbers<[1], [0], [0], [1], [0, 0, 1, 1], [], []>} : vector<8x4xbf16>, vector<4x1024xbf16>, vector<8x1024xf32> -> vector<8x1024xf32>
    %84 = arith.addf %78, %83 : vector<8x1024xf32>
    %c0_76 = arith.constant 0 : index
    %c0_77 = arith.constant 0 : index
    %c112 = arith.constant 112 : index
    %85 = vector.load %arg1[%c0_76, %c0_77, %c112] : memref<1x4x1280xbf16, #tpu.memory_space<vmem>>, vector<1x4x1024xbf16>
    %86 = vector.shape_cast %85 : vector<1x4x1024xbf16> to vector<4x1024xbf16>
    %c14 = arith.constant 14 : index
    %c0_78 = arith.constant 0 : index
    %c0_79 = arith.constant 0 : index
    %87 = vector.load %arg2[%c14, %c0_78, %c0_79] : memref<27x8x4xbf16, #tpu.memory_space<vmem>>, vector<1x8x4xbf16>
    %88 = vector.shape_cast %87 : vector<1x8x4xbf16> to vector<8x4xbf16>
    %cst_80 = arith.constant dense<0.000000e+00> : vector<8x1024xf32>
    %89 = tpu.matmul %88, %86, %cst_80 {dimension_numbers = #tpu.dot_dimension_numbers<[1], [0], [0], [1], [0, 0, 1, 1], [], []>} : vector<8x4xbf16>, vector<4x1024xbf16>, vector<8x1024xf32> -> vector<8x1024xf32>
    %90 = arith.addf %84, %89 : vector<8x1024xf32>
    %c0_81 = arith.constant 0 : index
    %c0_82 = arith.constant 0 : index
    %c120 = arith.constant 120 : index
    %91 = vector.load %arg1[%c0_81, %c0_82, %c120] : memref<1x4x1280xbf16, #tpu.memory_space<vmem>>, vector<1x4x1024xbf16>
    %92 = vector.shape_cast %91 : vector<1x4x1024xbf16> to vector<4x1024xbf16>
    %c15 = arith.constant 15 : index
    %c0_83 = arith.constant 0 : index
    %c0_84 = arith.constant 0 : index
    %93 = vector.load %arg2[%c15, %c0_83, %c0_84] : memref<27x8x4xbf16, #tpu.memory_space<vmem>>, vector<1x8x4xbf16>
    %94 = vector.shape_cast %93 : vector<1x8x4xbf16> to vector<8x4xbf16>
    %cst_85 = arith.constant dense<0.000000e+00> : vector<8x1024xf32>
    %95 = tpu.matmul %94, %92, %cst_85 {dimension_numbers = #tpu.dot_dimension_numbers<[1], [0], [0], [1], [0, 0, 1, 1], [], []>} : vector<8x4xbf16>, vector<4x1024xbf16>, vector<8x1024xf32> -> vector<8x1024xf32>
    %96 = arith.addf %90, %95 : vector<8x1024xf32>
    %c0_86 = arith.constant 0 : index
    %c0_87 = arith.constant 0 : index
    %c121 = arith.constant 121 : index
    %97 = vector.load %arg1[%c0_86, %c0_87, %c121] : memref<1x4x1280xbf16, #tpu.memory_space<vmem>>, vector<1x4x1024xbf16>
    %98 = vector.shape_cast %97 : vector<1x4x1024xbf16> to vector<4x1024xbf16>
    %c16 = arith.constant 16 : index
    %c0_88 = arith.constant 0 : index
    %c0_89 = arith.constant 0 : index
    %99 = vector.load %arg2[%c16, %c0_88, %c0_89] : memref<27x8x4xbf16, #tpu.memory_space<vmem>>, vector<1x8x4xbf16>
    %100 = vector.shape_cast %99 : vector<1x8x4xbf16> to vector<8x4xbf16>
    %cst_90 = arith.constant dense<0.000000e+00> : vector<8x1024xf32>
    %101 = tpu.matmul %100, %98, %cst_90 {dimension_numbers = #tpu.dot_dimension_numbers<[1], [0], [0], [1], [0, 0, 1, 1], [], []>} : vector<8x4xbf16>, vector<4x1024xbf16>, vector<8x1024xf32> -> vector<8x1024xf32>
    %102 = arith.addf %96, %101 : vector<8x1024xf32>
    %c0_91 = arith.constant 0 : index
    %c0_92 = arith.constant 0 : index
    %c122 = arith.constant 122 : index
    %103 = vector.load %arg1[%c0_91, %c0_92, %c122] : memref<1x4x1280xbf16, #tpu.memory_space<vmem>>, vector<1x4x1024xbf16>
    %104 = vector.shape_cast %103 : vector<1x4x1024xbf16> to vector<4x1024xbf16>
    %c17 = arith.constant 17 : index
    %c0_93 = arith.constant 0 : index
    %c0_94 = arith.constant 0 : index
    %105 = vector.load %arg2[%c17, %c0_93, %c0_94] : memref<27x8x4xbf16, #tpu.memory_space<vmem>>, vector<1x8x4xbf16>
    %106 = vector.shape_cast %105 : vector<1x8x4xbf16> to vector<8x4xbf16>
    %cst_95 = arith.constant dense<0.000000e+00> : vector<8x1024xf32>
    %107 = tpu.matmul %106, %104, %cst_95 {dimension_numbers = #tpu.dot_dimension_numbers<[1], [0], [0], [1], [0, 0, 1, 1], [], []>} : vector<8x4xbf16>, vector<4x1024xbf16>, vector<8x1024xf32> -> vector<8x1024xf32>
    %108 = arith.addf %102, %107 : vector<8x1024xf32>
    %c0_96 = arith.constant 0 : index
    %c0_97 = arith.constant 0 : index
    %c200 = arith.constant 200 : index
    %109 = vector.load %arg1[%c0_96, %c0_97, %c200] : memref<1x4x1280xbf16, #tpu.memory_space<vmem>>, vector<1x4x1024xbf16>
    %110 = vector.shape_cast %109 : vector<1x4x1024xbf16> to vector<4x1024xbf16>
    %c18 = arith.constant 18 : index
    %c0_98 = arith.constant 0 : index
    %c0_99 = arith.constant 0 : index
    %111 = vector.load %arg2[%c18, %c0_98, %c0_99] : memref<27x8x4xbf16, #tpu.memory_space<vmem>>, vector<1x8x4xbf16>
    %112 = vector.shape_cast %111 : vector<1x8x4xbf16> to vector<8x4xbf16>
    %cst_100 = arith.constant dense<0.000000e+00> : vector<8x1024xf32>
    %113 = tpu.matmul %112, %110, %cst_100 {dimension_numbers = #tpu.dot_dimension_numbers<[1], [0], [0], [1], [0, 0, 1, 1], [], []>} : vector<8x4xbf16>, vector<4x1024xbf16>, vector<8x1024xf32> -> vector<8x1024xf32>
    %114 = arith.addf %108, %113 : vector<8x1024xf32>
    %c0_101 = arith.constant 0 : index
    %c0_102 = arith.constant 0 : index
    %c201 = arith.constant 201 : index
    %115 = vector.load %arg1[%c0_101, %c0_102, %c201] : memref<1x4x1280xbf16, #tpu.memory_space<vmem>>, vector<1x4x1024xbf16>
    %116 = vector.shape_cast %115 : vector<1x4x1024xbf16> to vector<4x1024xbf16>
    %c19 = arith.constant 19 : index
    %c0_103 = arith.constant 0 : index
    %c0_104 = arith.constant 0 : index
    %117 = vector.load %arg2[%c19, %c0_103, %c0_104] : memref<27x8x4xbf16, #tpu.memory_space<vmem>>, vector<1x8x4xbf16>
    %118 = vector.shape_cast %117 : vector<1x8x4xbf16> to vector<8x4xbf16>
    %cst_105 = arith.constant dense<0.000000e+00> : vector<8x1024xf32>
    %119 = tpu.matmul %118, %116, %cst_105 {dimension_numbers = #tpu.dot_dimension_numbers<[1], [0], [0], [1], [0, 0, 1, 1], [], []>} : vector<8x4xbf16>, vector<4x1024xbf16>, vector<8x1024xf32> -> vector<8x1024xf32>
    %120 = arith.addf %114, %119 : vector<8x1024xf32>
    %c0_106 = arith.constant 0 : index
    %c0_107 = arith.constant 0 : index
    %c202 = arith.constant 202 : index
    %121 = vector.load %arg1[%c0_106, %c0_107, %c202] : memref<1x4x1280xbf16, #tpu.memory_space<vmem>>, vector<1x4x1024xbf16>
    %122 = vector.shape_cast %121 : vector<1x4x1024xbf16> to vector<4x1024xbf16>
    %c20_108 = arith.constant 20 : index
    %c0_109 = arith.constant 0 : index
    %c0_110 = arith.constant 0 : index
    %123 = vector.load %arg2[%c20_108, %c0_109, %c0_110] : memref<27x8x4xbf16, #tpu.memory_space<vmem>>, vector<1x8x4xbf16>
    %124 = vector.shape_cast %123 : vector<1x8x4xbf16> to vector<8x4xbf16>
    %cst_111 = arith.constant dense<0.000000e+00> : vector<8x1024xf32>
    %125 = tpu.matmul %124, %122, %cst_111 {dimension_numbers = #tpu.dot_dimension_numbers<[1], [0], [0], [1], [0, 0, 1, 1], [], []>} : vector<8x4xbf16>, vector<4x1024xbf16>, vector<8x1024xf32> -> vector<8x1024xf32>
    %126 = arith.addf %120, %125 : vector<8x1024xf32>
    %c0_112 = arith.constant 0 : index
    %c0_113 = arith.constant 0 : index
    %c210 = arith.constant 210 : index
    %127 = vector.load %arg1[%c0_112, %c0_113, %c210] : memref<1x4x1280xbf16, #tpu.memory_space<vmem>>, vector<1x4x1024xbf16>
    %128 = vector.shape_cast %127 : vector<1x4x1024xbf16> to vector<4x1024xbf16>
    %c21_114 = arith.constant 21 : index
    %c0_115 = arith.constant 0 : index
    %c0_116 = arith.constant 0 : index
    %129 = vector.load %arg2[%c21_114, %c0_115, %c0_116] : memref<27x8x4xbf16, #tpu.memory_space<vmem>>, vector<1x8x4xbf16>
    %130 = vector.shape_cast %129 : vector<1x8x4xbf16> to vector<8x4xbf16>
    %cst_117 = arith.constant dense<0.000000e+00> : vector<8x1024xf32>
    %131 = tpu.matmul %130, %128, %cst_117 {dimension_numbers = #tpu.dot_dimension_numbers<[1], [0], [0], [1], [0, 0, 1, 1], [], []>} : vector<8x4xbf16>, vector<4x1024xbf16>, vector<8x1024xf32> -> vector<8x1024xf32>
    %132 = arith.addf %126, %131 : vector<8x1024xf32>
    %c0_118 = arith.constant 0 : index
    %c0_119 = arith.constant 0 : index
    %c211 = arith.constant 211 : index
    %133 = vector.load %arg1[%c0_118, %c0_119, %c211] : memref<1x4x1280xbf16, #tpu.memory_space<vmem>>, vector<1x4x1024xbf16>
    %134 = vector.shape_cast %133 : vector<1x4x1024xbf16> to vector<4x1024xbf16>
    %c22_120 = arith.constant 22 : index
    %c0_121 = arith.constant 0 : index
    %c0_122 = arith.constant 0 : index
    %135 = vector.load %arg2[%c22_120, %c0_121, %c0_122] : memref<27x8x4xbf16, #tpu.memory_space<vmem>>, vector<1x8x4xbf16>
    %136 = vector.shape_cast %135 : vector<1x8x4xbf16> to vector<8x4xbf16>
    %cst_123 = arith.constant dense<0.000000e+00> : vector<8x1024xf32>
    %137 = tpu.matmul %136, %134, %cst_123 {dimension_numbers = #tpu.dot_dimension_numbers<[1], [0], [0], [1], [0, 0, 1, 1], [], []>} : vector<8x4xbf16>, vector<4x1024xbf16>, vector<8x1024xf32> -> vector<8x1024xf32>
    %138 = arith.addf %132, %137 : vector<8x1024xf32>
    %c0_124 = arith.constant 0 : index
    %c0_125 = arith.constant 0 : index
    %c212 = arith.constant 212 : index
    %139 = vector.load %arg1[%c0_124, %c0_125, %c212] : memref<1x4x1280xbf16, #tpu.memory_space<vmem>>, vector<1x4x1024xbf16>
    %140 = vector.shape_cast %139 : vector<1x4x1024xbf16> to vector<4x1024xbf16>
    %c23 = arith.constant 23 : index
    %c0_126 = arith.constant 0 : index
    %c0_127 = arith.constant 0 : index
    %141 = vector.load %arg2[%c23, %c0_126, %c0_127] : memref<27x8x4xbf16, #tpu.memory_space<vmem>>, vector<1x8x4xbf16>
    %142 = vector.shape_cast %141 : vector<1x8x4xbf16> to vector<8x4xbf16>
    %cst_128 = arith.constant dense<0.000000e+00> : vector<8x1024xf32>
    %143 = tpu.matmul %142, %140, %cst_128 {dimension_numbers = #tpu.dot_dimension_numbers<[1], [0], [0], [1], [0, 0, 1, 1], [], []>} : vector<8x4xbf16>, vector<4x1024xbf16>, vector<8x1024xf32> -> vector<8x1024xf32>
    %144 = arith.addf %138, %143 : vector<8x1024xf32>
    %c0_129 = arith.constant 0 : index
    %c0_130 = arith.constant 0 : index
    %c220 = arith.constant 220 : index
    %145 = vector.load %arg1[%c0_129, %c0_130, %c220] : memref<1x4x1280xbf16, #tpu.memory_space<vmem>>, vector<1x4x1024xbf16>
    %146 = vector.shape_cast %145 : vector<1x4x1024xbf16> to vector<4x1024xbf16>
    %c24 = arith.constant 24 : index
    %c0_131 = arith.constant 0 : index
    %c0_132 = arith.constant 0 : index
    %147 = vector.load %arg2[%c24, %c0_131, %c0_132] : memref<27x8x4xbf16, #tpu.memory_space<vmem>>, vector<1x8x4xbf16>
    %148 = vector.shape_cast %147 : vector<1x8x4xbf16> to vector<8x4xbf16>
    %cst_133 = arith.constant dense<0.000000e+00> : vector<8x1024xf32>
    %149 = tpu.matmul %148, %146, %cst_133 {dimension_numbers = #tpu.dot_dimension_numbers<[1], [0], [0], [1], [0, 0, 1, 1], [], []>} : vector<8x4xbf16>, vector<4x1024xbf16>, vector<8x1024xf32> -> vector<8x1024xf32>
    %150 = arith.addf %144, %149 : vector<8x1024xf32>
    %c0_134 = arith.constant 0 : index
    %c0_135 = arith.constant 0 : index
    %c221 = arith.constant 221 : index
    %151 = vector.load %arg1[%c0_134, %c0_135, %c221] : memref<1x4x1280xbf16, #tpu.memory_space<vmem>>, vector<1x4x1024xbf16>
    %152 = vector.shape_cast %151 : vector<1x4x1024xbf16> to vector<4x1024xbf16>
    %c25 = arith.constant 25 : index
    %c0_136 = arith.constant 0 : index
    %c0_137 = arith.constant 0 : index
    %153 = vector.load %arg2[%c25, %c0_136, %c0_137] : memref<27x8x4xbf16, #tpu.memory_space<vmem>>, vector<1x8x4xbf16>
    %154 = vector.shape_cast %153 : vector<1x8x4xbf16> to vector<8x4xbf16>
    %cst_138 = arith.constant dense<0.000000e+00> : vector<8x1024xf32>
    %155 = tpu.matmul %154, %152, %cst_138 {dimension_numbers = #tpu.dot_dimension_numbers<[1], [0], [0], [1], [0, 0, 1, 1], [], []>} : vector<8x4xbf16>, vector<4x1024xbf16>, vector<8x1024xf32> -> vector<8x1024xf32>
    %156 = arith.addf %150, %155 : vector<8x1024xf32>
    %c0_139 = arith.constant 0 : index
    %c0_140 = arith.constant 0 : index
    %c222 = arith.constant 222 : index
    %157 = vector.load %arg1[%c0_139, %c0_140, %c222] : memref<1x4x1280xbf16, #tpu.memory_space<vmem>>, vector<1x4x1024xbf16>
    %158 = vector.shape_cast %157 : vector<1x4x1024xbf16> to vector<4x1024xbf16>
    %c26 = arith.constant 26 : index
    %c0_141 = arith.constant 0 : index
    %c0_142 = arith.constant 0 : index
    %159 = vector.load %arg2[%c26, %c0_141, %c0_142] : memref<27x8x4xbf16, #tpu.memory_space<vmem>>, vector<1x8x4xbf16>
    %160 = vector.shape_cast %159 : vector<1x8x4xbf16> to vector<8x4xbf16>
    %cst_143 = arith.constant dense<0.000000e+00> : vector<8x1024xf32>
    %161 = tpu.matmul %160, %158, %cst_143 {dimension_numbers = #tpu.dot_dimension_numbers<[1], [0], [0], [1], [0, 0, 1, 1], [], []>} : vector<8x4xbf16>, vector<4x1024xbf16>, vector<8x1024xf32> -> vector<8x1024xf32>
    %162 = arith.addf %156, %161 : vector<8x1024xf32>
    %c0_144 = arith.constant 0 : index
    %c0_145 = arith.constant 0 : index
    %163 = vector.load %arg5[%c0_144, %c0_145] : memref<1x1024xf32, #tpu.memory_space<vmem>>, vector<1x1024xf32>
    %164 = vector.shape_cast %162 : vector<8x1024xf32> to vector<2x4x1024xf32>
    %165 = vector.shape_cast %163 : vector<1x1024xf32> to vector<1x1x1024xf32>
    %166 = vector.broadcast %165 : vector<1x1x1024xf32> to vector<2x4x1024xf32>
    %167 = arith.mulf %164, %166 : vector<2x4x1024xf32>
    %cst_146 = arith.constant dense<0.000000e+00> : vector<2x4xf32>
    %168 = vector.multi_reduction <add>, %167, %cst_146 [2] : vector<2x4x1024xf32> to vector<2x4xf32>
    %169 = vector.shape_cast %168 : vector<2x4xf32> to vector<2x4x1xf32>
    %cst_147 = arith.constant dense<0.000000e+00> : vector<2x1xf32>
    %170 = vector.multi_reduction <add>, %169, %cst_147 [1] : vector<2x4x1xf32> to vector<2x1xf32>
    %171 = vector.shape_cast %170 : vector<2x1xf32> to vector<2x1x1xf32>
    %cst_148 = arith.constant 4.8828125E-4 : f32
    %172 = vector.broadcast %cst_148 : f32 to vector<2x1x1xf32>
    %173 = arith.mulf %171, %172 : vector<2x1x1xf32>
    %174 = vector.broadcast %173 : vector<2x1x1xf32> to vector<2x4x1024xf32>
    %175 = arith.subf %164, %174 : vector<2x4x1024xf32>
    %176 = vector.broadcast %165 : vector<1x1x1024xf32> to vector<2x4x1024xf32>
    %177 = arith.mulf %175, %176 : vector<2x4x1024xf32>
    %178 = arith.mulf %177, %177 : vector<2x4x1024xf32>
    %cst_149 = arith.constant dense<0.000000e+00> : vector<2x4xf32>
    %179 = vector.multi_reduction <add>, %178, %cst_149 [2] : vector<2x4x1024xf32> to vector<2x4xf32>
    %180 = vector.shape_cast %179 : vector<2x4xf32> to vector<2x4x1xf32>
    %cst_150 = arith.constant dense<0.000000e+00> : vector<2x1xf32>
    %181 = vector.multi_reduction <add>, %180, %cst_150 [1] : vector<2x4x1xf32> to vector<2x1xf32>
    %182 = vector.shape_cast %181 : vector<2x1xf32> to vector<2x1x1xf32>
    %cst_151 = arith.constant 4.8828125E-4 : f32
    %183 = vector.broadcast %cst_151 : f32 to vector<2x1x1xf32>
    %184 = arith.mulf %182, %183 : vector<2x1x1xf32>
    %cst_152 = arith.constant 9.99999974E-6 : f32
    %185 = vector.broadcast %cst_152 : f32 to vector<2x1x1xf32>
    %186 = arith.addf %184, %185 : vector<2x1x1xf32>
    %187 = math.rsqrt %186 : vector<2x1x1xf32>
    %188 = vector.broadcast %187 : vector<2x1x1xf32> to vector<2x4x1024xf32>
    %189 = arith.mulf %175, %188 : vector<2x4x1024xf32>
    %190 = vector.shape_cast %189 : vector<2x4x1024xf32> to vector<8x1024xf32>
    %c0_153 = arith.constant 0 : index
    %c0_154 = arith.constant 0 : index
    %191 = vector.load %arg3[%c0_153, %c0_154] : memref<8x1xf32, #tpu.memory_space<vmem>>, vector<8x1xf32>
    %192 = vector.broadcast %191 : vector<8x1xf32> to vector<8x1024xf32>
    %193 = arith.mulf %190, %192 : vector<8x1024xf32>
    %c0_155 = arith.constant 0 : index
    %c0_156 = arith.constant 0 : index
    %194 = vector.load %arg4[%c0_155, %c0_156] : memref<8x1xf32, #tpu.memory_space<vmem>>, vector<8x1xf32>
    %195 = vector.broadcast %194 : vector<8x1xf32> to vector<8x1024xf32>
    %196 = arith.addf %193, %195 : vector<8x1024xf32>
    %cst_157 = arith.constant 0.000000e+00 : f32
    %197 = vector.broadcast %cst_157 : f32 to vector<8x1024xf32>
    %198 = arith.maximumf %196, %197 : vector<8x1024xf32>
    %199 = vector.shape_cast %198 : vector<8x1024xf32> to vector<1x8x1024xf32>
    %c0_158 = arith.constant 0 : index
    %c0_159 = arith.constant 0 : index
    %c0_160 = arith.constant 0 : index
    %200 = vector.load %arg6[%c0_158, %c0_159, %c0_160] : memref<1x8x1024xf32, #tpu.memory_space<vmem>>, vector<1x8x1024xf32>
    tpu.vector_store %arg6[%c0_158, %c0_159, %c0_160], %199 {strides = array<i32>} : memref<1x8x1024xf32, #tpu.memory_space<vmem>>, vector<1x8x1024xf32>,
    return
  }
  func.func @transform_0(%arg0: i32) -> (i32, i32, i32) {
    %c0_i32 = arith.constant 0 : i32
    %c0_i32_0 = arith.constant 0 : i32
    %c0_i32_1 = arith.constant 0 : i32
    return %arg0, %c0_i32, %c0_i32_0 : i32, i32, i32
  }
  func.func @transform_1(%arg0: i32) -> (i32, i32, i32) {
    %c0_i32 = arith.constant 0 : i32
    %c0_i32_0 = arith.constant 0 : i32
    %c0_i32_1 = arith.constant 0 : i32
    %c0_i32_2 = arith.constant 0 : i32
    return %c0_i32, %c0_i32_0, %c0_i32_1 : i32, i32, i32
  }
  func.func @transform_2(%arg0: i32) -> (i32, i32) {
    %c0_i32 = arith.constant 0 : i32
    %c0_i32_0 = arith.constant 0 : i32
    %c0_i32_1 = arith.constant 0 : i32
    return %c0_i32, %c0_i32_0 : i32, i32
  }
  func.func @transform_3(%arg0: i32) -> (i32, i32) {
    %c0_i32 = arith.constant 0 : i32
    %c0_i32_0 = arith.constant 0 : i32
    %c0_i32_1 = arith.constant 0 : i32
    return %c0_i32, %c0_i32_0 : i32, i32
  }
  func.func @transform_4(%arg0: i32) -> (i32, i32) {
    %c0_i32 = arith.constant 0 : i32
    %c0_i32_0 = arith.constant 0 : i32
    %c0_i32_1 = arith.constant 0 : i32
    return %c0_i32, %c0_i32_0 : i32, i32
  }
  func.func @transform_5(%arg0: i32) -> (i32, i32, i32) {
    %c0_i32 = arith.constant 0 : i32
    %c0_i32_0 = arith.constant 0 : i32
    %c0_i32_1 = arith.constant 0 : i32
    return %arg0, %c0_i32, %c0_i32_0 : i32, i32, i32
  }
}

</mosaic_0001>

<llo_original>
// kernel: conv_block.1
$region0: #{conv_block.1}
  #allocation0 [shape = 'u32[]', space=smem, size = 0x4, offset = 0x4, fixed_abs, tag = 'smem constant byte address 0x4 - core index']
  #allocation1 [shape = 'u32[144,128]{1,0:T(1,128)}', space=vmem, size = 0x12000, scoped, tag = 'internal scratch']
  %s0 = inlined_call_operand.vmem [shape: bf16[2,4,1280], index: 0, kind: input, shape index: {}]
  %s1 = inlined_call_operand.vmem [shape: bf16[27,8,4], index: 1, kind: input, shape index: {}]
  %s2 = inlined_call_operand.vmem [shape: f32[8,1], index: 2, kind: input, shape index: {}]
  %s3 = inlined_call_operand.vmem [shape: f32[8,1], index: 3, kind: input, shape index: {}]
  %s4 = inlined_call_operand.vmem [shape: f32[1,1024], index: 4, kind: input, shape index: {}]
  %s5 = inlined_call_operand.vmem [shape: f32[2,8,1024], index: 5, kind: output, shape index: {}]
  %s6 = sld [smem:[#allocation0]]
  $region53: #{conv_block.1} parent=0
    _
  %s8 = ssub.s32 1, %s6
  %s9 = scalar_select 0, %s8, %s6
  loop: start=0, step=1, limit=4
  $region2: #{conv_block.1} parent=0 // loop_pre_header
    _
  $region3: #{conv_block.1} parent=0 // loop_header
    %s11 = sphi 0, %s15
    %p12 = scmp.ge.s32.totalorder %s11, 4
    %s21 = sphi 0, %s23
    %s24 = sphi 0, %s21
    %s25 = sphi 0, %s24
    %s41 = sphi 0, %s25
    %s45 = sphi 0, %s45
    %s47 = sphi 0, %s45
    %s48 = sphi 0, %s47
    %s62 = sphi 0, %s48
    %s66 = sphi 0, %s66
    %s68 = sphi 0, %s66
    %s69 = sphi 0, %s68
    %s83 = sphi 0, %s69
    %s87 = sphi 0, %s87
    %s89 = sphi 0, %s87
    %s90 = sphi 0, %s89
    %s104 = sphi 0, %s90
    %s108 = sphi 0, %s108
    %s110 = sphi 0, %s108
    %s111 = sphi 0, %s110
    %s125 = sphi 0, %s111
    %s131 = sphi 0, %s133
    %s134 = sphi 0, %s131
    %s135 = sphi 0, %s134
    %s151 = sphi 0, %s135
  $region4: #{conv_block.1} parent=0 // loop_header_branch
    %14 = sbr.rel (%p12) target = $region8
  $region5: #{conv_block.1} parent=0 // loop_body
    %s16 = ssub.s32 %s11, 1
    %s17 = ssub.s32 %s11, 2
    %s18 = sadd.s32 %s11, 1
    %s19 = ssub.s32 %s11, %s18
    %p20 = scmp.eq.s32.totalorder %s19, 0
    %s22 = sadd.s32 %s21, 1
    %s23 = scalar_select %p20, %s21, %s22
    %p26 = pneg %p20
    %p27 = scmp.eq.s32.totalorder %s11, 1
    %p28 = por %p26, %p27
    %p29 = scmp.ne.s32.totalorder %s21, %s24
    %p30 = scmp.eq.s32.totalorder %s11, 0
    %p31 = por %p29, %p30
    %p32 = scmp.ne.s32.totalorder %s21, %s24
    %p33 = scmp.eq.s32.totalorder %s16, 1
    %p34 = por %p32, %p33
    %p35 = scmp.ne.s32.totalorder %s24, %s25
    %p36 = scmp.eq.s32.totalorder %s16, 0
    %p37 = por %p35, %p36
    %p38 = scmp.ne.s32.totalorder %s24, %s25
    %p39 = scmp.eq.s32.totalorder %s17, 1
    %p40 = por %p38, %p39
    %p42 = scmp.ne.s32.totalorder %s25, %s41
    %p43 = scmp.eq.s32.totalorder %s17, 0
    %p44 = por %p42, %p43
    %s46 = sadd.s32 %s45, 1
    %p49 = scmp.eq.s32.totalorder %s11, 1
    %p50 = scmp.ne.s32.totalorder %s45, %s47
    %p51 = scmp.eq.s32.totalorder %s11, 0
    %p52 = por %p50, %p51
    %p53 = scmp.ne.s32.totalorder %s45, %s47
    %p54 = scmp.eq.s32.totalorder %s16, 1
    %p55 = por %p53, %p54
    %p56 = scmp.ne.s32.totalorder %s47, %s48
    %p57 = scmp.eq.s32.totalorder %s16, 0
    %p58 = por %p56, %p57
    %p59 = scmp.ne.s32.totalorder %s47, %s48
    %p60 = scmp.eq.s32.totalorder %s17, 1
    %p61 = por %p59, %p60
    %p63 = scmp.ne.s32.totalorder %s48, %s62
    %p64 = scmp.eq.s32.totalorder %s17, 0
    %p65 = por %p63, %p64
    %s67 = sadd.s32 %s66, 1
    %p70 = scmp.eq.s32.totalorder %s11, 1
    %p71 = scmp.ne.s32.totalorder %s66, %s68
    %p72 = scmp.eq.s32.totalorder %s11, 0
    %p73 = por %p71, %p72
    %p74 = scmp.ne.s32.totalorder %s66, %s68
    %p75 = scmp.eq.s32.totalorder %s16, 1
    %p76 = por %p74, %p75
    %p77 = scmp.ne.s32.totalorder %s68, %s69
    %p78 = scmp.eq.s32.totalorder %s16, 0
    %p79 = por %p77, %p78
    %p80 = scmp.ne.s32.totalorder %s68, %s69
    %p81 = scmp.eq.s32.totalorder %s17, 1
    %p82 = por %p80, %p81
    %p84 = scmp.ne.s32.totalorder %s69, %s83
    %p85 = scmp.eq.s32.totalorder %s17, 0
    %p86 = por %p84, %p85
    %s88 = sadd.s32 %s87, 1
    %p91 = scmp.eq.s32.totalorder %s11, 1
    %p92 = scmp.ne.s32.totalorder %s87, %s89
    %p93 = scmp.eq.s32.totalorder %s11, 0
    %p94 = por %p92, %p93
    %p95 = scmp.ne.s32.totalorder %s87, %s89
    %p96 = scmp.eq.s32.totalorder %s16, 1
    %p97 = por %p95, %p96
    %p98 = scmp.ne.s32.totalorder %s89, %s90
    %p99 = scmp.eq.s32.totalorder %s16, 0
    %p100 = por %p98, %p99
    %p101 = scmp.ne.s32.totalorder %s89, %s90
    %p102 = scmp.eq.s32.totalorder %s17, 1
    %p103 = por %p101, %p102
    %p105 = scmp.ne.s32.totalorder %s90, %s104
    %p106 = scmp.eq.s32.totalorder %s17, 0
    %p107 = por %p105, %p106
    %s109 = sadd.s32 %s108, 1
    %p112 = scmp.eq.s32.totalorder %s11, 1
    %p113 = scmp.ne.s32.totalorder %s108, %s110
    %p114 = scmp.eq.s32.totalorder %s11, 0
    %p115 = por %p113, %p114
    %p116 = scmp.ne.s32.totalorder %s108, %s110
    %p117 = scmp.eq.s32.totalorder %s16, 1
    %p118 = por %p116, %p117
    %p119 = scmp.ne.s32.totalorder %s110, %s111
    %p120 = scmp.eq.s32.totalorder %s16, 0
    %p121 = por %p119, %p120
    %p122 = scmp.ne.s32.totalorder %s110, %s111
    %p123 = scmp.eq.s32.totalorder %s17, 1
    %p124 = por %p122, %p123
    %p126 = scmp.ne.s32.totalorder %s111, %s125
    %p127 = scmp.eq.s32.totalorder %s17, 0
    %p128 = por %p126, %p127
    %s129 = ssub.s32 %s11, %s18
    %p130 = scmp.eq.s32.totalorder %s129, 0
    %s132 = sadd.s32 %s131, 1
    %s133 = scalar_select %p130, %s131, %s132
    %p136 = pneg %p130
    %p137 = scmp.eq.s32.totalorder %s11, 1
    %p138 = por %p136, %p137
    %p139 = scmp.ne.s32.totalorder %s131, %s134
    %p140 = scmp.eq.s32.totalorder %s11, 0
    %p141 = por %p139, %p140
    %p142 = scmp.ne.s32.totalorder %s131, %s134
    %p143 = scmp.eq.s32.totalorder %s16, 1
    %p144 = por %p142, %p143
    %p145 = scmp.ne.s32.totalorder %s134, %s135
    %p146 = scmp.eq.s32.totalorder %s16, 0
    %p147 = por %p145, %p146
    %p148 = scmp.ne.s32.totalorder %s134, %s135
    %p149 = scmp.eq.s32.totalorder %s17, 1
    %p150 = por %p148, %p149
    %p152 = scmp.ne.s32.totalorder %s135, %s151
    %p153 = scmp.eq.s32.totalorder %s17, 0
    %p154 = por %p152, %p153
    %p155 = scmp.le.s32.totalorder 1, %s11
    %p156 = scmp.lt.s32.totalorder %s11, 3
    %p157 = pnand %p155, %p156
    %p158 = pneg %p157
    // Predicated region
    $region9: #{conv_block.1} parent=5 // pred_check
      _
    $region10: #{conv_block.1} parent=5 // pred_check_branch
      %160 = sbr.rel (%p157) target = $region12
    $region11: #{conv_block.1} parent=5 // pred_region
      %s161 = ssub.s32 %s11, 1
      // Predicated region
      $region13: #{conv_block.1} parent=11 // pred_check
        %p162 = pneg %p58
      $region14: #{conv_block.1} parent=11 // pred_check_branch
        %164 = sbr.rel (%p162) target = $region16
      $region15: #{conv_block.1} parent=11 // pred_region
        _
      $region16: #{conv_block.1} parent=11 // pred_fallthru
        _
      // Predicated region
      $region17: #{conv_block.1} parent=11 // pred_check
        %p165 = pneg %p79
      $region18: #{conv_block.1} parent=11 // pred_check_branch
        %167 = sbr.rel (%p165) target = $region20
      $region19: #{conv_block.1} parent=11 // pred_region
        _
      $region20: #{conv_block.1} parent=11 // pred_fallthru
        _
      // Predicated region
      $region21: #{conv_block.1} parent=11 // pred_check
        %p168 = pneg %p100
      $region22: #{conv_block.1} parent=11 // pred_check_branch
        %170 = sbr.rel (%p168) target = $region24
      $region23: #{conv_block.1} parent=11 // pred_region
        _
      $region24: #{conv_block.1} parent=11 // pred_fallthru
        _
      // Predicated region
      $region25: #{conv_block.1} parent=11 // pred_check
        %p171 = pneg %p121
      $region26: #{conv_block.1} parent=11 // pred_check_branch
        %173 = sbr.rel (%p171) target = $region28
      $region27: #{conv_block.1} parent=11 // pred_region
        _
      $region28: #{conv_block.1} parent=11 // pred_fallthru
        _
    $region12: #{conv_block.1} parent=5 // pred_fallthru
      _
    %p174 = scmp.lt.s32.totalorder %s11, 2
    // Predicated region
    $region29: #{conv_block.1} parent=5 // pred_check
      %p175 = pneg %p174
    $region30: #{conv_block.1} parent=5 // pred_check_branch
      %177 = sbr.rel (%p175) target = $region32
    $region31: #{conv_block.1} parent=5 // pred_region
      // Predicated region
      $region33: #{conv_block.1} parent=31 // pred_check
        %p178 = pneg %p31
      $region34: #{conv_block.1} parent=31 // pred_check_branch
        %180 = sbr.rel (%p178) target = $region36
      $region35: #{conv_block.1} parent=31 // pred_region
        %p181 = scmp.lt.s32.totalorder %s11, 1
        %s182 = scalar_select %p181, %s11, 1
        %s183 = smul.addr %s182, 10
        %s184 = smul.addr %s183, 2
        %s185 = scalar_lea.vmem %s0, %s184
      $region36: #{conv_block.1} parent=31 // pred_fallthru
        _
    $region32: #{conv_block.1} parent=5 // pred_fallthru
      _
    %p186 = scmp.le.s32.totalorder 1, %s11
    %p187 = scmp.lt.s32.totalorder %s11, 3
    %p188 = pnand %p186, %p187
    %p189 = pneg %p188
    // Predicated region
    $region37: #{conv_block.1} parent=5 // pred_check
      _
    $region38: #{conv_block.1} parent=5 // pred_check_branch
      %191 = sbr.rel (%p188) target = $region40
    $region39: #{conv_block.1} parent=5 // pred_region
      %s192 = ssub.s32 %s11, 1
      %p193 = scmp.lt.s32.totalorder %s16, 1
      %s194 = scalar_select %p193, %s16, 1
      %s195 = smul.addr %s194, 10
      %s196 = smul.addr %s195, 2
      %s197 = scalar_lea.vmem %s0, %s196
      %p198 = pneg %p37
      %p199 = pneg %p34
      %p200 = pneg %p58
      %p201 = pneg %p55
      %p202 = pneg %p79
      %p203 = pneg %p76
      %p204 = pneg %p100
      %p205 = pneg %p97
      %p206 = pneg %p121
      %p207 = pneg %p118
      %p208 = pneg %p147
      %p209 = pneg %p144
      %p210 = scmp.lt.s32.totalorder %s16, 1
      %s211 = scalar_select %p210, %s16, 1
      %s212 = smul.addr %s211, 8
      %s213 = smul.addr %s212, 8
      %s214 = scalar_lea.vmem %s5, %s213
      %p215 = scmp.lt.s32.totalorder %s16, 1
      %s216 = scalar_select %p215, %s16, 1
      %s217 = smul.addr %s216, 10
      %s218 = smul.addr %s217, 2
      %s219 = scalar_lea.vmem %s0, %s218
      %p220 = scmp.lt.s32.totalorder %s16, 1
      %s221 = scalar_select %p220, %s16, 1
      %s222 = smul.addr %s221, 8
      %s223 = smul.addr %s222, 8
      %s224 = scalar_lea.vmem %s5, %s223
      %v226 = vld [vmem:[%s219] sm:$0xff]
      %v227 = vld [vmem:[%s219 + $0x8] sm:$0xff]
      %v228 = vld [vmem:[%s1] sm:$0xf]
      %v229 = vld [vmem:[%s219 + $0x10] sm:$0x3]
      %s230 = scalar_lea.vmem %s1, 4
      %v231 = vld [vmem:[%s230] sm:$0xf]
      %v235 = vcombine.high %v226, %v226
      %v237 = vunpack.c.l.s4 1983009808
      %v238 = vunpack.c.0.s8 %v237
      %v239 = vlaneseq
      %v240 = vshrl.u32 %v239, 7
      %v241 = vsub.s32 %v238, %v240
      %v242 = vrot.slane %v226, %v241
      %v244 = vunpack.c.l.s4 1983009808
      %v245 = vunpack.c.0.s8 %v244
      %v246 = vlaneseq
      %v247 = vshrl.u32 %v246, 7
      %v248 = vsub.s32 %v245, %v247
      %v249 = vrot.slane %v235, %v248
      %v250 = vcombine.high %v242, %v242
      %v251 = vcombine.high %v249, %v249
      %v252 = vcombine.high %v227, %v227
      %v254 = vunpack.c.l.s4 1983009808
      %v255 = vunpack.c.0.s8 %v254
      %v256 = vlaneseq
      %v257 = vshrl.u32 %v256, 7
      %v258 = vsub.s32 %v255, %v257
      %v259 = vrot.slane %v227, %v258
      %v261 = vunpack.c.l.s4 1983009808
      %v262 = vunpack.c.0.s8 %v261
      %v263 = vlaneseq
      %v264 = vshrl.u32 %v263, 7
      %v265 = vsub.s32 %v262, %v264
      %v266 = vrot.slane %v252, %v265
      %v267 = vcombine.high %v259, %v259
      %v268 = vcombine.high %v266, %v266
      %v270 = vunpack.c.l.s4 1983009808
      %v271 = vunpack.c.0.s8 %v270
      %v272 = vlaneseq
      %v273 = vshrl.u32 %v272, 7
      %v274 = vsub.s32 %v271, %v273
      %v275 = vrot.slane %v229, %v274
      %276 = vrot.lane.b32.xlu0 %v242, 127
      %v277 = vpop.permute.xlu0 %276
      %278 = vrot.lane.b32.xlu0 %v250, 127
      %v279 = vpop.permute.xlu0 %278
      %280 = vrot.lane.b32.xlu0 %v249, 127
      %v281 = vpop.permute.xlu0 %280
      %282 = vrot.lane.b32.xlu0 %v251, 127
      %v283 = vpop.permute.xlu0 %282
      %284 = vrot.lane.b32.xlu0 %v259, 127
      %v285 = vpop.permute.xlu0 %284
      %286 = vrot.lane.b32.xlu0 %v267, 127
      %v287 = vpop.permute.xlu0 %286
      %288 = vrot.lane.b32.xlu0 %v266, 127
      %v289 = vpop.permute.xlu0 %288
      %290 = vrot.lane.b32.xlu0 %v268, 127
      %v291 = vpop.permute.xlu0 %290
      %292 = vrot.lane.b32.xlu0 %v275, 127
      %v293 = vpop.permute.xlu0 %292
      %vm294 = vcmask 1039360
      %v295 = vsel %vm294, %v277, %v279
      %v296 = vsel %vm294, %v279, %v281
      %v297 = vsel %vm294, %v281, %v283
      %v298 = vsel %vm294, %v283, %v285
      %v299 = vsel %vm294, %v285, %v287
      %v300 = vsel %vm294, %v287, %v289
      %v301 = vsel %vm294, %v289, %v291
      %v302 = vsel %vm294, %v291, %v293
      %vm303 = vcmask 31744
      %v305 = vsel %vm303, %v231, 0
      %vm307 = vcmask 1041408
      %v309 = vsel %vm307, %v295, 0
      %v312 = vsel %vm307, %v296, 0
      %v315 = vsel %vm307, %v297, 0
      %v318 = vsel %vm307, %v298, 0
      %v321 = vsel %vm307, %v299, 0
      %v324 = vsel %vm307, %v300, 0
      %v327 = vsel %vm307, %v301, 0
      %v330 = vsel %vm307, %v302, 0
      %332 = vmatprep.subr.bf16.mxu0 %v312
      %333 = vmatpush1.bf16.msra.mxu0 %v309
      %334 = vmatprep.subr.bf16.mxu0 0
      %335 = vmatpush1.bf16.msra.mxu0 0
      %336 = vmatprep.subr.bf16.mxu0 0
      %337 = vmatpush1.bf16.msra.mxu0 0
      %338 = vmatprep.subr.bf16.mxu0 0
      %339 = vmatpush1.bf16.msra.mxu0 0
      %340 = vmatprep.subr.bf16.mxu0 0
      %341 = vmatpush1.bf16.msra.mxu0 0
      %342 = vmatprep.subr.bf16.mxu0 0
      %343 = vmatpush1.bf16.msra.mxu0 0
      %344 = vmatprep.subr.bf16.mxu0 0
      %345 = vmatpush1.bf16.msra.mxu0 0
      %346 = vmatprep.subr.bf16.mxu0 0
      %347 = vmatpush1.bf16.msra.mxu0 0
      %348 = vmatprep.subr.bf16.mxu0 0
      %349 = vmatpush1.bf16.msra.mxu0 0
      %350 = vmatprep.subr.bf16.mxu0 0
      %351 = vmatpush1.bf16.msra.mxu0 0
      %352 = vmatprep.subr.bf16.mxu0 0
      %353 = vmatpush1.bf16.msra.mxu0 0
      %354 = vmatprep.subr.bf16.mxu0 0
      %355 = vmatpush1.bf16.msra.mxu0 0
      %356 = vmatprep.subr.bf16.mxu0 0
      %357 = vmatpush1.bf16.msra.mxu0 0
      %358 = vmatprep.subr.bf16.mxu0 0
      %359 = vmatpush1.bf16.msra.mxu0 0
      %360 = vmatprep.subr.bf16.mxu0 0
      %361 = vmatpush1.bf16.msra.mxu0 0
      %362 = vmatprep.subr.bf16.mxu0 0
      %363 = vmatpush1.bf16.msra.mxu0 0
      %364 = vmatprep.mubr.bf16.mxu0 0
      %365 = vmatmul.mubr.bf16.gmra.mrb[0].mxu0 %v305
      %v366 = vpop.f32.mrb[0].mxu0
      %v367 = vadd.f32 0.0, %v366
      %v368 = vpop.f32.mrb[0].mxu0
      %v369 = vadd.f32 0.0, %v368
      %v370 = vpop.f32.mrb[0].mxu0
      %v371 = vpop.f32.mrb[0].mxu0
      %372 = vdwg.mxu0
      %373 = vmatprep.subr.bf16.mxu0 %v318
      %374 = vmatpush1.bf16.msra.mxu0 %v315
      %375 = vmatprep.subr.bf16.mxu0 0
      %376 = vmatpush1.bf16.msra.mxu0 0
      %377 = vmatprep.subr.bf16.mxu0 0
      %378 = vmatpush1.bf16.msra.mxu0 0
      %379 = vmatprep.subr.bf16.mxu0 0
      %380 = vmatpush1.bf16.msra.mxu0 0
      %381 = vmatprep.subr.bf16.mxu0 0
      %382 = vmatpush1.bf16.msra.mxu0 0
      %383 = vmatprep.subr.bf16.mxu0 0
      %384 = vmatpush1.bf16.msra.mxu0 0
      %385 = vmatprep.subr.bf16.mxu0 0
      %386 = vmatpush1.bf16.msra.mxu0 0
      %387 = vmatprep.subr.bf16.mxu0 0
      %388 = vmatpush1.bf16.msra.mxu0 0
      %389 = vmatprep.subr.bf16.mxu0 0
      %390 = vmatpush1.bf16.msra.mxu0 0
      %391 = vmatprep.subr.bf16.mxu0 0
      %392 = vmatpush1.bf16.msra.mxu0 0
      %393 = vmatprep.subr.bf16.mxu0 0
      %394 = vmatpush1.bf16.msra.mxu0 0
      %395 = vmatprep.subr.bf16.mxu0 0
      %396 = vmatpush1.bf16.msra.mxu0 0
      %397 = vmatprep.subr.bf16.mxu0 0
      %398 = vmatpush1.bf16.msra.mxu0 0
      %399 = vmatprep.subr.bf16.mxu0 0
      %400 = vmatpush1.bf16.msra.mxu0 0
      %401 = vmatprep.subr.bf16.mxu0 0
      %402 = vmatpush1.bf16.msra.mxu0 0
      %403 = vmatprep.subr.bf16.mxu0 0
      %404 = vmatpush1.bf16.msra.mxu0 0
      %405 = vmatprep.mubr.bf16.mxu0 0
      %406 = vmatmul.mubr.bf16.gmra.mrb[0].mxu0 %v305
      %v407 = vpop.f32.mrb[0].mxu0
      %v408 = vadd.f32 0.0, %v407
      %v409 = vpop.f32.mrb[0].mxu0
      %v410 = vadd.f32 0.0, %v409
      %v411 = vpop.f32.mrb[0].mxu0
      %v412 = vpop.f32.mrb[0].mxu0
      %413 = vdwg.mxu0
      %414 = vmatprep.subr.bf16.mxu0 %v324
      %415 = vmatpush1.bf16.msra.mxu0 %v321
      %416 = vmatprep.subr.bf16.mxu0 0
      %417 = vmatpush1.bf16.msra.mxu0 0
      %418 = vmatprep.subr.bf16.mxu0 0
      %419 = vmatpush1.bf16.msra.mxu0 0
      %420 = vmatprep.subr.bf16.mxu0 0
      %421 = vmatpush1.bf16.msra.mxu0 0
      %422 = vmatprep.subr.bf16.mxu0 0
      %423 = vmatpush1.bf16.msra.mxu0 0
      %424 = vmatprep.subr.bf16.mxu0 0
      %425 = vmatpush1.bf16.msra.mxu0 0
      %426 = vmatprep.subr.bf16.mxu0 0
      %427 = vmatpush1.bf16.msra.mxu0 0
      %428 = vmatprep.subr.bf16.mxu0 0
      %429 = vmatpush1.bf16.msra.mxu0 0
      %430 = vmatprep.subr.bf16.mxu0 0
      %431 = vmatpush1.bf16.msra.mxu0 0
      %432 = vmatprep.subr.bf16.mxu0 0
      %433 = vmatpush1.bf16.msra.mxu0 0
      %434 = vmatprep.subr.bf16.mxu0 0
      %435 = vmatpush1.bf16.msra.mxu0 0
      %436 = vmatprep.subr.bf16.mxu0 0
      %437 = vmatpush1.bf16.msra.mxu0 0
      %438 = vmatprep.subr.bf16.mxu0 0
      %439 = vmatpush1.bf16.msra.mxu0 0
      %440 = vmatprep.subr.bf16.mxu0 0
      %441 = vmatpush1.bf16.msra.mxu0 0
      %442 = vmatprep.subr.bf16.mxu0 0
      %443 = vmatpush1.bf16.msra.mxu0 0
      %444 = vmatprep.subr.bf16.mxu0 0
      %445 = vmatpush1.bf16.msra.mxu0 0
      %446 = vmatprep.mubr.bf16.mxu0 0
      %447 = vmatmul.mubr.bf16.gmra.mrb[0].mxu0 %v305
      %v448 = vpop.f32.mrb[0].mxu0
      %v449 = vadd.f32 0.0, %v448
      %v450 = vpop.f32.mrb[0].mxu0
      %v451 = vadd.f32 0.0, %v450
      %v452 = vpop.f32.mrb[0].mxu0
      %v453 = vpop.f32.mrb[0].mxu0
      %454 = vdwg.mxu0
      %455 = vmatprep.subr.bf16.mxu0 %v330
      %456 = vmatpush1.bf16.msra.mxu0 %v327
      %457 = vmatprep.subr.bf16.mxu0 0
      %458 = vmatpush1.bf16.msra.mxu0 0
      %459 = vmatprep.subr.bf16.mxu0 0
      %460 = vmatpush1.bf16.msra.mxu0 0
      %461 = vmatprep.subr.bf16.mxu0 0
      %462 = vmatpush1.bf16.msra.mxu0 0
      %463 = vmatprep.subr.bf16.mxu0 0
      %464 = vmatpush1.bf16.msra.mxu0 0
      %465 = vmatprep.subr.bf16.mxu0 0
      %466 = vmatpush1.bf16.msra.mxu0 0
      %467 = vmatprep.subr.bf16.mxu0 0
      %468 = vmatpush1.bf16.msra.mxu0 0
      %469 = vmatprep.subr.bf16.mxu0 0
      %470 = vmatpush1.bf16.msra.mxu0 0
      %471 = vmatprep.subr.bf16.mxu0 0
      %472 = vmatpush1.bf16.msra.mxu0 0
      %473 = vmatprep.subr.bf16.mxu0 0
      %474 = vmatpush1.bf16.msra.mxu0 0
      %475 = vmatprep.subr.bf16.mxu0 0
      %476 = vmatpush1.bf16.msra.mxu0 0
      %477 = vmatprep.subr.bf16.mxu0 0
      %478 = vmatpush1.bf16.msra.mxu0 0
      %479 = vmatprep.subr.bf16.mxu0 0
      %480 = vmatpush1.bf16.msra.mxu0 0
      %481 = vmatprep.subr.bf16.mxu0 0
      %482 = vmatpush1.bf16.msra.mxu0 0
      %483 = vmatprep.subr.bf16.mxu0 0
      %484 = vmatpush1.bf16.msra.mxu0 0
      %485 = vmatprep.subr.bf16.mxu0 0
      %486 = vmatpush1.bf16.msra.mxu0 0
      %487 = vmatprep.mubr.bf16.mxu0 0
      %488 = vmatmul.mubr.bf16.gmra.mrb[0].mxu0 %v305
      %v489 = vpop.f32.mrb[0].mxu0
      %v490 = vadd.f32 0.0, %v489
      %v491 = vpop.f32.mrb[0].mxu0
      %v492 = vadd.f32 0.0, %v491
      %v493 = vpop.f32.mrb[0].mxu0
      %v494 = vpop.f32.mrb[0].mxu0
      %495 = vdwg.mxu0
      %v497 = vsel %vm303, %v228, 0
      %v500 = vsel %vm307, %v242, 0
      %v503 = vsel %vm307, %v250, 0
      %v506 = vsel %vm307, %v249, 0
      %v509 = vsel %vm307, %v251, 0
      %v512 = vsel %vm307, %v259, 0
      %v515 = vsel %vm307, %v267, 0
      %v518 = vsel %vm307, %v266, 0
      %v521 = vsel %vm307, %v268, 0
      %523 = vmatprep.subr.bf16.mxu0 %v503
      %524 = vmatpush1.bf16.msra.mxu0 %v500
      %525 = vmatprep.subr.bf16.mxu0 0
      %526 = vmatpush1.bf16.msra.mxu0 0
      %527 = vmatprep.subr.bf16.mxu0 0
      %528 = vmatpush1.bf16.msra.mxu0 0
      %529 = vmatprep.subr.bf16.mxu0 0
      %530 = vmatpush1.bf16.msra.mxu0 0
      %531 = vmatprep.subr.bf16.mxu0 0
      %532 = vmatpush1.bf16.msra.mxu0 0
      %533 = vmatprep.subr.bf16.mxu0 0
      %534 = vmatpush1.bf16.msra.mxu0 0
      %535 = vmatprep.subr.bf16.mxu0 0
      %536 = vmatpush1.bf16.msra.mxu0 0
      %537 = vmatprep.subr.bf16.mxu0 0
      %538 = vmatpush1.bf16.msra.mxu0 0
      %539 = vmatprep.subr.bf16.mxu0 0
      %540 = vmatpush1.bf16.msra.mxu0 0
      %541 = vmatprep.subr.bf16.mxu0 0
      %542 = vmatpush1.bf16.msra.mxu0 0
      %543 = vmatprep.subr.bf16.mxu0 0
      %544 = vmatpush1.bf16.msra.mxu0 0
      %545 = vmatprep.subr.bf16.mxu0 0
      %546 = vmatpush1.bf16.msra.mxu0 0
      %547 = vmatprep.subr.bf16.mxu0 0
      %548 = vmatpush1.bf16.msra.mxu0 0
      %549 = vmatprep.subr.bf16.mxu0 0
      %550 = vmatpush1.bf16.msra.mxu0 0
      %551 = vmatprep.subr.bf16.mxu0 0
      %552 = vmatpush1.bf16.msra.mxu0 0
      %553 = vmatprep.subr.bf16.mxu0 0
      %554 = vmatpush1.bf16.msra.mxu0 0
      %555 = vmatprep.mubr.bf16.mxu0 0
      %556 = vmatmul.mubr.bf16.gmra.mrb[0].mxu0 %v497
      %v557 = vpop.f32.mrb[0].mxu0
      %v558 = vadd.f32 %v367, %v557
      %v559 = vpop.f32.mrb[0].mxu0
      %v560 = vadd.f32 %v369, %v559
      %v561 = vpop.f32.mrb[0].mxu0
      %v562 = vpop.f32.mrb[0].mxu0
      %563 = vdwg.mxu0
      %564 = vmatprep.subr.bf16.mxu0 %v509
      %565 = vmatpush1.bf16.msra.mxu0 %v506
      %566 = vmatprep.subr.bf16.mxu0 0
      %567 = vmatpush1.bf16.msra.mxu0 0
      %568 = vmatprep.subr.bf16.mxu0 0
      %569 = vmatpush1.bf16.msra.mxu0 0
      %570 = vmatprep.subr.bf16.mxu0 0
      %571 = vmatpush1.bf16.msra.mxu0 0
      %572 = vmatprep.subr.bf16.mxu0 0
      %573 = vmatpush1.bf16.msra.mxu0 0
      %574 = vmatprep.subr.bf16.mxu0 0
      %575 = vmatpush1.bf16.msra.mxu0 0
      %576 = vmatprep.subr.bf16.mxu0 0
      %577 = vmatpush1.bf16.msra.mxu0 0
      %578 = vmatprep.subr.bf16.mxu0 0
      %579 = vmatpush1.bf16.msra.mxu0 0
      %580 = vmatprep.subr.bf16.mxu0 0
      %581 = vmatpush1.bf16.msra.mxu0 0
      %582 = vmatprep.subr.bf16.mxu0 0
      %583 = vmatpush1.bf16.msra.mxu0 0
      %584 = vmatprep.subr.bf16.mxu0 0
      %585 = vmatpush1.bf16.msra.mxu0 0
      %586 = vmatprep.subr.bf16.mxu0 0
      %587 = vmatpush1.bf16.msra.mxu0 0
      %588 = vmatprep.subr.bf16.mxu0 0
      %589 = vmatpush1.bf16.msra.mxu0 0
      %590 = vmatprep.subr.bf16.mxu0 0
      %591 = vmatpush1.bf16.msra.mxu0 0
      %592 = vmatprep.subr.bf16.mxu0 0
      %593 = vmatpush1.bf16.msra.mxu0 0
      %594 = vmatprep.subr.bf16.mxu0 0
      %595 = vmatpush1.bf16.msra.mxu0 0
      %596 = vmatprep.mubr.bf16.mxu0 0
      %597 = vmatmul.mubr.bf16.gmra.mrb[0].mxu0 %v497
      %v598 = vpop.f32.mrb[0].mxu0
      %v599 = vadd.f32 %v408, %v598
      %v600 = vpop.f32.mrb[0].mxu0
      %v601 = vadd.f32 %v410, %v600
      %v602 = vpop.f32.mrb[0].mxu0
      %v603 = vpop.f32.mrb[0].mxu0
      %604 = vdwg.mxu0
      %605 = vmatprep.subr.bf16.mxu0 %v515
      %606 = vmatpush1.bf16.msra.mxu0 %v512
      %607 = vmatprep.subr.bf16.mxu0 0
      %608 = vmatpush1.bf16.msra.mxu0 0
      %609 = vmatprep.subr.bf16.mxu0 0
      %610 = vmatpush1.bf16.msra.mxu0 0
      %611 = vmatprep.subr.bf16.mxu0 0
      %612 = vmatpush1.bf16.msra.mxu0 0
      %613 = vmatprep.subr.bf16.mxu0 0
      %614 = vmatpush1.bf16.msra.mxu0 0
      %615 = vmatprep.subr.bf16.mxu0 0
      %616 = vmatpush1.bf16.msra.mxu0 0
      %617 = vmatprep.subr.bf16.mxu0 0
      %618 = vmatpush1.bf16.msra.mxu0 0
      %619 = vmatprep.subr.bf16.mxu0 0
      %620 = vmatpush1.bf16.msra.mxu0 0
      %621 = vmatprep.subr.bf16.mxu0 0
      %622 = vmatpush1.bf16.msra.mxu0 0
      %623 = vmatprep.subr.bf16.mxu0 0
      %624 = vmatpush1.bf16.msra.mxu0 0
      %625 = vmatprep.subr.bf16.mxu0 0
      %626 = vmatpush1.bf16.msra.mxu0 0
      %627 = vmatprep.subr.bf16.mxu0 0
      %628 = vmatpush1.bf16.msra.mxu0 0
      %629 = vmatprep.subr.bf16.mxu0 0
      %630 = vmatpush1.bf16.msra.mxu0 0
      %631 = vmatprep.subr.bf16.mxu0 0
      %632 = vmatpush1.bf16.msra.mxu0 0
      %633 = vmatprep.subr.bf16.mxu0 0
      %634 = vmatpush1.bf16.msra.mxu0 0
      %635 = vmatprep.subr.bf16.mxu0 0
      %636 = vmatpush1.bf16.msra.mxu0 0
      %637 = vmatprep.mubr.bf16.mxu0 0
      %638 = vmatmul.mubr.bf16.gmra.mrb[0].mxu0 %v497
      %v639 = vpop.f32.mrb[0].mxu0
      %v640 = vadd.f32 %v449, %v639
      %v641 = vpop.f32.mrb[0].mxu0
      %v642 = vadd.f32 %v451, %v641
      %v643 = vpop.f32.mrb[0].mxu0
      %v644 = vpop.f32.mrb[0].mxu0
      %645 = vdwg.mxu0
      %646 = vmatprep.subr.bf16.mxu0 %v521
      %647 = vmatpush1.bf16.msra.mxu0 %v518
      %648 = vmatprep.subr.bf16.mxu0 0
      %649 = vmatpush1.bf16.msra.mxu0 0
      %650 = vmatprep.subr.bf16.mxu0 0
      %651 = vmatpush1.bf16.msra.mxu0 0
      %652 = vmatprep.subr.bf16.mxu0 0
      %653 = vmatpush1.bf16.msra.mxu0 0
      %654 = vmatprep.subr.bf16.mxu0 0
      %655 = vmatpush1.bf16.msra.mxu0 0
      %656 = vmatprep.subr.bf16.mxu0 0
      %657 = vmatpush1.bf16.msra.mxu0 0
      %658 = vmatprep.subr.bf16.mxu0 0
      %659 = vmatpush1.bf16.msra.mxu0 0
      %660 = vmatprep.subr.bf16.mxu0 0
      %661 = vmatpush1.bf16.msra.mxu0 0
      %662 = vmatprep.subr.bf16.mxu0 0
      %663 = vmatpush1.bf16.msra.mxu0 0
      %664 = vmatprep.subr.bf16.mxu0 0
      %665 = vmatpush1.bf16.msra.mxu0 0
      %666 = vmatprep.subr.bf16.mxu0 0
      %667 = vmatpush1.bf16.msra.mxu0 0
      %668 = vmatprep.subr.bf16.mxu0 0
      %669 = vmatpush1.bf16.msra.mxu0 0
      %670 = vmatprep.subr.bf16.mxu0 0
      %671 = vmatpush1.bf16.msra.mxu0 0
      %672 = vmatprep.subr.bf16.mxu0 0
      %673 = vmatpush1.bf16.msra.mxu0 0
      %674 = vmatprep.subr.bf16.mxu0 0
      %675 = vmatpush1.bf16.msra.mxu0 0
      %676 = vmatprep.subr.bf16.mxu0 0
      %677 = vmatpush1.bf16.msra.mxu0 0
      %678 = vmatprep.mubr.bf16.mxu0 0
      %679 = vmatmul.mubr.bf16.gmra.mrb[0].mxu0 %v497
      %v680 = vpop.f32.mrb[0].mxu0
      %v681 = vadd.f32 %v490, %v680
      %v682 = vpop.f32.mrb[0].mxu0
      %v683 = vadd.f32 %v492, %v682
      %v684 = vpop.f32.mrb[0].mxu0
      %v685 = vpop.f32.mrb[0].mxu0
      %686 = vdwg.mxu0
      %v687 = vld [vmem:[%s219] sm:$0xff]
      %v688 = vld [vmem:[%s219 + $0x8] sm:$0xff]
      %v689 = vld [vmem:[%s219 + $0x10] sm:$0x3]
      %s690 = scalar_lea.vmem %s1, 8
      %v691 = vld [vmem:[%s690] sm:$0xf]
      %v695 = vcombine.high %v687, %v687
      %v697 = vunpack.c.l.s4 1983009808
      %v698 = vunpack.c.0.s8 %v697
      %v699 = vlaneseq
      %v700 = vshrl.u32 %v699, 7
      %v701 = vsub.s32 %v698, %v700
      %v702 = vrot.slane %v687, %v701
      %v704 = vunpack.c.l.s4 1983009808
      %v705 = vunpack.c.0.s8 %v704
      %v706 = vlaneseq
      %v707 = vshrl.u32 %v706, 7
      %v708 = vsub.s32 %v705, %v707
      %v709 = vrot.slane %v695, %v708
      %v710 = vcombine.high %v702, %v702
      %v711 = vcombine.high %v709, %v709
      %v712 = vcombine.high %v688, %v688
      %v714 = vunpack.c.l.s4 1983009808
      %v715 = vunpack.c.0.s8 %v714
      %v716 = vlaneseq
      %v717 = vshrl.u32 %v716, 7
      %v718 = vsub.s32 %v715, %v717
      %v719 = vrot.slane %v688, %v718
      %v721 = vunpack.c.l.s4 1983009808
      %v722 = vunpack.c.0.s8 %v721
      %v723 = vlaneseq
      %v724 = vshrl.u32 %v723, 7
      %v725 = vsub.s32 %v722, %v724
      %v726 = vrot.slane %v712, %v725
      %v727 = vcombine.high %v719, %v719
      %v728 = vcombine.high %v726, %v726
      %v730 = vunpack.c.l.s4 1983009808
      %v731 = vunpack.c.0.s8 %v730
      %v732 = vlaneseq
      %v733 = vshrl.u32 %v732, 7
      %v734 = vsub.s32 %v731, %v733
      %v735 = vrot.slane %v689, %v734
      %736 = vrot.lane.b32.xlu0 %v702, 126
      %v737 = vpop.permute.xlu0 %736
      %738 = vrot.lane.b32.xlu0 %v710, 126
      %v739 = vpop.permute.xlu0 %738
      %740 = vrot.lane.b32.xlu0 %v709, 126
      %v741 = vpop.permute.xlu0 %740
      %742 = vrot.lane.b32.xlu0 %v711, 126
      %v743 = vpop.permute.xlu0 %742
      %744 = vrot.lane.b32.xlu0 %v719, 126
      %v745 = vpop.permute.xlu0 %744
      %746 = vrot.lane.b32.xlu0 %v727, 126
      %v747 = vpop.permute.xlu0 %746
      %748 = vrot.lane.b32.xlu0 %v726, 126
      %v749 = vpop.permute.xlu0 %748
      %750 = vrot.lane.b32.xlu0 %v728, 126
      %v751 = vpop.permute.xlu0 %750
      %752 = vrot.lane.b32.xlu0 %v735, 126
      %v753 = vpop.permute.xlu0 %752
      %vm754 = vcmask 1031168
      %v755 = vsel %vm754, %v737, %v739
      %v756 = vsel %vm754, %v739, %v741
      %v757 = vsel %vm754, %v741, %v743
      %v758 = vsel %vm754, %v743, %v745
      %v759 = vsel %vm754, %v745, %v747
      %v760 = vsel %vm754, %v747, %v749
      %v761 = vsel %vm754, %v749, %v751
      %v762 = vsel %vm754, %v751, %v753
      %v764 = vsel %vm303, %v691, 0
      %v767 = vsel %vm307, %v755, 0
      %v770 = vsel %vm307, %v756, 0
      %v773 = vsel %vm307, %v757, 0
      %v776 = vsel %vm307, %v758, 0
      %v779 = vsel %vm307, %v759, 0
      %v782 = vsel %vm307, %v760, 0
      %v785 = vsel %vm307, %v761, 0
      %v788 = vsel %vm307, %v762, 0
      %790 = vmatprep.subr.bf16.mxu0 %v770
      %791 = vmatpush1.bf16.msra.mxu0 %v767
      %792 = vmatprep.subr.bf16.mxu0 0
      %793 = vmatpush1.bf16.msra.mxu0 0
      %794 = vmatprep.subr.bf16.mxu0 0
      %795 = vmatpush1.bf16.msra.mxu0 0
      %796 = vmatprep.subr.bf16.mxu0 0
      %797 = vmatpush1.bf16.msra.mxu0 0
      %798 = vmatprep.subr.bf16.mxu0 0
      %799 = vmatpush1.bf16.msra.mxu0 0
      %800 = vmatprep.subr.bf16.mxu0 0
      %801 = vmatpush1.bf16.msra.mxu0 0
      %802 = vmatprep.subr.bf16.mxu0 0
      %803 = vmatpush1.bf16.msra.mxu0 0
      %804 = vmatprep.subr.bf16.mxu0 0
      %805 = vmatpush1.bf16.msra.mxu0 0
      %806 = vmatprep.subr.bf16.mxu0 0
      %807 = vmatpush1.bf16.msra.mxu0 0
      %808 = vmatprep.subr.bf16.mxu0 0
      %809 = vmatpush1.bf16.msra.mxu0 0
      %810 = vmatprep.subr.bf16.mxu0 0
      %811 = vmatpush1.bf16.msra.mxu0 0
      %812 = vmatprep.subr.bf16.mxu0 0
      %813 = vmatpush1.bf16.msra.mxu0 0
      %814 = vmatprep.subr.bf16.mxu0 0
      %815 = vmatpush1.bf16.msra.mxu0 0
      %816 = vmatprep.subr.bf16.mxu0 0
      %817 = vmatpush1.bf16.msra.mxu0 0
      %818 = vmatprep.subr.bf16.mxu0 0
      %819 = vmatpush1.bf16.msra.mxu0 0
      %820 = vmatprep.subr.bf16.mxu0 0
      %821 = vmatpush1.bf16.msra.mxu0 0
      %822 = vmatprep.mubr.bf16.mxu0 0
      %823 = vmatmul.mubr.bf16.gmra.mrb[0].mxu0 %v764
      %v824 = vpop.f32.mrb[0].mxu0
      %v825 = vadd.f32 0.0, %v824
      %v826 = vpop.f32.mrb[0].mxu0
      %v827 = vadd.f32 0.0, %v826
      %v828 = vpop.f32.mrb[0].mxu0
      %v829 = vpop.f32.mrb[0].mxu0
      %830 = vdwg.mxu0
      %831 = vmatprep.subr.bf16.mxu0 %v776
      %832 = vmatpush1.bf16.msra.mxu0 %v773
      %833 = vmatprep.subr.bf16.mxu0 0
      %834 = vmatpush1.bf16.msra.mxu0 0
      %835 = vmatprep.subr.bf16.mxu0 0
      %836 = vmatpush1.bf16.msra.mxu0 0
      %837 = vmatprep.subr.bf16.mxu0 0
      %838 = vmatpush1.bf16.msra.mxu0 0
      %839 = vmatprep.subr.bf16.mxu0 0
      %840 = vmatpush1.bf16.msra.mxu0 0
      %841 = vmatprep.subr.bf16.mxu0 0
      %842 = vmatpush1.bf16.msra.mxu0 0
      %843 = vmatprep.subr.bf16.mxu0 0
      %844 = vmatpush1.bf16.msra.mxu0 0
      %845 = vmatprep.subr.bf16.mxu0 0
      %846 = vmatpush1.bf16.msra.mxu0 0
      %847 = vmatprep.subr.bf16.mxu0 0
      %848 = vmatpush1.bf16.msra.mxu0 0
      %849 = vmatprep.subr.bf16.mxu0 0
      %850 = vmatpush1.bf16.msra.mxu0 0
      %851 = vmatprep.subr.bf16.mxu0 0
      %852 = vmatpush1.bf16.msra.mxu0 0
      %853 = vmatprep.subr.bf16.mxu0 0
      %854 = vmatpush1.bf16.msra.mxu0 0
      %855 = vmatprep.subr.bf16.mxu0 0
      %856 = vmatpush1.bf16.msra.mxu0 0
      %857 = vmatprep.subr.bf16.mxu0 0
      %858 = vmatpush1.bf16.msra.mxu0 0
      %859 = vmatprep.subr.bf16.mxu0 0
      %860 = vmatpush1.bf16.msra.mxu0 0
      %861 = vmatprep.subr.bf16.mxu0 0
      %862 = vmatpush1.bf16.msra.mxu0 0
      %863 = vmatprep.mubr.bf16.mxu0 0
      %864 = vmatmul.mubr.bf16.gmra.mrb[0].mxu0 %v764
      %v865 = vpop.f32.mrb[0].mxu0
      %v866 = vadd.f32 0.0, %v865
      %v867 = vpop.f32.mrb[0].mxu0
      %v868 = vadd.f32 0.0, %v867
      %v869 = vpop.f32.mrb[0].mxu0
      %v870 = vpop.f32.mrb[0].mxu0
      %871 = vdwg.mxu0
      %872 = vmatprep.subr.bf16.mxu0 %v782
      %873 = vmatpush1.bf16.msra.mxu0 %v779
      %874 = vmatprep.subr.bf16.mxu0 0
      %875 = vmatpush1.bf16.msra.mxu0 0
      %876 = vmatprep.subr.bf16.mxu0 0
      %877 = vmatpush1.bf16.msra.mxu0 0
      %878 = vmatprep.subr.bf16.mxu0 0
      %879 = vmatpush1.bf16.msra.mxu0 0
      %880 = vmatprep.subr.bf16.mxu0 0
      %881 = vmatpush1.bf16.msra.mxu0 0
      %882 = vmatprep.subr.bf16.mxu0 0
      %883 = vmatpush1.bf16.msra.mxu0 0
      %884 = vmatprep.subr.bf16.mxu0 0
      %885 = vmatpush1.bf16.msra.mxu0 0
      %886 = vmatprep.subr.bf16.mxu0 0
      %887 = vmatpush1.bf16.msra.mxu0 0
      %888 = vmatprep.subr.bf16.mxu0 0
      %889 = vmatpush1.bf16.msra.mxu0 0
      %890 = vmatprep.subr.bf16.mxu0 0
      %891 = vmatpush1.bf16.msra.mxu0 0
      %892 = vmatprep.subr.bf16.mxu0 0
      %893 = vmatpush1.bf16.msra.mxu0 0
      %894 = vmatprep.subr.bf16.mxu0 0
      %895 = vmatpush1.bf16.msra.mxu0 0
      %896 = vmatprep.subr.bf16.mxu0 0
      %897 = vmatpush1.bf16.msra.mxu0 0
      %898 = vmatprep.subr.bf16.mxu0 0
      %899 = vmatpush1.bf16.msra.mxu0 0
      %900 = vmatprep.subr.bf16.mxu0 0
      %901 = vmatpush1.bf16.msra.mxu0 0
      %902 = vmatprep.subr.bf16.mxu0 0
      %903 = vmatpush1.bf16.msra.mxu0 0
      %904 = vmatprep.mubr.bf16.mxu0 0
      %905 = vmatmul.mubr.bf16.gmra.mrb[0].mxu0 %v764
      %v906 = vpop.f32.mrb[0].mxu0
      %v907 = vadd.f32 0.0, %v906
      %v908 = vpop.f32.mrb[0].mxu0
      %v909 = vadd.f32 0.0, %v908
      %v910 = vpop.f32.mrb[0].mxu0
      %v911 = vpop.f32.mrb[0].mxu0
      %912 = vdwg.mxu0
      %913 = vmatprep.subr.bf16.mxu0 %v788
      %914 = vmatpush1.bf16.msra.mxu0 %v785
      %915 = vmatprep.subr.bf16.mxu0 0
      %916 = vmatpush1.bf16.msra.mxu0 0
      %917 = vmatprep.subr.bf16.mxu0 0
      %918 = vmatpush1.bf16.msra.mxu0 0
      %919 = vmatprep.subr.bf16.mxu0 0
      %920 = vmatpush1.bf16.msra.mxu0 0
      %921 = vmatprep.subr.bf16.mxu0 0
      %922 = vmatpush1.bf16.msra.mxu0 0
      %923 = vmatprep.subr.bf16.mxu0 0
      %924 = vmatpush1.bf16.msra.mxu0 0
      %925 = vmatprep.subr.bf16.mxu0 0
      %926 = vmatpush1.bf16.msra.mxu0 0
      %927 = vmatprep.subr.bf16.mxu0 0
      %928 = vmatpush1.bf16.msra.mxu0 0
      %929 = vmatprep.subr.bf16.mxu0 0
      %930 = vmatpush1.bf16.msra.mxu0 0
      %931 = vmatprep.subr.bf16.mxu0 0
      %932 = vmatpush1.bf16.msra.mxu0 0
      %933 = vmatprep.subr.bf16.mxu0 0
      %934 = vmatpush1.bf16.msra.mxu0 0
      %935 = vmatprep.subr.bf16.mxu0 0
      %936 = vmatpush1.bf16.msra.mxu0 0
      %937 = vmatprep.subr.bf16.mxu0 0
      %938 = vmatpush1.bf16.msra.mxu0 0
      %939 = vmatprep.subr.bf16.mxu0 0
      %940 = vmatpush1.bf16.msra.mxu0 0
      %941 = vmatprep.subr.bf16.mxu0 0
      %942 = vmatpush1.bf16.msra.mxu0 0
      %943 = vmatprep.subr.bf16.mxu0 0
      %944 = vmatpush1.bf16.msra.mxu0 0
      %945 = vmatprep.mubr.bf16.mxu0 0
      %946 = vmatmul.mubr.bf16.gmra.mrb[0].mxu0 %v764
      %v947 = vpop.f32.mrb[0].mxu0
      %v948 = vadd.f32 0.0, %v947
      %v949 = vpop.f32.mrb[0].mxu0
      %v950 = vadd.f32 0.0, %v949
      %v951 = vpop.f32.mrb[0].mxu0
      %v952 = vpop.f32.mrb[0].mxu0
      %953 = vdwg.mxu0
      %v954 = vadd.f32 %v558, %v825
      %v955 = vadd.f32 %v560, %v827
      %v956 = vadd.f32 %v599, %v866
      %v957 = vadd.f32 %v601, %v868
      %v958 = vadd.f32 %v640, %v907
      %v959 = vadd.f32 %v642, %v909
      %v960 = vadd.f32 %v681, %v948
      %v961 = vadd.f32 %v683, %v950
      %v962 = vld [vmem:[%s219] sm:$0xff]
      %v963 = vld [vmem:[%s219 + $0x8] sm:$0xff]
      %v964 = vld [vmem:[%s219 + $0x10] sm:$0x3]
      %s965 = scalar_lea.vmem %s1, 12
      %v966 = vld [vmem:[%s965] sm:$0xf]
      %v970 = vcombine.high %v962, %v962
      %v972 = vunpack.c.l.s4 1983009808
      %v973 = vunpack.c.0.s8 %v972
      %v974 = vlaneseq
      %v975 = vshrl.u32 %v974, 7
      %v976 = vsub.s32 %v973, %v975
      %v977 = vrot.slane %v962, %v976
      %v979 = vunpack.c.l.s4 1983009808
      %v980 = vunpack.c.0.s8 %v979
      %v981 = vlaneseq
      %v982 = vshrl.u32 %v981, 7
      %v983 = vsub.s32 %v980, %v982
      %v984 = vrot.slane %v970, %v983
      %v985 = vcombine.high %v977, %v977
      %v986 = vcombine.high %v984, %v984
      %v987 = vcombine.high %v963, %v963
      %v989 = vunpack.c.l.s4 1983009808
      %v990 = vunpack.c.0.s8 %v989
      %v991 = vlaneseq
      %v992 = vshrl.u32 %v991, 7
      %v993 = vsub.s32 %v990, %v992
      %v994 = vrot.slane %v963, %v993
      %v996 = vunpack.c.l.s4 1983009808
      %v997 = vunpack.c.0.s8 %v996
      %v998 = vlaneseq
      %v999 = vshrl.u32 %v998, 7
      %v1000 = vsub.s32 %v997, %v999
      %v1001 = vrot.slane %v987, %v1000
      %v1002 = vcombine.high %v994, %v994
      %v1003 = vcombine.high %v1001, %v1001
      %v1005 = vunpack.c.l.s4 1983009808
      %v1006 = vunpack.c.0.s8 %v1005
      %v1007 = vlaneseq
      %v1008 = vshrl.u32 %v1007, 7
      %v1009 = vsub.s32 %v1006, %v1008
      %v1010 = vrot.slane %v964, %v1009
      %1011 = vrot.lane.b32.xlu0 %v977, 118
      %v1012 = vpop.permute.xlu0 %1011
      %1013 = vrot.lane.b32.xlu0 %v985, 118
      %v1014 = vpop.permute.xlu0 %1013
      %1015 = vrot.lane.b32.xlu0 %v984, 118
      %v1016 = vpop.permute.xlu0 %1015
      %1017 = vrot.lane.b32.xlu0 %v986, 118
      %v1018 = vpop.permute.xlu0 %1017
      %1019 = vrot.lane.b32.xlu0 %v994, 118
      %v1020 = vpop.permute.xlu0 %1019
      %1021 = vrot.lane.b32.xlu0 %v1002, 118
      %v1022 = vpop.permute.xlu0 %1021
      %1023 = vrot.lane.b32.xlu0 %v1001, 118
      %v1024 = vpop.permute.xlu0 %1023
      %1025 = vrot.lane.b32.xlu0 %v1003, 118
      %v1026 = vpop.permute.xlu0 %1025
      %1027 = vrot.lane.b32.xlu0 %v1010, 118
      %v1028 = vpop.permute.xlu0 %1027
      %vm1029 = vcmask 965632
      %v1030 = vsel %vm1029, %v1012, %v1014
      %v1031 = vsel %vm1029, %v1014, %v1016
      %v1032 = vsel %vm1029, %v1016, %v1018
      %v1033 = vsel %vm1029, %v1018, %v1020
      %v1034 = vsel %vm1029, %v1020, %v1022
      %v1035 = vsel %vm1029, %v1022, %v1024
      %v1036 = vsel %vm1029, %v1024, %v1026
      %v1037 = vsel %vm1029, %v1026, %v1028
      %v1039 = vsel %vm303, %v966, 0
      %v1042 = vsel %vm307, %v1030, 0
      %v1045 = vsel %vm307, %v1031, 0
      %v1048 = vsel %vm307, %v1032, 0
      %v1051 = vsel %vm307, %v1033, 0
      %v1054 = vsel %vm307, %v1034, 0
      %v1057 = vsel %vm307, %v1035, 0
      %v1060 = vsel %vm307, %v1036, 0
      %v1063 = vsel %vm307, %v1037, 0
      %1065 = vmatprep.subr.bf16.mxu0 %v1045
      %1066 = vmatpush1.bf16.msra.mxu0 %v1042
      %1067 = vmatprep.subr.bf16.mxu0 0
      %1068 = vmatpush1.bf16.msra.mxu0 0
      %1069 = vmatprep.subr.bf16.mxu0 0
      %1070 = vmatpush1.bf16.msra.mxu0 0
      %1071 = vmatprep.subr.bf16.mxu0 0
      %1072 = vmatpush1.bf16.msra.mxu0 0
      %1073 = vmatprep.subr.bf16.mxu0 0
      %1074 = vmatpush1.bf16.msra.mxu0 0
      %1075 = vmatprep.subr.bf16.mxu0 0
      %1076 = vmatpush1.bf16.msra.mxu0 0
      %1077 = vmatprep.subr.bf16.mxu0 0
      %1078 = vmatpush1.bf16.msra.mxu0 0
      %1079 = vmatprep.subr.bf16.mxu0 0
      %1080 = vmatpush1.bf16.msra.mxu0 0
      %1081 = vmatprep.subr.bf16.mxu0 0
      %1082 = vmatpush1.bf16.msra.mxu0 0
      %1083 = vmatprep.subr.bf16.mxu0 0
      %1084 = vmatpush1.bf16.msra.mxu0 0
      %1085 = vmatprep.subr.bf16.mxu0 0
      %1086 = vmatpush1.bf16.msra.mxu0 0
      %1087 = vmatprep.subr.bf16.mxu0 0
      %1088 = vmatpush1.bf16.msra.mxu0 0
      %1089 = vmatprep.subr.bf16.mxu0 0
      %1090 = vmatpush1.bf16.msra.mxu0 0
      %1091 = vmatprep.subr.bf16.mxu0 0
      %1092 = vmatpush1.bf16.msra.mxu0 0
      %1093 = vmatprep.subr.bf16.mxu0 0
      %1094 = vmatpush1.bf16.msra.mxu0 0
      %1095 = vmatprep.subr.bf16.mxu0 0
      %1096 = vmatpush1.bf16.msra.mxu0 0
      %1097 = vmatprep.mubr.bf16.mxu0 0
      %1098 = vmatmul.mubr.bf16.gmra.mrb[0].mxu0 %v1039
      %v1099 = vpop.f32.mrb[0].mxu0
      %v1100 = vadd.f32 0.0, %v1099
      %v1101 = vpop.f32.mrb[0].mxu0
      %v1102 = vadd.f32 0.0, %v1101
      %v1103 = vpop.f32.mrb[0].mxu0
      %v1104 = vpop.f32.mrb[0].mxu0
      %1105 = vdwg.mxu0
      %1106 = vmatprep.subr.bf16.mxu0 %v1051
      %1107 = vmatpush1.bf16.msra.mxu0 %v1048
      %1108 = vmatprep.subr.bf16.mxu0 0
      %1109 = vmatpush1.bf16.msra.mxu0 0
      %1110 = vmatprep.subr.bf16.mxu0 0
      %1111 = vmatpush1.bf16.msra.mxu0 0
      %1112 = vmatprep.subr.bf16.mxu0 0
      %1113 = vmatpush1.bf16.msra.mxu0 0
      %1114 = vmatprep.subr.bf16.mxu0 0
      %1115 = vmatpush1.bf16.msra.mxu0 0
      %1116 = vmatprep.subr.bf16.mxu0 0
      %1117 = vmatpush1.bf16.msra.mxu0 0
      %1118 = vmatprep.subr.bf16.mxu0 0
      %1119 = vmatpush1.bf16.msra.mxu0 0
      %1120 = vmatprep.subr.bf16.mxu0 0
      %1121 = vmatpush1.bf16.msra.mxu0 0
      %1122 = vmatprep.subr.bf16.mxu0 0
      %1123 = vmatpush1.bf16.msra.mxu0 0
      %1124 = vmatprep.subr.bf16.mxu0 0
      %1125 = vmatpush1.bf16.msra.mxu0 0
      %1126 = vmatprep.subr.bf16.mxu0 0
      %1127 = vmatpush1.bf16.msra.mxu0 0
      %1128 = vmatprep.subr.bf16.mxu0 0
      %1129 = vmatpush1.bf16.msra.mxu0 0
      %1130 = vmatprep.subr.bf16.mxu0 0
      %1131 = vmatpush1.bf16.msra.mxu0 0
      %1132 = vmatprep.subr.bf16.mxu0 0
      %1133 = vmatpush1.bf16.msra.mxu0 0
      %1134 = vmatprep.subr.bf16.mxu0 0
      %1135 = vmatpush1.bf16.msra.mxu0 0
      %1136 = vmatprep.subr.bf16.mxu0 0
      %1137 = vmatpush1.bf16.msra.mxu0 0
      %1138 = vmatprep.mubr.bf16.mxu0 0
      %1139 = vmatmul.mubr.bf16.gmra.mrb[0].mxu0 %v1039
      %v1140 = vpop.f32.mrb[0].mxu0
      %v1141 = vadd.f32 0.0, %v1140
      %v1142 = vpop.f32.mrb[0].mxu0
      %v1143 = vadd.f32 0.0, %v1142
      %v1144 = vpop.f32.mrb[0].mxu0
      %v1145 = vpop.f32.mrb[0].mxu0
      %1146 = vdwg.mxu0
      %1147 = vmatprep.subr.bf16.mxu0 %v1057
      %1148 = vmatpush1.bf16.msra.mxu0 %v1054
      %1149 = vmatprep.subr.bf16.mxu0 0
      %1150 = vmatpush1.bf16.msra.mxu0 0
      %1151 = vmatprep.subr.bf16.mxu0 0
      %1152 = vmatpush1.bf16.msra.mxu0 0
      %1153 = vmatprep.subr.bf16.mxu0 0
      %1154 = vmatpush1.bf16.msra.mxu0 0
      %1155 = vmatprep.subr.bf16.mxu0 0
      %1156 = vmatpush1.bf16.msra.mxu0 0
      %1157 = vmatprep.subr.bf16.mxu0 0
      %1158 = vmatpush1.bf16.msra.mxu0 0
      %1159 = vmatprep.subr.bf16.mxu0 0
      %1160 = vmatpush1.bf16.msra.mxu0 0
      %1161 = vmatprep.subr.bf16.mxu0 0
      %1162 = vmatpush1.bf16.msra.mxu0 0
      %1163 = vmatprep.subr.bf16.mxu0 0
      %1164 = vmatpush1.bf16.msra.mxu0 0
      %1165 = vmatprep.subr.bf16.mxu0 0
      %1166 = vmatpush1.bf16.msra.mxu0 0
      %1167 = vmatprep.subr.bf16.mxu0 0
      %1168 = vmatpush1.bf16.msra.mxu0 0
      %1169 = vmatprep.subr.bf16.mxu0 0
      %1170 = vmatpush1.bf16.msra.mxu0 0
      %1171 = vmatprep.subr.bf16.mxu0 0
      %1172 = vmatpush1.bf16.msra.mxu0 0
      %1173 = vmatprep.subr.bf16.mxu0 0
      %1174 = vmatpush1.bf16.msra.mxu0 0
      %1175 = vmatprep.subr.bf16.mxu0 0
      %1176 = vmatpush1.bf16.msra.mxu0 0
      %1177 = vmatprep.subr.bf16.mxu0 0
      %1178 = vmatpush1.bf16.msra.mxu0 0
      %1179 = vmatprep.mubr.bf16.mxu0 0
      %1180 = vmatmul.mubr.bf16.gmra.mrb[0].mxu0 %v1039
      %v1181 = vpop.f32.mrb[0].mxu0
      %v1182 = vadd.f32 0.0, %v1181
      %v1183 = vpop.f32.mrb[0].mxu0
      %v1184 = vadd.f32 0.0, %v1183
      %v1185 = vpop.f32.mrb[0].mxu0
      %v1186 = vpop.f32.mrb[0].mxu0
      %1187 = vdwg.mxu0
      %1188 = vmatprep.subr.bf16.mxu0 %v1063
      %1189 = vmatpush1.bf16.msra.mxu0 %v1060
      %1190 = vmatprep.subr.bf16.mxu0 0
      %1191 = vmatpush1.bf16.msra.mxu0 0
      %1192 = vmatprep.subr.bf16.mxu0 0
      %1193 = vmatpush1.bf16.msra.mxu0 0
      %1194 = vmatprep.subr.bf16.mxu0 0
      %1195 = vmatpush1.bf16.msra.mxu0 0
      %1196 = vmatprep.subr.bf16.mxu0 0
      %1197 = vmatpush1.bf16.msra.mxu0 0
      %1198 = vmatprep.subr.bf16.mxu0 0
      %1199 = vmatpush1.bf16.msra.mxu0 0
      %1200 = vmatprep.subr.bf16.mxu0 0
      %1201 = vmatpush1.bf16.msra.mxu0 0
      %1202 = vmatprep.subr.bf16.mxu0 0
      %1203 = vmatpush1.bf16.msra.mxu0 0
      %1204 = vmatprep.subr.bf16.mxu0 0
      %1205 = vmatpush1.bf16.msra.mxu0 0
      %1206 = vmatprep.subr.bf16.mxu0 0
      %1207 = vmatpush1.bf16.msra.mxu0 0
      %1208 = vmatprep.subr.bf16.mxu0 0
      %1209 = vmatpush1.bf16.msra.mxu0 0
      %1210 = vmatprep.subr.bf16.mxu0 0
      %1211 = vmatpush1.bf16.msra.mxu0 0
      %1212 = vmatprep.subr.bf16.mxu0 0
      %1213 = vmatpush1.bf16.msra.mxu0 0
      %1214 = vmatprep.subr.bf16.mxu0 0
      %1215 = vmatpush1.bf16.msra.mxu0 0
      %1216 = vmatprep.subr.bf16.mxu0 0
      %1217 = vmatpush1.bf16.msra.mxu0 0
      %1218 = vmatprep.subr.bf16.mxu0 0
      %1219 = vmatpush1.bf16.msra.mxu0 0
      %1220 = vmatprep.mubr.bf16.mxu0 0
      %1221 = vmatmul.mubr.bf16.gmra.mrb[0].mxu0 %v1039
      %v1222 = vpop.f32.mrb[0].mxu0
      %v1223 = vadd.f32 0.0, %v1222
      %v1224 = vpop.f32.mrb[0].mxu0
      %v1225 = vadd.f32 0.0, %v1224
      %v1226 = vpop.f32.mrb[0].mxu0
      %v1227 = vpop.f32.mrb[0].mxu0
      %1228 = vdwg.mxu0
      %v1229 = vadd.f32 %v954, %v1100
      %v1230 = vadd.f32 %v955, %v1102
      %v1231 = vadd.f32 %v956, %v1141
      %v1232 = vadd.f32 %v957, %v1143
      %v1233 = vadd.f32 %v958, %v1182
      %v1234 = vadd.f32 %v959, %v1184
      %v1235 = vadd.f32 %v960, %v1223
      %v1236 = vadd.f32 %v961, %v1225
      %v1237 = vld [vmem:[%s219] sm:$0xff]
      %v1238 = vld [vmem:[%s219 + $0x8] sm:$0xff]
      %v1239 = vld [vmem:[%s219 + $0x10] sm:$0x3]
      %s1240 = scalar_lea.vmem %s1, 16
      %v1241 = vld [vmem:[%s1240] sm:$0xf]
      %v1245 = vcombine.high %v1237, %v1237
      %v1247 = vunpack.c.l.s4 1983009808
      %v1248 = vunpack.c.0.s8 %v1247
      %v1249 = vlaneseq
      %v1250 = vshrl.u32 %v1249, 7
      %v1251 = vsub.s32 %v1248, %v1250
      %v1252 = vrot.slane %v1237, %v1251
      %v1254 = vunpack.c.l.s4 1983009808
      %v1255 = vunpack.c.0.s8 %v1254
      %v1256 = vlaneseq
      %v1257 = vshrl.u32 %v1256, 7
      %v1258 = vsub.s32 %v1255, %v1257
      %v1259 = vrot.slane %v1245, %v1258
      %v1260 = vcombine.high %v1252, %v1252
      %v1261 = vcombine.high %v1259, %v1259
      %v1262 = vcombine.high %v1238, %v1238
      %v1264 = vunpack.c.l.s4 1983009808
      %v1265 = vunpack.c.0.s8 %v1264
      %v1266 = vlaneseq
      %v1267 = vshrl.u32 %v1266, 7
      %v1268 = vsub.s32 %v1265, %v1267
      %v1269 = vrot.slane %v1238, %v1268
      %v1271 = vunpack.c.l.s4 1983009808
      %v1272 = vunpack.c.0.s8 %v1271
      %v1273 = vlaneseq
      %v1274 = vshrl.u32 %v1273, 7
      %v1275 = vsub.s32 %v1272, %v1274
      %v1276 = vrot.slane %v1262, %v1275
      %v1277 = vcombine.high %v1269, %v1269
      %v1278 = vcombine.high %v1276, %v1276
      %v1280 = vunpack.c.l.s4 1983009808
      %v1281 = vunpack.c.0.s8 %v1280
      %v1282 = vlaneseq
      %v1283 = vshrl.u32 %v1282, 7
      %v1284 = vsub.s32 %v1281, %v1283
      %v1285 = vrot.slane %v1239, %v1284
      %1286 = vrot.lane.b32.xlu0 %v1252, 117
      %v1287 = vpop.permute.xlu0 %1286
      %1288 = vrot.lane.b32.xlu0 %v1260, 117
      %v1289 = vpop.permute.xlu0 %1288
      %1290 = vrot.lane.b32.xlu0 %v1259, 117
      %v1291 = vpop.permute.xlu0 %1290
      %1292 = vrot.lane.b32.xlu0 %v1261, 117
      %v1293 = vpop.permute.xlu0 %1292
      %1294 = vrot.lane.b32.xlu0 %v1269, 117
      %v1295 = vpop.permute.xlu0 %1294
      %1296 = vrot.lane.b32.xlu0 %v1277, 117
      %v1297 = vpop.permute.xlu0 %1296
      %1298 = vrot.lane.b32.xlu0 %v1276, 117
      %v1299 = vpop.permute.xlu0 %1298
      %1300 = vrot.lane.b32.xlu0 %v1278, 117
      %v1301 = vpop.permute.xlu0 %1300
      %1302 = vrot.lane.b32.xlu0 %v1285, 117
      %v1303 = vpop.permute.xlu0 %1302
      %vm1304 = vcmask 957440
      %v1305 = vsel %vm1304, %v1287, %v1289
      %v1306 = vsel %vm1304, %v1289, %v1291
      %v1307 = vsel %vm1304, %v1291, %v1293
      %v1308 = vsel %vm1304, %v1293, %v1295
      %v1309 = vsel %vm1304, %v1295, %v1297
      %v1310 = vsel %vm1304, %v1297, %v1299
      %v1311 = vsel %vm1304, %v1299, %v1301
      %v1312 = vsel %vm1304, %v1301, %v1303
      %v1314 = vsel %vm303, %v1241, 0
      %v1317 = vsel %vm307, %v1305, 0
      %v1320 = vsel %vm307, %v1306, 0
      %v1323 = vsel %vm307, %v1307, 0
      %v1326 = vsel %vm307, %v1308, 0
      %v1329 = vsel %vm307, %v1309, 0
      %v1332 = vsel %vm307, %v1310, 0
      %v1335 = vsel %vm307, %v1311, 0
      %v1338 = vsel %vm307, %v1312, 0
      %1340 = vmatprep.subr.bf16.mxu0 %v1320
      %1341 = vmatpush1.bf16.msra.mxu0 %v1317
      %1342 = vmatprep.subr.bf16.mxu0 0
      %1343 = vmatpush1.bf16.msra.mxu0 0
      %1344 = vmatprep.subr.bf16.mxu0 0
      %1345 = vmatpush1.bf16.msra.mxu0 0
      %1346 = vmatprep.subr.bf16.mxu0 0
      %1347 = vmatpush1.bf16.msra.mxu0 0
      %1348 = vmatprep.subr.bf16.mxu0 0
      %1349 = vmatpush1.bf16.msra.mxu0 0
      %1350 = vmatprep.subr.bf16.mxu0 0
      %1351 = vmatpush1.bf16.msra.mxu0 0
      %1352 = vmatprep.subr.bf16.mxu0 0
      %1353 = vmatpush1.bf16.msra.mxu0 0
      %1354 = vmatprep.subr.bf16.mxu0 0
      %1355 = vmatpush1.bf16.msra.mxu0 0
      %1356 = vmatprep.subr.bf16.mxu0 0
      %1357 = vmatpush1.bf16.msra.mxu0 0
      %1358 = vmatprep.subr.bf16.mxu0 0
      %1359 = vmatpush1.bf16.msra.mxu0 0
      %1360 = vmatprep.subr.bf16.mxu0 0
      %1361 = vmatpush1.bf16.msra.mxu0 0
      %1362 = vmatprep.subr.bf16.mxu0 0
      %1363 = vmatpush1.bf16.msra.mxu0 0
      %1364 = vmatprep.subr.bf16.mxu0 0
      %1365 = vmatpush1.bf16.msra.mxu0 0
      %1366 = vmatprep.subr.bf16.mxu0 0
      %1367 = vmatpush1.bf16.msra.mxu0 0
      %1368 = vmatprep.subr.bf16.mxu0 0
      %1369 = vmatpush1.bf16.msra.mxu0 0
      %1370 = vmatprep.subr.bf16.mxu0 0
      %1371 = vmatpush1.bf16.msra.mxu0 0
      %1372 = vmatprep.mubr.bf16.mxu0 0
      %1373 = vmatmul.mubr.bf16.gmra.mrb[0].mxu0 %v1314
      %v1374 = vpop.f32.mrb[0].mxu0
      %v1375 = vadd.f32 0.0, %v1374
      %v1376 = vpop.f32.mrb[0].mxu0
      %v1377 = vadd.f32 0.0, %v1376
      %v1378 = vpop.f32.mrb[0].mxu0
      %v1379 = vpop.f32.mrb[0].mxu0
      %1380 = vdwg.mxu0
      %1381 = vmatprep.subr.bf16.mxu0 %v1326
      %1382 = vmatpush1.bf16.msra.mxu0 %v1323
      %1383 = vmatprep.subr.bf16.mxu0 0
      %1384 = vmatpush1.bf16.msra.mxu0 0
      %1385 = vmatprep.subr.bf16.mxu0 0
      %1386 = vmatpush1.bf16.msra.mxu0 0
      %1387 = vmatprep.subr.bf16.mxu0 0
      %1388 = vmatpush1.bf16.msra.mxu0 0
      %1389 = vmatprep.subr.bf16.mxu0 0
      %1390 = vmatpush1.bf16.msra.mxu0 0
      %1391 = vmatprep.subr.bf16.mxu0 0
      %1392 = vmatpush1.bf16.msra.mxu0 0
      %1393 = vmatprep.subr.bf16.mxu0 0
      %1394 = vmatpush1.bf16.msra.mxu0 0
      %1395 = vmatprep.subr.bf16.mxu0 0
      %1396 = vmatpush1.bf16.msra.mxu0 0
      %1397 = vmatprep.subr.bf16.mxu0 0
      %1398 = vmatpush1.bf16.msra.mxu0 0
      %1399 = vmatprep.subr.bf16.mxu0 0
      %1400 = vmatpush1.bf16.msra.mxu0 0
      %1401 = vmatprep.subr.bf16.mxu0 0
      %1402 = vmatpush1.bf16.msra.mxu0 0
      %1403 = vmatprep.subr.bf16.mxu0 0
      %1404 = vmatpush1.bf16.msra.mxu0 0
      %1405 = vmatprep.subr.bf16.mxu0 0
      %1406 = vmatpush1.bf16.msra.mxu0 0
      %1407 = vmatprep.subr.bf16.mxu0 0
      %1408 = vmatpush1.bf16.msra.mxu0 0
      %1409 = vmatprep.subr.bf16.mxu0 0
      %1410 = vmatpush1.bf16.msra.mxu0 0
      %1411 = vmatprep.subr.bf16.mxu0 0
      %1412 = vmatpush1.bf16.msra.mxu0 0
      %1413 = vmatprep.mubr.bf16.mxu0 0
      %1414 = vmatmul.mubr.bf16.gmra.mrb[0].mxu0 %v1314
      %v1415 = vpop.f32.mrb[0].mxu0
      %v1416 = vadd.f32 0.0, %v1415
      %v1417 = vpop.f32.mrb[0].mxu0
      %v1418 = vadd.f32 0.0, %v1417
      %v1419 = vpop.f32.mrb[0].mxu0
      %v1420 = vpop.f32.mrb[0].mxu0
      %1421 = vdwg.mxu0
      %1422 = vmatprep.subr.bf16.mxu0 %v1332
      %1423 = vmatpush1.bf16.msra.mxu0 %v1329
      %1424 = vmatprep.subr.bf16.mxu0 0
      %1425 = vmatpush1.bf16.msra.mxu0 0
      %1426 = vmatprep.subr.bf16.mxu0 0
      %1427 = vmatpush1.bf16.msra.mxu0 0
      %1428 = vmatprep.subr.bf16.mxu0 0
      %1429 = vmatpush1.bf16.msra.mxu0 0
      %1430 = vmatprep.subr.bf16.mxu0 0
      %1431 = vmatpush1.bf16.msra.mxu0 0
      %1432 = vmatprep.subr.bf16.mxu0 0
      %1433 = vmatpush1.bf16.msra.mxu0 0
      %1434 = vmatprep.subr.bf16.mxu0 0
      %1435 = vmatpush1.bf16.msra.mxu0 0
      %1436 = vmatprep.subr.bf16.mxu0 0
      %1437 = vmatpush1.bf16.msra.mxu0 0
      %1438 = vmatprep.subr.bf16.mxu0 0
      %1439 = vmatpush1.bf16.msra.mxu0 0
      %1440 = vmatprep.subr.bf16.mxu0 0
      %1441 = vmatpush1.bf16.msra.mxu0 0
      %1442 = vmatprep.subr.bf16.mxu0 0
      %1443 = vmatpush1.bf16.msra.mxu0 0
      %1444 = vmatprep.subr.bf16.mxu0 0
      %1445 = vmatpush1.bf16.msra.mxu0 0
      %1446 = vmatprep.subr.bf16.mxu0 0
      %1447 = vmatpush1.bf16.msra.mxu0 0
      %1448 = vmatprep.subr.bf16.mxu0 0
      %1449 = vmatpush1.bf16.msra.mxu0 0
      %1450 = vmatprep.subr.bf16.mxu0 0
      %1451 = vmatpush1.bf16.msra.mxu0 0
      %1452 = vmatprep.subr.bf16.mxu0 0
      %1453 = vmatpush1.bf16.msra.mxu0 0
      %1454 = vmatprep.mubr.bf16.mxu0 0
      %1455 = vmatmul.mubr.bf16.gmra.mrb[0].mxu0 %v1314
      %v1456 = vpop.f32.mrb[0].mxu0
      %v1457 = vadd.f32 0.0, %v1456
      %v1458 = vpop.f32.mrb[0].mxu0
      %v1459 = vadd.f32 0.0, %v1458
      %v1460 = vpop.f32.mrb[0].mxu0
      %v1461 = vpop.f32.mrb[0].mxu0
      %1462 = vdwg.mxu0
      %1463 = vmatprep.subr.bf16.mxu0 %v1338
      %1464 = vmatpush1.bf16.msra.mxu0 %v1335
      %1465 = vmatprep.subr.bf16.mxu0 0
      %1466 = vmatpush1.bf16.msra.mxu0 0
      %1467 = vmatprep.subr.bf16.mxu0 0
      %1468 = vmatpush1.bf16.msra.mxu0 0
      %1469 = vmatprep.subr.bf16.mxu0 0
      %1470 = vmatpush1.bf16.msra.mxu0 0
      %1471 = vmatprep.subr.bf16.mxu0 0
      %1472 = vmatpush1.bf16.msra.mxu0 0
      %1473 = vmatprep.subr.bf16.mxu0 0
      %1474 = vmatpush1.bf16.msra.mxu0 0
      %1475 = vmatprep.subr.bf16.mxu0 0
      %1476 = vmatpush1.bf16.msra.mxu0 0
      %1477 = vmatprep.subr.bf16.mxu0 0
      %1478 = vmatpush1.bf16.msra.mxu0 0
      %1479 = vmatprep.subr.bf16.mxu0 0
      %1480 = vmatpush1.bf16.msra.mxu0 0
      %1481 = vmatprep.subr.bf16.mxu0 0
      %1482 = vmatpush1.bf16.msra.mxu0 0
      %1483 = vmatprep.subr.bf16.mxu0 0
      %1484 = vmatpush1.bf16.msra.mxu0 0
      %1485 = vmatprep.subr.bf16.mxu0 0
      %1486 = vmatpush1.bf16.msra.mxu0 0
      %1487 = vmatprep.subr.bf16.mxu0 0
      %1488 = vmatpush1.bf16.msra.mxu0 0
      %1489 = vmatprep.subr.bf16.mxu0 0
      %1490 = vmatpush1.bf16.msra.mxu0 0
      %1491 = vmatprep.subr.bf16.mxu0 0
      %1492 = vmatpush1.bf16.msra.mxu0 0
      %1493 = vmatprep.subr.bf16.mxu0 0
      %1494 = vmatpush1.bf16.msra.mxu0 0
      %1495 = vmatprep.mubr.bf16.mxu0 0
      %1496 = vmatmul.mubr.bf16.gmra.mrb[0].mxu0 %v1314
      %v1497 = vpop.f32.mrb[0].mxu0
      %v1498 = vadd.f32 0.0, %v1497
      %v1499 = vpop.f32.mrb[0].mxu0
      %v1500 = vadd.f32 0.0, %v1499
      %v1501 = vpop.f32.mrb[0].mxu0
      %v1502 = vpop.f32.mrb[0].mxu0
      %1503 = vdwg.mxu0
      %v1504 = vadd.f32 %v1229, %v1375
      %v1505 = vadd.f32 %v1230, %v1377
      %v1506 = vadd.f32 %v1231, %v1416
      %v1507 = vadd.f32 %v1232, %v1418
      %v1508 = vadd.f32 %v1233, %v1457
      %v1509 = vadd.f32 %v1234, %v1459
      %v1510 = vadd.f32 %v1235, %v1498
      %v1511 = vadd.f32 %v1236, %v1500
      %v1512 = vld [vmem:[%s219] sm:$0xff]
      %v1513 = vld [vmem:[%s219 + $0x8] sm:$0xff]
      %v1514 = vld [vmem:[%s219 + $0x10] sm:$0x3]
      %s1515 = scalar_lea.vmem %s1, 20
      %v1516 = vld [vmem:[%s1515] sm:$0xf]
      %v1520 = vcombine.high %v1512, %v1512
      %v1522 = vunpack.c.l.s4 1983009808
      %v1523 = vunpack.c.0.s8 %v1522
      %v1524 = vlaneseq
      %v1525 = vshrl.u32 %v1524, 7
      %v1526 = vsub.s32 %v1523, %v1525
      %v1527 = vrot.slane %v1512, %v1526
      %v1529 = vunpack.c.l.s4 1983009808
      %v1530 = vunpack.c.0.s8 %v1529
      %v1531 = vlaneseq
      %v1532 = vshrl.u32 %v1531, 7
      %v1533 = vsub.s32 %v1530, %v1532
      %v1534 = vrot.slane %v1520, %v1533
      %v1535 = vcombine.high %v1527, %v1527
      %v1536 = vcombine.high %v1534, %v1534
      %v1537 = vcombine.high %v1513, %v1513
      %v1539 = vunpack.c.l.s4 1983009808
      %v1540 = vunpack.c.0.s8 %v1539
      %v1541 = vlaneseq
      %v1542 = vshrl.u32 %v1541, 7
      %v1543 = vsub.s32 %v1540, %v1542
      %v1544 = vrot.slane %v1513, %v1543
      %v1546 = vunpack.c.l.s4 1983009808
      %v1547 = vunpack.c.0.s8 %v1546
      %v1548 = vlaneseq
      %v1549 = vshrl.u32 %v1548, 7
      %v1550 = vsub.s32 %v1547, %v1549
      %v1551 = vrot.slane %v1537, %v1550
      %v1552 = vcombine.high %v1544, %v1544
      %v1553 = vcombine.high %v1551, %v1551
      %v1555 = vunpack.c.l.s4 1983009808
      %v1556 = vunpack.c.0.s8 %v1555
      %v1557 = vlaneseq
      %v1558 = vshrl.u32 %v1557, 7
      %v1559 = vsub.s32 %v1556, %v1558
      %v1560 = vrot.slane %v1514, %v1559
      %1561 = vrot.lane.b32.xlu0 %v1527, 116
      %v1562 = vpop.permute.xlu0 %1561
      %1563 = vrot.lane.b32.xlu0 %v1535, 116
      %v1564 = vpop.permute.xlu0 %1563
      %1565 = vrot.lane.b32.xlu0 %v1534, 116
      %v1566 = vpop.permute.xlu0 %1565
      %1567 = vrot.lane.b32.xlu0 %v1536, 116
      %v1568 = vpop.permute.xlu0 %1567
      %1569 = vrot.lane.b32.xlu0 %v1544, 116
      %v1570 = vpop.permute.xlu0 %1569
      %1571 = vrot.lane.b32.xlu0 %v1552, 116
      %v1572 = vpop.permute.xlu0 %1571
      %1573 = vrot.lane.b32.xlu0 %v1551, 116
      %v1574 = vpop.permute.xlu0 %1573
      %1575 = vrot.lane.b32.xlu0 %v1553, 116
      %v1576 = vpop.permute.xlu0 %1575
      %1577 = vrot.lane.b32.xlu0 %v1560, 116
      %v1578 = vpop.permute.xlu0 %1577
      %vm1579 = vcmask 949248
      %v1580 = vsel %vm1579, %v1562, %v1564
      %v1581 = vsel %vm1579, %v1564, %v1566
      %v1582 = vsel %vm1579, %v1566, %v1568
      %v1583 = vsel %vm1579, %v1568, %v1570
      %v1584 = vsel %vm1579, %v1570, %v1572
      %v1585 = vsel %vm1579, %v1572, %v1574
      %v1586 = vsel %vm1579, %v1574, %v1576
      %v1587 = vsel %vm1579, %v1576, %v1578
      %v1589 = vsel %vm303, %v1516, 0
      %v1592 = vsel %vm307, %v1580, 0
      %v1595 = vsel %vm307, %v1581, 0
      %v1598 = vsel %vm307, %v1582, 0
      %v1601 = vsel %vm307, %v1583, 0
      %v1604 = vsel %vm307, %v1584, 0
      %v1607 = vsel %vm307, %v1585, 0
      %v1610 = vsel %vm307, %v1586, 0
      %v1613 = vsel %vm307, %v1587, 0
      %1615 = vmatprep.subr.bf16.mxu0 %v1595
      %1616 = vmatpush1.bf16.msra.mxu0 %v1592
      %1617 = vmatprep.subr.bf16.mxu0 0
      %1618 = vmatpush1.bf16.msra.mxu0 0
      %1619 = vmatprep.subr.bf16.mxu0 0
      %1620 = vmatpush1.bf16.msra.mxu0 0
      %1621 = vmatprep.subr.bf16.mxu0 0
      %1622 = vmatpush1.bf16.msra.mxu0 0
      %1623 = vmatprep.subr.bf16.mxu0 0
      %1624 = vmatpush1.bf16.msra.mxu0 0
      %1625 = vmatprep.subr.bf16.mxu0 0
      %1626 = vmatpush1.bf16.msra.mxu0 0
      %1627 = vmatprep.subr.bf16.mxu0 0
      %1628 = vmatpush1.bf16.msra.mxu0 0
      %1629 = vmatprep.subr.bf16.mxu0 0
      %1630 = vmatpush1.bf16.msra.mxu0 0
      %1631 = vmatprep.subr.bf16.mxu0 0
      %1632 = vmatpush1.bf16.msra.mxu0 0
      %1633 = vmatprep.subr.bf16.mxu0 0
      %1634 = vmatpush1.bf16.msra.mxu0 0
      %1635 = vmatprep.subr.bf16.mxu0 0
      %1636 = vmatpush1.bf16.msra.mxu0 0
      %1637 = vmatprep.subr.bf16.mxu0 0
      %1638 = vmatpush1.bf16.msra.mxu0 0
      %1639 = vmatprep.subr.bf16.mxu0 0
      %1640 = vmatpush1.bf16.msra.mxu0 0
      %1641 = vmatprep.subr.bf16.mxu0 0
      %1642 = vmatpush1.bf16.msra.mxu0 0
      %1643 = vmatprep.subr.bf16.mxu0 0
      %1644 = vmatpush1.bf16.msra.mxu0 0
      %1645 = vmatprep.subr.bf16.mxu0 0
      %1646 = vmatpush1.bf16.msra.mxu0 0
      %1647 = vmatprep.mubr.bf16.mxu0 0
      %1648 = vmatmul.mubr.bf16.gmra.mrb[0].mxu0 %v1589
      %v1649 = vpop.f32.mrb[0].mxu0
      %v1650 = vadd.f32 0.0, %v1649
      %v1651 = vpop.f32.mrb[0].mxu0
      %v1652 = vadd.f32 0.0, %v1651
      %v1653 = vpop.f32.mrb[0].mxu0
      %v1654 = vpop.f32.mrb[0].mxu0
      %1655 = vdwg.mxu0
      %1656 = vmatprep.subr.bf16.mxu0 %v1601
      %1657 = vmatpush1.bf16.msra.mxu0 %v1598
      %1658 = vmatprep.subr.bf16.mxu0 0
      %1659 = vmatpush1.bf16.msra.mxu0 0
      %1660 = vmatprep.subr.bf16.mxu0 0
      %1661 = vmatpush1.bf16.msra.mxu0 0
      %1662 = vmatprep.subr.bf16.mxu0 0
      %1663 = vmatpush1.bf16.msra.mxu0 0
      %1664 = vmatprep.subr.bf16.mxu0 0
      %1665 = vmatpush1.bf16.msra.mxu0 0
      %1666 = vmatprep.subr.bf16.mxu0 0
      %1667 = vmatpush1.bf16.msra.mxu0 0
      %1668 = vmatprep.subr.bf16.mxu0 0
      %1669 = vmatpush1.bf16.msra.mxu0 0
      %1670 = vmatprep.subr.bf16.mxu0 0
      %1671 = vmatpush1.bf16.msra.mxu0 0
      %1672 = vmatprep.subr.bf16.mxu0 0
      %1673 = vmatpush1.bf16.msra.mxu0 0
      %1674 = vmatprep.subr.bf16.mxu0 0
      %1675 = vmatpush1.bf16.msra.mxu0 0
      %1676 = vmatprep.subr.bf16.mxu0 0
      %1677 = vmatpush1.bf16.msra.mxu0 0
      %1678 = vmatprep.subr.bf16.mxu0 0
      %1679 = vmatpush1.bf16.msra.mxu0 0
      %1680 = vmatprep.subr.bf16.mxu0 0
      %1681 = vmatpush1.bf16.msra.mxu0 0
      %1682 = vmatprep.subr.bf16.mxu0 0
      %1683 = vmatpush1.bf16.msra.mxu0 0
      %1684 = vmatprep.subr.bf16.mxu0 0
      %1685 = vmatpush1.bf16.msra.mxu0 0
      %1686 = vmatprep.subr.bf16.mxu0 0
      %1687 = vmatpush1.bf16.msra.mxu0 0
      %1688 = vmatprep.mubr.bf16.mxu0 0
      %1689 = vmatmul.mubr.bf16.gmra.mrb[0].mxu0 %v1589
      %v1690 = vpop.f32.mrb[0].mxu0
      %v1691 = vadd.f32 0.0, %v1690
      %v1692 = vpop.f32.mrb[0].mxu0
      %v1693 = vadd.f32 0.0, %v1692
      %v1694 = vpop.f32.mrb[0].mxu0
      %v1695 = vpop.f32.mrb[0].mxu0
      %1696 = vdwg.mxu0
      %1697 = vmatprep.subr.bf16.mxu0 %v1607
      %1698 = vmatpush1.bf16.msra.mxu0 %v1604
      %1699 = vmatprep.subr.bf16.mxu0 0
      %1700 = vmatpush1.bf16.msra.mxu0 0
      %1701 = vmatprep.subr.bf16.mxu0 0
      %1702 = vmatpush1.bf16.msra.mxu0 0
      %1703 = vmatprep.subr.bf16.mxu0 0
      %1704 = vmatpush1.bf16.msra.mxu0 0
      %1705 = vmatprep.subr.bf16.mxu0 0
      %1706 = vmatpush1.bf16.msra.mxu0 0
      %1707 = vmatprep.subr.bf16.mxu0 0
      %1708 = vmatpush1.bf16.msra.mxu0 0
      %1709 = vmatprep.subr.bf16.mxu0 0
      %1710 = vmatpush1.bf16.msra.mxu0 0
      %1711 = vmatprep.subr.bf16.mxu0 0
      %1712 = vmatpush1.bf16.msra.mxu0 0
      %1713 = vmatprep.subr.bf16.mxu0 0
      %1714 = vmatpush1.bf16.msra.mxu0 0
      %1715 = vmatprep.subr.bf16.mxu0 0
      %1716 = vmatpush1.bf16.msra.mxu0 0
      %1717 = vmatprep.subr.bf16.mxu0 0
      %1718 = vmatpush1.bf16.msra.mxu0 0
      %1719 = vmatprep.subr.bf16.mxu0 0
      %1720 = vmatpush1.bf16.msra.mxu0 0
      %1721 = vmatprep.subr.bf16.mxu0 0
      %1722 = vmatpush1.bf16.msra.mxu0 0
      %1723 = vmatprep.subr.bf16.mxu0 0
      %1724 = vmatpush1.bf16.msra.mxu0 0
      %1725 = vmatprep.subr.bf16.mxu0 0
      %1726 = vmatpush1.bf16.msra.mxu0 0
      %1727 = vmatprep.subr.bf16.mxu0 0
      %1728 = vmatpush1.bf16.msra.mxu0 0
      %1729 = vmatprep.mubr.bf16.mxu0 0
      %1730 = vmatmul.mubr.bf16.gmra.mrb[0].mxu0 %v1589
      %v1731 = vpop.f32.mrb[0].mxu0
      %v1732 = vadd.f32 0.0, %v1731
      %v1733 = vpop.f32.mrb[0].mxu0
      %v1734 = vadd.f32 0.0, %v1733
      %v1735 = vpop.f32.mrb[0].mxu0
      %v1736 = vpop.f32.mrb[0].mxu0
      %1737 = vdwg.mxu0
      %1738 = vmatprep.subr.bf16.mxu0 %v1613
      %1739 = vmatpush1.bf16.msra.mxu0 %v1610
      %1740 = vmatprep.subr.bf16.mxu0 0
      %1741 = vmatpush1.bf16.msra.mxu0 0
      %1742 = vmatprep.subr.bf16.mxu0 0
      %1743 = vmatpush1.bf16.msra.mxu0 0
      %1744 = vmatprep.subr.bf16.mxu0 0
      %1745 = vmatpush1.bf16.msra.mxu0 0
      %1746 = vmatprep.subr.bf16.mxu0 0
      %1747 = vmatpush1.bf16.msra.mxu0 0
      %1748 = vmatprep.subr.bf16.mxu0 0
      %1749 = vmatpush1.bf16.msra.mxu0 0
      %1750 = vmatprep.subr.bf16.mxu0 0
      %1751 = vmatpush1.bf16.msra.mxu0 0
      %1752 = vmatprep.subr.bf16.mxu0 0
      %1753 = vmatpush1.bf16.msra.mxu0 0
      %1754 = vmatprep.subr.bf16.mxu0 0
      %1755 = vmatpush1.bf16.msra.mxu0 0
      %1756 = vmatprep.subr.bf16.mxu0 0
      %1757 = vmatpush1.bf16.msra.mxu0 0
      %1758 = vmatprep.subr.bf16.mxu0 0
      %1759 = vmatpush1.bf16.msra.mxu0 0
      %1760 = vmatprep.subr.bf16.mxu0 0
      %1761 = vmatpush1.bf16.msra.mxu0 0
      %1762 = vmatprep.subr.bf16.mxu0 0
      %1763 = vmatpush1.bf16.msra.mxu0 0
      %1764 = vmatprep.subr.bf16.mxu0 0
      %1765 = vmatpush1.bf16.msra.mxu0 0
      %1766 = vmatprep.subr.bf16.mxu0 0
      %1767 = vmatpush1.bf16.msra.mxu0 0
      %1768 = vmatprep.subr.bf16.mxu0 0
      %1769 = vmatpush1.bf16.msra.mxu0 0
      %1770 = vmatprep.mubr.bf16.mxu0 0
      %1771 = vmatmul.mubr.bf16.gmra.mrb[0].mxu0 %v1589
      %v1772 = vpop.f32.mrb[0].mxu0
      %v1773 = vadd.f32 0.0, %v1772
      %v1774 = vpop.f32.mrb[0].mxu0
      %v1775 = vadd.f32 0.0, %v1774
      %v1776 = vpop.f32.mrb[0].mxu0
      %v1777 = vpop.f32.mrb[0].mxu0
      %1778 = vdwg.mxu0
      %v1779 = vadd.f32 %v1504, %v1650
      %v1780 = vadd.f32 %v1505, %v1652
      %v1781 = vadd.f32 %v1506, %v1691
      %v1782 = vadd.f32 %v1507, %v1693
      %v1783 = vadd.f32 %v1508, %v1732
      %v1784 = vadd.f32 %v1509, %v1734
      %v1785 = vadd.f32 %v1510, %v1773
      %v1786 = vadd.f32 %v1511, %v1775
      %v1787 = vld [vmem:[%s219] sm:$0xff]
      %v1788 = vld [vmem:[%s219 + $0x8] sm:$0xff]
      %v1789 = vld [vmem:[%s219 + $0x10] sm:$0x3]
      %s1790 = scalar_lea.vmem %s1, 24
      %v1791 = vld [vmem:[%s1790] sm:$0xf]
      %v1795 = vcombine.high %v1787, %v1787
      %v1797 = vunpack.c.l.s4 1983009808
      %v1798 = vunpack.c.0.s8 %v1797
      %v1799 = vlaneseq
      %v1800 = vshrl.u32 %v1799, 7
      %v1801 = vsub.s32 %v1798, %v1800
      %v1802 = vrot.slane %v1787, %v1801
      %v1804 = vunpack.c.l.s4 1983009808
      %v1805 = vunpack.c.0.s8 %v1804
      %v1806 = vlaneseq
      %v1807 = vshrl.u32 %v1806, 7
      %v1808 = vsub.s32 %v1805, %v1807
      %v1809 = vrot.slane %v1795, %v1808
      %v1810 = vcombine.high %v1802, %v1802
      %v1811 = vcombine.high %v1809, %v1809
      %v1812 = vcombine.high %v1788, %v1788
      %v1814 = vunpack.c.l.s4 1983009808
      %v1815 = vunpack.c.0.s8 %v1814
      %v1816 = vlaneseq
      %v1817 = vshrl.u32 %v1816, 7
      %v1818 = vsub.s32 %v1815, %v1817
      %v1819 = vrot.slane %v1788, %v1818
      %v1821 = vunpack.c.l.s4 1983009808
      %v1822 = vunpack.c.0.s8 %v1821
      %v1823 = vlaneseq
      %v1824 = vshrl.u32 %v1823, 7
      %v1825 = vsub.s32 %v1822, %v1824
      %v1826 = vrot.slane %v1812, %v1825
      %v1827 = vcombine.high %v1819, %v1819
      %v1828 = vcombine.high %v1826, %v1826
      %v1830 = vunpack.c.l.s4 1983009808
      %v1831 = vunpack.c.0.s8 %v1830
      %v1832 = vlaneseq
      %v1833 = vshrl.u32 %v1832, 7
      %v1834 = vsub.s32 %v1831, %v1833
      %v1835 = vrot.slane %v1789, %v1834
      %1836 = vrot.lane.b32.xlu0 %v1802, 108
      %v1837 = vpop.permute.xlu0 %1836
      %1838 = vrot.lane.b32.xlu0 %v1810, 108
      %v1839 = vpop.permute.xlu0 %1838
      %1840 = vrot.lane.b32.xlu0 %v1809, 108
      %v1841 = vpop.permute.xlu0 %1840
      %1842 = vrot.lane.b32.xlu0 %v1811, 108
      %v1843 = vpop.permute.xlu0 %1842
      %1844 = vrot.lane.b32.xlu0 %v1819, 108
      %v1845 = vpop.permute.xlu0 %1844
      %1846 = vrot.lane.b32.xlu0 %v1827, 108
      %v1847 = vpop.permute.xlu0 %1846
      %1848 = vrot.lane.b32.xlu0 %v1826, 108
      %v1849 = vpop.permute.xlu0 %1848
      %1850 = vrot.lane.b32.xlu0 %v1828, 108
      %v1851 = vpop.permute.xlu0 %1850
      %1852 = vrot.lane.b32.xlu0 %v1835, 108
      %v1853 = vpop.permute.xlu0 %1852
      %vm1854 = vcmask 883712
      %v1855 = vsel %vm1854, %v1837, %v1839
      %v1856 = vsel %vm1854, %v1839, %v1841
      %v1857 = vsel %vm1854, %v1841, %v1843
      %v1858 = vsel %vm1854, %v1843, %v1845
      %v1859 = vsel %vm1854, %v1845, %v1847
      %v1860 = vsel %vm1854, %v1847, %v1849
      %v1861 = vsel %vm1854, %v1849, %v1851
      %v1862 = vsel %vm1854, %v1851, %v1853
      %v1864 = vsel %vm303, %v1791, 0
      %v1867 = vsel %vm307, %v1855, 0
      %v1870 = vsel %vm307, %v1856, 0
      %v1873 = vsel %vm307, %v1857, 0
      %v1876 = vsel %vm307, %v1858, 0
      %v1879 = vsel %vm307, %v1859, 0
      %v1882 = vsel %vm307, %v1860, 0
      %v1885 = vsel %vm307, %v1861, 0
      %v1888 = vsel %vm307, %v1862, 0
      %1890 = vmatprep.subr.bf16.mxu0 %v1870
      %1891 = vmatpush1.bf16.msra.mxu0 %v1867
      %1892 = vmatprep.subr.bf16.mxu0 0
      %1893 = vmatpush1.bf16.msra.mxu0 0
      %1894 = vmatprep.subr.bf16.mxu0 0
      %1895 = vmatpush1.bf16.msra.mxu0 0
      %1896 = vmatprep.subr.bf16.mxu0 0
      %1897 = vmatpush1.bf16.msra.mxu0 0
      %1898 = vmatprep.subr.bf16.mxu0 0
      %1899 = vmatpush1.bf16.msra.mxu0 0
      %1900 = vmatprep.subr.bf16.mxu0 0
      %1901 = vmatpush1.bf16.msra.mxu0 0
      %1902 = vmatprep.subr.bf16.mxu0 0
      %1903 = vmatpush1.bf16.msra.mxu0 0
      %1904 = vmatprep.subr.bf16.mxu0 0
      %1905 = vmatpush1.bf16.msra.mxu0 0
      %1906 = vmatprep.subr.bf16.mxu0 0
      %1907 = vmatpush1.bf16.msra.mxu0 0
      %1908 = vmatprep.subr.bf16.mxu0 0
      %1909 = vmatpush1.bf16.msra.mxu0 0
      %1910 = vmatprep.subr.bf16.mxu0 0
      %1911 = vmatpush1.bf16.msra.mxu0 0
      %1912 = vmatprep.subr.bf16.mxu0 0
      %1913 = vmatpush1.bf16.msra.mxu0 0
      %1914 = vmatprep.subr.bf16.mxu0 0
      %1915 = vmatpush1.bf16.msra.mxu0 0
      %1916 = vmatprep.subr.bf16.mxu0 0
      %1917 = vmatpush1.bf16.msra.mxu0 0
      %1918 = vmatprep.subr.bf16.mxu0 0
      %1919 = vmatpush1.bf16.msra.mxu0 0
      %1920 = vmatprep.subr.bf16.mxu0 0
      %1921 = vmatpush1.bf16.msra.mxu0 0
      %1922 = vmatprep.mubr.bf16.mxu0 0
      %1923 = vmatmul.mubr.bf16.gmra.mrb[0].mxu0 %v1864
      %v1924 = vpop.f32.mrb[0].mxu0
      %v1925 = vadd.f32 0.0, %v1924
      %v1926 = vpop.f32.mrb[0].mxu0
      %v1927 = vadd.f32 0.0, %v1926
      %v1928 = vpop.f32.mrb[0].mxu0
      %v1929 = vpop.f32.mrb[0].mxu0
      %1930 = vdwg.mxu0
      %1931 = vmatprep.subr.bf16.mxu0 %v1876
      %1932 = vmatpush1.bf16.msra.mxu0 %v1873
      %1933 = vmatprep.subr.bf16.mxu0 0
      %1934 = vmatpush1.bf16.msra.mxu0 0
      %1935 = vmatprep.subr.bf16.mxu0 0
      %1936 = vmatpush1.bf16.msra.mxu0 0
      %1937 = vmatprep.subr.bf16.mxu0 0
      %1938 = vmatpush1.bf16.msra.mxu0 0
      %1939 = vmatprep.subr.bf16.mxu0 0
      %1940 = vmatpush1.bf16.msra.mxu0 0
      %1941 = vmatprep.subr.bf16.mxu0 0
      %1942 = vmatpush1.bf16.msra.mxu0 0
      %1943 = vmatprep.subr.bf16.mxu0 0
      %1944 = vmatpush1.bf16.msra.mxu0 0
      %1945 = vmatprep.subr.bf16.mxu0 0
      %1946 = vmatpush1.bf16.msra.mxu0 0
      %1947 = vmatprep.subr.bf16.mxu0 0
      %1948 = vmatpush1.bf16.msra.mxu0 0
      %1949 = vmatprep.subr.bf16.mxu0 0
      %1950 = vmatpush1.bf16.msra.mxu0 0
      %1951 = vmatprep.subr.bf16.mxu0 0
      %1952 = vmatpush1.bf16.msra.mxu0 0
      %1953 = vmatprep.subr.bf16.mxu0 0
      %1954 = vmatpush1.bf16.msra.mxu0 0
      %1955 = vmatprep.subr.bf16.mxu0 0
      %1956 = vmatpush1.bf16.msra.mxu0 0
      %1957 = vmatprep.subr.bf16.mxu0 0
      %1958 = vmatpush1.bf16.msra.mxu0 0
      %1959 = vmatprep.subr.bf16.mxu0 0
      %1960 = vmatpush1.bf16.msra.mxu0 0
      %1961 = vmatprep.subr.bf16.mxu0 0
      %1962 = vmatpush1.bf16.msra.mxu0 0
      %1963 = vmatprep.mubr.bf16.mxu0 0
      %1964 = vmatmul.mubr.bf16.gmra.mrb[0].mxu0 %v1864
      %v1965 = vpop.f32.mrb[0].mxu0
      %v1966 = vadd.f32 0.0, %v1965
      %v1967 = vpop.f32.mrb[0].mxu0
      %v1968 = vadd.f32 0.0, %v1967
      %v1969 = vpop.f32.mrb[0].mxu0
      %v1970 = vpop.f32.mrb[0].mxu0
      %1971 = vdwg.mxu0
      %1972 = vmatprep.subr.bf16.mxu0 %v1882
      %1973 = vmatpush1.bf16.msra.mxu0 %v1879
      %1974 = vmatprep.subr.bf16.mxu0 0
      %1975 = vmatpush1.bf16.msra.mxu0 0
      %1976 = vmatprep.subr.bf16.mxu0 0
      %1977 = vmatpush1.bf16.msra.mxu0 0
      %1978 = vmatprep.subr.bf16.mxu0 0
      %1979 = vmatpush1.bf16.msra.mxu0 0
      %1980 = vmatprep.subr.bf16.mxu0 0
      %1981 = vmatpush1.bf16.msra.mxu0 0
      %1982 = vmatprep.subr.bf16.mxu0 0
      %1983 = vmatpush1.bf16.msra.mxu0 0
      %1984 = vmatprep.subr.bf16.mxu0 0
      %1985 = vmatpush1.bf16.msra.mxu0 0
      %1986 = vmatprep.subr.bf16.mxu0 0
      %1987 = vmatpush1.bf16.msra.mxu0 0
      %1988 = vmatprep.subr.bf16.mxu0 0
      %1989 = vmatpush1.bf16.msra.mxu0 0
      %1990 = vmatprep.subr.bf16.mxu0 0
      %1991 = vmatpush1.bf16.msra.mxu0 0
      %1992 = vmatprep.subr.bf16.mxu0 0
      %1993 = vmatpush1.bf16.msra.mxu0 0
      %1994 = vmatprep.subr.bf16.mxu0 0
      %1995 = vmatpush1.bf16.msra.mxu0 0
      %1996 = vmatprep.subr.bf16.mxu0 0
      %1997 = vmatpush1.bf16.msra.mxu0 0
      %1998 = vmatprep.subr.bf16.mxu0 0
      %1999 = vmatpush1.bf16.msra.mxu0 0
      %2000 = vmatprep.subr.bf16.mxu0 0
      %2001 = vmatpush1.bf16.msra.mxu0 0
      %2002 = vmatprep.subr.bf16.mxu0 0
      %2003 = vmatpush1.bf16.msra.mxu0 0
      %2004 = vmatprep.mubr.bf16.mxu0 0
      %2005 = vmatmul.mubr.bf16.gmra.mrb[0].mxu0 %v1864
      %v2006 = vpop.f32.mrb[0].mxu0
      %v2007 = vadd.f32 0.0, %v2006
      %v2008 = vpop.f32.mrb[0].mxu0
      %v2009 = vadd.f32 0.0, %v2008
      %v2010 = vpop.f32.mrb[0].mxu0
      %v2011 = vpop.f32.mrb[0].mxu0
      %2012 = vdwg.mxu0
      %2013 = vmatprep.subr.bf16.mxu0 %v1888
      %2014 = vmatpush1.bf16.msra.mxu0 %v1885
      %2015 = vmatprep.subr.bf16.mxu0 0
      %2016 = vmatpush1.bf16.msra.mxu0 0
      %2017 = vmatprep.subr.bf16.mxu0 0
      %2018 = vmatpush1.bf16.msra.mxu0 0
      %2019 = vmatprep.subr.bf16.mxu0 0
      %2020 = vmatpush1.bf16.msra.mxu0 0
      %2021 = vmatprep.subr.bf16.mxu0 0
      %2022 = vmatpush1.bf16.msra.mxu0 0
      %2023 = vmatprep.subr.bf16.mxu0 0
      %2024 = vmatpush1.bf16.msra.mxu0 0
      %2025 = vmatprep.subr.bf16.mxu0 0
      %2026 = vmatpush1.bf16.msra.mxu0 0
      %2027 = vmatprep.subr.bf16.mxu0 0
      %2028 = vmatpush1.bf16.msra.mxu0 0
      %2029 = vmatprep.subr.bf16.mxu0 0
      %2030 = vmatpush1.bf16.msra.mxu0 0
      %2031 = vmatprep.subr.bf16.mxu0 0
      %2032 = vmatpush1.bf16.msra.mxu0 0
      %2033 = vmatprep.subr.bf16.mxu0 0
      %2034 = vmatpush1.bf16.msra.mxu0 0
      %2035 = vmatprep.subr.bf16.mxu0 0
      %2036 = vmatpush1.bf16.msra.mxu0 0
      %2037 = vmatprep.subr.bf16.mxu0 0
      %2038 = vmatpush1.bf16.msra.mxu0 0
      %2039 = vmatprep.subr.bf16.mxu0 0
      %2040 = vmatpush1.bf16.msra.mxu0 0
      %2041 = vmatprep.subr.bf16.mxu0 0
      %2042 = vmatpush1.bf16.msra.mxu0 0
      %2043 = vmatprep.subr.bf16.mxu0 0
      %2044 = vmatpush1.bf16.msra.mxu0 0
      %2045 = vmatprep.mubr.bf16.mxu0 0
      %2046 = vmatmul.mubr.bf16.gmra.mrb[0].mxu0 %v1864
      %v2047 = vpop.f32.mrb[0].mxu0
      %v2048 = vadd.f32 0.0, %v2047
      %v2049 = vpop.f32.mrb[0].mxu0
      %v2050 = vadd.f32 0.0, %v2049
      %v2051 = vpop.f32.mrb[0].mxu0
      %v2052 = vpop.f32.mrb[0].mxu0
      %2053 = vdwg.mxu0
      %v2054 = vadd.f32 %v1779, %v1925
      %v2055 = vadd.f32 %v1780, %v1927
      %v2056 = vadd.f32 %v1781, %v1966
      %v2057 = vadd.f32 %v1782, %v1968
      %v2058 = vadd.f32 %v1783, %v2007
      %v2059 = vadd.f32 %v1784, %v2009
      %v2060 = vadd.f32 %v1785, %v2048
      %v2061 = vadd.f32 %v1786, %v2050
      %v2062 = vld [vmem:[%s219] sm:$0xff]
      %v2063 = vld [vmem:[%s219 + $0x8] sm:$0xff]
      %v2064 = vld [vmem:[%s219 + $0x10] sm:$0x3]
      %s2065 = scalar_lea.vmem %s1, 28
      %v2066 = vld [vmem:[%s2065] sm:$0xf]
      %v2070 = vcombine.high %v2062, %v2062
      %v2072 = vunpack.c.l.s4 1983009808
      %v2073 = vunpack.c.0.s8 %v2072
      %v2074 = vlaneseq
      %v2075 = vshrl.u32 %v2074, 7
      %v2076 = vsub.s32 %v2073, %v2075
      %v2077 = vrot.slane %v2062, %v2076
      %v2079 = vunpack.c.l.s4 1983009808
      %v2080 = vunpack.c.0.s8 %v2079
      %v2081 = vlaneseq
      %v2082 = vshrl.u32 %v2081, 7
      %v2083 = vsub.s32 %v2080, %v2082
      %v2084 = vrot.slane %v2070, %v2083
      %v2085 = vcombine.high %v2077, %v2077
      %v2086 = vcombine.high %v2084, %v2084
      %v2087 = vcombine.high %v2063, %v2063
      %v2089 = vunpack.c.l.s4 1983009808
      %v2090 = vunpack.c.0.s8 %v2089
      %v2091 = vlaneseq
      %v2092 = vshrl.u32 %v2091, 7
      %v2093 = vsub.s32 %v2090, %v2092
      %v2094 = vrot.slane %v2063, %v2093
      %v2096 = vunpack.c.l.s4 1983009808
      %v2097 = vunpack.c.0.s8 %v2096
      %v2098 = vlaneseq
      %v2099 = vshrl.u32 %v2098, 7
      %v2100 = vsub.s32 %v2097, %v2099
      %v2101 = vrot.slane %v2087, %v2100
      %v2102 = vcombine.high %v2094, %v2094
      %v2103 = vcombine.high %v2101, %v2101
      %v2105 = vunpack.c.l.s4 1983009808
      %v2106 = vunpack.c.0.s8 %v2105
      %v2107 = vlaneseq
      %v2108 = vshrl.u32 %v2107, 7
      %v2109 = vsub.s32 %v2106, %v2108
      %v2110 = vrot.slane %v2064, %v2109
      %2111 = vrot.lane.b32.xlu0 %v2077, 107
      %v2112 = vpop.permute.xlu0 %2111
      %2113 = vrot.lane.b32.xlu0 %v2085, 107
      %v2114 = vpop.permute.xlu0 %2113
      %2115 = vrot.lane.b32.xlu0 %v2084, 107
      %v2116 = vpop.permute.xlu0 %2115
      %2117 = vrot.lane.b32.xlu0 %v2086, 107
      %v2118 = vpop.permute.xlu0 %2117
      %2119 = vrot.lane.b32.xlu0 %v2094, 107
      %v2120 = vpop.permute.xlu0 %2119
      %2121 = vrot.lane.b32.xlu0 %v2102, 107
      %v2122 = vpop.permute.xlu0 %2121
      %2123 = vrot.lane.b32.xlu0 %v2101, 107
      %v2124 = vpop.permute.xlu0 %2123
      %2125 = vrot.lane.b32.xlu0 %v2103, 107
      %v2126 = vpop.permute.xlu0 %2125
      %2127 = vrot.lane.b32.xlu0 %v2110, 107
      %v2128 = vpop.permute.xlu0 %2127
      %vm2129 = vcmask 875520
      %v2130 = vsel %vm2129, %v2112, %v2114
      %v2131 = vsel %vm2129, %v2114, %v2116
      %v2132 = vsel %vm2129, %v2116, %v2118
      %v2133 = vsel %vm2129, %v2118, %v2120
      %v2134 = vsel %vm2129, %v2120, %v2122
      %v2135 = vsel %vm2129, %v2122, %v2124
      %v2136 = vsel %vm2129, %v2124, %v2126
      %v2137 = vsel %vm2129, %v2126, %v2128
      %v2139 = vsel %vm303, %v2066, 0
      %v2142 = vsel %vm307, %v2130, 0
      %v2145 = vsel %vm307, %v2131, 0
      %v2148 = vsel %vm307, %v2132, 0
      %v2151 = vsel %vm307, %v2133, 0
      %v2154 = vsel %vm307, %v2134, 0
      %v2157 = vsel %vm307, %v2135, 0
      %v2160 = vsel %vm307, %v2136, 0
      %v2163 = vsel %vm307, %v2137, 0
      %2165 = vmatprep.subr.bf16.mxu0 %v2145
      %2166 = vmatpush1.bf16.msra.mxu0 %v2142
      %2167 = vmatprep.subr.bf16.mxu0 0
      %2168 = vmatpush1.bf16.msra.mxu0 0
      %2169 = vmatprep.subr.bf16.mxu0 0
      %2170 = vmatpush1.bf16.msra.mxu0 0
      %2171 = vmatprep.subr.bf16.mxu0 0
      %2172 = vmatpush1.bf16.msra.mxu0 0
      %2173 = vmatprep.subr.bf16.mxu0 0
      %2174 = vmatpush1.bf16.msra.mxu0 0
      %2175 = vmatprep.subr.bf16.mxu0 0
      %2176 = vmatpush1.bf16.msra.mxu0 0
      %2177 = vmatprep.subr.bf16.mxu0 0
      %2178 = vmatpush1.bf16.msra.mxu0 0
      %2179 = vmatprep.subr.bf16.mxu0 0
      %2180 = vmatpush1.bf16.msra.mxu0 0
      %2181 = vmatprep.subr.bf16.mxu0 0
      %2182 = vmatpush1.bf16.msra.mxu0 0
      %2183 = vmatprep.subr.bf16.mxu0 0
      %2184 = vmatpush1.bf16.msra.mxu0 0
      %2185 = vmatprep.subr.bf16.mxu0 0
      %2186 = vmatpush1.bf16.msra.mxu0 0
      %2187 = vmatprep.subr.bf16.mxu0 0
      %2188 = vmatpush1.bf16.msra.mxu0 0
      %2189 = vmatprep.subr.bf16.mxu0 0
      %2190 = vmatpush1.bf16.msra.mxu0 0
      %2191 = vmatprep.subr.bf16.mxu0 0
      %2192 = vmatpush1.bf16.msra.mxu0 0
      %2193 = vmatprep.subr.bf16.mxu0 0
      %2194 = vmatpush1.bf16.msra.mxu0 0
      %2195 = vmatprep.subr.bf16.mxu0 0
      %2196 = vmatpush1.bf16.msra.mxu0 0
      %2197 = vmatprep.mubr.bf16.mxu0 0
      %2198 = vmatmul.mubr.bf16.gmra.mrb[0].mxu0 %v2139
      %v2199 = vpop.f32.mrb[0].mxu0
      %v2200 = vadd.f32 0.0, %v2199
      %v2201 = vpop.f32.mrb[0].mxu0
      %v2202 = vadd.f32 0.0, %v2201
      %v2203 = vpop.f32.mrb[0].mxu0
      %v2204 = vpop.f32.mrb[0].mxu0
      %2205 = vdwg.mxu0
      %2206 = vmatprep.subr.bf16.mxu0 %v2151
      %2207 = vmatpush1.bf16.msra.mxu0 %v2148
      %2208 = vmatprep.subr.bf16.mxu0 0
      %2209 = vmatpush1.bf16.msra.mxu0 0
      %2210 = vmatprep.subr.bf16.mxu0 0
      %2211 = vmatpush1.bf16.msra.mxu0 0
      %2212 = vmatprep.subr.bf16.mxu0 0
      %2213 = vmatpush1.bf16.msra.mxu0 0
      %2214 = vmatprep.subr.bf16.mxu0 0
      %2215 = vmatpush1.bf16.msra.mxu0 0
      %2216 = vmatprep.subr.bf16.mxu0 0
      %2217 = vmatpush1.bf16.msra.mxu0 0
      %2218 = vmatprep.subr.bf16.mxu0 0
      %2219 = vmatpush1.bf16.msra.mxu0 0
      %2220 = vmatprep.subr.bf16.mxu0 0
      %2221 = vmatpush1.bf16.msra.mxu0 0
      %2222 = vmatprep.subr.bf16.mxu0 0
      %2223 = vmatpush1.bf16.msra.mxu0 0
      %2224 = vmatprep.subr.bf16.mxu0 0
      %2225 = vmatpush1.bf16.msra.mxu0 0
      %2226 = vmatprep.subr.bf16.mxu0 0
      %2227 = vmatpush1.bf16.msra.mxu0 0
      %2228 = vmatprep.subr.bf16.mxu0 0
      %2229 = vmatpush1.bf16.msra.mxu0 0
      %2230 = vmatprep.subr.bf16.mxu0 0
      %2231 = vmatpush1.bf16.msra.mxu0 0
      %2232 = vmatprep.subr.bf16.mxu0 0
      %2233 = vmatpush1.bf16.msra.mxu0 0
      %2234 = vmatprep.subr.bf16.mxu0 0
      %2235 = vmatpush1.bf16.msra.mxu0 0
      %2236 = vmatprep.subr.bf16.mxu0 0
      %2237 = vmatpush1.bf16.msra.mxu0 0
      %2238 = vmatprep.mubr.bf16.mxu0 0
      %2239 = vmatmul.mubr.bf16.gmra.mrb[0].mxu0 %v2139
      %v2240 = vpop.f32.mrb[0].mxu0
      %v2241 = vadd.f32 0.0, %v2240
      %v2242 = vpop.f32.mrb[0].mxu0
      %v2243 = vadd.f32 0.0, %v2242
      %v2244 = vpop.f32.mrb[0].mxu0
      %v2245 = vpop.f32.mrb[0].mxu0
      %2246 = vdwg.mxu0
      %2247 = vmatprep.subr.bf16.mxu0 %v2157
      %2248 = vmatpush1.bf16.msra.mxu0 %v2154
      %2249 = vmatprep.subr.bf16.mxu0 0
      %2250 = vmatpush1.bf16.msra.mxu0 0
      %2251 = vmatprep.subr.bf16.mxu0 0
      %2252 = vmatpush1.bf16.msra.mxu0 0
      %2253 = vmatprep.subr.bf16.mxu0 0
      %2254 = vmatpush1.bf16.msra.mxu0 0
      %2255 = vmatprep.subr.bf16.mxu0 0
      %2256 = vmatpush1.bf16.msra.mxu0 0
      %2257 = vmatprep.subr.bf16.mxu0 0
      %2258 = vmatpush1.bf16.msra.mxu0 0
      %2259 = vmatprep.subr.bf16.mxu0 0
      %2260 = vmatpush1.bf16.msra.mxu0 0
      %2261 = vmatprep.subr.bf16.mxu0 0
      %2262 = vmatpush1.bf16.msra.mxu0 0
      %2263 = vmatprep.subr.bf16.mxu0 0
      %2264 = vmatpush1.bf16.msra.mxu0 0
      %2265 = vmatprep.subr.bf16.mxu0 0
      %2266 = vmatpush1.bf16.msra.mxu0 0
      %2267 = vmatprep.subr.bf16.mxu0 0
      %2268 = vmatpush1.bf16.msra.mxu0 0
      %2269 = vmatprep.subr.bf16.mxu0 0
      %2270 = vmatpush1.bf16.msra.mxu0 0
      %2271 = vmatprep.subr.bf16.mxu0 0
      %2272 = vmatpush1.bf16.msra.mxu0 0
      %2273 = vmatprep.subr.bf16.mxu0 0
      %2274 = vmatpush1.bf16.msra.mxu0 0
      %2275 = vmatprep.subr.bf16.mxu0 0
      %2276 = vmatpush1.bf16.msra.mxu0 0
      %2277 = vmatprep.subr.bf16.mxu0 0
      %2278 = vmatpush1.bf16.msra.mxu0 0
      %2279 = vmatprep.mubr.bf16.mxu0 0
      %2280 = vmatmul.mubr.bf16.gmra.mrb[0].mxu0 %v2139
      %v2281 = vpop.f32.mrb[0].mxu0
      %v2282 = vadd.f32 0.0, %v2281
      %v2283 = vpop.f32.mrb[0].mxu0
      %v2284 = vadd.f32 0.0, %v2283
      %v2285 = vpop.f32.mrb[0].mxu0
      %v2286 = vpop.f32.mrb[0].mxu0
      %2287 = vdwg.mxu0
      %2288 = vmatprep.subr.bf16.mxu0 %v2163
      %2289 = vmatpush1.bf16.msra.mxu0 %v2160
      %2290 = vmatprep.subr.bf16.mxu0 0
      %2291 = vmatpush1.bf16.msra.mxu0 0
      %2292 = vmatprep.subr.bf16.mxu0 0
      %2293 = vmatpush1.bf16.msra.mxu0 0
      %2294 = vmatprep.subr.bf16.mxu0 0
      %2295 = vmatpush1.bf16.msra.mxu0 0
      %2296 = vmatprep.subr.bf16.mxu0 0
      %2297 = vmatpush1.bf16.msra.mxu0 0
      %2298 = vmatprep.subr.bf16.mxu0 0
      %2299 = vmatpush1.bf16.msra.mxu0 0
      %2300 = vmatprep.subr.bf16.mxu0 0
      %2301 = vmatpush1.bf16.msra.mxu0 0
      %2302 = vmatprep.subr.bf16.mxu0 0
      %2303 = vmatpush1.bf16.msra.mxu0 0
      %2304 = vmatprep.subr.bf16.mxu0 0
      %2305 = vmatpush1.bf16.msra.mxu0 0
      %2306 = vmatprep.subr.bf16.mxu0 0
      %2307 = vmatpush1.bf16.msra.mxu0 0
      %2308 = vmatprep.subr.bf16.mxu0 0
      %2309 = vmatpush1.bf16.msra.mxu0 0
      %2310 = vmatprep.subr.bf16.mxu0 0
      %2311 = vmatpush1.bf16.msra.mxu0 0
      %2312 = vmatprep.subr.bf16.mxu0 0
      %2313 = vmatpush1.bf16.msra.mxu0 0
      %2314 = vmatprep.subr.bf16.mxu0 0
      %2315 = vmatpush1.bf16.msra.mxu0 0
      %2316 = vmatprep.subr.bf16.mxu0 0
      %2317 = vmatpush1.bf16.msra.mxu0 0
      %2318 = vmatprep.subr.bf16.mxu0 0
      %2319 = vmatpush1.bf16.msra.mxu0 0
      %2320 = vmatprep.mubr.bf16.mxu0 0
      %2321 = vmatmul.mubr.bf16.gmra.mrb[0].mxu0 %v2139
      %v2322 = vpop.f32.mrb[0].mxu0
      %v2323 = vadd.f32 0.0, %v2322
      %v2324 = vpop.f32.mrb[0].mxu0
      %v2325 = vadd.f32 0.0, %v2324
      %v2326 = vpop.f32.mrb[0].mxu0
      %v2327 = vpop.f32.mrb[0].mxu0
      %2328 = vdwg.mxu0
      %v2329 = vadd.f32 %v2054, %v2200
      %v2330 = vadd.f32 %v2055, %v2202
      %v2331 = vadd.f32 %v2056, %v2241
      %v2332 = vadd.f32 %v2057, %v2243
      %v2333 = vadd.f32 %v2058, %v2282
      %v2334 = vadd.f32 %v2059, %v2284
      %v2335 = vadd.f32 %v2060, %v2323
      %v2336 = vadd.f32 %v2061, %v2325
      %v2337 = vld [vmem:[%s219] sm:$0xff]
      %v2338 = vld [vmem:[%s219 + $0x8] sm:$0xff]
      %v2339 = vld [vmem:[%s219 + $0x10] sm:$0x3]
      %s2340 = scalar_lea.vmem %s1, 32
      %v2341 = vld [vmem:[%s2340] sm:$0xf]
      %v2345 = vcombine.high %v2337, %v2337
      %v2347 = vunpack.c.l.s4 1983009808
      %v2348 = vunpack.c.0.s8 %v2347
      %v2349 = vlaneseq
      %v2350 = vshrl.u32 %v2349, 7
      %v2351 = vsub.s32 %v2348, %v2350
      %v2352 = vrot.slane %v2337, %v2351
      %v2354 = vunpack.c.l.s4 1983009808
      %v2355 = vunpack.c.0.s8 %v2354
      %v2356 = vlaneseq
      %v2357 = vshrl.u32 %v2356, 7
      %v2358 = vsub.s32 %v2355, %v2357
      %v2359 = vrot.slane %v2345, %v2358
      %v2360 = vcombine.high %v2352, %v2352
      %v2361 = vcombine.high %v2359, %v2359
      %v2362 = vcombine.high %v2338, %v2338
      %v2364 = vunpack.c.l.s4 1983009808
      %v2365 = vunpack.c.0.s8 %v2364
      %v2366 = vlaneseq
      %v2367 = vshrl.u32 %v2366, 7
      %v2368 = vsub.s32 %v2365, %v2367
      %v2369 = vrot.slane %v2338, %v2368
      %v2371 = vunpack.c.l.s4 1983009808
      %v2372 = vunpack.c.0.s8 %v2371
      %v2373 = vlaneseq
      %v2374 = vshrl.u32 %v2373, 7
      %v2375 = vsub.s32 %v2372, %v2374
      %v2376 = vrot.slane %v2362, %v2375
      %v2377 = vcombine.high %v2369, %v2369
      %v2378 = vcombine.high %v2376, %v2376
      %v2380 = vunpack.c.l.s4 1983009808
      %v2381 = vunpack.c.0.s8 %v2380
      %v2382 = vlaneseq
      %v2383 = vshrl.u32 %v2382, 7
      %v2384 = vsub.s32 %v2381, %v2383
      %v2385 = vrot.slane %v2339, %v2384
      %2386 = vrot.lane.b32.xlu0 %v2352, 106
      %v2387 = vpop.permute.xlu0 %2386
      %2388 = vrot.lane.b32.xlu0 %v2360, 106
      %v2389 = vpop.permute.xlu0 %2388
      %2390 = vrot.lane.b32.xlu0 %v2359, 106
      %v2391 = vpop.permute.xlu0 %2390
      %2392 = vrot.lane.b32.xlu0 %v2361, 106
      %v2393 = vpop.permute.xlu0 %2392
      %2394 = vrot.lane.b32.xlu0 %v2369, 106
      %v2395 = vpop.permute.xlu0 %2394
      %2396 = vrot.lane.b32.xlu0 %v2377, 106
      %v2397 = vpop.permute.xlu0 %2396
      %2398 = vrot.lane.b32.xlu0 %v2376, 106
      %v2399 = vpop.permute.xlu0 %2398
      %2400 = vrot.lane.b32.xlu0 %v2378, 106
      %v2401 = vpop.permute.xlu0 %2400
      %2402 = vrot.lane.b32.xlu0 %v2385, 106
      %v2403 = vpop.permute.xlu0 %2402
      %vm2404 = vcmask 867328
      %v2405 = vsel %vm2404, %v2387, %v2389
      %v2406 = vsel %vm2404, %v2389, %v2391
      %v2407 = vsel %vm2404, %v2391, %v2393
      %v2408 = vsel %vm2404, %v2393, %v2395
      %v2409 = vsel %vm2404, %v2395, %v2397
      %v2410 = vsel %vm2404, %v2397, %v2399
      %v2411 = vsel %vm2404, %v2399, %v2401
      %v2412 = vsel %vm2404, %v2401, %v2403
      %v2414 = vsel %vm303, %v2341, 0
      %v2417 = vsel %vm307, %v2405, 0
      %v2420 = vsel %vm307, %v2406, 0
      %v2423 = vsel %vm307, %v2407, 0
      %v2426 = vsel %vm307, %v2408, 0
      %v2429 = vsel %vm307, %v2409, 0
      %v2432 = vsel %vm307, %v2410, 0
      %v2435 = vsel %vm307, %v2411, 0
      %v2438 = vsel %vm307, %v2412, 0
      %2440 = vmatprep.subr.bf16.mxu0 %v2420
      %2441 = vmatpush1.bf16.msra.mxu0 %v2417
      %2442 = vmatprep.subr.bf16.mxu0 0
      %2443 = vmatpush1.bf16.msra.mxu0 0
      %2444 = vmatprep.subr.bf16.mxu0 0
      %2445 = vmatpush1.bf16.msra.mxu0 0
      %2446 = vmatprep.subr.bf16.mxu0 0
      %2447 = vmatpush1.bf16.msra.mxu0 0
      %2448 = vmatprep.subr.bf16.mxu0 0
      %2449 = vmatpush1.bf16.msra.mxu0 0
      %2450 = vmatprep.subr.bf16.mxu0 0
      %2451 = vmatpush1.bf16.msra.mxu0 0
      %2452 = vmatprep.subr.bf16.mxu0 0
      %2453 = vmatpush1.bf16.msra.mxu0 0
      %2454 = vmatprep.subr.bf16.mxu0 0
      %2455 = vmatpush1.bf16.msra.mxu0 0
      %2456 = vmatprep.subr.bf16.mxu0 0
      %2457 = vmatpush1.bf16.msra.mxu0 0
      %2458 = vmatprep.subr.bf16.mxu0 0
      %2459 = vmatpush1.bf16.msra.mxu0 0
      %2460 = vmatprep.subr.bf16.mxu0 0
      %2461 = vmatpush1.bf16.msra.mxu0 0
      %2462 = vmatprep.subr.bf16.mxu0 0
      %2463 = vmatpush1.bf16.msra.mxu0 0
      %2464 = vmatprep.subr.bf16.mxu0 0
      %2465 = vmatpush1.bf16.msra.mxu0 0
      %2466 = vmatprep.subr.bf16.mxu0 0
      %2467 = vmatpush1.bf16.msra.mxu0 0
      %2468 = vmatprep.subr.bf16.mxu0 0
      %2469 = vmatpush1.bf16.msra.mxu0 0
      %2470 = vmatprep.subr.bf16.mxu0 0
      %2471 = vmatpush1.bf16.msra.mxu0 0
      %2472 = vmatprep.mubr.bf16.mxu0 0
      %2473 = vmatmul.mubr.bf16.gmra.mrb[0].mxu0 %v2414
      %v2474 = vpop.f32.mrb[0].mxu0
      %v2475 = vadd.f32 0.0, %v2474
      %v2476 = vpop.f32.mrb[0].mxu0
      %v2477 = vadd.f32 0.0, %v2476
      %v2478 = vpop.f32.mrb[0].mxu0
      %v2479 = vpop.f32.mrb[0].mxu0
      %2480 = vdwg.mxu0
      %2481 = vmatprep.subr.bf16.mxu0 %v2426
      %2482 = vmatpush1.bf16.msra.mxu0 %v2423
      %2483 = vmatprep.subr.bf16.mxu0 0
      %2484 = vmatpush1.bf16.msra.mxu0 0
      %2485 = vmatprep.subr.bf16.mxu0 0
      %2486 = vmatpush1.bf16.msra.mxu0 0
      %2487 = vmatprep.subr.bf16.mxu0 0
      %2488 = vmatpush1.bf16.msra.mxu0 0
      %2489 = vmatprep.subr.bf16.mxu0 0
      %2490 = vmatpush1.bf16.msra.mxu0 0
      %2491 = vmatprep.subr.bf16.mxu0 0
      %2492 = vmatpush1.bf16.msra.mxu0 0
      %2493 = vmatprep.subr.bf16.mxu0 0
      %2494 = vmatpush1.bf16.msra.mxu0 0
      %2495 = vmatprep.subr.bf16.mxu0 0
      %2496 = vmatpush1.bf16.msra.mxu0 0
      %2497 = vmatprep.subr.bf16.mxu0 0
      %2498 = vmatpush1.bf16.msra.mxu0 0
      %2499 = vmatprep.subr.bf16.mxu0 0
      %2500 = vmatpush1.bf16.msra.mxu0 0
      %2501 = vmatprep.subr.bf16.mxu0 0
      %2502 = vmatpush1.bf16.msra.mxu0 0
      %2503 = vmatprep.subr.bf16.mxu0 0
      %2504 = vmatpush1.bf16.msra.mxu0 0
      %2505 = vmatprep.subr.bf16.mxu0 0
      %2506 = vmatpush1.bf16.msra.mxu0 0
      %2507 = vmatprep.subr.bf16.mxu0 0
      %2508 = vmatpush1.bf16.msra.mxu0 0
      %2509 = vmatprep.subr.bf16.mxu0 0
      %2510 = vmatpush1.bf16.msra.mxu0 0
      %2511 = vmatprep.subr.bf16.mxu0 0
      %2512 = vmatpush1.bf16.msra.mxu0 0
      %2513 = vmatprep.mubr.bf16.mxu0 0
      %2514 = vmatmul.mubr.bf16.gmra.mrb[0].mxu0 %v2414
      %v2515 = vpop.f32.mrb[0].mxu0
      %v2516 = vadd.f32 0.0, %v2515
      %v2517 = vpop.f32.mrb[0].mxu0
      %v2518 = vadd.f32 0.0, %v2517
      %v2519 = vpop.f32.mrb[0].mxu0
      %v2520 = vpop.f32.mrb[0].mxu0
      %2521 = vdwg.mxu0
      %2522 = vmatprep.subr.bf16.mxu0 %v2432
      %2523 = vmatpush1.bf16.msra.mxu0 %v2429
      %2524 = vmatprep.subr.bf16.mxu0 0
      %2525 = vmatpush1.bf16.msra.mxu0 0
      %2526 = vmatprep.subr.bf16.mxu0 0
      %2527 = vmatpush1.bf16.msra.mxu0 0
      %2528 = vmatprep.subr.bf16.mxu0 0
      %2529 = vmatpush1.bf16.msra.mxu0 0
      %2530 = vmatprep.subr.bf16.mxu0 0
      %2531 = vmatpush1.bf16.msra.mxu0 0
      %2532 = vmatprep.subr.bf16.mxu0 0
      %2533 = vmatpush1.bf16.msra.mxu0 0
      %2534 = vmatprep.subr.bf16.mxu0 0
      %2535 = vmatpush1.bf16.msra.mxu0 0
      %2536 = vmatprep.subr.bf16.mxu0 0
      %2537 = vmatpush1.bf16.msra.mxu0 0
      %2538 = vmatprep.subr.bf16.mxu0 0
      %2539 = vmatpush1.bf16.msra.mxu0 0
      %2540 = vmatprep.subr.bf16.mxu0 0
      %2541 = vmatpush1.bf16.msra.mxu0 0
      %2542 = vmatprep.subr.bf16.mxu0 0
      %2543 = vmatpush1.bf16.msra.mxu0 0
      %2544 = vmatprep.subr.bf16.mxu0 0
      %2545 = vmatpush1.bf16.msra.mxu0 0
      %2546 = vmatprep.subr.bf16.mxu0 0
      %2547 = vmatpush1.bf16.msra.mxu0 0
      %2548 = vmatprep.subr.bf16.mxu0 0
      %2549 = vmatpush1.bf16.msra.mxu0 0
      %2550 = vmatprep.subr.bf16.mxu0 0
      %2551 = vmatpush1.bf16.msra.mxu0 0
      %2552 = vmatprep.subr.bf16.mxu0 0
      %2553 = vmatpush1.bf16.msra.mxu0 0
      %2554 = vmatprep.mubr.bf16.mxu0 0
      %2555 = vmatmul.mubr.bf16.gmra.mrb[0].mxu0 %v2414
      %v2556 = vpop.f32.mrb[0].mxu0
      %v2557 = vadd.f32 0.0, %v2556
      %v2558 = vpop.f32.mrb[0].mxu0
      %v2559 = vadd.f32 0.0, %v2558
      %v2560 = vpop.f32.mrb[0].mxu0
      %v2561 = vpop.f32.mrb[0].mxu0
      %2562 = vdwg.mxu0
      %2563 = vmatprep.subr.bf16.mxu0 %v2438
      %2564 = vmatpush1.bf16.msra.mxu0 %v2435
      %2565 = vmatprep.subr.bf16.mxu0 0
      %2566 = vmatpush1.bf16.msra.mxu0 0
      %2567 = vmatprep.subr.bf16.mxu0 0
      %2568 = vmatpush1.bf16.msra.mxu0 0
      %2569 = vmatprep.subr.bf16.mxu0 0
      %2570 = vmatpush1.bf16.msra.mxu0 0
      %2571 = vmatprep.subr.bf16.mxu0 0
      %2572 = vmatpush1.bf16.msra.mxu0 0
      %2573 = vmatprep.subr.bf16.mxu0 0
      %2574 = vmatpush1.bf16.msra.mxu0 0
      %2575 = vmatprep.subr.bf16.mxu0 0
      %2576 = vmatpush1.bf16.msra.mxu0 0
      %2577 = vmatprep.subr.bf16.mxu0 0
      %2578 = vmatpush1.bf16.msra.mxu0 0
      %2579 = vmatprep.subr.bf16.mxu0 0
      %2580 = vmatpush1.bf16.msra.mxu0 0
      %2581 = vmatprep.subr.bf16.mxu0 0
      %2582 = vmatpush1.bf16.msra.mxu0 0
      %2583 = vmatprep.subr.bf16.mxu0 0
      %2584 = vmatpush1.bf16.msra.mxu0 0
      %2585 = vmatprep.subr.bf16.mxu0 0
      %2586 = vmatpush1.bf16.msra.mxu0 0
      %2587 = vmatprep.subr.bf16.mxu0 0
      %2588 = vmatpush1.bf16.msra.mxu0 0
      %2589 = vmatprep.subr.bf16.mxu0 0
      %2590 = vmatpush1.bf16.msra.mxu0 0
      %2591 = vmatprep.subr.bf16.mxu0 0
      %2592 = vmatpush1.bf16.msra.mxu0 0
      %2593 = vmatprep.subr.bf16.mxu0 0
      %2594 = vmatpush1.bf16.msra.mxu0 0
      %2595 = vmatprep.mubr.bf16.mxu0 0
      %2596 = vmatmul.mubr.bf16.gmra.mrb[0].mxu0 %v2414
      %v2597 = vpop.f32.mrb[0].mxu0
      %v2598 = vadd.f32 0.0, %v2597
      %v2599 = vpop.f32.mrb[0].mxu0
      %v2600 = vadd.f32 0.0, %v2599
      %v2601 = vpop.f32.mrb[0].mxu0
      %v2602 = vpop.f32.mrb[0].mxu0
      %2603 = vdwg.mxu0
      %v2604 = vadd.f32 %v2329, %v2475
      %v2605 = vadd.f32 %v2330, %v2477
      %v2606 = vadd.f32 %v2331, %v2516
      %v2607 = vadd.f32 %v2332, %v2518
      %v2608 = vadd.f32 %v2333, %v2557
      %v2609 = vadd.f32 %v2334, %v2559
      %v2610 = vadd.f32 %v2335, %v2598
      %v2611 = vadd.f32 %v2336, %v2600
      %v2612 = vld [vmem:[%s219] sm:$0xff]
      %v2613 = vld [vmem:[%s219 + $0x8] sm:$0xff]
      %v2614 = vld [vmem:[%s219 + $0x10] sm:$0x3]
      %s2615 = scalar_lea.vmem %s1, 36
      %v2616 = vld [vmem:[%s2615] sm:$0xf]
      %v2620 = vcombine.high %v2612, %v2612
      %v2622 = vunpack.c.l.s4 1983009808
      %v2623 = vunpack.c.0.s8 %v2622
      %v2624 = vlaneseq
      %v2625 = vshrl.u32 %v2624, 7
      %v2626 = vsub.s32 %v2623, %v2625
      %v2627 = vrot.slane %v2612, %v2626
      %v2629 = vunpack.c.l.s4 1983009808
      %v2630 = vunpack.c.0.s8 %v2629
      %v2631 = vlaneseq
      %v2632 = vshrl.u32 %v2631, 7
      %v2633 = vsub.s32 %v2630, %v2632
      %v2634 = vrot.slane %v2620, %v2633
      %v2635 = vcombine.high %v2627, %v2627
      %v2636 = vcombine.high %v2634, %v2634
      %v2637 = vcombine.high %v2613, %v2613
      %v2639 = vunpack.c.l.s4 1983009808
      %v2640 = vunpack.c.0.s8 %v2639
      %v2641 = vlaneseq
      %v2642 = vshrl.u32 %v2641, 7
      %v2643 = vsub.s32 %v2640, %v2642
      %v2644 = vrot.slane %v2613, %v2643
      %v2646 = vunpack.c.l.s4 1983009808
      %v2647 = vunpack.c.0.s8 %v2646
      %v2648 = vlaneseq
      %v2649 = vshrl.u32 %v2648, 7
      %v2650 = vsub.s32 %v2647, %v2649
      %v2651 = vrot.slane %v2637, %v2650
      %v2652 = vcombine.high %v2644, %v2644
      %v2653 = vcombine.high %v2651, %v2651
      %v2655 = vunpack.c.l.s4 1983009808
      %v2656 = vunpack.c.0.s8 %v2655
      %v2657 = vlaneseq
      %v2658 = vshrl.u32 %v2657, 7
      %v2659 = vsub.s32 %v2656, %v2658
      %v2660 = vrot.slane %v2614, %v2659
      %2661 = vrot.lane.b32.xlu0 %v2627, 28
      %v2662 = vpop.permute.xlu0 %2661
      %2663 = vrot.lane.b32.xlu0 %v2635, 28
      %v2664 = vpop.permute.xlu0 %2663
      %2665 = vrot.lane.b32.xlu0 %v2634, 28
      %v2666 = vpop.permute.xlu0 %2665
      %2667 = vrot.lane.b32.xlu0 %v2636, 28
      %v2668 = vpop.permute.xlu0 %2667
      %2669 = vrot.lane.b32.xlu0 %v2644, 28
      %v2670 = vpop.permute.xlu0 %2669
      %2671 = vrot.lane.b32.xlu0 %v2652, 28
      %v2672 = vpop.permute.xlu0 %2671
      %2673 = vrot.lane.b32.xlu0 %v2651, 28
      %v2674 = vpop.permute.xlu0 %2673
      %2675 = vrot.lane.b32.xlu0 %v2653, 28
      %v2676 = vpop.permute.xlu0 %2675
      %2677 = vrot.lane.b32.xlu0 %v2660, 28
      %v2678 = vpop.permute.xlu0 %2677
      %vm2679 = vcmask 228352
      %v2680 = vsel %vm2679, %v2662, %v2664
      %v2681 = vsel %vm2679, %v2664, %v2666
      %v2682 = vsel %vm2679, %v2666, %v2668
      %v2683 = vsel %vm2679, %v2668, %v2670
      %v2684 = vsel %vm2679, %v2670, %v2672
      %v2685 = vsel %vm2679, %v2672, %v2674
      %v2686 = vsel %vm2679, %v2674, %v2676
      %v2687 = vsel %vm2679, %v2676, %v2678
      %v2689 = vsel %vm303, %v2616, 0
      %v2692 = vsel %vm307, %v2680, 0
      %v2695 = vsel %vm307, %v2681, 0
      %v2698 = vsel %vm307, %v2682, 0
      %v2701 = vsel %vm307, %v2683, 0
      %v2704 = vsel %vm307, %v2684, 0
      %v2707 = vsel %vm307, %v2685, 0
      %v2710 = vsel %vm307, %v2686, 0
      %v2713 = vsel %vm307, %v2687, 0
      %2715 = vmatprep.subr.bf16.mxu0 %v2695
      %2716 = vmatpush1.bf16.msra.mxu0 %v2692
      %2717 = vmatprep.subr.bf16.mxu0 0
      %2718 = vmatpush1.bf16.msra.mxu0 0
      %2719 = vmatprep.subr.bf16.mxu0 0
      %2720 = vmatpush1.bf16.msra.mxu0 0
      %2721 = vmatprep.subr.bf16.mxu0 0
      %2722 = vmatpush1.bf16.msra.mxu0 0
      %2723 = vmatprep.subr.bf16.mxu0 0
      %2724 = vmatpush1.bf16.msra.mxu0 0
      %2725 = vmatprep.subr.bf16.mxu0 0
      %2726 = vmatpush1.bf16.msra.mxu0 0
      %2727 = vmatprep.subr.bf16.mxu0 0
      %2728 = vmatpush1.bf16.msra.mxu0 0
      %2729 = vmatprep.subr.bf16.mxu0 0
      %2730 = vmatpush1.bf16.msra.mxu0 0
      %2731 = vmatprep.subr.bf16.mxu0 0
      %2732 = vmatpush1.bf16.msra.mxu0 0
      %2733 = vmatprep.subr.bf16.mxu0 0
      %2734 = vmatpush1.bf16.msra.mxu0 0
      %2735 = vmatprep.subr.bf16.mxu0 0
      %2736 = vmatpush1.bf16.msra.mxu0 0
      %2737 = vmatprep.subr.bf16.mxu0 0
      %2738 = vmatpush1.bf16.msra.mxu0 0
      %2739 = vmatprep.subr.bf16.mxu0 0
      %2740 = vmatpush1.bf16.msra.mxu0 0
      %2741 = vmatprep.subr.bf16.mxu0 0
      %2742 = vmatpush1.bf16.msra.mxu0 0
      %2743 = vmatprep.subr.bf16.mxu0 0
      %2744 = vmatpush1.bf16.msra.mxu0 0
      %2745 = vmatprep.subr.bf16.mxu0 0
      %2746 = vmatpush1.bf16.msra.mxu0 0
      %2747 = vmatprep.mubr.bf16.mxu0 0
      %2748 = vmatmul.mubr.bf16.gmra.mrb[0].mxu0 %v2689
      %v2749 = vpop.f32.mrb[0].mxu0
      %v2750 = vadd.f32 0.0, %v2749
      %v2751 = vpop.f32.mrb[0].mxu0
      %v2752 = vadd.f32 0.0, %v2751
      %v2753 = vpop.f32.mrb[0].mxu0
      %v2754 = vpop.f32.mrb[0].mxu0
      %2755 = vdwg.mxu0
      %2756 = vmatprep.subr.bf16.mxu0 %v2701
      %2757 = vmatpush1.bf16.msra.mxu0 %v2698
      %2758 = vmatprep.subr.bf16.mxu0 0
      %2759 = vmatpush1.bf16.msra.mxu0 0
      %2760 = vmatprep.subr.bf16.mxu0 0
      %2761 = vmatpush1.bf16.msra.mxu0 0
      %2762 = vmatprep.subr.bf16.mxu0 0
      %2763 = vmatpush1.bf16.msra.mxu0 0
      %2764 = vmatprep.subr.bf16.mxu0 0
      %2765 = vmatpush1.bf16.msra.mxu0 0
      %2766 = vmatprep.subr.bf16.mxu0 0
      %2767 = vmatpush1.bf16.msra.mxu0 0
      %2768 = vmatprep.subr.bf16.mxu0 0
      %2769 = vmatpush1.bf16.msra.mxu0 0
      %2770 = vmatprep.subr.bf16.mxu0 0
      %2771 = vmatpush1.bf16.msra.mxu0 0
      %2772 = vmatprep.subr.bf16.mxu0 0
      %2773 = vmatpush1.bf16.msra.mxu0 0
      %2774 = vmatprep.subr.bf16.mxu0 0
      %2775 = vmatpush1.bf16.msra.mxu0 0
      %2776 = vmatprep.subr.bf16.mxu0 0
      %2777 = vmatpush1.bf16.msra.mxu0 0
      %2778 = vmatprep.subr.bf16.mxu0 0
      %2779 = vmatpush1.bf16.msra.mxu0 0
      %2780 = vmatprep.subr.bf16.mxu0 0
      %2781 = vmatpush1.bf16.msra.mxu0 0
      %2782 = vmatprep.subr.bf16.mxu0 0
      %2783 = vmatpush1.bf16.msra.mxu0 0
      %2784 = vmatprep.subr.bf16.mxu0 0
      %2785 = vmatpush1.bf16.msra.mxu0 0
      %2786 = vmatprep.subr.bf16.mxu0 0
      %2787 = vmatpush1.bf16.msra.mxu0 0
      %2788 = vmatprep.mubr.bf16.mxu0 0
      %2789 = vmatmul.mubr.bf16.gmra.mrb[0].mxu0 %v2689
      %v2790 = vpop.f32.mrb[0].mxu0
      %v2791 = vadd.f32 0.0, %v2790
      %v2792 = vpop.f32.mrb[0].mxu0
      %v2793 = vadd.f32 0.0, %v2792
      %v2794 = vpop.f32.mrb[0].mxu0
      %v2795 = vpop.f32.mrb[0].mxu0
      %2796 = vdwg.mxu0
      %2797 = vmatprep.subr.bf16.mxu0 %v2707
      %2798 = vmatpush1.bf16.msra.mxu0 %v2704
      %2799 = vmatprep.subr.bf16.mxu0 0
      %2800 = vmatpush1.bf16.msra.mxu0 0
      %2801 = vmatprep.subr.bf16.mxu0 0
      %2802 = vmatpush1.bf16.msra.mxu0 0
      %2803 = vmatprep.subr.bf16.mxu0 0
      %2804 = vmatpush1.bf16.msra.mxu0 0
      %2805 = vmatprep.subr.bf16.mxu0 0
      %2806 = vmatpush1.bf16.msra.mxu0 0
      %2807 = vmatprep.subr.bf16.mxu0 0
      %2808 = vmatpush1.bf16.msra.mxu0 0
      %2809 = vmatprep.subr.bf16.mxu0 0
      %2810 = vmatpush1.bf16.msra.mxu0 0
      %2811 = vmatprep.subr.bf16.mxu0 0
      %2812 = vmatpush1.bf16.msra.mxu0 0
      %2813 = vmatprep.subr.bf16.mxu0 0
      %2814 = vmatpush1.bf16.msra.mxu0 0
      %2815 = vmatprep.subr.bf16.mxu0 0
      %2816 = vmatpush1.bf16.msra.mxu0 0
      %2817 = vmatprep.subr.bf16.mxu0 0
      %2818 = vmatpush1.bf16.msra.mxu0 0
      %2819 = vmatprep.subr.bf16.mxu0 0
      %2820 = vmatpush1.bf16.msra.mxu0 0
      %2821 = vmatprep.subr.bf16.mxu0 0
      %2822 = vmatpush1.bf16.msra.mxu0 0
      %2823 = vmatprep.subr.bf16.mxu0 0
      %2824 = vmatpush1.bf16.msra.mxu0 0
      %2825 = vmatprep.subr.bf16.mxu0 0
      %2826 = vmatpush1.bf16.msra.mxu0 0
      %2827 = vmatprep.subr.bf16.mxu0 0
      %2828 = vmatpush1.bf16.msra.mxu0 0
      %2829 = vmatprep.mubr.bf16.mxu0 0
      %2830 = vmatmul.mubr.bf16.gmra.mrb[0].mxu0 %v2689
      %v2831 = vpop.f32.mrb[0].mxu0
      %v2832 = vadd.f32 0.0, %v2831
      %v2833 = vpop.f32.mrb[0].mxu0
      %v2834 = vadd.f32 0.0, %v2833
      %v2835 = vpop.f32.mrb[0].mxu0
      %v2836 = vpop.f32.mrb[0].mxu0
      %2837 = vdwg.mxu0
      %2838 = vmatprep.subr.bf16.mxu0 %v2713
      %2839 = vmatpush1.bf16.msra.mxu0 %v2710
      %2840 = vmatprep.subr.bf16.mxu0 0
      %2841 = vmatpush1.bf16.msra.mxu0 0
      %2842 = vmatprep.subr.bf16.mxu0 0
      %2843 = vmatpush1.bf16.msra.mxu0 0
      %2844 = vmatprep.subr.bf16.mxu0 0
      %2845 = vmatpush1.bf16.msra.mxu0 0
      %2846 = vmatprep.subr.bf16.mxu0 0
      %2847 = vmatpush1.bf16.msra.mxu0 0
      %2848 = vmatprep.subr.bf16.mxu0 0
      %2849 = vmatpush1.bf16.msra.mxu0 0
      %2850 = vmatprep.subr.bf16.mxu0 0
      %2851 = vmatpush1.bf16.msra.mxu0 0
      %2852 = vmatprep.subr.bf16.mxu0 0
      %2853 = vmatpush1.bf16.msra.mxu0 0
      %2854 = vmatprep.subr.bf16.mxu0 0
      %2855 = vmatpush1.bf16.msra.mxu0 0
      %2856 = vmatprep.subr.bf16.mxu0 0
      %2857 = vmatpush1.bf16.msra.mxu0 0
      %2858 = vmatprep.subr.bf16.mxu0 0
      %2859 = vmatpush1.bf16.msra.mxu0 0
      %2860 = vmatprep.subr.bf16.mxu0 0
      %2861 = vmatpush1.bf16.msra.mxu0 0
      %2862 = vmatprep.subr.bf16.mxu0 0
      %2863 = vmatpush1.bf16.msra.mxu0 0
      %2864 = vmatprep.subr.bf16.mxu0 0
      %2865 = vmatpush1.bf16.msra.mxu0 0
      %2866 = vmatprep.subr.bf16.mxu0 0
      %2867 = vmatpush1.bf16.msra.mxu0 0
      %2868 = vmatprep.subr.bf16.mxu0 0
      %2869 = vmatpush1.bf16.msra.mxu0 0
      %2870 = vmatprep.mubr.bf16.mxu0 0
      %2871 = vmatmul.mubr.bf16.gmra.mrb[0].mxu0 %v2689
      %v2872 = vpop.f32.mrb[0].mxu0
      %v2873 = vadd.f32 0.0, %v2872
      %v2874 = vpop.f32.mrb[0].mxu0
      %v2875 = vadd.f32 0.0, %v2874
      %v2876 = vpop.f32.mrb[0].mxu0
      %v2877 = vpop.f32.mrb[0].mxu0
      %2878 = vdwg.mxu0
      %v2879 = vadd.f32 %v2604, %v2750
      %v2880 = vadd.f32 %v2605, %v2752
      %v2881 = vadd.f32 %v2606, %v2791
      %v2882 = vadd.f32 %v2607, %v2793
      %v2883 = vadd.f32 %v2608, %v2832
      %v2884 = vadd.f32 %v2609, %v2834
      %v2885 = vadd.f32 %v2610, %v2873
      %v2886 = vadd.f32 %v2611, %v2875
      %v2887 = vld [vmem:[%s219] sm:$0xff]
      %v2888 = vld [vmem:[%s219 + $0x8] sm:$0xff]
      %v2889 = vld [vmem:[%s219 + $0x10] sm:$0x3]
      %s2890 = scalar_lea.vmem %s1, 40
      %v2891 = vld [vmem:[%s2890] sm:$0xf]
      %v2895 = vcombine.high %v2887, %v2887
      %v2897 = vunpack.c.l.s4 1983009808
      %v2898 = vunpack.c.0.s8 %v2897
      %v2899 = vlaneseq
      %v2900 = vshrl.u32 %v2899, 7
      %v2901 = vsub.s32 %v2898, %v2900
      %v2902 = vrot.slane %v2887, %v2901
      %v2904 = vunpack.c.l.s4 1983009808
      %v2905 = vunpack.c.0.s8 %v2904
      %v2906 = vlaneseq
      %v2907 = vshrl.u32 %v2906, 7
      %v2908 = vsub.s32 %v2905, %v2907
      %v2909 = vrot.slane %v2895, %v2908
      %v2910 = vcombine.high %v2902, %v2902
      %v2911 = vcombine.high %v2909, %v2909
      %v2912 = vcombine.high %v2888, %v2888
      %v2914 = vunpack.c.l.s4 1983009808
      %v2915 = vunpack.c.0.s8 %v2914
      %v2916 = vlaneseq
      %v2917 = vshrl.u32 %v2916, 7
      %v2918 = vsub.s32 %v2915, %v2917
      %v2919 = vrot.slane %v2888, %v2918
      %v2921 = vunpack.c.l.s4 1983009808
      %v2922 = vunpack.c.0.s8 %v2921
      %v2923 = vlaneseq
      %v2924 = vshrl.u32 %v2923, 7
      %v2925 = vsub.s32 %v2922, %v2924
      %v2926 = vrot.slane %v2912, %v2925
      %v2927 = vcombine.high %v2919, %v2919
      %v2928 = vcombine.high %v2926, %v2926
      %v2930 = vunpack.c.l.s4 1983009808
      %v2931 = vunpack.c.0.s8 %v2930
      %v2932 = vlaneseq
      %v2933 = vshrl.u32 %v2932, 7
      %v2934 = vsub.s32 %v2931, %v2933
      %v2935 = vrot.slane %v2889, %v2934
      %2936 = vrot.lane.b32.xlu0 %v2902, 27
      %v2937 = vpop.permute.xlu0 %2936
      %2938 = vrot.lane.b32.xlu0 %v2910, 27
      %v2939 = vpop.permute.xlu0 %2938
      %2940 = vrot.lane.b32.xlu0 %v2909, 27
      %v2941 = vpop.permute.xlu0 %2940
      %2942 = vrot.lane.b32.xlu0 %v2911, 27
      %v2943 = vpop.permute.xlu0 %2942
      %2944 = vrot.lane.b32.xlu0 %v2919, 27
      %v2945 = vpop.permute.xlu0 %2944
      %2946 = vrot.lane.b32.xlu0 %v2927, 27
      %v2947 = vpop.permute.xlu0 %2946
      %2948 = vrot.lane.b32.xlu0 %v2926, 27
      %v2949 = vpop.permute.xlu0 %2948
      %2950 = vrot.lane.b32.xlu0 %v2928, 27
      %v2951 = vpop.permute.xlu0 %2950
      %2952 = vrot.lane.b32.xlu0 %v2935, 27
      %v2953 = vpop.permute.xlu0 %2952
      %vm2954 = vcmask 220160
      %v2955 = vsel %vm2954, %v2937, %v2939
      %v2956 = vsel %vm2954, %v2939, %v2941
      %v2957 = vsel %vm2954, %v2941, %v2943
      %v2958 = vsel %vm2954, %v2943, %v2945
      %v2959 = vsel %vm2954, %v2945, %v2947
      %v2960 = vsel %vm2954, %v2947, %v2949
      %v2961 = vsel %vm2954, %v2949, %v2951
      %v2962 = vsel %vm2954, %v2951, %v2953
      %v2964 = vsel %vm303, %v2891, 0
      %v2967 = vsel %vm307, %v2955, 0
      %v2970 = vsel %vm307, %v2956, 0
      %v2973 = vsel %vm307, %v2957, 0
      %v2976 = vsel %vm307, %v2958, 0
      %v2979 = vsel %vm307, %v2959, 0
      %v2982 = vsel %vm307, %v2960, 0
      %v2985 = vsel %vm307, %v2961, 0
      %v2988 = vsel %vm307, %v2962, 0
      %2990 = vmatprep.subr.bf16.mxu0 %v2970
      %2991 = vmatpush1.bf16.msra.mxu0 %v2967
      %2992 = vmatprep.subr.bf16.mxu0 0
      %2993 = vmatpush1.bf16.msra.mxu0 0
      %2994 = vmatprep.subr.bf16.mxu0 0
      %2995 = vmatpush1.bf16.msra.mxu0 0
      %2996 = vmatprep.subr.bf16.mxu0 0
      %2997 = vmatpush1.bf16.msra.mxu0 0
      %2998 = vmatprep.subr.bf16.mxu0 0
      %2999 = vmatpush1.bf16.msra.mxu0 0
      %3000 = vmatprep.subr.bf16.mxu0 0
      %3001 = vmatpush1.bf16.msra.mxu0 0
      %3002 = vmatprep.subr.bf16.mxu0 0
      %3003 = vmatpush1.bf16.msra.mxu0 0
      %3004 = vmatprep.subr.bf16.mxu0 0
      %3005 = vmatpush1.bf16.msra.mxu0 0
      %3006 = vmatprep.subr.bf16.mxu0 0
      %3007 = vmatpush1.bf16.msra.mxu0 0
      %3008 = vmatprep.subr.bf16.mxu0 0
      %3009 = vmatpush1.bf16.msra.mxu0 0
      %3010 = vmatprep.subr.bf16.mxu0 0
      %3011 = vmatpush1.bf16.msra.mxu0 0
      %3012 = vmatprep.subr.bf16.mxu0 0
      %3013 = vmatpush1.bf16.msra.mxu0 0
      %3014 = vmatprep.subr.bf16.mxu0 0
      %3015 = vmatpush1.bf16.msra.mxu0 0
      %3016 = vmatprep.subr.bf16.mxu0 0
      %3017 = vmatpush1.bf16.msra.mxu0 0
      %3018 = vmatprep.subr.bf16.mxu0 0
      %3019 = vmatpush1.bf16.msra.mxu0 0
      %3020 = vmatprep.subr.bf16.mxu0 0
      %3021 = vmatpush1.bf16.msra.mxu0 0
      %3022 = vmatprep.mubr.bf16.mxu0 0
      %3023 = vmatmul.mubr.bf16.gmra.mrb[0].mxu0 %v2964
      %v3024 = vpop.f32.mrb[0].mxu0
      %v3025 = vadd.f32 0.0, %v3024
      %v3026 = vpop.f32.mrb[0].mxu0
      %v3027 = vadd.f32 0.0, %v3026
      %v3028 = vpop.f32.mrb[0].mxu0
      %v3029 = vpop.f32.mrb[0].mxu0
      %3030 = vdwg.mxu0
      %3031 = vmatprep.subr.bf16.mxu0 %v2976
      %3032 = vmatpush1.bf16.msra.mxu0 %v2973
      %3033 = vmatprep.subr.bf16.mxu0 0
      %3034 = vmatpush1.bf16.msra.mxu0 0
      %3035 = vmatprep.subr.bf16.mxu0 0
      %3036 = vmatpush1.bf16.msra.mxu0 0
      %3037 = vmatprep.subr.bf16.mxu0 0
      %3038 = vmatpush1.bf16.msra.mxu0 0
      %3039 = vmatprep.subr.bf16.mxu0 0
      %3040 = vmatpush1.bf16.msra.mxu0 0
      %3041 = vmatprep.subr.bf16.mxu0 0
      %3042 = vmatpush1.bf16.msra.mxu0 0
      %3043 = vmatprep.subr.bf16.mxu0 0
      %3044 = vmatpush1.bf16.msra.mxu0 0
      %3045 = vmatprep.subr.bf16.mxu0 0
      %3046 = vmatpush1.bf16.msra.mxu0 0
      %3047 = vmatprep.subr.bf16.mxu0 0
      %3048 = vmatpush1.bf16.msra.mxu0 0
      %3049 = vmatprep.subr.bf16.mxu0 0
      %3050 = vmatpush1.bf16.msra.mxu0 0
      %3051 = vmatprep.subr.bf16.mxu0 0
      %3052 = vmatpush1.bf16.msra.mxu0 0
      %3053 = vmatprep.subr.bf16.mxu0 0
      %3054 = vmatpush1.bf16.msra.mxu0 0
      %3055 = vmatprep.subr.bf16.mxu0 0
      %3056 = vmatpush1.bf16.msra.mxu0 0
      %3057 = vmatprep.subr.bf16.mxu0 0
      %3058 = vmatpush1.bf16.msra.mxu0 0
      %3059 = vmatprep.subr.bf16.mxu0 0
      %3060 = vmatpush1.bf16.msra.mxu0 0
      %3061 = vmatprep.subr.bf16.mxu0 0
      %3062 = vmatpush1.bf16.msra.mxu0 0
      %3063 = vmatprep.mubr.bf16.mxu0 0
      %3064 = vmatmul.mubr.bf16.gmra.mrb[0].mxu0 %v2964
      %v3065 = vpop.f32.mrb[0].mxu0
      %v3066 = vadd.f32 0.0, %v3065
      %v3067 = vpop.f32.mrb[0].mxu0
      %v3068 = vadd.f32 0.0, %v3067
      %v3069 = vpop.f32.mrb[0].mxu0
      %v3070 = vpop.f32.mrb[0].mxu0
      %3071 = vdwg.mxu0
      %3072 = vmatprep.subr.bf16.mxu0 %v2982
      %3073 = vmatpush1.bf16.msra.mxu0 %v2979
      %3074 = vmatprep.subr.bf16.mxu0 0
      %3075 = vmatpush1.bf16.msra.mxu0 0
      %3076 = vmatprep.subr.bf16.mxu0 0
      %3077 = vmatpush1.bf16.msra.mxu0 0
      %3078 = vmatprep.subr.bf16.mxu0 0
      %3079 = vmatpush1.bf16.msra.mxu0 0
      %3080 = vmatprep.subr.bf16.mxu0 0
      %3081 = vmatpush1.bf16.msra.mxu0 0
      %3082 = vmatprep.subr.bf16.mxu0 0
      %3083 = vmatpush1.bf16.msra.mxu0 0
      %3084 = vmatprep.subr.bf16.mxu0 0
      %3085 = vmatpush1.bf16.msra.mxu0 0
      %3086 = vmatprep.subr.bf16.mxu0 0
      %3087 = vmatpush1.bf16.msra.mxu0 0
      %3088 = vmatprep.subr.bf16.mxu0 0
      %3089 = vmatpush1.bf16.msra.mxu0 0
      %3090 = vmatprep.subr.bf16.mxu0 0
      %3091 = vmatpush1.bf16.msra.mxu0 0
      %3092 = vmatprep.subr.bf16.mxu0 0
      %3093 = vmatpush1.bf16.msra.mxu0 0
      %3094 = vmatprep.subr.bf16.mxu0 0
      %3095 = vmatpush1.bf16.msra.mxu0 0
      %3096 = vmatprep.subr.bf16.mxu0 0
      %3097 = vmatpush1.bf16.msra.mxu0 0
      %3098 = vmatprep.subr.bf16.mxu0 0
      %3099 = vmatpush1.bf16.msra.mxu0 0
      %3100 = vmatprep.subr.bf16.mxu0 0
      %3101 = vmatpush1.bf16.msra.mxu0 0
      %3102 = vmatprep.subr.bf16.mxu0 0
      %3103 = vmatpush1.bf16.msra.mxu0 0
      %3104 = vmatprep.mubr.bf16.mxu0 0
      %3105 = vmatmul.mubr.bf16.gmra.mrb[0].mxu0 %v2964
      %v3106 = vpop.f32.mrb[0].mxu0
      %v3107 = vadd.f32 0.0, %v3106
      %v3108 = vpop.f32.mrb[0].mxu0
      %v3109 = vadd.f32 0.0, %v3108
      %v3110 = vpop.f32.mrb[0].mxu0
      %v3111 = vpop.f32.mrb[0].mxu0
      %3112 = vdwg.mxu0
      %3113 = vmatprep.subr.bf16.mxu0 %v2988
      %3114 = vmatpush1.bf16.msra.mxu0 %v2985
      %3115 = vmatprep.subr.bf16.mxu0 0
      %3116 = vmatpush1.bf16.msra.mxu0 0
      %3117 = vmatprep.subr.bf16.mxu0 0
      %3118 = vmatpush1.bf16.msra.mxu0 0
      %3119 = vmatprep.subr.bf16.mxu0 0
      %3120 = vmatpush1.bf16.msra.mxu0 0
      %3121 = vmatprep.subr.bf16.mxu0 0
      %3122 = vmatpush1.bf16.msra.mxu0 0
      %3123 = vmatprep.subr.bf16.mxu0 0
      %3124 = vmatpush1.bf16.msra.mxu0 0
      %3125 = vmatprep.subr.bf16.mxu0 0
      %3126 = vmatpush1.bf16.msra.mxu0 0
      %3127 = vmatprep.subr.bf16.mxu0 0
      %3128 = vmatpush1.bf16.msra.mxu0 0
      %3129 = vmatprep.subr.bf16.mxu0 0
      %3130 = vmatpush1.bf16.msra.mxu0 0
      %3131 = vmatprep.subr.bf16.mxu0 0
      %3132 = vmatpush1.bf16.msra.mxu0 0
      %3133 = vmatprep.subr.bf16.mxu0 0
      %3134 = vmatpush1.bf16.msra.mxu0 0
      %3135 = vmatprep.subr.bf16.mxu0 0
      %3136 = vmatpush1.bf16.msra.mxu0 0
      %3137 = vmatprep.subr.bf16.mxu0 0
      %3138 = vmatpush1.bf16.msra.mxu0 0
      %3139 = vmatprep.subr.bf16.mxu0 0
      %3140 = vmatpush1.bf16.msra.mxu0 0
      %3141 = vmatprep.subr.bf16.mxu0 0
      %3142 = vmatpush1.bf16.msra.mxu0 0
      %3143 = vmatprep.subr.bf16.mxu0 0
      %3144 = vmatpush1.bf16.msra.mxu0 0
      %3145 = vmatprep.mubr.bf16.mxu0 0
      %3146 = vmatmul.mubr.bf16.gmra.mrb[0].mxu0 %v2964
      %v3147 = vpop.f32.mrb[0].mxu0
      %v3148 = vadd.f32 0.0, %v3147
      %v3149 = vpop.f32.mrb[0].mxu0
      %v3150 = vadd.f32 0.0, %v3149
      %v3151 = vpop.f32.mrb[0].mxu0
      %v3152 = vpop.f32.mrb[0].mxu0
      %3153 = vdwg.mxu0
      %v3154 = vadd.f32 %v2879, %v3025
      %v3155 = vadd.f32 %v2880, %v3027
      %v3156 = vadd.f32 %v2881, %v3066
      %v3157 = vadd.f32 %v2882, %v3068
      %v3158 = vadd.f32 %v2883, %v3107
      %v3159 = vadd.f32 %v2884, %v3109
      %v3160 = vadd.f32 %v2885, %v3148
      %v3161 = vadd.f32 %v2886, %v3150
      %v3162 = vld [vmem:[%s219] sm:$0xff]
      %v3163 = vld [vmem:[%s219 + $0x8] sm:$0xff]
      %v3164 = vld [vmem:[%s219 + $0x10] sm:$0x3]
      %s3165 = scalar_lea.vmem %s1, 44
      %v3166 = vld [vmem:[%s3165] sm:$0xf]
      %v3170 = vcombine.high %v3162, %v3162
      %v3172 = vunpack.c.l.s4 1983009808
      %v3173 = vunpack.c.0.s8 %v3172
      %v3174 = vlaneseq
      %v3175 = vshrl.u32 %v3174, 7
      %v3176 = vsub.s32 %v3173, %v3175
      %v3177 = vrot.slane %v3162, %v3176
      %v3179 = vunpack.c.l.s4 1983009808
      %v3180 = vunpack.c.0.s8 %v3179
      %v3181 = vlaneseq
      %v3182 = vshrl.u32 %v3181, 7
      %v3183 = vsub.s32 %v3180, %v3182
      %v3184 = vrot.slane %v3170, %v3183
      %v3185 = vcombine.high %v3177, %v3177
      %v3186 = vcombine.high %v3184, %v3184
      %v3187 = vcombine.high %v3163, %v3163
      %v3189 = vunpack.c.l.s4 1983009808
      %v3190 = vunpack.c.0.s8 %v3189
      %v3191 = vlaneseq
      %v3192 = vshrl.u32 %v3191, 7
      %v3193 = vsub.s32 %v3190, %v3192
      %v3194 = vrot.slane %v3163, %v3193
      %v3196 = vunpack.c.l.s4 1983009808
      %v3197 = vunpack.c.0.s8 %v3196
      %v3198 = vlaneseq
      %v3199 = vshrl.u32 %v3198, 7
      %v3200 = vsub.s32 %v3197, %v3199
      %v3201 = vrot.slane %v3187, %v3200
      %v3202 = vcombine.high %v3194, %v3194
      %v3203 = vcombine.high %v3201, %v3201
      %v3205 = vunpack.c.l.s4 1983009808
      %v3206 = vunpack.c.0.s8 %v3205
      %v3207 = vlaneseq
      %v3208 = vshrl.u32 %v3207, 7
      %v3209 = vsub.s32 %v3206, %v3208
      %v3210 = vrot.slane %v3164, %v3209
      %3211 = vrot.lane.b32.xlu0 %v3177, 26
      %v3212 = vpop.permute.xlu0 %3211
      %3213 = vrot.lane.b32.xlu0 %v3185, 26
      %v3214 = vpop.permute.xlu0 %3213
      %3215 = vrot.lane.b32.xlu0 %v3184, 26
      %v3216 = vpop.permute.xlu0 %3215
      %3217 = vrot.lane.b32.xlu0 %v3186, 26
      %v3218 = vpop.permute.xlu0 %3217
      %3219 = vrot.lane.b32.xlu0 %v3194, 26
      %v3220 = vpop.permute.xlu0 %3219
      %3221 = vrot.lane.b32.xlu0 %v3202, 26
      %v3222 = vpop.permute.xlu0 %3221
      %3223 = vrot.lane.b32.xlu0 %v3201, 26
      %v3224 = vpop.permute.xlu0 %3223
      %3225 = vrot.lane.b32.xlu0 %v3203, 26
      %v3226 = vpop.permute.xlu0 %3225
      %3227 = vrot.lane.b32.xlu0 %v3210, 26
      %v3228 = vpop.permute.xlu0 %3227
      %vm3229 = vcmask 211968
      %v3230 = vsel %vm3229, %v3212, %v3214
      %v3231 = vsel %vm3229, %v3214, %v3216
      %v3232 = vsel %vm3229, %v3216, %v3218
      %v3233 = vsel %vm3229, %v3218, %v3220
      %v3234 = vsel %vm3229, %v3220, %v3222
      %v3235 = vsel %vm3229, %v3222, %v3224
      %v3236 = vsel %vm3229, %v3224, %v3226
      %v3237 = vsel %vm3229, %v3226, %v3228
      %v3239 = vsel %vm303, %v3166, 0
      %v3242 = vsel %vm307, %v3230, 0
      %v3245 = vsel %vm307, %v3231, 0
      %v3248 = vsel %vm307, %v3232, 0
      %v3251 = vsel %vm307, %v3233, 0
      %v3254 = vsel %vm307, %v3234, 0
      %v3257 = vsel %vm307, %v3235, 0
      %v3260 = vsel %vm307, %v3236, 0
      %v3263 = vsel %vm307, %v3237, 0
      %3265 = vmatprep.subr.bf16.mxu0 %v3245
      %3266 = vmatpush1.bf16.msra.mxu0 %v3242
      %3267 = vmatprep.subr.bf16.mxu0 0
      %3268 = vmatpush1.bf16.msra.mxu0 0
      %3269 = vmatprep.subr.bf16.mxu0 0
      %3270 = vmatpush1.bf16.msra.mxu0 0
      %3271 = vmatprep.subr.bf16.mxu0 0
      %3272 = vmatpush1.bf16.msra.mxu0 0
      %3273 = vmatprep.subr.bf16.mxu0 0
      %3274 = vmatpush1.bf16.msra.mxu0 0
      %3275 = vmatprep.subr.bf16.mxu0 0
      %3276 = vmatpush1.bf16.msra.mxu0 0
      %3277 = vmatprep.subr.bf16.mxu0 0
      %3278 = vmatpush1.bf16.msra.mxu0 0
      %3279 = vmatprep.subr.bf16.mxu0 0
      %3280 = vmatpush1.bf16.msra.mxu0 0
      %3281 = vmatprep.subr.bf16.mxu0 0
      %3282 = vmatpush1.bf16.msra.mxu0 0
      %3283 = vmatprep.subr.bf16.mxu0 0
      %3284 = vmatpush1.bf16.msra.mxu0 0
      %3285 = vmatprep.subr.bf16.mxu0 0
      %3286 = vmatpush1.bf16.msra.mxu0 0
      %3287 = vmatprep.subr.bf16.mxu0 0
      %3288 = vmatpush1.bf16.msra.mxu0 0
      %3289 = vmatprep.subr.bf16.mxu0 0
      %3290 = vmatpush1.bf16.msra.mxu0 0
      %3291 = vmatprep.subr.bf16.mxu0 0
      %3292 = vmatpush1.bf16.msra.mxu0 0
      %3293 = vmatprep.subr.bf16.mxu0 0
      %3294 = vmatpush1.bf16.msra.mxu0 0
      %3295 = vmatprep.subr.bf16.mxu0 0
      %3296 = vmatpush1.bf16.msra.mxu0 0
      %3297 = vmatprep.mubr.bf16.mxu0 0
      %3298 = vmatmul.mubr.bf16.gmra.mrb[0].mxu0 %v3239
      %v3299 = vpop.f32.mrb[0].mxu0
      %v3300 = vadd.f32 0.0, %v3299
      %v3301 = vpop.f32.mrb[0].mxu0
      %v3302 = vadd.f32 0.0, %v3301
      %v3303 = vpop.f32.mrb[0].mxu0
      %v3304 = vpop.f32.mrb[0].mxu0
      %3305 = vdwg.mxu0
      %3306 = vmatprep.subr.bf16.mxu0 %v3251
      %3307 = vmatpush1.bf16.msra.mxu0 %v3248
      %3308 = vmatprep.subr.bf16.mxu0 0
      %3309 = vmatpush1.bf16.msra.mxu0 0
      %3310 = vmatprep.subr.bf16.mxu0 0
      %3311 = vmatpush1.bf16.msra.mxu0 0
      %3312 = vmatprep.subr.bf16.mxu0 0
      %3313 = vmatpush1.bf16.msra.mxu0 0
      %3314 = vmatprep.subr.bf16.mxu0 0
      %3315 = vmatpush1.bf16.msra.mxu0 0
      %3316 = vmatprep.subr.bf16.mxu0 0
      %3317 = vmatpush1.bf16.msra.mxu0 0
      %3318 = vmatprep.subr.bf16.mxu0 0
      %3319 = vmatpush1.bf16.msra.mxu0 0
      %3320 = vmatprep.subr.bf16.mxu0 0
      %3321 = vmatpush1.bf16.msra.mxu0 0
      %3322 = vmatprep.subr.bf16.mxu0 0
      %3323 = vmatpush1.bf16.msra.mxu0 0
      %3324 = vmatprep.subr.bf16.mxu0 0
      %3325 = vmatpush1.bf16.msra.mxu0 0
      %3326 = vmatprep.subr.bf16.mxu0 0
      %3327 = vmatpush1.bf16.msra.mxu0 0
      %3328 = vmatprep.subr.bf16.mxu0 0
      %3329 = vmatpush1.bf16.msra.mxu0 0
      %3330 = vmatprep.subr.bf16.mxu0 0
      %3331 = vmatpush1.bf16.msra.mxu0 0
      %3332 = vmatprep.subr.bf16.mxu0 0
      %3333 = vmatpush1.bf16.msra.mxu0 0
      %3334 = vmatprep.subr.bf16.mxu0 0
      %3335 = vmatpush1.bf16.msra.mxu0 0
      %3336 = vmatprep.subr.bf16.mxu0 0
      %3337 = vmatpush1.bf16.msra.mxu0 0
      %3338 = vmatprep.mubr.bf16.mxu0 0
      %3339 = vmatmul.mubr.bf16.gmra.mrb[0].mxu0 %v3239
      %v3340 = vpop.f32.mrb[0].mxu0
      %v3341 = vadd.f32 0.0, %v3340
      %v3342 = vpop.f32.mrb[0].mxu0
      %v3343 = vadd.f32 0.0, %v3342
      %v3344 = vpop.f32.mrb[0].mxu0
      %v3345 = vpop.f32.mrb[0].mxu0
      %3346 = vdwg.mxu0
      %3347 = vmatprep.subr.bf16.mxu0 %v3257
      %3348 = vmatpush1.bf16.msra.mxu0 %v3254
      %3349 = vmatprep.subr.bf16.mxu0 0
      %3350 = vmatpush1.bf16.msra.mxu0 0
      %3351 = vmatprep.subr.bf16.mxu0 0
      %3352 = vmatpush1.bf16.msra.mxu0 0
      %3353 = vmatprep.subr.bf16.mxu0 0
      %3354 = vmatpush1.bf16.msra.mxu0 0
      %3355 = vmatprep.subr.bf16.mxu0 0
      %3356 = vmatpush1.bf16.msra.mxu0 0
      %3357 = vmatprep.subr.bf16.mxu0 0
      %3358 = vmatpush1.bf16.msra.mxu0 0
      %3359 = vmatprep.subr.bf16.mxu0 0
      %3360 = vmatpush1.bf16.msra.mxu0 0
      %3361 = vmatprep.subr.bf16.mxu0 0
      %3362 = vmatpush1.bf16.msra.mxu0 0
      %3363 = vmatprep.subr.bf16.mxu0 0
      %3364 = vmatpush1.bf16.msra.mxu0 0
      %3365 = vmatprep.subr.bf16.mxu0 0
      %3366 = vmatpush1.bf16.msra.mxu0 0
      %3367 = vmatprep.subr.bf16.mxu0 0
      %3368 = vmatpush1.bf16.msra.mxu0 0
      %3369 = vmatprep.subr.bf16.mxu0 0
      %3370 = vmatpush1.bf16.msra.mxu0 0
      %3371 = vmatprep.subr.bf16.mxu0 0
      %3372 = vmatpush1.bf16.msra.mxu0 0
      %3373 = vmatprep.subr.bf16.mxu0 0
      %3374 = vmatpush1.bf16.msra.mxu0 0
      %3375 = vmatprep.subr.bf16.mxu0 0
      %3376 = vmatpush1.bf16.msra.mxu0 0
      %3377 = vmatprep.subr.bf16.mxu0 0
      %3378 = vmatpush1.bf16.msra.mxu0 0
      %3379 = vmatprep.mubr.bf16.mxu0 0
      %3380 = vmatmul.mubr.bf16.gmra.mrb[0].mxu0 %v3239
      %v3381 = vpop.f32.mrb[0].mxu0
      %v3382 = vadd.f32 0.0, %v3381
      %v3383 = vpop.f32.mrb[0].mxu0
      %v3384 = vadd.f32 0.0, %v3383
      %v3385 = vpop.f32.mrb[0].mxu0
      %v3386 = vpop.f32.mrb[0].mxu0
      %3387 = vdwg.mxu0
      %3388 = vmatprep.subr.bf16.mxu0 %v3263
      %3389 = vmatpush1.bf16.msra.mxu0 %v3260
      %3390 = vmatprep.subr.bf16.mxu0 0
      %3391 = vmatpush1.bf16.msra.mxu0 0
      %3392 = vmatprep.subr.bf16.mxu0 0
      %3393 = vmatpush1.bf16.msra.mxu0 0
      %3394 = vmatprep.subr.bf16.mxu0 0
      %3395 = vmatpush1.bf16.msra.mxu0 0
      %3396 = vmatprep.subr.bf16.mxu0 0
      %3397 = vmatpush1.bf16.msra.mxu0 0
      %3398 = vmatprep.subr.bf16.mxu0 0
      %3399 = vmatpush1.bf16.msra.mxu0 0
      %3400 = vmatprep.subr.bf16.mxu0 0
      %3401 = vmatpush1.bf16.msra.mxu0 0
      %3402 = vmatprep.subr.bf16.mxu0 0
      %3403 = vmatpush1.bf16.msra.mxu0 0
      %3404 = vmatprep.subr.bf16.mxu0 0
      %3405 = vmatpush1.bf16.msra.mxu0 0
      %3406 = vmatprep.subr.bf16.mxu0 0
      %3407 = vmatpush1.bf16.msra.mxu0 0
      %3408 = vmatprep.subr.bf16.mxu0 0
      %3409 = vmatpush1.bf16.msra.mxu0 0
      %3410 = vmatprep.subr.bf16.mxu0 0
      %3411 = vmatpush1.bf16.msra.mxu0 0
      %3412 = vmatprep.subr.bf16.mxu0 0
      %3413 = vmatpush1.bf16.msra.mxu0 0
      %3414 = vmatprep.subr.bf16.mxu0 0
      %3415 = vmatpush1.bf16.msra.mxu0 0
      %3416 = vmatprep.subr.bf16.mxu0 0
      %3417 = vmatpush1.bf16.msra.mxu0 0
      %3418 = vmatprep.subr.bf16.mxu0 0
      %3419 = vmatpush1.bf16.msra.mxu0 0
      %3420 = vmatprep.mubr.bf16.mxu0 0
      %3421 = vmatmul.mubr.bf16.gmra.mrb[0].mxu0 %v3239
      %v3422 = vpop.f32.mrb[0].mxu0
      %v3423 = vadd.f32 0.0, %v3422
      %v3424 = vpop.f32.mrb[0].mxu0
      %v3425 = vadd.f32 0.0, %v3424
      %v3426 = vpop.f32.mrb[0].mxu0
      %v3427 = vpop.f32.mrb[0].mxu0
      %3428 = vdwg.mxu0
      %v3429 = vadd.f32 %v3154, %v3300
      %v3430 = vadd.f32 %v3155, %v3302
      %v3431 = vadd.f32 %v3156, %v3341
      %v3432 = vadd.f32 %v3157, %v3343
      %v3433 = vadd.f32 %v3158, %v3382
      %v3434 = vadd.f32 %v3159, %v3384
      %v3435 = vadd.f32 %v3160, %v3423
      %v3436 = vadd.f32 %v3161, %v3425
      %v3437 = vld [vmem:[%s219] sm:$0xff]
      %v3438 = vld [vmem:[%s219 + $0x8] sm:$0xff]
      %v3439 = vld [vmem:[%s219 + $0x10] sm:$0x3]
      %s3440 = scalar_lea.vmem %s1, 48
      %v3441 = vld [vmem:[%s3440] sm:$0xf]
      %v3445 = vcombine.high %v3437, %v3437
      %v3447 = vunpack.c.l.s4 1983009808
      %v3448 = vunpack.c.0.s8 %v3447
      %v3449 = vlaneseq
      %v3450 = vshrl.u32 %v3449, 7
      %v3451 = vsub.s32 %v3448, %v3450
      %v3452 = vrot.slane %v3437, %v3451
      %v3454 = vunpack.c.l.s4 1983009808
      %v3455 = vunpack.c.0.s8 %v3454
      %v3456 = vlaneseq
      %v3457 = vshrl.u32 %v3456, 7
      %v3458 = vsub.s32 %v3455, %v3457
      %v3459 = vrot.slane %v3445, %v3458
      %v3460 = vcombine.high %v3452, %v3452
      %v3461 = vcombine.high %v3459, %v3459
      %v3462 = vcombine.high %v3438, %v3438
      %v3464 = vunpack.c.l.s4 1983009808
      %v3465 = vunpack.c.0.s8 %v3464
      %v3466 = vlaneseq
      %v3467 = vshrl.u32 %v3466, 7
      %v3468 = vsub.s32 %v3465, %v3467
      %v3469 = vrot.slane %v3438, %v3468
      %v3471 = vunpack.c.l.s4 1983009808
      %v3472 = vunpack.c.0.s8 %v3471
      %v3473 = vlaneseq
      %v3474 = vshrl.u32 %v3473, 7
      %v3475 = vsub.s32 %v3472, %v3474
      %v3476 = vrot.slane %v3462, %v3475
      %v3477 = vcombine.high %v3469, %v3469
      %v3478 = vcombine.high %v3476, %v3476
      %v3480 = vunpack.c.l.s4 1983009808
      %v3481 = vunpack.c.0.s8 %v3480
      %v3482 = vlaneseq
      %v3483 = vshrl.u32 %v3482, 7
      %v3484 = vsub.s32 %v3481, %v3483
      %v3485 = vrot.slane %v3439, %v3484
      %3486 = vrot.lane.b32.xlu0 %v3452, 18
      %v3487 = vpop.permute.xlu0 %3486
      %3488 = vrot.lane.b32.xlu0 %v3460, 18
      %v3489 = vpop.permute.xlu0 %3488
      %3490 = vrot.lane.b32.xlu0 %v3459, 18
      %v3491 = vpop.permute.xlu0 %3490
      %3492 = vrot.lane.b32.xlu0 %v3461, 18
      %v3493 = vpop.permute.xlu0 %3492
      %3494 = vrot.lane.b32.xlu0 %v3469, 18
      %v3495 = vpop.permute.xlu0 %3494
      %3496 = vrot.lane.b32.xlu0 %v3477, 18
      %v3497 = vpop.permute.xlu0 %3496
      %3498 = vrot.lane.b32.xlu0 %v3476, 18
      %v3499 = vpop.permute.xlu0 %3498
      %3500 = vrot.lane.b32.xlu0 %v3478, 18
      %v3501 = vpop.permute.xlu0 %3500
      %3502 = vrot.lane.b32.xlu0 %v3485, 18
      %v3503 = vpop.permute.xlu0 %3502
      %vm3504 = vcmask 146432
      %v3505 = vsel %vm3504, %v3487, %v3489
      %v3506 = vsel %vm3504, %v3489, %v3491
      %v3507 = vsel %vm3504, %v3491, %v3493
      %v3508 = vsel %vm3504, %v3493, %v3495
      %v3509 = vsel %vm3504, %v3495, %v3497
      %v3510 = vsel %vm3504, %v3497, %v3499
      %v3511 = vsel %vm3504, %v3499, %v3501
      %v3512 = vsel %vm3504, %v3501, %v3503
      %v3514 = vsel %vm303, %v3441, 0
      %v3517 = vsel %vm307, %v3505, 0
      %v3520 = vsel %vm307, %v3506, 0
      %v3523 = vsel %vm307, %v3507, 0
      %v3526 = vsel %vm307, %v3508, 0
      %v3529 = vsel %vm307, %v3509, 0
      %v3532 = vsel %vm307, %v3510, 0
      %v3535 = vsel %vm307, %v3511, 0
      %v3538 = vsel %vm307, %v3512, 0
      %3540 = vmatprep.subr.bf16.mxu0 %v3520
      %3541 = vmatpush1.bf16.msra.mxu0 %v3517
      %3542 = vmatprep.subr.bf16.mxu0 0
      %3543 = vmatpush1.bf16.msra.mxu0 0
      %3544 = vmatprep.subr.bf16.mxu0 0
      %3545 = vmatpush1.bf16.msra.mxu0 0
      %3546 = vmatprep.subr.bf16.mxu0 0
      %3547 = vmatpush1.bf16.msra.mxu0 0
      %3548 = vmatprep.subr.bf16.mxu0 0
      %3549 = vmatpush1.bf16.msra.mxu0 0
      %3550 = vmatprep.subr.bf16.mxu0 0
      %3551 = vmatpush1.bf16.msra.mxu0 0
      %3552 = vmatprep.subr.bf16.mxu0 0
      %3553 = vmatpush1.bf16.msra.mxu0 0
      %3554 = vmatprep.subr.bf16.mxu0 0
      %3555 = vmatpush1.bf16.msra.mxu0 0
      %3556 = vmatprep.subr.bf16.mxu0 0
      %3557 = vmatpush1.bf16.msra.mxu0 0
      %3558 = vmatprep.subr.bf16.mxu0 0
      %3559 = vmatpush1.bf16.msra.mxu0 0
      %3560 = vmatprep.subr.bf16.mxu0 0
      %3561 = vmatpush1.bf16.msra.mxu0 0
      %3562 = vmatprep.subr.bf16.mxu0 0
      %3563 = vmatpush1.bf16.msra.mxu0 0
      %3564 = vmatprep.subr.bf16.mxu0 0
      %3565 = vmatpush1.bf16.msra.mxu0 0
      %3566 = vmatprep.subr.bf16.mxu0 0
      %3567 = vmatpush1.bf16.msra.mxu0 0
      %3568 = vmatprep.subr.bf16.mxu0 0
      %3569 = vmatpush1.bf16.msra.mxu0 0
      %3570 = vmatprep.subr.bf16.mxu0 0
      %3571 = vmatpush1.bf16.msra.mxu0 0
      %3572 = vmatprep.mubr.bf16.mxu0 0
      %3573 = vmatmul.mubr.bf16.gmra.mrb[0].mxu0 %v3514
      %v3574 = vpop.f32.mrb[0].mxu0
      %v3575 = vadd.f32 0.0, %v3574
      %v3576 = vpop.f32.mrb[0].mxu0
      %v3577 = vadd.f32 0.0, %v3576
      %v3578 = vpop.f32.mrb[0].mxu0
      %v3579 = vpop.f32.mrb[0].mxu0
      %3580 = vdwg.mxu0
      %3581 = vmatprep.subr.bf16.mxu0 %v3526
      %3582 = vmatpush1.bf16.msra.mxu0 %v3523
      %3583 = vmatprep.subr.bf16.mxu0 0
      %3584 = vmatpush1.bf16.msra.mxu0 0
      %3585 = vmatprep.subr.bf16.mxu0 0
      %3586 = vmatpush1.bf16.msra.mxu0 0
      %3587 = vmatprep.subr.bf16.mxu0 0
      %3588 = vmatpush1.bf16.msra.mxu0 0
      %3589 = vmatprep.subr.bf16.mxu0 0
      %3590 = vmatpush1.bf16.msra.mxu0 0
      %3591 = vmatprep.subr.bf16.mxu0 0
      %3592 = vmatpush1.bf16.msra.mxu0 0
      %3593 = vmatprep.subr.bf16.mxu0 0
      %3594 = vmatpush1.bf16.msra.mxu0 0
      %3595 = vmatprep.subr.bf16.mxu0 0
      %3596 = vmatpush1.bf16.msra.mxu0 0
      %3597 = vmatprep.subr.bf16.mxu0 0
      %3598 = vmatpush1.bf16.msra.mxu0 0
      %3599 = vmatprep.subr.bf16.mxu0 0
      %3600 = vmatpush1.bf16.msra.mxu0 0
      %3601 = vmatprep.subr.bf16.mxu0 0
      %3602 = vmatpush1.bf16.msra.mxu0 0
      %3603 = vmatprep.subr.bf16.mxu0 0
      %3604 = vmatpush1.bf16.msra.mxu0 0
      %3605 = vmatprep.subr.bf16.mxu0 0
      %3606 = vmatpush1.bf16.msra.mxu0 0
      %3607 = vmatprep.subr.bf16.mxu0 0
      %3608 = vmatpush1.bf16.msra.mxu0 0
      %3609 = vmatprep.subr.bf16.mxu0 0
      %3610 = vmatpush1.bf16.msra.mxu0 0
      %3611 = vmatprep.subr.bf16.mxu0 0
      %3612 = vmatpush1.bf16.msra.mxu0 0
      %3613 = vmatprep.mubr.bf16.mxu0 0
      %3614 = vmatmul.mubr.bf16.gmra.mrb[0].mxu0 %v3514
      %v3615 = vpop.f32.mrb[0].mxu0
      %v3616 = vadd.f32 0.0, %v3615
      %v3617 = vpop.f32.mrb[0].mxu0
      %v3618 = vadd.f32 0.0, %v3617
      %v3619 = vpop.f32.mrb[0].mxu0
      %v3620 = vpop.f32.mrb[0].mxu0
      %3621 = vdwg.mxu0
      %3622 = vmatprep.subr.bf16.mxu0 %v3532
      %3623 = vmatpush1.bf16.msra.mxu0 %v3529
      %3624 = vmatprep.subr.bf16.mxu0 0
      %3625 = vmatpush1.bf16.msra.mxu0 0
      %3626 = vmatprep.subr.bf16.mxu0 0
      %3627 = vmatpush1.bf16.msra.mxu0 0
      %3628 = vmatprep.subr.bf16.mxu0 0
      %3629 = vmatpush1.bf16.msra.mxu0 0
      %3630 = vmatprep.subr.bf16.mxu0 0
      %3631 = vmatpush1.bf16.msra.mxu0 0
      %3632 = vmatprep.subr.bf16.mxu0 0
      %3633 = vmatpush1.bf16.msra.mxu0 0
      %3634 = vmatprep.subr.bf16.mxu0 0
      %3635 = vmatpush1.bf16.msra.mxu0 0
      %3636 = vmatprep.subr.bf16.mxu0 0
      %3637 = vmatpush1.bf16.msra.mxu0 0
      %3638 = vmatprep.subr.bf16.mxu0 0
      %3639 = vmatpush1.bf16.msra.mxu0 0
      %3640 = vmatprep.subr.bf16.mxu0 0
      %3641 = vmatpush1.bf16.msra.mxu0 0
      %3642 = vmatprep.subr.bf16.mxu0 0
      %3643 = vmatpush1.bf16.msra.mxu0 0
      %3644 = vmatprep.subr.bf16.mxu0 0
      %3645 = vmatpush1.bf16.msra.mxu0 0
      %3646 = vmatprep.subr.bf16.mxu0 0
      %3647 = vmatpush1.bf16.msra.mxu0 0
      %3648 = vmatprep.subr.bf16.mxu0 0
      %3649 = vmatpush1.bf16.msra.mxu0 0
      %3650 = vmatprep.subr.bf16.mxu0 0
      %3651 = vmatpush1.bf16.msra.mxu0 0
      %3652 = vmatprep.subr.bf16.mxu0 0
      %3653 = vmatpush1.bf16.msra.mxu0 0
      %3654 = vmatprep.mubr.bf16.mxu0 0
      %3655 = vmatmul.mubr.bf16.gmra.mrb[0].mxu0 %v3514
      %v3656 = vpop.f32.mrb[0].mxu0
      %v3657 = vadd.f32 0.0, %v3656
      %v3658 = vpop.f32.mrb[0].mxu0
      %v3659 = vadd.f32 0.0, %v3658
      %v3660 = vpop.f32.mrb[0].mxu0
      %v3661 = vpop.f32.mrb[0].mxu0
      %3662 = vdwg.mxu0
      %3663 = vmatprep.subr.bf16.mxu0 %v3538
      %3664 = vmatpush1.bf16.msra.mxu0 %v3535
      %3665 = vmatprep.subr.bf16.mxu0 0
      %3666 = vmatpush1.bf16.msra.mxu0 0
      %3667 = vmatprep.subr.bf16.mxu0 0
      %3668 = vmatpush1.bf16.msra.mxu0 0
      %3669 = vmatprep.subr.bf16.mxu0 0
      %3670 = vmatpush1.bf16.msra.mxu0 0
      %3671 = vmatprep.subr.bf16.mxu0 0
      %3672 = vmatpush1.bf16.msra.mxu0 0
      %3673 = vmatprep.subr.bf16.mxu0 0
      %3674 = vmatpush1.bf16.msra.mxu0 0
      %3675 = vmatprep.subr.bf16.mxu0 0
      %3676 = vmatpush1.bf16.msra.mxu0 0
      %3677 = vmatprep.subr.bf16.mxu0 0
      %3678 = vmatpush1.bf16.msra.mxu0 0
      %3679 = vmatprep.subr.bf16.mxu0 0
      %3680 = vmatpush1.bf16.msra.mxu0 0
      %3681 = vmatprep.subr.bf16.mxu0 0
      %3682 = vmatpush1.bf16.msra.mxu0 0
      %3683 = vmatprep.subr.bf16.mxu0 0
      %3684 = vmatpush1.bf16.msra.mxu0 0
      %3685 = vmatprep.subr.bf16.mxu0 0
      %3686 = vmatpush1.bf16.msra.mxu0 0
      %3687 = vmatprep.subr.bf16.mxu0 0
      %3688 = vmatpush1.bf16.msra.mxu0 0
      %3689 = vmatprep.subr.bf16.mxu0 0
      %3690 = vmatpush1.bf16.msra.mxu0 0
      %3691 = vmatprep.subr.bf16.mxu0 0
      %3692 = vmatpush1.bf16.msra.mxu0 0
      %3693 = vmatprep.subr.bf16.mxu0 0
      %3694 = vmatpush1.bf16.msra.mxu0 0
      %3695 = vmatprep.mubr.bf16.mxu0 0
      %3696 = vmatmul.mubr.bf16.gmra.mrb[0].mxu0 %v3514
      %v3697 = vpop.f32.mrb[0].mxu0
      %v3698 = vadd.f32 0.0, %v3697
      %v3699 = vpop.f32.mrb[0].mxu0
      %v3700 = vadd.f32 0.0, %v3699
      %v3701 = vpop.f32.mrb[0].mxu0
      %v3702 = vpop.f32.mrb[0].mxu0
      %3703 = vdwg.mxu0
      %v3704 = vadd.f32 %v3429, %v3575
      %v3705 = vadd.f32 %v3430, %v3577
      %v3706 = vadd.f32 %v3431, %v3616
      %v3707 = vadd.f32 %v3432, %v3618
      %v3708 = vadd.f32 %v3433, %v3657
      %v3709 = vadd.f32 %v3434, %v3659
      %v3710 = vadd.f32 %v3435, %v3698
      %v3711 = vadd.f32 %v3436, %v3700
      %v3712 = vld [vmem:[%s219] sm:$0xff]
      %v3713 = vld [vmem:[%s219 + $0x8] sm:$0xff]
      %v3714 = vld [vmem:[%s219 + $0x10] sm:$0x3]
      %s3715 = scalar_lea.vmem %s1, 52
      %v3716 = vld [vmem:[%s3715] sm:$0xf]
      %v3720 = vcombine.high %v3712, %v3712
      %v3722 = vunpack.c.l.s4 1983009808
      %v3723 = vunpack.c.0.s8 %v3722
      %v3724 = vlaneseq
      %v3725 = vshrl.u32 %v3724, 7
      %v3726 = vsub.s32 %v3723, %v3725
      %v3727 = vrot.slane %v3712, %v3726
      %v3729 = vunpack.c.l.s4 1983009808
      %v3730 = vunpack.c.0.s8 %v3729
      %v3731 = vlaneseq
      %v3732 = vshrl.u32 %v3731, 7
      %v3733 = vsub.s32 %v3730, %v3732
      %v3734 = vrot.slane %v3720, %v3733
      %v3735 = vcombine.high %v3727, %v3727
      %v3736 = vcombine.high %v3734, %v3734
      %v3737 = vcombine.high %v3713, %v3713
      %v3739 = vunpack.c.l.s4 1983009808
      %v3740 = vunpack.c.0.s8 %v3739
      %v3741 = vlaneseq
      %v3742 = vshrl.u32 %v3741, 7
      %v3743 = vsub.s32 %v3740, %v3742
      %v3744 = vrot.slane %v3713, %v3743
      %v3746 = vunpack.c.l.s4 1983009808
      %v3747 = vunpack.c.0.s8 %v3746
      %v3748 = vlaneseq
      %v3749 = vshrl.u32 %v3748, 7
      %v3750 = vsub.s32 %v3747, %v3749
      %v3751 = vrot.slane %v3737, %v3750
      %v3752 = vcombine.high %v3744, %v3744
      %v3753 = vcombine.high %v3751, %v3751
      %v3755 = vunpack.c.l.s4 1983009808
      %v3756 = vunpack.c.0.s8 %v3755
      %v3757 = vlaneseq
      %v3758 = vshrl.u32 %v3757, 7
      %v3759 = vsub.s32 %v3756, %v3758
      %v3760 = vrot.slane %v3714, %v3759
      %3761 = vrot.lane.b32.xlu0 %v3727, 17
      %v3762 = vpop.permute.xlu0 %3761
      %3763 = vrot.lane.b32.xlu0 %v3735, 17
      %v3764 = vpop.permute.xlu0 %3763
      %3765 = vrot.lane.b32.xlu0 %v3734, 17
      %v3766 = vpop.permute.xlu0 %3765
      %3767 = vrot.lane.b32.xlu0 %v3736, 17
      %v3768 = vpop.permute.xlu0 %3767
      %3769 = vrot.lane.b32.xlu0 %v3744, 17
      %v3770 = vpop.permute.xlu0 %3769
      %3771 = vrot.lane.b32.xlu0 %v3752, 17
      %v3772 = vpop.permute.xlu0 %3771
      %3773 = vrot.lane.b32.xlu0 %v3751, 17
      %v3774 = vpop.permute.xlu0 %3773
      %3775 = vrot.lane.b32.xlu0 %v3753, 17
      %v3776 = vpop.permute.xlu0 %3775
      %3777 = vrot.lane.b32.xlu0 %v3760, 17
      %v3778 = vpop.permute.xlu0 %3777
      %vm3779 = vcmask 138240
      %v3780 = vsel %vm3779, %v3762, %v3764
      %v3781 = vsel %vm3779, %v3764, %v3766
      %v3782 = vsel %vm3779, %v3766, %v3768
      %v3783 = vsel %vm3779, %v3768, %v3770
      %v3784 = vsel %vm3779, %v3770, %v3772
      %v3785 = vsel %vm3779, %v3772, %v3774
      %v3786 = vsel %vm3779, %v3774, %v3776
      %v3787 = vsel %vm3779, %v3776, %v3778
      %v3789 = vsel %vm303, %v3716, 0
      %v3792 = vsel %vm307, %v3780, 0
      %v3795 = vsel %vm307, %v3781, 0
      %v3798 = vsel %vm307, %v3782, 0
      %v3801 = vsel %vm307, %v3783, 0
      %v3804 = vsel %vm307, %v3784, 0
      %v3807 = vsel %vm307, %v3785, 0
      %v3810 = vsel %vm307, %v3786, 0
      %v3813 = vsel %vm307, %v3787, 0
      %3815 = vmatprep.subr.bf16.mxu0 %v3795
      %3816 = vmatpush1.bf16.msra.mxu0 %v3792
      %3817 = vmatprep.subr.bf16.mxu0 0
      %3818 = vmatpush1.bf16.msra.mxu0 0
      %3819 = vmatprep.subr.bf16.mxu0 0
      %3820 = vmatpush1.bf16.msra.mxu0 0
      %3821 = vmatprep.subr.bf16.mxu0 0
      %3822 = vmatpush1.bf16.msra.mxu0 0
      %3823 = vmatprep.subr.bf16.mxu0 0
      %3824 = vmatpush1.bf16.msra.mxu0 0
      %3825 = vmatprep.subr.bf16.mxu0 0
      %3826 = vmatpush1.bf16.msra.mxu0 0
      %3827 = vmatprep.subr.bf16.mxu0 0
      %3828 = vmatpush1.bf16.msra.mxu0 0
      %3829 = vmatprep.subr.bf16.mxu0 0
      %3830 = vmatpush1.bf16.msra.mxu0 0
      %3831 = vmatprep.subr.bf16.mxu0 0
      %3832 = vmatpush1.bf16.msra.mxu0 0
      %3833 = vmatprep.subr.bf16.mxu0 0
      %3834 = vmatpush1.bf16.msra.mxu0 0
      %3835 = vmatprep.subr.bf16.mxu0 0
      %3836 = vmatpush1.bf16.msra.mxu0 0
      %3837 = vmatprep.subr.bf16.mxu0 0
      %3838 = vmatpush1.bf16.msra.mxu0 0
      %3839 = vmatprep.subr.bf16.mxu0 0
      %3840 = vmatpush1.bf16.msra.mxu0 0
      %3841 = vmatprep.subr.bf16.mxu0 0
      %3842 = vmatpush1.bf16.msra.mxu0 0
      %3843 = vmatprep.subr.bf16.mxu0 0
      %3844 = vmatpush1.bf16.msra.mxu0 0
      %3845 = vmatprep.subr.bf16.mxu0 0
      %3846 = vmatpush1.bf16.msra.mxu0 0
      %3847 = vmatprep.mubr.bf16.mxu0 0
      %3848 = vmatmul.mubr.bf16.gmra.mrb[0].mxu0 %v3789
      %v3849 = vpop.f32.mrb[0].mxu0
      %v3850 = vadd.f32 0.0, %v3849
      %v3851 = vpop.f32.mrb[0].mxu0
      %v3852 = vadd.f32 0.0, %v3851
      %v3853 = vpop.f32.mrb[0].mxu0
      %v3854 = vpop.f32.mrb[0].mxu0
      %3855 = vdwg.mxu0
      %3856 = vmatprep.subr.bf16.mxu0 %v3801
      %3857 = vmatpush1.bf16.msra.mxu0 %v3798
      %3858 = vmatprep.subr.bf16.mxu0 0
      %3859 = vmatpush1.bf16.msra.mxu0 0
      %3860 = vmatprep.subr.bf16.mxu0 0
      %3861 = vmatpush1.bf16.msra.mxu0 0
      %3862 = vmatprep.subr.bf16.mxu0 0
      %3863 = vmatpush1.bf16.msra.mxu0 0
      %3864 = vmatprep.subr.bf16.mxu0 0
      %3865 = vmatpush1.bf16.msra.mxu0 0
      %3866 = vmatprep.subr.bf16.mxu0 0
      %3867 = vmatpush1.bf16.msra.mxu0 0
      %3868 = vmatprep.subr.bf16.mxu0 0
      %3869 = vmatpush1.bf16.msra.mxu0 0
      %3870 = vmatprep.subr.bf16.mxu0 0
      %3871 = vmatpush1.bf16.msra.mxu0 0
      %3872 = vmatprep.subr.bf16.mxu0 0
      %3873 = vmatpush1.bf16.msra.mxu0 0
      %3874 = vmatprep.subr.bf16.mxu0 0
      %3875 = vmatpush1.bf16.msra.mxu0 0
      %3876 = vmatprep.subr.bf16.mxu0 0
      %3877 = vmatpush1.bf16.msra.mxu0 0
      %3878 = vmatprep.subr.bf16.mxu0 0
      %3879 = vmatpush1.bf16.msra.mxu0 0
      %3880 = vmatprep.subr.bf16.mxu0 0
      %3881 = vmatpush1.bf16.msra.mxu0 0
      %3882 = vmatprep.subr.bf16.mxu0 0
      %3883 = vmatpush1.bf16.msra.mxu0 0
      %3884 = vmatprep.subr.bf16.mxu0 0
      %3885 = vmatpush1.bf16.msra.mxu0 0
      %3886 = vmatprep.subr.bf16.mxu0 0
      %3887 = vmatpush1.bf16.msra.mxu0 0
      %3888 = vmatprep.mubr.bf16.mxu0 0
      %3889 = vmatmul.mubr.bf16.gmra.mrb[0].mxu0 %v3789
      %v3890 = vpop.f32.mrb[0].mxu0
      %v3891 = vadd.f32 0.0, %v3890
      %v3892 = vpop.f32.mrb[0].mxu0
      %v3893 = vadd.f32 0.0, %v3892
      %v3894 = vpop.f32.mrb[0].mxu0
      %v3895 = vpop.f32.mrb[0].mxu0
      %3896 = vdwg.mxu0
      %3897 = vmatprep.subr.bf16.mxu0 %v3807
      %3898 = vmatpush1.bf16.msra.mxu0 %v3804
      %3899 = vmatprep.subr.bf16.mxu0 0
      %3900 = vmatpush1.bf16.msra.mxu0 0
      %3901 = vmatprep.subr.bf16.mxu0 0
      %3902 = vmatpush1.bf16.msra.mxu0 0
      %3903 = vmatprep.subr.bf16.mxu0 0
      %3904 = vmatpush1.bf16.msra.mxu0 0
      %3905 = vmatprep.subr.bf16.mxu0 0
      %3906 = vmatpush1.bf16.msra.mxu0 0
      %3907 = vmatprep.subr.bf16.mxu0 0
      %3908 = vmatpush1.bf16.msra.mxu0 0
      %3909 = vmatprep.subr.bf16.mxu0 0
      %3910 = vmatpush1.bf16.msra.mxu0 0
      %3911 = vmatprep.subr.bf16.mxu0 0
      %3912 = vmatpush1.bf16.msra.mxu0 0
      %3913 = vmatprep.subr.bf16.mxu0 0
      %3914 = vmatpush1.bf16.msra.mxu0 0
      %3915 = vmatprep.subr.bf16.mxu0 0
      %3916 = vmatpush1.bf16.msra.mxu0 0
      %3917 = vmatprep.subr.bf16.mxu0 0
      %3918 = vmatpush1.bf16.msra.mxu0 0
      %3919 = vmatprep.subr.bf16.mxu0 0
      %3920 = vmatpush1.bf16.msra.mxu0 0
      %3921 = vmatprep.subr.bf16.mxu0 0
      %3922 = vmatpush1.bf16.msra.mxu0 0
      %3923 = vmatprep.subr.bf16.mxu0 0
      %3924 = vmatpush1.bf16.msra.mxu0 0
      %3925 = vmatprep.subr.bf16.mxu0 0
      %3926 = vmatpush1.bf16.msra.mxu0 0
      %3927 = vmatprep.subr.bf16.mxu0 0
      %3928 = vmatpush1.bf16.msra.mxu0 0
      %3929 = vmatprep.mubr.bf16.mxu0 0
      %3930 = vmatmul.mubr.bf16.gmra.mrb[0].mxu0 %v3789
      %v3931 = vpop.f32.mrb[0].mxu0
      %v3932 = vadd.f32 0.0, %v3931
      %v3933 = vpop.f32.mrb[0].mxu0
      %v3934 = vadd.f32 0.0, %v3933
      %v3935 = vpop.f32.mrb[0].mxu0
      %v3936 = vpop.f32.mrb[0].mxu0
      %3937 = vdwg.mxu0
      %3938 = vmatprep.subr.bf16.mxu0 %v3813
      %3939 = vmatpush1.bf16.msra.mxu0 %v3810
      %3940 = vmatprep.subr.bf16.mxu0 0
      %3941 = vmatpush1.bf16.msra.mxu0 0
      %3942 = vmatprep.subr.bf16.mxu0 0
      %3943 = vmatpush1.bf16.msra.mxu0 0
      %3944 = vmatprep.subr.bf16.mxu0 0
      %3945 = vmatpush1.bf16.msra.mxu0 0
      %3946 = vmatprep.subr.bf16.mxu0 0
      %3947 = vmatpush1.bf16.msra.mxu0 0
      %3948 = vmatprep.subr.bf16.mxu0 0
      %3949 = vmatpush1.bf16.msra.mxu0 0
      %3950 = vmatprep.subr.bf16.mxu0 0
      %3951 = vmatpush1.bf16.msra.mxu0 0
      %3952 = vmatprep.subr.bf16.mxu0 0
      %3953 = vmatpush1.bf16.msra.mxu0 0
      %3954 = vmatprep.subr.bf16.mxu0 0
      %3955 = vmatpush1.bf16.msra.mxu0 0
      %3956 = vmatprep.subr.bf16.mxu0 0
      %3957 = vmatpush1.bf16.msra.mxu0 0
      %3958 = vmatprep.subr.bf16.mxu0 0
      %3959 = vmatpush1.bf16.msra.mxu0 0
      %3960 = vmatprep.subr.bf16.mxu0 0
      %3961 = vmatpush1.bf16.msra.mxu0 0
      %3962 = vmatprep.subr.bf16.mxu0 0
      %3963 = vmatpush1.bf16.msra.mxu0 0
      %3964 = vmatprep.subr.bf16.mxu0 0
      %3965 = vmatpush1.bf16.msra.mxu0 0
      %3966 = vmatprep.subr.bf16.mxu0 0
      %3967 = vmatpush1.bf16.msra.mxu0 0
      %3968 = vmatprep.subr.bf16.mxu0 0
      %3969 = vmatpush1.bf16.msra.mxu0 0
      %3970 = vmatprep.mubr.bf16.mxu0 0
      %3971 = vmatmul.mubr.bf16.gmra.mrb[0].mxu0 %v3789
      %v3972 = vpop.f32.mrb[0].mxu0
      %v3973 = vadd.f32 0.0, %v3972
      %v3974 = vpop.f32.mrb[0].mxu0
      %v3975 = vadd.f32 0.0, %v3974
      %v3976 = vpop.f32.mrb[0].mxu0
      %v3977 = vpop.f32.mrb[0].mxu0
      %3978 = vdwg.mxu0
      %v3979 = vadd.f32 %v3704, %v3850
      %v3980 = vadd.f32 %v3705, %v3852
      %v3981 = vadd.f32 %v3706, %v3891
      %v3982 = vadd.f32 %v3707, %v3893
      %v3983 = vadd.f32 %v3708, %v3932
      %v3984 = vadd.f32 %v3709, %v3934
      %v3985 = vadd.f32 %v3710, %v3973
      %v3986 = vadd.f32 %v3711, %v3975
      %v3987 = vld [vmem:[%s219] sm:$0xff]
      %v3988 = vld [vmem:[%s219 + $0x8] sm:$0xff]
      %v3989 = vld [vmem:[%s219 + $0x10] sm:$0x3]
      %s3990 = scalar_lea.vmem %s1, 56
      %v3991 = vld [vmem:[%s3990] sm:$0xf]
      %v3995 = vcombine.high %v3987, %v3987
      %v3997 = vunpack.c.l.s4 1983009808
      %v3998 = vunpack.c.0.s8 %v3997
      %v3999 = vlaneseq
      %v4000 = vshrl.u32 %v3999, 7
      %v4001 = vsub.s32 %v3998, %v4000
      %v4002 = vrot.slane %v3987, %v4001
      %v4004 = vunpack.c.l.s4 1983009808
      %v4005 = vunpack.c.0.s8 %v4004
      %v4006 = vlaneseq
      %v4007 = vshrl.u32 %v4006, 7
      %v4008 = vsub.s32 %v4005, %v4007
      %v4009 = vrot.slane %v3995, %v4008
      %v4010 = vcombine.high %v4002, %v4002
      %v4011 = vcombine.high %v4009, %v4009
      %v4012 = vcombine.high %v3988, %v3988
      %v4014 = vunpack.c.l.s4 1983009808
      %v4015 = vunpack.c.0.s8 %v4014
      %v4016 = vlaneseq
      %v4017 = vshrl.u32 %v4016, 7
      %v4018 = vsub.s32 %v4015, %v4017
      %v4019 = vrot.slane %v3988, %v4018
      %v4021 = vunpack.c.l.s4 1983009808
      %v4022 = vunpack.c.0.s8 %v4021
      %v4023 = vlaneseq
      %v4024 = vshrl.u32 %v4023, 7
      %v4025 = vsub.s32 %v4022, %v4024
      %v4026 = vrot.slane %v4012, %v4025
      %v4027 = vcombine.high %v4019, %v4019
      %v4028 = vcombine.high %v4026, %v4026
      %v4030 = vunpack.c.l.s4 1983009808
      %v4031 = vunpack.c.0.s8 %v4030
      %v4032 = vlaneseq
      %v4033 = vshrl.u32 %v4032, 7
      %v4034 = vsub.s32 %v4031, %v4033
      %v4035 = vrot.slane %v3989, %v4034
      %4036 = vrot.lane.b32.xlu0 %v4002, 16
      %v4037 = vpop.permute.xlu0 %4036
      %4038 = vrot.lane.b32.xlu0 %v4010, 16
      %v4039 = vpop.permute.xlu0 %4038
      %4040 = vrot.lane.b32.xlu0 %v4009, 16
      %v4041 = vpop.permute.xlu0 %4040
      %4042 = vrot.lane.b32.xlu0 %v4011, 16
      %v4043 = vpop.permute.xlu0 %4042
      %4044 = vrot.lane.b32.xlu0 %v4019, 16
      %v4045 = vpop.permute.xlu0 %4044
      %4046 = vrot.lane.b32.xlu0 %v4027, 16
      %v4047 = vpop.permute.xlu0 %4046
      %4048 = vrot.lane.b32.xlu0 %v4026, 16
      %v4049 = vpop.permute.xlu0 %4048
      %4050 = vrot.lane.b32.xlu0 %v4028, 16
      %v4051 = vpop.permute.xlu0 %4050
      %4052 = vrot.lane.b32.xlu0 %v4035, 16
      %v4053 = vpop.permute.xlu0 %4052
      %vm4054 = vcmask 130048
      %v4055 = vsel %vm4054, %v4037, %v4039
      %v4056 = vsel %vm4054, %v4039, %v4041
      %v4057 = vsel %vm4054, %v4041, %v4043
      %v4058 = vsel %vm4054, %v4043, %v4045
      %v4059 = vsel %vm4054, %v4045, %v4047
      %v4060 = vsel %vm4054, %v4047, %v4049
      %v4061 = vsel %vm4054, %v4049, %v4051
      %v4062 = vsel %vm4054, %v4051, %v4053
      %v4064 = vsel %vm303, %v3991, 0
      %v4067 = vsel %vm307, %v4055, 0
      %v4070 = vsel %vm307, %v4056, 0
      %v4073 = vsel %vm307, %v4057, 0
      %v4076 = vsel %vm307, %v4058, 0
      %v4079 = vsel %vm307, %v4059, 0
      %v4082 = vsel %vm307, %v4060, 0
      %v4085 = vsel %vm307, %v4061, 0
      %v4088 = vsel %vm307, %v4062, 0
      %4090 = vmatprep.subr.bf16.mxu0 %v4070
      %4091 = vmatpush1.bf16.msra.mxu0 %v4067
      %4092 = vmatprep.subr.bf16.mxu0 0
      %4093 = vmatpush1.bf16.msra.mxu0 0
      %4094 = vmatprep.subr.bf16.mxu0 0
      %4095 = vmatpush1.bf16.msra.mxu0 0
      %4096 = vmatprep.subr.bf16.mxu0 0
      %4097 = vmatpush1.bf16.msra.mxu0 0
      %4098 = vmatprep.subr.bf16.mxu0 0
      %4099 = vmatpush1.bf16.msra.mxu0 0
      %4100 = vmatprep.subr.bf16.mxu0 0
      %4101 = vmatpush1.bf16.msra.mxu0 0
      %4102 = vmatprep.subr.bf16.mxu0 0
      %4103 = vmatpush1.bf16.msra.mxu0 0
      %4104 = vmatprep.subr.bf16.mxu0 0
      %4105 = vmatpush1.bf16.msra.mxu0 0
      %4106 = vmatprep.subr.bf16.mxu0 0
      %4107 = vmatpush1.bf16.msra.mxu0 0
      %4108 = vmatprep.subr.bf16.mxu0 0
      %4109 = vmatpush1.bf16.msra.mxu0 0
      %4110 = vmatprep.subr.bf16.mxu0 0
      %4111 = vmatpush1.bf16.msra.mxu0 0
      %4112 = vmatprep.subr.bf16.mxu0 0
      %4113 = vmatpush1.bf16.msra.mxu0 0
      %4114 = vmatprep.subr.bf16.mxu0 0
      %4115 = vmatpush1.bf16.msra.mxu0 0
      %4116 = vmatprep.subr.bf16.mxu0 0
      %4117 = vmatpush1.bf16.msra.mxu0 0
      %4118 = vmatprep.subr.bf16.mxu0 0
      %4119 = vmatpush1.bf16.msra.mxu0 0
      %4120 = vmatprep.subr.bf16.mxu0 0
      %4121 = vmatpush1.bf16.msra.mxu0 0
      %4122 = vmatprep.mubr.bf16.mxu0 0
      %4123 = vmatmul.mubr.bf16.gmra.mrb[0].mxu0 %v4064
      %v4124 = vpop.f32.mrb[0].mxu0
      %v4125 = vadd.f32 0.0, %v4124
      %v4126 = vpop.f32.mrb[0].mxu0
      %v4127 = vadd.f32 0.0, %v4126
      %v4128 = vpop.f32.mrb[0].mxu0
      %v4129 = vpop.f32.mrb[0].mxu0
      %4130 = vdwg.mxu0
      %4131 = vmatprep.subr.bf16.mxu0 %v4076
      %4132 = vmatpush1.bf16.msra.mxu0 %v4073
      %4133 = vmatprep.subr.bf16.mxu0 0
      %4134 = vmatpush1.bf16.msra.mxu0 0
      %4135 = vmatprep.subr.bf16.mxu0 0
      %4136 = vmatpush1.bf16.msra.mxu0 0
      %4137 = vmatprep.subr.bf16.mxu0 0
      %4138 = vmatpush1.bf16.msra.mxu0 0
      %4139 = vmatprep.subr.bf16.mxu0 0
      %4140 = vmatpush1.bf16.msra.mxu0 0
      %4141 = vmatprep.subr.bf16.mxu0 0
      %4142 = vmatpush1.bf16.msra.mxu0 0
      %4143 = vmatprep.subr.bf16.mxu0 0
      %4144 = vmatpush1.bf16.msra.mxu0 0
      %4145 = vmatprep.subr.bf16.mxu0 0
      %4146 = vmatpush1.bf16.msra.mxu0 0
      %4147 = vmatprep.subr.bf16.mxu0 0
      %4148 = vmatpush1.bf16.msra.mxu0 0
      %4149 = vmatprep.subr.bf16.mxu0 0
      %4150 = vmatpush1.bf16.msra.mxu0 0
      %4151 = vmatprep.subr.bf16.mxu0 0
      %4152 = vmatpush1.bf16.msra.mxu0 0
      %4153 = vmatprep.subr.bf16.mxu0 0
      %4154 = vmatpush1.bf16.msra.mxu0 0
      %4155 = vmatprep.subr.bf16.mxu0 0
      %4156 = vmatpush1.bf16.msra.mxu0 0
      %4157 = vmatprep.subr.bf16.mxu0 0
      %4158 = vmatpush1.bf16.msra.mxu0 0
      %4159 = vmatprep.subr.bf16.mxu0 0
      %4160 = vmatpush1.bf16.msra.mxu0 0
      %4161 = vmatprep.subr.bf16.mxu0 0
      %4162 = vmatpush1.bf16.msra.mxu0 0
      %4163 = vmatprep.mubr.bf16.mxu0 0
      %4164 = vmatmul.mubr.bf16.gmra.mrb[0].mxu0 %v4064
      %v4165 = vpop.f32.mrb[0].mxu0
      %v4166 = vadd.f32 0.0, %v4165
      %v4167 = vpop.f32.mrb[0].mxu0
      %v4168 = vadd.f32 0.0, %v4167
      %v4169 = vpop.f32.mrb[0].mxu0
      %v4170 = vpop.f32.mrb[0].mxu0
      %4171 = vdwg.mxu0
      %4172 = vmatprep.subr.bf16.mxu0 %v4082
      %4173 = vmatpush1.bf16.msra.mxu0 %v4079
      %4174 = vmatprep.subr.bf16.mxu0 0
      %4175 = vmatpush1.bf16.msra.mxu0 0
      %4176 = vmatprep.subr.bf16.mxu0 0
      %4177 = vmatpush1.bf16.msra.mxu0 0
      %4178 = vmatprep.subr.bf16.mxu0 0
      %4179 = vmatpush1.bf16.msra.mxu0 0
      %4180 = vmatprep.subr.bf16.mxu0 0
      %4181 = vmatpush1.bf16.msra.mxu0 0
      %4182 = vmatprep.subr.bf16.mxu0 0
      %4183 = vmatpush1.bf16.msra.mxu0 0
      %4184 = vmatprep.subr.bf16.mxu0 0
      %4185 = vmatpush1.bf16.msra.mxu0 0
      %4186 = vmatprep.subr.bf16.mxu0 0
      %4187 = vmatpush1.bf16.msra.mxu0 0
      %4188 = vmatprep.subr.bf16.mxu0 0
      %4189 = vmatpush1.bf16.msra.mxu0 0
      %4190 = vmatprep.subr.bf16.mxu0 0
      %4191 = vmatpush1.bf16.msra.mxu0 0
      %4192 = vmatprep.subr.bf16.mxu0 0
      %4193 = vmatpush1.bf16.msra.mxu0 0
      %4194 = vmatprep.subr.bf16.mxu0 0
      %4195 = vmatpush1.bf16.msra.mxu0 0
      %4196 = vmatprep.subr.bf16.mxu0 0
      %4197 = vmatpush1.bf16.msra.mxu0 0
      %4198 = vmatprep.subr.bf16.mxu0 0
      %4199 = vmatpush1.bf16.msra.mxu0 0
      %4200 = vmatprep.subr.bf16.mxu0 0
      %4201 = vmatpush1.bf16.msra.mxu0 0
      %4202 = vmatprep.subr.bf16.mxu0 0
      %4203 = vmatpush1.bf16.msra.mxu0 0
      %4204 = vmatprep.mubr.bf16.mxu0 0
      %4205 = vmatmul.mubr.bf16.gmra.mrb[0].mxu0 %v4064
      %v4206 = vpop.f32.mrb[0].mxu0
      %v4207 = vadd.f32 0.0, %v4206
      %v4208 = vpop.f32.mrb[0].mxu0
      %v4209 = vadd.f32 0.0, %v4208
      %v4210 = vpop.f32.mrb[0].mxu0
      %v4211 = vpop.f32.mrb[0].mxu0
      %4212 = vdwg.mxu0
      %4213 = vmatprep.subr.bf16.mxu0 %v4088
      %4214 = vmatpush1.bf16.msra.mxu0 %v4085
      %4215 = vmatprep.subr.bf16.mxu0 0
      %4216 = vmatpush1.bf16.msra.mxu0 0
      %4217 = vmatprep.subr.bf16.mxu0 0
      %4218 = vmatpush1.bf16.msra.mxu0 0
      %4219 = vmatprep.subr.bf16.mxu0 0
      %4220 = vmatpush1.bf16.msra.mxu0 0
      %4221 = vmatprep.subr.bf16.mxu0 0
      %4222 = vmatpush1.bf16.msra.mxu0 0
      %4223 = vmatprep.subr.bf16.mxu0 0
      %4224 = vmatpush1.bf16.msra.mxu0 0
      %4225 = vmatprep.subr.bf16.mxu0 0
      %4226 = vmatpush1.bf16.msra.mxu0 0
      %4227 = vmatprep.subr.bf16.mxu0 0
      %4228 = vmatpush1.bf16.msra.mxu0 0
      %4229 = vmatprep.subr.bf16.mxu0 0
      %4230 = vmatpush1.bf16.msra.mxu0 0
      %4231 = vmatprep.subr.bf16.mxu0 0
      %4232 = vmatpush1.bf16.msra.mxu0 0
      %4233 = vmatprep.subr.bf16.mxu0 0
      %4234 = vmatpush1.bf16.msra.mxu0 0
      %4235 = vmatprep.subr.bf16.mxu0 0
      %4236 = vmatpush1.bf16.msra.mxu0 0
      %4237 = vmatprep.subr.bf16.mxu0 0
      %4238 = vmatpush1.bf16.msra.mxu0 0
      %4239 = vmatprep.subr.bf16.mxu0 0
      %4240 = vmatpush1.bf16.msra.mxu0 0
      %4241 = vmatprep.subr.bf16.mxu0 0
      %4242 = vmatpush1.bf16.msra.mxu0 0
      %4243 = vmatprep.subr.bf16.mxu0 0
      %4244 = vmatpush1.bf16.msra.mxu0 0
      %4245 = vmatprep.mubr.bf16.mxu0 0
      %4246 = vmatmul.mubr.bf16.gmra.mrb[0].mxu0 %v4064
      %v4247 = vpop.f32.mrb[0].mxu0
      %v4248 = vadd.f32 0.0, %v4247
      %v4249 = vpop.f32.mrb[0].mxu0
      %v4250 = vadd.f32 0.0, %v4249
      %v4251 = vpop.f32.mrb[0].mxu0
      %v4252 = vpop.f32.mrb[0].mxu0
      %4253 = vdwg.mxu0
      %v4254 = vadd.f32 %v3979, %v4125
      %v4255 = vadd.f32 %v3980, %v4127
      %v4256 = vadd.f32 %v3981, %v4166
      %v4257 = vadd.f32 %v3982, %v4168
      %v4258 = vadd.f32 %v3983, %v4207
      %v4259 = vadd.f32 %v3984, %v4209
      %v4260 = vadd.f32 %v3985, %v4248
      %v4261 = vadd.f32 %v3986, %v4250
      %v4262 = vld [vmem:[%s219] sm:$0xff]
      %v4263 = vld [vmem:[%s219 + $0x8] sm:$0xff]
      %v4264 = vld [vmem:[%s219 + $0x10] sm:$0x3]
      %s4265 = scalar_lea.vmem %s1, 60
      %v4266 = vld [vmem:[%s4265] sm:$0xf]
      %v4270 = vcombine.high %v4262, %v4262
      %v4272 = vunpack.c.l.s4 1983009808
      %v4273 = vunpack.c.0.s8 %v4272
      %v4274 = vlaneseq
      %v4275 = vshrl.u32 %v4274, 7
      %v4276 = vsub.s32 %v4273, %v4275
      %v4277 = vrot.slane %v4262, %v4276
      %v4279 = vunpack.c.l.s4 1983009808
      %v4280 = vunpack.c.0.s8 %v4279
      %v4281 = vlaneseq
      %v4282 = vshrl.u32 %v4281, 7
      %v4283 = vsub.s32 %v4280, %v4282
      %v4284 = vrot.slane %v4270, %v4283
      %v4285 = vcombine.high %v4277, %v4277
      %v4286 = vcombine.high %v4284, %v4284
      %v4287 = vcombine.high %v4263, %v4263
      %v4289 = vunpack.c.l.s4 1983009808
      %v4290 = vunpack.c.0.s8 %v4289
      %v4291 = vlaneseq
      %v4292 = vshrl.u32 %v4291, 7
      %v4293 = vsub.s32 %v4290, %v4292
      %v4294 = vrot.slane %v4263, %v4293
      %v4296 = vunpack.c.l.s4 1983009808
      %v4297 = vunpack.c.0.s8 %v4296
      %v4298 = vlaneseq
      %v4299 = vshrl.u32 %v4298, 7
      %v4300 = vsub.s32 %v4297, %v4299
      %v4301 = vrot.slane %v4287, %v4300
      %v4302 = vcombine.high %v4294, %v4294
      %v4303 = vcombine.high %v4301, %v4301
      %v4305 = vunpack.c.l.s4 1983009808
      %v4306 = vunpack.c.0.s8 %v4305
      %v4307 = vlaneseq
      %v4308 = vshrl.u32 %v4307, 7
      %v4309 = vsub.s32 %v4306, %v4308
      %v4310 = vrot.slane %v4264, %v4309
      %4311 = vrot.lane.b32.xlu0 %v4277, 8
      %v4312 = vpop.permute.xlu0 %4311
      %4313 = vrot.lane.b32.xlu0 %v4285, 8
      %v4314 = vpop.permute.xlu0 %4313
      %4315 = vrot.lane.b32.xlu0 %v4284, 8
      %v4316 = vpop.permute.xlu0 %4315
      %4317 = vrot.lane.b32.xlu0 %v4286, 8
      %v4318 = vpop.permute.xlu0 %4317
      %4319 = vrot.lane.b32.xlu0 %v4294, 8
      %v4320 = vpop.permute.xlu0 %4319
      %4321 = vrot.lane.b32.xlu0 %v4302, 8
      %v4322 = vpop.permute.xlu0 %4321
      %4323 = vrot.lane.b32.xlu0 %v4301, 8
      %v4324 = vpop.permute.xlu0 %4323
      %4325 = vrot.lane.b32.xlu0 %v4303, 8
      %v4326 = vpop.permute.xlu0 %4325
      %4327 = vrot.lane.b32.xlu0 %v4310, 8
      %v4328 = vpop.permute.xlu0 %4327
      %vm4329 = vcmask 64512
      %v4330 = vsel %vm4329, %v4312, %v4314
      %v4331 = vsel %vm4329, %v4314, %v4316
      %v4332 = vsel %vm4329, %v4316, %v4318
      %v4333 = vsel %vm4329, %v4318, %v4320
      %v4334 = vsel %vm4329, %v4320, %v4322
      %v4335 = vsel %vm4329, %v4322, %v4324
      %v4336 = vsel %vm4329, %v4324, %v4326
      %v4337 = vsel %vm4329, %v4326, %v4328
      %v4339 = vsel %vm303, %v4266, 0
      %v4342 = vsel %vm307, %v4330, 0
      %v4345 = vsel %vm307, %v4331, 0
      %v4348 = vsel %vm307, %v4332, 0
      %v4351 = vsel %vm307, %v4333, 0
      %v4354 = vsel %vm307, %v4334, 0
      %v4357 = vsel %vm307, %v4335, 0
      %v4360 = vsel %vm307, %v4336, 0
      %v4363 = vsel %vm307, %v4337, 0
      %4365 = vmatprep.subr.bf16.mxu0 %v4345
      %4366 = vmatpush1.bf16.msra.mxu0 %v4342
      %4367 = vmatprep.subr.bf16.mxu0 0
      %4368 = vmatpush1.bf16.msra.mxu0 0
      %4369 = vmatprep.subr.bf16.mxu0 0
      %4370 = vmatpush1.bf16.msra.mxu0 0
      %4371 = vmatprep.subr.bf16.mxu0 0
      %4372 = vmatpush1.bf16.msra.mxu0 0
      %4373 = vmatprep.subr.bf16.mxu0 0
      %4374 = vmatpush1.bf16.msra.mxu0 0
      %4375 = vmatprep.subr.bf16.mxu0 0
      %4376 = vmatpush1.bf16.msra.mxu0 0
      %4377 = vmatprep.subr.bf16.mxu0 0
      %4378 = vmatpush1.bf16.msra.mxu0 0
      %4379 = vmatprep.subr.bf16.mxu0 0
      %4380 = vmatpush1.bf16.msra.mxu0 0
      %4381 = vmatprep.subr.bf16.mxu0 0
      %4382 = vmatpush1.bf16.msra.mxu0 0
      %4383 = vmatprep.subr.bf16.mxu0 0
      %4384 = vmatpush1.bf16.msra.mxu0 0
      %4385 = vmatprep.subr.bf16.mxu0 0
      %4386 = vmatpush1.bf16.msra.mxu0 0
      %4387 = vmatprep.subr.bf16.mxu0 0
      %4388 = vmatpush1.bf16.msra.mxu0 0
      %4389 = vmatprep.subr.bf16.mxu0 0
      %4390 = vmatpush1.bf16.msra.mxu0 0
      %4391 = vmatprep.subr.bf16.mxu0 0
      %4392 = vmatpush1.bf16.msra.mxu0 0
      %4393 = vmatprep.subr.bf16.mxu0 0
      %4394 = vmatpush1.bf16.msra.mxu0 0
      %4395 = vmatprep.subr.bf16.mxu0 0
      %4396 = vmatpush1.bf16.msra.mxu0 0
      %4397 = vmatprep.mubr.bf16.mxu0 0
      %4398 = vmatmul.mubr.bf16.gmra.mrb[0].mxu0 %v4339
      %v4399 = vpop.f32.mrb[0].mxu0
      %v4400 = vadd.f32 0.0, %v4399
      %v4401 = vpop.f32.mrb[0].mxu0
      %v4402 = vadd.f32 0.0, %v4401
      %v4403 = vpop.f32.mrb[0].mxu0
      %v4404 = vpop.f32.mrb[0].mxu0
      %4405 = vdwg.mxu0
      %4406 = vmatprep.subr.bf16.mxu0 %v4351
      %4407 = vmatpush1.bf16.msra.mxu0 %v4348
      %4408 = vmatprep.subr.bf16.mxu0 0
      %4409 = vmatpush1.bf16.msra.mxu0 0
      %4410 = vmatprep.subr.bf16.mxu0 0
      %4411 = vmatpush1.bf16.msra.mxu0 0
      %4412 = vmatprep.subr.bf16.mxu0 0
      %4413 = vmatpush1.bf16.msra.mxu0 0
      %4414 = vmatprep.subr.bf16.mxu0 0
      %4415 = vmatpush1.bf16.msra.mxu0 0
      %4416 = vmatprep.subr.bf16.mxu0 0
      %4417 = vmatpush1.bf16.msra.mxu0 0
      %4418 = vmatprep.subr.bf16.mxu0 0
      %4419 = vmatpush1.bf16.msra.mxu0 0
      %4420 = vmatprep.subr.bf16.mxu0 0
      %4421 = vmatpush1.bf16.msra.mxu0 0
      %4422 = vmatprep.subr.bf16.mxu0 0
      %4423 = vmatpush1.bf16.msra.mxu0 0
      %4424 = vmatprep.subr.bf16.mxu0 0
      %4425 = vmatpush1.bf16.msra.mxu0 0
      %4426 = vmatprep.subr.bf16.mxu0 0
      %4427 = vmatpush1.bf16.msra.mxu0 0
      %4428 = vmatprep.subr.bf16.mxu0 0
      %4429 = vmatpush1.bf16.msra.mxu0 0
      %4430 = vmatprep.subr.bf16.mxu0 0
      %4431 = vmatpush1.bf16.msra.mxu0 0
      %4432 = vmatprep.subr.bf16.mxu0 0
      %4433 = vmatpush1.bf16.msra.mxu0 0
      %4434 = vmatprep.subr.bf16.mxu0 0
      %4435 = vmatpush1.bf16.msra.mxu0 0
      %4436 = vmatprep.subr.bf16.mxu0 0
      %4437 = vmatpush1.bf16.msra.mxu0 0
      %4438 = vmatprep.mubr.bf16.mxu0 0
      %4439 = vmatmul.mubr.bf16.gmra.mrb[0].mxu0 %v4339
      %v4440 = vpop.f32.mrb[0].mxu0
      %v4441 = vadd.f32 0.0, %v4440
      %v4442 = vpop.f32.mrb[0].mxu0
      %v4443 = vadd.f32 0.0, %v4442
      %v4444 = vpop.f32.mrb[0].mxu0
      %v4445 = vpop.f32.mrb[0].mxu0
      %4446 = vdwg.mxu0
      %4447 = vmatprep.subr.bf16.mxu0 %v4357
      %4448 = vmatpush1.bf16.msra.mxu0 %v4354
      %4449 = vmatprep.subr.bf16.mxu0 0
      %4450 = vmatpush1.bf16.msra.mxu0 0
      %4451 = vmatprep.subr.bf16.mxu0 0
      %4452 = vmatpush1.bf16.msra.mxu0 0
      %4453 = vmatprep.subr.bf16.mxu0 0
      %4454 = vmatpush1.bf16.msra.mxu0 0
      %4455 = vmatprep.subr.bf16.mxu0 0
      %4456 = vmatpush1.bf16.msra.mxu0 0
      %4457 = vmatprep.subr.bf16.mxu0 0
      %4458 = vmatpush1.bf16.msra.mxu0 0
      %4459 = vmatprep.subr.bf16.mxu0 0
      %4460 = vmatpush1.bf16.msra.mxu0 0
      %4461 = vmatprep.subr.bf16.mxu0 0
      %4462 = vmatpush1.bf16.msra.mxu0 0
      %4463 = vmatprep.subr.bf16.mxu0 0
      %4464 = vmatpush1.bf16.msra.mxu0 0
      %4465 = vmatprep.subr.bf16.mxu0 0
      %4466 = vmatpush1.bf16.msra.mxu0 0
      %4467 = vmatprep.subr.bf16.mxu0 0
      %4468 = vmatpush1.bf16.msra.mxu0 0
      %4469 = vmatprep.subr.bf16.mxu0 0
      %4470 = vmatpush1.bf16.msra.mxu0 0
      %4471 = vmatprep.subr.bf16.mxu0 0
      %4472 = vmatpush1.bf16.msra.mxu0 0
      %4473 = vmatprep.subr.bf16.mxu0 0
      %4474 = vmatpush1.bf16.msra.mxu0 0
      %4475 = vmatprep.subr.bf16.mxu0 0
      %4476 = vmatpush1.bf16.msra.mxu0 0
      %4477 = vmatprep.subr.bf16.mxu0 0
      %4478 = vmatpush1.bf16.msra.mxu0 0
      %4479 = vmatprep.mubr.bf16.mxu0 0
      %4480 = vmatmul.mubr.bf16.gmra.mrb[0].mxu0 %v4339
      %v4481 = vpop.f32.mrb[0].mxu0
      %v4482 = vadd.f32 0.0, %v4481
      %v4483 = vpop.f32.mrb[0].mxu0
      %v4484 = vadd.f32 0.0, %v4483
      %v4485 = vpop.f32.mrb[0].mxu0
      %v4486 = vpop.f32.mrb[0].mxu0
      %4487 = vdwg.mxu0
      %4488 = vmatprep.subr.bf16.mxu0 %v4363
      %4489 = vmatpush1.bf16.msra.mxu0 %v4360
      %4490 = vmatprep.subr.bf16.mxu0 0
      %4491 = vmatpush1.bf16.msra.mxu0 0
      %4492 = vmatprep.subr.bf16.mxu0 0
      %4493 = vmatpush1.bf16.msra.mxu0 0
      %4494 = vmatprep.subr.bf16.mxu0 0
      %4495 = vmatpush1.bf16.msra.mxu0 0
      %4496 = vmatprep.subr.bf16.mxu0 0
      %4497 = vmatpush1.bf16.msra.mxu0 0
      %4498 = vmatprep.subr.bf16.mxu0 0
      %4499 = vmatpush1.bf16.msra.mxu0 0
      %4500 = vmatprep.subr.bf16.mxu0 0
      %4501 = vmatpush1.bf16.msra.mxu0 0
      %4502 = vmatprep.subr.bf16.mxu0 0
      %4503 = vmatpush1.bf16.msra.mxu0 0
      %4504 = vmatprep.subr.bf16.mxu0 0
      %4505 = vmatpush1.bf16.msra.mxu0 0
      %4506 = vmatprep.subr.bf16.mxu0 0
      %4507 = vmatpush1.bf16.msra.mxu0 0
      %4508 = vmatprep.subr.bf16.mxu0 0
      %4509 = vmatpush1.bf16.msra.mxu0 0
      %4510 = vmatprep.subr.bf16.mxu0 0
      %4511 = vmatpush1.bf16.msra.mxu0 0
      %4512 = vmatprep.subr.bf16.mxu0 0
      %4513 = vmatpush1.bf16.msra.mxu0 0
      %4514 = vmatprep.subr.bf16.mxu0 0
      %4515 = vmatpush1.bf16.msra.mxu0 0
      %4516 = vmatprep.subr.bf16.mxu0 0
      %4517 = vmatpush1.bf16.msra.mxu0 0
      %4518 = vmatprep.subr.bf16.mxu0 0
      %4519 = vmatpush1.bf16.msra.mxu0 0
      %4520 = vmatprep.mubr.bf16.mxu0 0
      %4521 = vmatmul.mubr.bf16.gmra.mrb[0].mxu0 %v4339
      %v4522 = vpop.f32.mrb[0].mxu0
      %v4523 = vadd.f32 0.0, %v4522
      %v4524 = vpop.f32.mrb[0].mxu0
      %v4525 = vadd.f32 0.0, %v4524
      %v4526 = vpop.f32.mrb[0].mxu0
      %v4527 = vpop.f32.mrb[0].mxu0
      %4528 = vdwg.mxu0
      %v4529 = vadd.f32 %v4254, %v4400
      %v4530 = vadd.f32 %v4255, %v4402
      %v4531 = vadd.f32 %v4256, %v4441
      %v4532 = vadd.f32 %v4257, %v4443
      %v4533 = vadd.f32 %v4258, %v4482
      %v4534 = vadd.f32 %v4259, %v4484
      %v4535 = vadd.f32 %v4260, %v4523
      %v4536 = vadd.f32 %v4261, %v4525
      %v4537 = vld [vmem:[%s219] sm:$0xff]
      %v4538 = vld [vmem:[%s219 + $0x8] sm:$0xff]
      %v4539 = vld [vmem:[%s219 + $0x10] sm:$0x3]
      %s4540 = scalar_lea.vmem %s1, 64
      %v4541 = vld [vmem:[%s4540] sm:$0xf]
      %v4545 = vcombine.high %v4537, %v4537
      %v4547 = vunpack.c.l.s4 1983009808
      %v4548 = vunpack.c.0.s8 %v4547
      %v4549 = vlaneseq
      %v4550 = vshrl.u32 %v4549, 7
      %v4551 = vsub.s32 %v4548, %v4550
      %v4552 = vrot.slane %v4537, %v4551
      %v4554 = vunpack.c.l.s4 1983009808
      %v4555 = vunpack.c.0.s8 %v4554
      %v4556 = vlaneseq
      %v4557 = vshrl.u32 %v4556, 7
      %v4558 = vsub.s32 %v4555, %v4557
      %v4559 = vrot.slane %v4545, %v4558
      %v4560 = vcombine.high %v4552, %v4552
      %v4561 = vcombine.high %v4559, %v4559
      %v4562 = vcombine.high %v4538, %v4538
      %v4564 = vunpack.c.l.s4 1983009808
      %v4565 = vunpack.c.0.s8 %v4564
      %v4566 = vlaneseq
      %v4567 = vshrl.u32 %v4566, 7
      %v4568 = vsub.s32 %v4565, %v4567
      %v4569 = vrot.slane %v4538, %v4568
      %v4571 = vunpack.c.l.s4 1983009808
      %v4572 = vunpack.c.0.s8 %v4571
      %v4573 = vlaneseq
      %v4574 = vshrl.u32 %v4573, 7
      %v4575 = vsub.s32 %v4572, %v4574
      %v4576 = vrot.slane %v4562, %v4575
      %v4577 = vcombine.high %v4569, %v4569
      %v4578 = vcombine.high %v4576, %v4576
      %v4580 = vunpack.c.l.s4 1983009808
      %v4581 = vunpack.c.0.s8 %v4580
      %v4582 = vlaneseq
      %v4583 = vshrl.u32 %v4582, 7
      %v4584 = vsub.s32 %v4581, %v4583
      %v4585 = vrot.slane %v4539, %v4584
      %4586 = vrot.lane.b32.xlu0 %v4552, 7
      %v4587 = vpop.permute.xlu0 %4586
      %4588 = vrot.lane.b32.xlu0 %v4560, 7
      %v4589 = vpop.permute.xlu0 %4588
      %4590 = vrot.lane.b32.xlu0 %v4559, 7
      %v4591 = vpop.permute.xlu0 %4590
      %4592 = vrot.lane.b32.xlu0 %v4561, 7
      %v4593 = vpop.permute.xlu0 %4592
      %4594 = vrot.lane.b32.xlu0 %v4569, 7
      %v4595 = vpop.permute.xlu0 %4594
      %4596 = vrot.lane.b32.xlu0 %v4577, 7
      %v4597 = vpop.permute.xlu0 %4596
      %4598 = vrot.lane.b32.xlu0 %v4576, 7
      %v4599 = vpop.permute.xlu0 %4598
      %4600 = vrot.lane.b32.xlu0 %v4578, 7
      %v4601 = vpop.permute.xlu0 %4600
      %4602 = vrot.lane.b32.xlu0 %v4585, 7
      %v4603 = vpop.permute.xlu0 %4602
      %vm4604 = vcmask 56320
      %v4605 = vsel %vm4604, %v4587, %v4589
      %v4606 = vsel %vm4604, %v4589, %v4591
      %v4607 = vsel %vm4604, %v4591, %v4593
      %v4608 = vsel %vm4604, %v4593, %v4595
      %v4609 = vsel %vm4604, %v4595, %v4597
      %v4610 = vsel %vm4604, %v4597, %v4599
      %v4611 = vsel %vm4604, %v4599, %v4601
      %v4612 = vsel %vm4604, %v4601, %v4603
      %v4614 = vsel %vm303, %v4541, 0
      %v4617 = vsel %vm307, %v4605, 0
      %v4620 = vsel %vm307, %v4606, 0
      %v4623 = vsel %vm307, %v4607, 0
      %v4626 = vsel %vm307, %v4608, 0
      %v4629 = vsel %vm307, %v4609, 0
      %v4632 = vsel %vm307, %v4610, 0
      %v4635 = vsel %vm307, %v4611, 0
      %v4638 = vsel %vm307, %v4612, 0
      %4640 = vmatprep.subr.bf16.mxu0 %v4620
      %4641 = vmatpush1.bf16.msra.mxu0 %v4617
      %4642 = vmatprep.subr.bf16.mxu0 0
      %4643 = vmatpush1.bf16.msra.mxu0 0
      %4644 = vmatprep.subr.bf16.mxu0 0
      %4645 = vmatpush1.bf16.msra.mxu0 0
      %4646 = vmatprep.subr.bf16.mxu0 0
      %4647 = vmatpush1.bf16.msra.mxu0 0
      %4648 = vmatprep.subr.bf16.mxu0 0
      %4649 = vmatpush1.bf16.msra.mxu0 0
      %4650 = vmatprep.subr.bf16.mxu0 0
      %4651 = vmatpush1.bf16.msra.mxu0 0
      %4652 = vmatprep.subr.bf16.mxu0 0
      %4653 = vmatpush1.bf16.msra.mxu0 0
      %4654 = vmatprep.subr.bf16.mxu0 0
      %4655 = vmatpush1.bf16.msra.mxu0 0
      %4656 = vmatprep.subr.bf16.mxu0 0
      %4657 = vmatpush1.bf16.msra.mxu0 0
      %4658 = vmatprep.subr.bf16.mxu0 0
      %4659 = vmatpush1.bf16.msra.mxu0 0
      %4660 = vmatprep.subr.bf16.mxu0 0
      %4661 = vmatpush1.bf16.msra.mxu0 0
      %4662 = vmatprep.subr.bf16.mxu0 0
      %4663 = vmatpush1.bf16.msra.mxu0 0
      %4664 = vmatprep.subr.bf16.mxu0 0
      %4665 = vmatpush1.bf16.msra.mxu0 0
      %4666 = vmatprep.subr.bf16.mxu0 0
      %4667 = vmatpush1.bf16.msra.mxu0 0
      %4668 = vmatprep.subr.bf16.mxu0 0
      %4669 = vmatpush1.bf16.msra.mxu0 0
      %4670 = vmatprep.subr.bf16.mxu0 0
      %4671 = vmatpush1.bf16.msra.mxu0 0
      %4672 = vmatprep.mubr.bf16.mxu0 0
      %4673 = vmatmul.mubr.bf16.gmra.mrb[0].mxu0 %v4614
      %v4674 = vpop.f32.mrb[0].mxu0
      %v4675 = vadd.f32 0.0, %v4674
      %v4676 = vpop.f32.mrb[0].mxu0
      %v4677 = vadd.f32 0.0, %v4676
      %v4678 = vpop.f32.mrb[0].mxu0
      %v4679 = vpop.f32.mrb[0].mxu0
      %4680 = vdwg.mxu0
      %4681 = vmatprep.subr.bf16.mxu0 %v4626
      %4682 = vmatpush1.bf16.msra.mxu0 %v4623
      %4683 = vmatprep.subr.bf16.mxu0 0
      %4684 = vmatpush1.bf16.msra.mxu0 0
      %4685 = vmatprep.subr.bf16.mxu0 0
      %4686 = vmatpush1.bf16.msra.mxu0 0
      %4687 = vmatprep.subr.bf16.mxu0 0
      %4688 = vmatpush1.bf16.msra.mxu0 0
      %4689 = vmatprep.subr.bf16.mxu0 0
      %4690 = vmatpush1.bf16.msra.mxu0 0
      %4691 = vmatprep.subr.bf16.mxu0 0
      %4692 = vmatpush1.bf16.msra.mxu0 0
      %4693 = vmatprep.subr.bf16.mxu0 0
      %4694 = vmatpush1.bf16.msra.mxu0 0
      %4695 = vmatprep.subr.bf16.mxu0 0
      %4696 = vmatpush1.bf16.msra.mxu0 0
      %4697 = vmatprep.subr.bf16.mxu0 0
      %4698 = vmatpush1.bf16.msra.mxu0 0
      %4699 = vmatprep.subr.bf16.mxu0 0
      %4700 = vmatpush1.bf16.msra.mxu0 0
      %4701 = vmatprep.subr.bf16.mxu0 0
      %4702 = vmatpush1.bf16.msra.mxu0 0
      %4703 = vmatprep.subr.bf16.mxu0 0
      %4704 = vmatpush1.bf16.msra.mxu0 0
      %4705 = vmatprep.subr.bf16.mxu0 0
      %4706 = vmatpush1.bf16.msra.mxu0 0
      %4707 = vmatprep.subr.bf16.mxu0 0
      %4708 = vmatpush1.bf16.msra.mxu0 0
      %4709 = vmatprep.subr.bf16.mxu0 0
      %4710 = vmatpush1.bf16.msra.mxu0 0
      %4711 = vmatprep.subr.bf16.mxu0 0
      %4712 = vmatpush1.bf16.msra.mxu0 0
      %4713 = vmatprep.mubr.bf16.mxu0 0
      %4714 = vmatmul.mubr.bf16.gmra.mrb[0].mxu0 %v4614
      %v4715 = vpop.f32.mrb[0].mxu0
      %v4716 = vadd.f32 0.0, %v4715
      %v4717 = vpop.f32.mrb[0].mxu0
      %v4718 = vadd.f32 0.0, %v4717
      %v4719 = vpop.f32.mrb[0].mxu0
      %v4720 = vpop.f32.mrb[0].mxu0
      %4721 = vdwg.mxu0
      %4722 = vmatprep.subr.bf16.mxu0 %v4632
      %4723 = vmatpush1.bf16.msra.mxu0 %v4629
      %4724 = vmatprep.subr.bf16.mxu0 0
      %4725 = vmatpush1.bf16.msra.mxu0 0
      %4726 = vmatprep.subr.bf16.mxu0 0
      %4727 = vmatpush1.bf16.msra.mxu0 0
      %4728 = vmatprep.subr.bf16.mxu0 0
      %4729 = vmatpush1.bf16.msra.mxu0 0
      %4730 = vmatprep.subr.bf16.mxu0 0
      %4731 = vmatpush1.bf16.msra.mxu0 0
      %4732 = vmatprep.subr.bf16.mxu0 0
      %4733 = vmatpush1.bf16.msra.mxu0 0
      %4734 = vmatprep.subr.bf16.mxu0 0
      %4735 = vmatpush1.bf16.msra.mxu0 0
      %4736 = vmatprep.subr.bf16.mxu0 0
      %4737 = vmatpush1.bf16.msra.mxu0 0
      %4738 = vmatprep.subr.bf16.mxu0 0
      %4739 = vmatpush1.bf16.msra.mxu0 0
      %4740 = vmatprep.subr.bf16.mxu0 0
      %4741 = vmatpush1.bf16.msra.mxu0 0
      %4742 = vmatprep.subr.bf16.mxu0 0
      %4743 = vmatpush1.bf16.msra.mxu0 0
      %4744 = vmatprep.subr.bf16.mxu0 0
      %4745 = vmatpush1.bf16.msra.mxu0 0
      %4746 = vmatprep.subr.bf16.mxu0 0
      %4747 = vmatpush1.bf16.msra.mxu0 0
      %4748 = vmatprep.subr.bf16.mxu0 0
      %4749 = vmatpush1.bf16.msra.mxu0 0
      %4750 = vmatprep.subr.bf16.mxu0 0
      %4751 = vmatpush1.bf16.msra.mxu0 0
      %4752 = vmatprep.subr.bf16.mxu0 0
      %4753 = vmatpush1.bf16.msra.mxu0 0
      %4754 = vmatprep.mubr.bf16.mxu0 0
      %4755 = vmatmul.mubr.bf16.gmra.mrb[0].mxu0 %v4614
      %v4756 = vpop.f32.mrb[0].mxu0
      %v4757 = vadd.f32 0.0, %v4756
      %v4758 = vpop.f32.mrb[0].mxu0
      %v4759 = vadd.f32 0.0, %v4758
      %v4760 = vpop.f32.mrb[0].mxu0
      %v4761 = vpop.f32.mrb[0].mxu0
      %4762 = vdwg.mxu0
      %4763 = vmatprep.subr.bf16.mxu0 %v4638
      %4764 = vmatpush1.bf16.msra.mxu0 %v4635
      %4765 = vmatprep.subr.bf16.mxu0 0
      %4766 = vmatpush1.bf16.msra.mxu0 0
      %4767 = vmatprep.subr.bf16.mxu0 0
      %4768 = vmatpush1.bf16.msra.mxu0 0
      %4769 = vmatprep.subr.bf16.mxu0 0
      %4770 = vmatpush1.bf16.msra.mxu0 0
      %4771 = vmatprep.subr.bf16.mxu0 0
      %4772 = vmatpush1.bf16.msra.mxu0 0
      %4773 = vmatprep.subr.bf16.mxu0 0
      %4774 = vmatpush1.bf16.msra.mxu0 0
      %4775 = vmatprep.subr.bf16.mxu0 0
      %4776 = vmatpush1.bf16.msra.mxu0 0
      %4777 = vmatprep.subr.bf16.mxu0 0
      %4778 = vmatpush1.bf16.msra.mxu0 0
      %4779 = vmatprep.subr.bf16.mxu0 0
      %4780 = vmatpush1.bf16.msra.mxu0 0
      %4781 = vmatprep.subr.bf16.mxu0 0
      %4782 = vmatpush1.bf16.msra.mxu0 0
      %4783 = vmatprep.subr.bf16.mxu0 0
      %4784 = vmatpush1.bf16.msra.mxu0 0
      %4785 = vmatprep.subr.bf16.mxu0 0
      %4786 = vmatpush1.bf16.msra.mxu0 0
      %4787 = vmatprep.subr.bf16.mxu0 0
      %4788 = vmatpush1.bf16.msra.mxu0 0
      %4789 = vmatprep.subr.bf16.mxu0 0
      %4790 = vmatpush1.bf16.msra.mxu0 0
      %4791 = vmatprep.subr.bf16.mxu0 0
      %4792 = vmatpush1.bf16.msra.mxu0 0
      %4793 = vmatprep.subr.bf16.mxu0 0
      %4794 = vmatpush1.bf16.msra.mxu0 0
      %4795 = vmatprep.mubr.bf16.mxu0 0
      %4796 = vmatmul.mubr.bf16.gmra.mrb[0].mxu0 %v4614
      %v4797 = vpop.f32.mrb[0].mxu0
      %v4798 = vadd.f32 0.0, %v4797
      %v4799 = vpop.f32.mrb[0].mxu0
      %v4800 = vadd.f32 0.0, %v4799
      %v4801 = vpop.f32.mrb[0].mxu0
      %v4802 = vpop.f32.mrb[0].mxu0
      %4803 = vdwg.mxu0
      %v4804 = vadd.f32 %v4529, %v4675
      %v4805 = vadd.f32 %v4530, %v4677
      %v4806 = vadd.f32 %v4531, %v4716
      %v4807 = vadd.f32 %v4532, %v4718
      %v4808 = vadd.f32 %v4533, %v4757
      %v4809 = vadd.f32 %v4534, %v4759
      %v4810 = vadd.f32 %v4535, %v4798
      %v4811 = vadd.f32 %v4536, %v4800
      %v4812 = vld [vmem:[%s219] sm:$0xff]
      %v4813 = vld [vmem:[%s219 + $0x8] sm:$0xff]
      %v4814 = vld [vmem:[%s219 + $0x10] sm:$0x3]
      %s4815 = scalar_lea.vmem %s1, 68
      %v4816 = vld [vmem:[%s4815] sm:$0xf]
      %v4820 = vcombine.high %v4812, %v4812
      %v4822 = vunpack.c.l.s4 1983009808
      %v4823 = vunpack.c.0.s8 %v4822
      %v4824 = vlaneseq
      %v4825 = vshrl.u32 %v4824, 7
      %v4826 = vsub.s32 %v4823, %v4825
      %v4827 = vrot.slane %v4812, %v4826
      %v4829 = vunpack.c.l.s4 1983009808
      %v4830 = vunpack.c.0.s8 %v4829
      %v4831 = vlaneseq
      %v4832 = vshrl.u32 %v4831, 7
      %v4833 = vsub.s32 %v4830, %v4832
      %v4834 = vrot.slane %v4820, %v4833
      %v4835 = vcombine.high %v4827, %v4827
      %v4836 = vcombine.high %v4834, %v4834
      %v4837 = vcombine.high %v4813, %v4813
      %v4839 = vunpack.c.l.s4 1983009808
      %v4840 = vunpack.c.0.s8 %v4839
      %v4841 = vlaneseq
      %v4842 = vshrl.u32 %v4841, 7
      %v4843 = vsub.s32 %v4840, %v4842
      %v4844 = vrot.slane %v4813, %v4843
      %v4846 = vunpack.c.l.s4 1983009808
      %v4847 = vunpack.c.0.s8 %v4846
      %v4848 = vlaneseq
      %v4849 = vshrl.u32 %v4848, 7
      %v4850 = vsub.s32 %v4847, %v4849
      %v4851 = vrot.slane %v4837, %v4850
      %v4852 = vcombine.high %v4844, %v4844
      %v4853 = vcombine.high %v4851, %v4851
      %v4855 = vunpack.c.l.s4 1983009808
      %v4856 = vunpack.c.0.s8 %v4855
      %v4857 = vlaneseq
      %v4858 = vshrl.u32 %v4857, 7
      %v4859 = vsub.s32 %v4856, %v4858
      %v4860 = vrot.slane %v4814, %v4859
      %4861 = vrot.lane.b32.xlu0 %v4827, 6
      %v4862 = vpop.permute.xlu0 %4861
      %4863 = vrot.lane.b32.xlu0 %v4835, 6
      %v4864 = vpop.permute.xlu0 %4863
      %4865 = vrot.lane.b32.xlu0 %v4834, 6
      %v4866 = vpop.permute.xlu0 %4865
      %4867 = vrot.lane.b32.xlu0 %v4836, 6
      %v4868 = vpop.permute.xlu0 %4867
      %4869 = vrot.lane.b32.xlu0 %v4844, 6
      %v4870 = vpop.permute.xlu0 %4869
      %4871 = vrot.lane.b32.xlu0 %v4852, 6
      %v4872 = vpop.permute.xlu0 %4871
      %4873 = vrot.lane.b32.xlu0 %v4851, 6
      %v4874 = vpop.permute.xlu0 %4873
      %4875 = vrot.lane.b32.xlu0 %v4853, 6
      %v4876 = vpop.permute.xlu0 %4875
      %4877 = vrot.lane.b32.xlu0 %v4860, 6
      %v4878 = vpop.permute.xlu0 %4877
      %vm4879 = vcmask 48128
      %v4880 = vsel %vm4879, %v4862, %v4864
      %v4881 = vsel %vm4879, %v4864, %v4866
      %v4882 = vsel %vm4879, %v4866, %v4868
      %v4883 = vsel %vm4879, %v4868, %v4870
      %v4884 = vsel %vm4879, %v4870, %v4872
      %v4885 = vsel %vm4879, %v4872, %v4874
      %v4886 = vsel %vm4879, %v4874, %v4876
      %v4887 = vsel %vm4879, %v4876, %v4878
      %v4889 = vsel %vm303, %v4816, 0
      %v4892 = vsel %vm307, %v4880, 0
      %v4895 = vsel %vm307, %v4881, 0
      %v4898 = vsel %vm307, %v4882, 0
      %v4901 = vsel %vm307, %v4883, 0
      %v4904 = vsel %vm307, %v4884, 0
      %v4907 = vsel %vm307, %v4885, 0
      %v4910 = vsel %vm307, %v4886, 0
      %v4913 = vsel %vm307, %v4887, 0
      %4915 = vmatprep.subr.bf16.mxu0 %v4895
      %4916 = vmatpush1.bf16.msra.mxu0 %v4892
      %4917 = vmatprep.subr.bf16.mxu0 0
      %4918 = vmatpush1.bf16.msra.mxu0 0
      %4919 = vmatprep.subr.bf16.mxu0 0
      %4920 = vmatpush1.bf16.msra.mxu0 0
      %4921 = vmatprep.subr.bf16.mxu0 0
      %4922 = vmatpush1.bf16.msra.mxu0 0
      %4923 = vmatprep.subr.bf16.mxu0 0
      %4924 = vmatpush1.bf16.msra.mxu0 0
      %4925 = vmatprep.subr.bf16.mxu0 0
      %4926 = vmatpush1.bf16.msra.mxu0 0
      %4927 = vmatprep.subr.bf16.mxu0 0
      %4928 = vmatpush1.bf16.msra.mxu0 0
      %4929 = vmatprep.subr.bf16.mxu0 0
      %4930 = vmatpush1.bf16.msra.mxu0 0
      %4931 = vmatprep.subr.bf16.mxu0 0
      %4932 = vmatpush1.bf16.msra.mxu0 0
      %4933 = vmatprep.subr.bf16.mxu0 0
      %4934 = vmatpush1.bf16.msra.mxu0 0
      %4935 = vmatprep.subr.bf16.mxu0 0
      %4936 = vmatpush1.bf16.msra.mxu0 0
      %4937 = vmatprep.subr.bf16.mxu0 0
      %4938 = vmatpush1.bf16.msra.mxu0 0
      %4939 = vmatprep.subr.bf16.mxu0 0
      %4940 = vmatpush1.bf16.msra.mxu0 0
      %4941 = vmatprep.subr.bf16.mxu0 0
      %4942 = vmatpush1.bf16.msra.mxu0 0
      %4943 = vmatprep.subr.bf16.mxu0 0
      %4944 = vmatpush1.bf16.msra.mxu0 0
      %4945 = vmatprep.subr.bf16.mxu0 0
      %4946 = vmatpush1.bf16.msra.mxu0 0
      %4947 = vmatprep.mubr.bf16.mxu0 0
      %4948 = vmatmul.mubr.bf16.gmra.mrb[0].mxu0 %v4889
      %v4949 = vpop.f32.mrb[0].mxu0
      %v4950 = vadd.f32 0.0, %v4949
      %v4951 = vpop.f32.mrb[0].mxu0
      %v4952 = vadd.f32 0.0, %v4951
      %v4953 = vpop.f32.mrb[0].mxu0
      %v4954 = vpop.f32.mrb[0].mxu0
      %4955 = vdwg.mxu0
      %4956 = vmatprep.subr.bf16.mxu0 %v4901
      %4957 = vmatpush1.bf16.msra.mxu0 %v4898
      %4958 = vmatprep.subr.bf16.mxu0 0
      %4959 = vmatpush1.bf16.msra.mxu0 0
      %4960 = vmatprep.subr.bf16.mxu0 0
      %4961 = vmatpush1.bf16.msra.mxu0 0
      %4962 = vmatprep.subr.bf16.mxu0 0
      %4963 = vmatpush1.bf16.msra.mxu0 0
      %4964 = vmatprep.subr.bf16.mxu0 0
      %4965 = vmatpush1.bf16.msra.mxu0 0
      %4966 = vmatprep.subr.bf16.mxu0 0
      %4967 = vmatpush1.bf16.msra.mxu0 0
      %4968 = vmatprep.subr.bf16.mxu0 0
      %4969 = vmatpush1.bf16.msra.mxu0 0
      %4970 = vmatprep.subr.bf16.mxu0 0
      %4971 = vmatpush1.bf16.msra.mxu0 0
      %4972 = vmatprep.subr.bf16.mxu0 0
      %4973 = vmatpush1.bf16.msra.mxu0 0
      %4974 = vmatprep.subr.bf16.mxu0 0
      %4975 = vmatpush1.bf16.msra.mxu0 0
      %4976 = vmatprep.subr.bf16.mxu0 0
      %4977 = vmatpush1.bf16.msra.mxu0 0
      %4978 = vmatprep.subr.bf16.mxu0 0
      %4979 = vmatpush1.bf16.msra.mxu0 0
      %4980 = vmatprep.subr.bf16.mxu0 0
      %4981 = vmatpush1.bf16.msra.mxu0 0
      %4982 = vmatprep.subr.bf16.mxu0 0
      %4983 = vmatpush1.bf16.msra.mxu0 0
      %4984 = vmatprep.subr.bf16.mxu0 0
      %4985 = vmatpush1.bf16.msra.mxu0 0
      %4986 = vmatprep.subr.bf16.mxu0 0
      %4987 = vmatpush1.bf16.msra.mxu0 0
      %4988 = vmatprep.mubr.bf16.mxu0 0
      %4989 = vmatmul.mubr.bf16.gmra.mrb[0].mxu0 %v4889
      %v4990 = vpop.f32.mrb[0].mxu0
      %v4991 = vadd.f32 0.0, %v4990
      %v4992 = vpop.f32.mrb[0].mxu0
      %v4993 = vadd.f32 0.0, %v4992
      %v4994 = vpop.f32.mrb[0].mxu0
      %v4995 = vpop.f32.mrb[0].mxu0
      %4996 = vdwg.mxu0
      %4997 = vmatprep.subr.bf16.mxu0 %v4907
      %4998 = vmatpush1.bf16.msra.mxu0 %v4904
      %4999 = vmatprep.subr.bf16.mxu0 0
      %5000 = vmatpush1.bf16.msra.mxu0 0
      %5001 = vmatprep.subr.bf16.mxu0 0
      %5002 = vmatpush1.bf16.msra.mxu0 0
      %5003 = vmatprep.subr.bf16.mxu0 0
      %5004 = vmatpush1.bf16.msra.mxu0 0
      %5005 = vmatprep.subr.bf16.mxu0 0
      %5006 = vmatpush1.bf16.msra.mxu0 0
      %5007 = vmatprep.subr.bf16.mxu0 0
      %5008 = vmatpush1.bf16.msra.mxu0 0
      %5009 = vmatprep.subr.bf16.mxu0 0
      %5010 = vmatpush1.bf16.msra.mxu0 0
      %5011 = vmatprep.subr.bf16.mxu0 0
      %5012 = vmatpush1.bf16.msra.mxu0 0
      %5013 = vmatprep.subr.bf16.mxu0 0
      %5014 = vmatpush1.bf16.msra.mxu0 0
      %5015 = vmatprep.subr.bf16.mxu0 0
      %5016 = vmatpush1.bf16.msra.mxu0 0
      %5017 = vmatprep.subr.bf16.mxu0 0
      %5018 = vmatpush1.bf16.msra.mxu0 0
      %5019 = vmatprep.subr.bf16.mxu0 0
      %5020 = vmatpush1.bf16.msra.mxu0 0
      %5021 = vmatprep.subr.bf16.mxu0 0
      %5022 = vmatpush1.bf16.msra.mxu0 0
      %5023 = vmatprep.subr.bf16.mxu0 0
      %5024 = vmatpush1.bf16.msra.mxu0 0
      %5025 = vmatprep.subr.bf16.mxu0 0
      %5026 = vmatpush1.bf16.msra.mxu0 0
      %5027 = vmatprep.subr.bf16.mxu0 0
      %5028 = vmatpush1.bf16.msra.mxu0 0
      %5029 = vmatprep.mubr.bf16.mxu0 0
      %5030 = vmatmul.mubr.bf16.gmra.mrb[0].mxu0 %v4889
      %v5031 = vpop.f32.mrb[0].mxu0
      %v5032 = vadd.f32 0.0, %v5031
      %v5033 = vpop.f32.mrb[0].mxu0
      %v5034 = vadd.f32 0.0, %v5033
      %v5035 = vpop.f32.mrb[0].mxu0
      %v5036 = vpop.f32.mrb[0].mxu0
      %5037 = vdwg.mxu0
      %5038 = vmatprep.subr.bf16.mxu0 %v4913
      %5039 = vmatpush1.bf16.msra.mxu0 %v4910
      %5040 = vmatprep.subr.bf16.mxu0 0
      %5041 = vmatpush1.bf16.msra.mxu0 0
      %5042 = vmatprep.subr.bf16.mxu0 0
      %5043 = vmatpush1.bf16.msra.mxu0 0
      %5044 = vmatprep.subr.bf16.mxu0 0
      %5045 = vmatpush1.bf16.msra.mxu0 0
      %5046 = vmatprep.subr.bf16.mxu0 0
      %5047 = vmatpush1.bf16.msra.mxu0 0
      %5048 = vmatprep.subr.bf16.mxu0 0
      %5049 = vmatpush1.bf16.msra.mxu0 0
      %5050 = vmatprep.subr.bf16.mxu0 0
      %5051 = vmatpush1.bf16.msra.mxu0 0
      %5052 = vmatprep.subr.bf16.mxu0 0
      %5053 = vmatpush1.bf16.msra.mxu0 0
      %5054 = vmatprep.subr.bf16.mxu0 0
      %5055 = vmatpush1.bf16.msra.mxu0 0
      %5056 = vmatprep.subr.bf16.mxu0 0
      %5057 = vmatpush1.bf16.msra.mxu0 0
      %5058 = vmatprep.subr.bf16.mxu0 0
      %5059 = vmatpush1.bf16.msra.mxu0 0
      %5060 = vmatprep.subr.bf16.mxu0 0
      %5061 = vmatpush1.bf16.msra.mxu0 0
      %5062 = vmatprep.subr.bf16.mxu0 0
      %5063 = vmatpush1.bf16.msra.mxu0 0
      %5064 = vmatprep.subr.bf16.mxu0 0
      %5065 = vmatpush1.bf16.msra.mxu0 0
      %5066 = vmatprep.subr.bf16.mxu0 0
      %5067 = vmatpush1.bf16.msra.mxu0 0
      %5068 = vmatprep.subr.bf16.mxu0 0
      %5069 = vmatpush1.bf16.msra.mxu0 0
      %5070 = vmatprep.mubr.bf16.mxu0 0
      %5071 = vmatmul.mubr.bf16.gmra.mrb[0].mxu0 %v4889
      %v5072 = vpop.f32.mrb[0].mxu0
      %v5073 = vadd.f32 0.0, %v5072
      %v5074 = vpop.f32.mrb[0].mxu0
      %v5075 = vadd.f32 0.0, %v5074
      %v5076 = vpop.f32.mrb[0].mxu0
      %v5077 = vpop.f32.mrb[0].mxu0
      %5078 = vdwg.mxu0
      %v5079 = vadd.f32 %v4804, %v4950
      %v5080 = vadd.f32 %v4805, %v4952
      %v5081 = vadd.f32 %v4806, %v4991
      %v5082 = vadd.f32 %v4807, %v4993
      %v5083 = vadd.f32 %v4808, %v5032
      %v5084 = vadd.f32 %v4809, %v5034
      %v5085 = vadd.f32 %v4810, %v5073
      %v5086 = vadd.f32 %v4811, %v5075
      %v5087 = vld [vmem:[%s219 + $0x2] sm:$0xff]
      %v5088 = vld [vmem:[%s219 + $0xa] sm:$0xff]
      %v5089 = vld [vmem:[%s219 + $0x12] sm:$0x3]
      %s5090 = scalar_lea.vmem %s1, 72
      %v5091 = vld [vmem:[%s5090] sm:$0xf]
      %v5095 = vcombine.high %v5087, %v5087
      %v5097 = vunpack.c.l.s4 1983009808
      %v5098 = vunpack.c.0.s8 %v5097
      %v5099 = vlaneseq
      %v5100 = vshrl.u32 %v5099, 7
      %v5101 = vsub.s32 %v5098, %v5100
      %v5102 = vrot.slane %v5087, %v5101
      %v5104 = vunpack.c.l.s4 1983009808
      %v5105 = vunpack.c.0.s8 %v5104
      %v5106 = vlaneseq
      %v5107 = vshrl.u32 %v5106, 7
      %v5108 = vsub.s32 %v5105, %v5107
      %v5109 = vrot.slane %v5095, %v5108
      %v5110 = vcombine.high %v5102, %v5102
      %v5111 = vcombine.high %v5109, %v5109
      %v5112 = vcombine.high %v5088, %v5088
      %v5114 = vunpack.c.l.s4 1983009808
      %v5115 = vunpack.c.0.s8 %v5114
      %v5116 = vlaneseq
      %v5117 = vshrl.u32 %v5116, 7
      %v5118 = vsub.s32 %v5115, %v5117
      %v5119 = vrot.slane %v5088, %v5118
      %v5121 = vunpack.c.l.s4 1983009808
      %v5122 = vunpack.c.0.s8 %v5121
      %v5123 = vlaneseq
      %v5124 = vshrl.u32 %v5123, 7
      %v5125 = vsub.s32 %v5122, %v5124
      %v5126 = vrot.slane %v5112, %v5125
      %v5127 = vcombine.high %v5119, %v5119
      %v5128 = vcombine.high %v5126, %v5126
      %v5130 = vunpack.c.l.s4 1983009808
      %v5131 = vunpack.c.0.s8 %v5130
      %v5132 = vlaneseq
      %v5133 = vshrl.u32 %v5132, 7
      %v5134 = vsub.s32 %v5131, %v5133
      %v5135 = vrot.slane %v5089, %v5134
      %5136 = vrot.lane.b32.xlu0 %v5102, 56
      %v5137 = vpop.permute.xlu0 %5136
      %5138 = vrot.lane.b32.xlu0 %v5110, 56
      %v5139 = vpop.permute.xlu0 %5138
      %5140 = vrot.lane.b32.xlu0 %v5109, 56
      %v5141 = vpop.permute.xlu0 %5140
      %5142 = vrot.lane.b32.xlu0 %v5111, 56
      %v5143 = vpop.permute.xlu0 %5142
      %5144 = vrot.lane.b32.xlu0 %v5119, 56
      %v5145 = vpop.permute.xlu0 %5144
      %5146 = vrot.lane.b32.xlu0 %v5127, 56
      %v5147 = vpop.permute.xlu0 %5146
      %5148 = vrot.lane.b32.xlu0 %v5126, 56
      %v5149 = vpop.permute.xlu0 %5148
      %5150 = vrot.lane.b32.xlu0 %v5128, 56
      %v5151 = vpop.permute.xlu0 %5150
      %5152 = vrot.lane.b32.xlu0 %v5135, 56
      %v5153 = vpop.permute.xlu0 %5152
      %vm5154 = vcmask 457728
      %v5155 = vsel %vm5154, %v5137, %v5139
      %v5156 = vsel %vm5154, %v5139, %v5141
      %v5157 = vsel %vm5154, %v5141, %v5143
      %v5158 = vsel %vm5154, %v5143, %v5145
      %v5159 = vsel %vm5154, %v5145, %v5147
      %v5160 = vsel %vm5154, %v5147, %v5149
      %v5161 = vsel %vm5154, %v5149, %v5151
      %v5162 = vsel %vm5154, %v5151, %v5153
      %v5164 = vsel %vm303, %v5091, 0
      %v5167 = vsel %vm307, %v5155, 0
      %v5170 = vsel %vm307, %v5156, 0
      %v5173 = vsel %vm307, %v5157, 0
      %v5176 = vsel %vm307, %v5158, 0
      %v5179 = vsel %vm307, %v5159, 0
      %v5182 = vsel %vm307, %v5160, 0
      %v5185 = vsel %vm307, %v5161, 0
      %v5188 = vsel %vm307, %v5162, 0
      %5190 = vmatprep.subr.bf16.mxu0 %v5170
      %5191 = vmatpush1.bf16.msra.mxu0 %v5167
      %5192 = vmatprep.subr.bf16.mxu0 0
      %5193 = vmatpush1.bf16.msra.mxu0 0
      %5194 = vmatprep.subr.bf16.mxu0 0
      %5195 = vmatpush1.bf16.msra.mxu0 0
      %5196 = vmatprep.subr.bf16.mxu0 0
      %5197 = vmatpush1.bf16.msra.mxu0 0
      %5198 = vmatprep.subr.bf16.mxu0 0
      %5199 = vmatpush1.bf16.msra.mxu0 0
      %5200 = vmatprep.subr.bf16.mxu0 0
      %5201 = vmatpush1.bf16.msra.mxu0 0
      %5202 = vmatprep.subr.bf16.mxu0 0
      %5203 = vmatpush1.bf16.msra.mxu0 0
      %5204 = vmatprep.subr.bf16.mxu0 0
      %5205 = vmatpush1.bf16.msra.mxu0 0
      %5206 = vmatprep.subr.bf16.mxu0 0
      %5207 = vmatpush1.bf16.msra.mxu0 0
      %5208 = vmatprep.subr.bf16.mxu0 0
      %5209 = vmatpush1.bf16.msra.mxu0 0
      %5210 = vmatprep.subr.bf16.mxu0 0
      %5211 = vmatpush1.bf16.msra.mxu0 0
      %5212 = vmatprep.subr.bf16.mxu0 0
      %5213 = vmatpush1.bf16.msra.mxu0 0
      %5214 = vmatprep.subr.bf16.mxu0 0
      %5215 = vmatpush1.bf16.msra.mxu0 0
      %5216 = vmatprep.subr.bf16.mxu0 0
      %5217 = vmatpush1.bf16.msra.mxu0 0
      %5218 = vmatprep.subr.bf16.mxu0 0
      %5219 = vmatpush1.bf16.msra.mxu0 0
      %5220 = vmatprep.subr.bf16.mxu0 0
      %5221 = vmatpush1.bf16.msra.mxu0 0
      %5222 = vmatprep.mubr.bf16.mxu0 0
      %5223 = vmatmul.mubr.bf16.gmra.mrb[0].mxu0 %v5164
      %v5224 = vpop.f32.mrb[0].mxu0
      %v5225 = vadd.f32 0.0, %v5224
      %v5226 = vpop.f32.mrb[0].mxu0
      %v5227 = vadd.f32 0.0, %v5226
      %v5228 = vpop.f32.mrb[0].mxu0
      %v5229 = vpop.f32.mrb[0].mxu0
      %5230 = vdwg.mxu0
      %5231 = vmatprep.subr.bf16.mxu0 %v5176
      %5232 = vmatpush1.bf16.msra.mxu0 %v5173
      %5233 = vmatprep.subr.bf16.mxu0 0
      %5234 = vmatpush1.bf16.msra.mxu0 0
      %5235 = vmatprep.subr.bf16.mxu0 0
      %5236 = vmatpush1.bf16.msra.mxu0 0
      %5237 = vmatprep.subr.bf16.mxu0 0
      %5238 = vmatpush1.bf16.msra.mxu0 0
      %5239 = vmatprep.subr.bf16.mxu0 0
      %5240 = vmatpush1.bf16.msra.mxu0 0
      %5241 = vmatprep.subr.bf16.mxu0 0
      %5242 = vmatpush1.bf16.msra.mxu0 0
      %5243 = vmatprep.subr.bf16.mxu0 0
      %5244 = vmatpush1.bf16.msra.mxu0 0
      %5245 = vmatprep.subr.bf16.mxu0 0
      %5246 = vmatpush1.bf16.msra.mxu0 0
      %5247 = vmatprep.subr.bf16.mxu0 0
      %5248 = vmatpush1.bf16.msra.mxu0 0
      %5249 = vmatprep.subr.bf16.mxu0 0
      %5250 = vmatpush1.bf16.msra.mxu0 0
      %5251 = vmatprep.subr.bf16.mxu0 0
      %5252 = vmatpush1.bf16.msra.mxu0 0
      %5253 = vmatprep.subr.bf16.mxu0 0
      %5254 = vmatpush1.bf16.msra.mxu0 0
      %5255 = vmatprep.subr.bf16.mxu0 0
      %5256 = vmatpush1.bf16.msra.mxu0 0
      %5257 = vmatprep.subr.bf16.mxu0 0
      %5258 = vmatpush1.bf16.msra.mxu0 0
      %5259 = vmatprep.subr.bf16.mxu0 0
      %5260 = vmatpush1.bf16.msra.mxu0 0
      %5261 = vmatprep.subr.bf16.mxu0 0
      %5262 = vmatpush1.bf16.msra.mxu0 0
      %5263 = vmatprep.mubr.bf16.mxu0 0
      %5264 = vmatmul.mubr.bf16.gmra.mrb[0].mxu0 %v5164
      %v5265 = vpop.f32.mrb[0].mxu0
      %v5266 = vadd.f32 0.0, %v5265
      %v5267 = vpop.f32.mrb[0].mxu0
      %v5268 = vadd.f32 0.0, %v5267
      %v5269 = vpop.f32.mrb[0].mxu0
      %v5270 = vpop.f32.mrb[0].mxu0
      %5271 = vdwg.mxu0
      %5272 = vmatprep.subr.bf16.mxu0 %v5182
      %5273 = vmatpush1.bf16.msra.mxu0 %v5179
      %5274 = vmatprep.subr.bf16.mxu0 0
      %5275 = vmatpush1.bf16.msra.mxu0 0
      %5276 = vmatprep.subr.bf16.mxu0 0
      %5277 = vmatpush1.bf16.msra.mxu0 0
      %5278 = vmatprep.subr.bf16.mxu0 0
      %5279 = vmatpush1.bf16.msra.mxu0 0
      %5280 = vmatprep.subr.bf16.mxu0 0
      %5281 = vmatpush1.bf16.msra.mxu0 0
      %5282 = vmatprep.subr.bf16.mxu0 0
      %5283 = vmatpush1.bf16.msra.mxu0 0
      %5284 = vmatprep.subr.bf16.mxu0 0
      %5285 = vmatpush1.bf16.msra.mxu0 0
      %5286 = vmatprep.subr.bf16.mxu0 0
      %5287 = vmatpush1.bf16.msra.mxu0 0
      %5288 = vmatprep.subr.bf16.mxu0 0
      %5289 = vmatpush1.bf16.msra.mxu0 0
      %5290 = vmatprep.subr.bf16.mxu0 0
      %5291 = vmatpush1.bf16.msra.mxu0 0
      %5292 = vmatprep.subr.bf16.mxu0 0
      %5293 = vmatpush1.bf16.msra.mxu0 0
      %5294 = vmatprep.subr.bf16.mxu0 0
      %5295 = vmatpush1.bf16.msra.mxu0 0
      %5296 = vmatprep.subr.bf16.mxu0 0
      %5297 = vmatpush1.bf16.msra.mxu0 0
      %5298 = vmatprep.subr.bf16.mxu0 0
      %5299 = vmatpush1.bf16.msra.mxu0 0
      %5300 = vmatprep.subr.bf16.mxu0 0
      %5301 = vmatpush1.bf16.msra.mxu0 0
      %5302 = vmatprep.subr.bf16.mxu0 0
      %5303 = vmatpush1.bf16.msra.mxu0 0
      %5304 = vmatprep.mubr.bf16.mxu0 0
      %5305 = vmatmul.mubr.bf16.gmra.mrb[0].mxu0 %v5164
      %v5306 = vpop.f32.mrb[0].mxu0
      %v5307 = vadd.f32 0.0, %v5306
      %v5308 = vpop.f32.mrb[0].mxu0
      %v5309 = vadd.f32 0.0, %v5308
      %v5310 = vpop.f32.mrb[0].mxu0
      %v5311 = vpop.f32.mrb[0].mxu0
      %5312 = vdwg.mxu0
      %5313 = vmatprep.subr.bf16.mxu0 %v5188
      %5314 = vmatpush1.bf16.msra.mxu0 %v5185
      %5315 = vmatprep.subr.bf16.mxu0 0
      %5316 = vmatpush1.bf16.msra.mxu0 0
      %5317 = vmatprep.subr.bf16.mxu0 0
      %5318 = vmatpush1.bf16.msra.mxu0 0
      %5319 = vmatprep.subr.bf16.mxu0 0
      %5320 = vmatpush1.bf16.msra.mxu0 0
      %5321 = vmatprep.subr.bf16.mxu0 0
      %5322 = vmatpush1.bf16.msra.mxu0 0
      %5323 = vmatprep.subr.bf16.mxu0 0
      %5324 = vmatpush1.bf16.msra.mxu0 0
      %5325 = vmatprep.subr.bf16.mxu0 0
      %5326 = vmatpush1.bf16.msra.mxu0 0
      %5327 = vmatprep.subr.bf16.mxu0 0
      %5328 = vmatpush1.bf16.msra.mxu0 0
      %5329 = vmatprep.subr.bf16.mxu0 0
      %5330 = vmatpush1.bf16.msra.mxu0 0
      %5331 = vmatprep.subr.bf16.mxu0 0
      %5332 = vmatpush1.bf16.msra.mxu0 0
      %5333 = vmatprep.subr.bf16.mxu0 0
      %5334 = vmatpush1.bf16.msra.mxu0 0
      %5335 = vmatprep.subr.bf16.mxu0 0
      %5336 = vmatpush1.bf16.msra.mxu0 0
      %5337 = vmatprep.subr.bf16.mxu0 0
      %5338 = vmatpush1.bf16.msra.mxu0 0
      %5339 = vmatprep.subr.bf16.mxu0 0
      %5340 = vmatpush1.bf16.msra.mxu0 0
      %5341 = vmatprep.subr.bf16.mxu0 0
      %5342 = vmatpush1.bf16.msra.mxu0 0
      %5343 = vmatprep.subr.bf16.mxu0 0
      %5344 = vmatpush1.bf16.msra.mxu0 0
      %5345 = vmatprep.mubr.bf16.mxu0 0
      %5346 = vmatmul.mubr.bf16.gmra.mrb[0].mxu0 %v5164
      %v5347 = vpop.f32.mrb[0].mxu0
      %v5348 = vadd.f32 0.0, %v5347
      %v5349 = vpop.f32.mrb[0].mxu0
      %v5350 = vadd.f32 0.0, %v5349
      %v5351 = vpop.f32.mrb[0].mxu0
      %v5352 = vpop.f32.mrb[0].mxu0
      %5353 = vdwg.mxu0
      %v5354 = vadd.f32 %v5079, %v5225
      %v5355 = vadd.f32 %v5080, %v5227
      %v5356 = vadd.f32 %v5081, %v5266
      %v5357 = vadd.f32 %v5082, %v5268
      %v5358 = vadd.f32 %v5083, %v5307
      %v5359 = vadd.f32 %v5084, %v5309
      %v5360 = vadd.f32 %v5085, %v5348
      %v5361 = vadd.f32 %v5086, %v5350
      %v5362 = vld [vmem:[%s219 + $0x2] sm:$0xff]
      %v5363 = vld [vmem:[%s219 + $0xa] sm:$0xff]
      %v5364 = vld [vmem:[%s219 + $0x12] sm:$0x3]
      %s5365 = scalar_lea.vmem %s1, 76
      %v5366 = vld [vmem:[%s5365] sm:$0xf]
      %v5370 = vcombine.high %v5362, %v5362
      %v5372 = vunpack.c.l.s4 1983009808
      %v5373 = vunpack.c.0.s8 %v5372
      %v5374 = vlaneseq
      %v5375 = vshrl.u32 %v5374, 7
      %v5376 = vsub.s32 %v5373, %v5375
      %v5377 = vrot.slane %v5362, %v5376
      %v5379 = vunpack.c.l.s4 1983009808
      %v5380 = vunpack.c.0.s8 %v5379
      %v5381 = vlaneseq
      %v5382 = vshrl.u32 %v5381, 7
      %v5383 = vsub.s32 %v5380, %v5382
      %v5384 = vrot.slane %v5370, %v5383
      %v5385 = vcombine.high %v5377, %v5377
      %v5386 = vcombine.high %v5384, %v5384
      %v5387 = vcombine.high %v5363, %v5363
      %v5389 = vunpack.c.l.s4 1983009808
      %v5390 = vunpack.c.0.s8 %v5389
      %v5391 = vlaneseq
      %v5392 = vshrl.u32 %v5391, 7
      %v5393 = vsub.s32 %v5390, %v5392
      %v5394 = vrot.slane %v5363, %v5393
      %v5396 = vunpack.c.l.s4 1983009808
      %v5397 = vunpack.c.0.s8 %v5396
      %v5398 = vlaneseq
      %v5399 = vshrl.u32 %v5398, 7
      %v5400 = vsub.s32 %v5397, %v5399
      %v5401 = vrot.slane %v5387, %v5400
      %v5402 = vcombine.high %v5394, %v5394
      %v5403 = vcombine.high %v5401, %v5401
      %v5405 = vunpack.c.l.s4 1983009808
      %v5406 = vunpack.c.0.s8 %v5405
      %v5407 = vlaneseq
      %v5408 = vshrl.u32 %v5407, 7
      %v5409 = vsub.s32 %v5406, %v5408
      %v5410 = vrot.slane %v5364, %v5409
      %5411 = vrot.lane.b32.xlu0 %v5377, 55
      %v5412 = vpop.permute.xlu0 %5411
      %5413 = vrot.lane.b32.xlu0 %v5385, 55
      %v5414 = vpop.permute.xlu0 %5413
      %5415 = vrot.lane.b32.xlu0 %v5384, 55
      %v5416 = vpop.permute.xlu0 %5415
      %5417 = vrot.lane.b32.xlu0 %v5386, 55
      %v5418 = vpop.permute.xlu0 %5417
      %5419 = vrot.lane.b32.xlu0 %v5394, 55
      %v5420 = vpop.permute.xlu0 %5419
      %5421 = vrot.lane.b32.xlu0 %v5402, 55
      %v5422 = vpop.permute.xlu0 %5421
      %5423 = vrot.lane.b32.xlu0 %v5401, 55
      %v5424 = vpop.permute.xlu0 %5423
      %5425 = vrot.lane.b32.xlu0 %v5403, 55
      %v5426 = vpop.permute.xlu0 %5425
      %5427 = vrot.lane.b32.xlu0 %v5410, 55
      %v5428 = vpop.permute.xlu0 %5427
      %vm5429 = vcmask 449536
      %v5430 = vsel %vm5429, %v5412, %v5414
      %v5431 = vsel %vm5429, %v5414, %v5416
      %v5432 = vsel %vm5429, %v5416, %v5418
      %v5433 = vsel %vm5429, %v5418, %v5420
      %v5434 = vsel %vm5429, %v5420, %v5422
      %v5435 = vsel %vm5429, %v5422, %v5424
      %v5436 = vsel %vm5429, %v5424, %v5426
      %v5437 = vsel %vm5429, %v5426, %v5428
      %v5439 = vsel %vm303, %v5366, 0
      %v5442 = vsel %vm307, %v5430, 0
      %v5445 = vsel %vm307, %v5431, 0
      %v5448 = vsel %vm307, %v5432, 0
      %v5451 = vsel %vm307, %v5433, 0
      %v5454 = vsel %vm307, %v5434, 0
      %v5457 = vsel %vm307, %v5435, 0
      %v5460 = vsel %vm307, %v5436, 0
      %v5463 = vsel %vm307, %v5437, 0
      %5465 = vmatprep.subr.bf16.mxu0 %v5445
      %5466 = vmatpush1.bf16.msra.mxu0 %v5442
      %5467 = vmatprep.subr.bf16.mxu0 0
      %5468 = vmatpush1.bf16.msra.mxu0 0
      %5469 = vmatprep.subr.bf16.mxu0 0
      %5470 = vmatpush1.bf16.msra.mxu0 0
      %5471 = vmatprep.subr.bf16.mxu0 0
      %5472 = vmatpush1.bf16.msra.mxu0 0
      %5473 = vmatprep.subr.bf16.mxu0 0
      %5474 = vmatpush1.bf16.msra.mxu0 0
      %5475 = vmatprep.subr.bf16.mxu0 0
      %5476 = vmatpush1.bf16.msra.mxu0 0
      %5477 = vmatprep.subr.bf16.mxu0 0
      %5478 = vmatpush1.bf16.msra.mxu0 0
      %5479 = vmatprep.subr.bf16.mxu0 0
      %5480 = vmatpush1.bf16.msra.mxu0 0
      %5481 = vmatprep.subr.bf16.mxu0 0
      %5482 = vmatpush1.bf16.msra.mxu0 0
      %5483 = vmatprep.subr.bf16.mxu0 0
      %5484 = vmatpush1.bf16.msra.mxu0 0
      %5485 = vmatprep.subr.bf16.mxu0 0
      %5486 = vmatpush1.bf16.msra.mxu0 0
      %5487 = vmatprep.subr.bf16.mxu0 0
      %5488 = vmatpush1.bf16.msra.mxu0 0
      %5489 = vmatprep.subr.bf16.mxu0 0
      %5490 = vmatpush1.bf16.msra.mxu0 0
      %5491 = vmatprep.subr.bf16.mxu0 0
      %5492 = vmatpush1.bf16.msra.mxu0 0
      %5493 = vmatprep.subr.bf16.mxu0 0
      %5494 = vmatpush1.bf16.msra.mxu0 0
      %5495 = vmatprep.subr.bf16.mxu0 0
      %5496 = vmatpush1.bf16.msra.mxu0 0
      %5497 = vmatprep.mubr.bf16.mxu0 0
      %5498 = vmatmul.mubr.bf16.gmra.mrb[0].mxu0 %v5439
      %v5499 = vpop.f32.mrb[0].mxu0
      %v5500 = vadd.f32 0.0, %v5499
      %v5501 = vpop.f32.mrb[0].mxu0
      %v5502 = vadd.f32 0.0, %v5501
      %v5503 = vpop.f32.mrb[0].mxu0
      %v5504 = vpop.f32.mrb[0].mxu0
      %5505 = vdwg.mxu0
      %5506 = vmatprep.subr.bf16.mxu0 %v5451
      %5507 = vmatpush1.bf16.msra.mxu0 %v5448
      %5508 = vmatprep.subr.bf16.mxu0 0
      %5509 = vmatpush1.bf16.msra.mxu0 0
      %5510 = vmatprep.subr.bf16.mxu0 0
      %5511 = vmatpush1.bf16.msra.mxu0 0
      %5512 = vmatprep.subr.bf16.mxu0 0
      %5513 = vmatpush1.bf16.msra.mxu0 0
      %5514 = vmatprep.subr.bf16.mxu0 0
      %5515 = vmatpush1.bf16.msra.mxu0 0
      %5516 = vmatprep.subr.bf16.mxu0 0
      %5517 = vmatpush1.bf16.msra.mxu0 0
      %5518 = vmatprep.subr.bf16.mxu0 0
      %5519 = vmatpush1.bf16.msra.mxu0 0
      %5520 = vmatprep.subr.bf16.mxu0 0
      %5521 = vmatpush1.bf16.msra.mxu0 0
      %5522 = vmatprep.subr.bf16.mxu0 0
      %5523 = vmatpush1.bf16.msra.mxu0 0
      %5524 = vmatprep.subr.bf16.mxu0 0
      %5525 = vmatpush1.bf16.msra.mxu0 0
      %5526 = vmatprep.subr.bf16.mxu0 0
      %5527 = vmatpush1.bf16.msra.mxu0 0
      %5528 = vmatprep.subr.bf16.mxu0 0
      %5529 = vmatpush1.bf16.msra.mxu0 0
      %5530 = vmatprep.subr.bf16.mxu0 0
      %5531 = vmatpush1.bf16.msra.mxu0 0
      %5532 = vmatprep.subr.bf16.mxu0 0
      %5533 = vmatpush1.bf16.msra.mxu0 0
      %5534 = vmatprep.subr.bf16.mxu0 0
      %5535 = vmatpush1.bf16.msra.mxu0 0
      %5536 = vmatprep.subr.bf16.mxu0 0
      %5537 = vmatpush1.bf16.msra.mxu0 0
      %5538 = vmatprep.mubr.bf16.mxu0 0
      %5539 = vmatmul.mubr.bf16.gmra.mrb[0].mxu0 %v5439
      %v5540 = vpop.f32.mrb[0].mxu0
      %v5541 = vadd.f32 0.0, %v5540
      %v5542 = vpop.f32.mrb[0].mxu0
      %v5543 = vadd.f32 0.0, %v5542
      %v5544 = vpop.f32.mrb[0].mxu0
      %v5545 = vpop.f32.mrb[0].mxu0
      %5546 = vdwg.mxu0
      %5547 = vmatprep.subr.bf16.mxu0 %v5457
      %5548 = vmatpush1.bf16.msra.mxu0 %v5454
      %5549 = vmatprep.subr.bf16.mxu0 0
      %5550 = vmatpush1.bf16.msra.mxu0 0
      %5551 = vmatprep.subr.bf16.mxu0 0
      %5552 = vmatpush1.bf16.msra.mxu0 0
      %5553 = vmatprep.subr.bf16.mxu0 0
      %5554 = vmatpush1.bf16.msra.mxu0 0
      %5555 = vmatprep.subr.bf16.mxu0 0
      %5556 = vmatpush1.bf16.msra.mxu0 0
      %5557 = vmatprep.subr.bf16.mxu0 0
      %5558 = vmatpush1.bf16.msra.mxu0 0
      %5559 = vmatprep.subr.bf16.mxu0 0
      %5560 = vmatpush1.bf16.msra.mxu0 0
      %5561 = vmatprep.subr.bf16.mxu0 0
      %5562 = vmatpush1.bf16.msra.mxu0 0
      %5563 = vmatprep.subr.bf16.mxu0 0
      %5564 = vmatpush1.bf16.msra.mxu0 0
      %5565 = vmatprep.subr.bf16.mxu0 0
      %5566 = vmatpush1.bf16.msra.mxu0 0
      %5567 = vmatprep.subr.bf16.mxu0 0
      %5568 = vmatpush1.bf16.msra.mxu0 0
      %5569 = vmatprep.subr.bf16.mxu0 0
      %5570 = vmatpush1.bf16.msra.mxu0 0
      %5571 = vmatprep.subr.bf16.mxu0 0
      %5572 = vmatpush1.bf16.msra.mxu0 0
      %5573 = vmatprep.subr.bf16.mxu0 0
      %5574 = vmatpush1.bf16.msra.mxu0 0
      %5575 = vmatprep.subr.bf16.mxu0 0
      %5576 = vmatpush1.bf16.msra.mxu0 0
      %5577 = vmatprep.subr.bf16.mxu0 0
      %5578 = vmatpush1.bf16.msra.mxu0 0
      %5579 = vmatprep.mubr.bf16.mxu0 0
      %5580 = vmatmul.mubr.bf16.gmra.mrb[0].mxu0 %v5439
      %v5581 = vpop.f32.mrb[0].mxu0
      %v5582 = vadd.f32 0.0, %v5581
      %v5583 = vpop.f32.mrb[0].mxu0
      %v5584 = vadd.f32 0.0, %v5583
      %v5585 = vpop.f32.mrb[0].mxu0
      %v5586 = vpop.f32.mrb[0].mxu0
      %5587 = vdwg.mxu0
      %5588 = vmatprep.subr.bf16.mxu0 %v5463
      %5589 = vmatpush1.bf16.msra.mxu0 %v5460
      %5590 = vmatprep.subr.bf16.mxu0 0
      %5591 = vmatpush1.bf16.msra.mxu0 0
      %5592 = vmatprep.subr.bf16.mxu0 0
      %5593 = vmatpush1.bf16.msra.mxu0 0
      %5594 = vmatprep.subr.bf16.mxu0 0
      %5595 = vmatpush1.bf16.msra.mxu0 0
      %5596 = vmatprep.subr.bf16.mxu0 0
      %5597 = vmatpush1.bf16.msra.mxu0 0
      %5598 = vmatprep.subr.bf16.mxu0 0
      %5599 = vmatpush1.bf16.msra.mxu0 0
      %5600 = vmatprep.subr.bf16.mxu0 0
      %5601 = vmatpush1.bf16.msra.mxu0 0
      %5602 = vmatprep.subr.bf16.mxu0 0
      %5603 = vmatpush1.bf16.msra.mxu0 0
      %5604 = vmatprep.subr.bf16.mxu0 0
      %5605 = vmatpush1.bf16.msra.mxu0 0
      %5606 = vmatprep.subr.bf16.mxu0 0
      %5607 = vmatpush1.bf16.msra.mxu0 0
      %5608 = vmatprep.subr.bf16.mxu0 0
      %5609 = vmatpush1.bf16.msra.mxu0 0
      %5610 = vmatprep.subr.bf16.mxu0 0
      %5611 = vmatpush1.bf16.msra.mxu0 0
      %5612 = vmatprep.subr.bf16.mxu0 0
      %5613 = vmatpush1.bf16.msra.mxu0 0
      %5614 = vmatprep.subr.bf16.mxu0 0
      %5615 = vmatpush1.bf16.msra.mxu0 0
      %5616 = vmatprep.subr.bf16.mxu0 0
      %5617 = vmatpush1.bf16.msra.mxu0 0
      %5618 = vmatprep.subr.bf16.mxu0 0
      %5619 = vmatpush1.bf16.msra.mxu0 0
      %5620 = vmatprep.mubr.bf16.mxu0 0
      %5621 = vmatmul.mubr.bf16.gmra.mrb[0].mxu0 %v5439
      %v5622 = vpop.f32.mrb[0].mxu0
      %v5623 = vadd.f32 0.0, %v5622
      %v5624 = vpop.f32.mrb[0].mxu0
      %v5625 = vadd.f32 0.0, %v5624
      %v5626 = vpop.f32.mrb[0].mxu0
      %v5627 = vpop.f32.mrb[0].mxu0
      %5628 = vdwg.mxu0
      %v5629 = vadd.f32 %v5354, %v5500
      %v5630 = vadd.f32 %v5355, %v5502
      %v5631 = vadd.f32 %v5356, %v5541
      %v5632 = vadd.f32 %v5357, %v5543
      %v5633 = vadd.f32 %v5358, %v5582
      %v5634 = vadd.f32 %v5359, %v5584
      %v5635 = vadd.f32 %v5360, %v5623
      %v5636 = vadd.f32 %v5361, %v5625
      %v5637 = vld [vmem:[%s219 + $0x2] sm:$0xff]
      %v5638 = vld [vmem:[%s219 + $0xa] sm:$0xff]
      %v5639 = vld [vmem:[%s219 + $0x12] sm:$0x3]
      %s5640 = scalar_lea.vmem %s1, 80
      %v5641 = vld [vmem:[%s5640] sm:$0xf]
      %v5645 = vcombine.high %v5637, %v5637
      %v5647 = vunpack.c.l.s4 1983009808
      %v5648 = vunpack.c.0.s8 %v5647
      %v5649 = vlaneseq
      %v5650 = vshrl.u32 %v5649, 7
      %v5651 = vsub.s32 %v5648, %v5650
      %v5652 = vrot.slane %v5637, %v5651
      %v5654 = vunpack.c.l.s4 1983009808
      %v5655 = vunpack.c.0.s8 %v5654
      %v5656 = vlaneseq
      %v5657 = vshrl.u32 %v5656, 7
      %v5658 = vsub.s32 %v5655, %v5657
      %v5659 = vrot.slane %v5645, %v5658
      %v5660 = vcombine.high %v5652, %v5652
      %v5661 = vcombine.high %v5659, %v5659
      %v5662 = vcombine.high %v5638, %v5638
      %v5664 = vunpack.c.l.s4 1983009808
      %v5665 = vunpack.c.0.s8 %v5664
      %v5666 = vlaneseq
      %v5667 = vshrl.u32 %v5666, 7
      %v5668 = vsub.s32 %v5665, %v5667
      %v5669 = vrot.slane %v5638, %v5668
      %v5671 = vunpack.c.l.s4 1983009808
      %v5672 = vunpack.c.0.s8 %v5671
      %v5673 = vlaneseq
      %v5674 = vshrl.u32 %v5673, 7
      %v5675 = vsub.s32 %v5672, %v5674
      %v5676 = vrot.slane %v5662, %v5675
      %v5677 = vcombine.high %v5669, %v5669
      %v5678 = vcombine.high %v5676, %v5676
      %v5680 = vunpack.c.l.s4 1983009808
      %v5681 = vunpack.c.0.s8 %v5680
      %v5682 = vlaneseq
      %v5683 = vshrl.u32 %v5682, 7
      %v5684 = vsub.s32 %v5681, %v5683
      %v5685 = vrot.slane %v5639, %v5684
      %5686 = vrot.lane.b32.xlu0 %v5652, 54
      %v5687 = vpop.permute.xlu0 %5686
      %5688 = vrot.lane.b32.xlu0 %v5660, 54
      %v5689 = vpop.permute.xlu0 %5688
      %5690 = vrot.lane.b32.xlu0 %v5659, 54
      %v5691 = vpop.permute.xlu0 %5690
      %5692 = vrot.lane.b32.xlu0 %v5661, 54
      %v5693 = vpop.permute.xlu0 %5692
      %5694 = vrot.lane.b32.xlu0 %v5669, 54
      %v5695 = vpop.permute.xlu0 %5694
      %5696 = vrot.lane.b32.xlu0 %v5677, 54
      %v5697 = vpop.permute.xlu0 %5696
      %5698 = vrot.lane.b32.xlu0 %v5676, 54
      %v5699 = vpop.permute.xlu0 %5698
      %5700 = vrot.lane.b32.xlu0 %v5678, 54
      %v5701 = vpop.permute.xlu0 %5700
      %5702 = vrot.lane.b32.xlu0 %v5685, 54
      %v5703 = vpop.permute.xlu0 %5702
      %vm5704 = vcmask 441344
      %v5705 = vsel %vm5704, %v5687, %v5689
      %v5706 = vsel %vm5704, %v5689, %v5691
      %v5707 = vsel %vm5704, %v5691, %v5693
      %v5708 = vsel %vm5704, %v5693, %v5695
      %v5709 = vsel %vm5704, %v5695, %v5697
      %v5710 = vsel %vm5704, %v5697, %v5699
      %v5711 = vsel %vm5704, %v5699, %v5701
      %v5712 = vsel %vm5704, %v5701, %v5703
      %v5714 = vsel %vm303, %v5641, 0
      %v5717 = vsel %vm307, %v5705, 0
      %v5720 = vsel %vm307, %v5706, 0
      %v5723 = vsel %vm307, %v5707, 0
      %v5726 = vsel %vm307, %v5708, 0
      %v5729 = vsel %vm307, %v5709, 0
      %v5732 = vsel %vm307, %v5710, 0
      %v5735 = vsel %vm307, %v5711, 0
      %v5738 = vsel %vm307, %v5712, 0
      %5740 = vmatprep.subr.bf16.mxu0 %v5720
      %5741 = vmatpush1.bf16.msra.mxu0 %v5717
      %5742 = vmatprep.subr.bf16.mxu0 0
      %5743 = vmatpush1.bf16.msra.mxu0 0
      %5744 = vmatprep.subr.bf16.mxu0 0
      %5745 = vmatpush1.bf16.msra.mxu0 0
      %5746 = vmatprep.subr.bf16.mxu0 0
      %5747 = vmatpush1.bf16.msra.mxu0 0
      %5748 = vmatprep.subr.bf16.mxu0 0
      %5749 = vmatpush1.bf16.msra.mxu0 0
      %5750 = vmatprep.subr.bf16.mxu0 0
      %5751 = vmatpush1.bf16.msra.mxu0 0
      %5752 = vmatprep.subr.bf16.mxu0 0
      %5753 = vmatpush1.bf16.msra.mxu0 0
      %5754 = vmatprep.subr.bf16.mxu0 0
      %5755 = vmatpush1.bf16.msra.mxu0 0
      %5756 = vmatprep.subr.bf16.mxu0 0
      %5757 = vmatpush1.bf16.msra.mxu0 0
      %5758 = vmatprep.subr.bf16.mxu0 0
      %5759 = vmatpush1.bf16.msra.mxu0 0
      %5760 = vmatprep.subr.bf16.mxu0 0
      %5761 = vmatpush1.bf16.msra.mxu0 0
      %5762 = vmatprep.subr.bf16.mxu0 0
      %5763 = vmatpush1.bf16.msra.mxu0 0
      %5764 = vmatprep.subr.bf16.mxu0 0
      %5765 = vmatpush1.bf16.msra.mxu0 0
      %5766 = vmatprep.subr.bf16.mxu0 0
      %5767 = vmatpush1.bf16.msra.mxu0 0
      %5768 = vmatprep.subr.bf16.mxu0 0
      %5769 = vmatpush1.bf16.msra.mxu0 0
      %5770 = vmatprep.subr.bf16.mxu0 0
      %5771 = vmatpush1.bf16.msra.mxu0 0
      %5772 = vmatprep.mubr.bf16.mxu0 0
      %5773 = vmatmul.mubr.bf16.gmra.mrb[0].mxu0 %v5714
      %v5774 = vpop.f32.mrb[0].mxu0
      %v5775 = vadd.f32 0.0, %v5774
      %v5776 = vpop.f32.mrb[0].mxu0
      %v5777 = vadd.f32 0.0, %v5776
      %v5778 = vpop.f32.mrb[0].mxu0
      %v5779 = vpop.f32.mrb[0].mxu0
      %5780 = vdwg.mxu0
      %5781 = vmatprep.subr.bf16.mxu0 %v5726
      %5782 = vmatpush1.bf16.msra.mxu0 %v5723
      %5783 = vmatprep.subr.bf16.mxu0 0
      %5784 = vmatpush1.bf16.msra.mxu0 0
      %5785 = vmatprep.subr.bf16.mxu0 0
      %5786 = vmatpush1.bf16.msra.mxu0 0
      %5787 = vmatprep.subr.bf16.mxu0 0
      %5788 = vmatpush1.bf16.msra.mxu0 0
      %5789 = vmatprep.subr.bf16.mxu0 0
      %5790 = vmatpush1.bf16.msra.mxu0 0
      %5791 = vmatprep.subr.bf16.mxu0 0
      %5792 = vmatpush1.bf16.msra.mxu0 0
      %5793 = vmatprep.subr.bf16.mxu0 0
      %5794 = vmatpush1.bf16.msra.mxu0 0
      %5795 = vmatprep.subr.bf16.mxu0 0
      %5796 = vmatpush1.bf16.msra.mxu0 0
      %5797 = vmatprep.subr.bf16.mxu0 0
      %5798 = vmatpush1.bf16.msra.mxu0 0
      %5799 = vmatprep.subr.bf16.mxu0 0
      %5800 = vmatpush1.bf16.msra.mxu0 0
      %5801 = vmatprep.subr.bf16.mxu0 0
      %5802 = vmatpush1.bf16.msra.mxu0 0
      %5803 = vmatprep.subr.bf16.mxu0 0
      %5804 = vmatpush1.bf16.msra.mxu0 0
      %5805 = vmatprep.subr.bf16.mxu0 0
      %5806 = vmatpush1.bf16.msra.mxu0 0
      %5807 = vmatprep.subr.bf16.mxu0 0
      %5808 = vmatpush1.bf16.msra.mxu0 0
      %5809 = vmatprep.subr.bf16.mxu0 0
      %5810 = vmatpush1.bf16.msra.mxu0 0
      %5811 = vmatprep.subr.bf16.mxu0 0
      %5812 = vmatpush1.bf16.msra.mxu0 0
      %5813 = vmatprep.mubr.bf16.mxu0 0
      %5814 = vmatmul.mubr.bf16.gmra.mrb[0].mxu0 %v5714
      %v5815 = vpop.f32.mrb[0].mxu0
      %v5816 = vadd.f32 0.0, %v5815
      %v5817 = vpop.f32.mrb[0].mxu0
      %v5818 = vadd.f32 0.0, %v5817
      %v5819 = vpop.f32.mrb[0].mxu0
      %v5820 = vpop.f32.mrb[0].mxu0
      %5821 = vdwg.mxu0
      %5822 = vmatprep.subr.bf16.mxu0 %v5732
      %5823 = vmatpush1.bf16.msra.mxu0 %v5729
      %5824 = vmatprep.subr.bf16.mxu0 0
      %5825 = vmatpush1.bf16.msra.mxu0 0
      %5826 = vmatprep.subr.bf16.mxu0 0
      %5827 = vmatpush1.bf16.msra.mxu0 0
      %5828 = vmatprep.subr.bf16.mxu0 0
      %5829 = vmatpush1.bf16.msra.mxu0 0
      %5830 = vmatprep.subr.bf16.mxu0 0
      %5831 = vmatpush1.bf16.msra.mxu0 0
      %5832 = vmatprep.subr.bf16.mxu0 0
      %5833 = vmatpush1.bf16.msra.mxu0 0
      %5834 = vmatprep.subr.bf16.mxu0 0
      %5835 = vmatpush1.bf16.msra.mxu0 0
      %5836 = vmatprep.subr.bf16.mxu0 0
      %5837 = vmatpush1.bf16.msra.mxu0 0
      %5838 = vmatprep.subr.bf16.mxu0 0
      %5839 = vmatpush1.bf16.msra.mxu0 0
      %5840 = vmatprep.subr.bf16.mxu0 0
      %5841 = vmatpush1.bf16.msra.mxu0 0
      %5842 = vmatprep.subr.bf16.mxu0 0
      %5843 = vmatpush1.bf16.msra.mxu0 0
      %5844 = vmatprep.subr.bf16.mxu0 0
      %5845 = vmatpush1.bf16.msra.mxu0 0
      %5846 = vmatprep.subr.bf16.mxu0 0
      %5847 = vmatpush1.bf16.msra.mxu0 0
      %5848 = vmatprep.subr.bf16.mxu0 0
      %5849 = vmatpush1.bf16.msra.mxu0 0
      %5850 = vmatprep.subr.bf16.mxu0 0
      %5851 = vmatpush1.bf16.msra.mxu0 0
      %5852 = vmatprep.subr.bf16.mxu0 0
      %5853 = vmatpush1.bf16.msra.mxu0 0
      %5854 = vmatprep.mubr.bf16.mxu0 0
      %5855 = vmatmul.mubr.bf16.gmra.mrb[0].mxu0 %v5714
      %v5856 = vpop.f32.mrb[0].mxu0
      %v5857 = vadd.f32 0.0, %v5856
      %v5858 = vpop.f32.mrb[0].mxu0
      %v5859 = vadd.f32 0.0, %v5858
      %v5860 = vpop.f32.mrb[0].mxu0
      %v5861 = vpop.f32.mrb[0].mxu0
      %5862 = vdwg.mxu0
      %5863 = vmatprep.subr.bf16.mxu0 %v5738
      %5864 = vmatpush1.bf16.msra.mxu0 %v5735
      %5865 = vmatprep.subr.bf16.mxu0 0
      %5866 = vmatpush1.bf16.msra.mxu0 0
      %5867 = vmatprep.subr.bf16.mxu0 0
      %5868 = vmatpush1.bf16.msra.mxu0 0
      %5869 = vmatprep.subr.bf16.mxu0 0
      %5870 = vmatpush1.bf16.msra.mxu0 0
      %5871 = vmatprep.subr.bf16.mxu0 0
      %5872 = vmatpush1.bf16.msra.mxu0 0
      %5873 = vmatprep.subr.bf16.mxu0 0
      %5874 = vmatpush1.bf16.msra.mxu0 0
      %5875 = vmatprep.subr.bf16.mxu0 0
      %5876 = vmatpush1.bf16.msra.mxu0 0
      %5877 = vmatprep.subr.bf16.mxu0 0
      %5878 = vmatpush1.bf16.msra.mxu0 0
      %5879 = vmatprep.subr.bf16.mxu0 0
      %5880 = vmatpush1.bf16.msra.mxu0 0
      %5881 = vmatprep.subr.bf16.mxu0 0
      %5882 = vmatpush1.bf16.msra.mxu0 0
      %5883 = vmatprep.subr.bf16.mxu0 0
      %5884 = vmatpush1.bf16.msra.mxu0 0
      %5885 = vmatprep.subr.bf16.mxu0 0
      %5886 = vmatpush1.bf16.msra.mxu0 0
      %5887 = vmatprep.subr.bf16.mxu0 0
      %5888 = vmatpush1.bf16.msra.mxu0 0
      %5889 = vmatprep.subr.bf16.mxu0 0
      %5890 = vmatpush1.bf16.msra.mxu0 0
      %5891 = vmatprep.subr.bf16.mxu0 0
      %5892 = vmatpush1.bf16.msra.mxu0 0
      %5893 = vmatprep.subr.bf16.mxu0 0
      %5894 = vmatpush1.bf16.msra.mxu0 0
      %5895 = vmatprep.mubr.bf16.mxu0 0
      %5896 = vmatmul.mubr.bf16.gmra.mrb[0].mxu0 %v5714
      %v5897 = vpop.f32.mrb[0].mxu0
      %v5898 = vadd.f32 0.0, %v5897
      %v5899 = vpop.f32.mrb[0].mxu0
      %v5900 = vadd.f32 0.0, %v5899
      %v5901 = vpop.f32.mrb[0].mxu0
      %v5902 = vpop.f32.mrb[0].mxu0
      %5903 = vdwg.mxu0
      %v5904 = vadd.f32 %v5629, %v5775
      %v5905 = vadd.f32 %v5630, %v5777
      %v5906 = vadd.f32 %v5631, %v5816
      %v5907 = vadd.f32 %v5632, %v5818
      %v5908 = vadd.f32 %v5633, %v5857
      %v5909 = vadd.f32 %v5634, %v5859
      %v5910 = vadd.f32 %v5635, %v5898
      %v5911 = vadd.f32 %v5636, %v5900
      %v5912 = vld [vmem:[%s219 + $0x2] sm:$0xff]
      %v5913 = vld [vmem:[%s219 + $0xa] sm:$0xff]
      %v5914 = vld [vmem:[%s219 + $0x12] sm:$0x3]
      %s5915 = scalar_lea.vmem %s1, 84
      %v5916 = vld [vmem:[%s5915] sm:$0xf]
      %v5920 = vcombine.high %v5912, %v5912
      %v5922 = vunpack.c.l.s4 1983009808
      %v5923 = vunpack.c.0.s8 %v5922
      %v5924 = vlaneseq
      %v5925 = vshrl.u32 %v5924, 7
      %v5926 = vsub.s32 %v5923, %v5925
      %v5927 = vrot.slane %v5912, %v5926
      %v5929 = vunpack.c.l.s4 1983009808
      %v5930 = vunpack.c.0.s8 %v5929
      %v5931 = vlaneseq
      %v5932 = vshrl.u32 %v5931, 7
      %v5933 = vsub.s32 %v5930, %v5932
      %v5934 = vrot.slane %v5920, %v5933
      %v5935 = vcombine.high %v5927, %v5927
      %v5936 = vcombine.high %v5934, %v5934
      %v5937 = vcombine.high %v5913, %v5913
      %v5939 = vunpack.c.l.s4 1983009808
      %v5940 = vunpack.c.0.s8 %v5939
      %v5941 = vlaneseq
      %v5942 = vshrl.u32 %v5941, 7
      %v5943 = vsub.s32 %v5940, %v5942
      %v5944 = vrot.slane %v5913, %v5943
      %v5946 = vunpack.c.l.s4 1983009808
      %v5947 = vunpack.c.0.s8 %v5946
      %v5948 = vlaneseq
      %v5949 = vshrl.u32 %v5948, 7
      %v5950 = vsub.s32 %v5947, %v5949
      %v5951 = vrot.slane %v5937, %v5950
      %v5952 = vcombine.high %v5944, %v5944
      %v5953 = vcombine.high %v5951, %v5951
      %v5955 = vunpack.c.l.s4 1983009808
      %v5956 = vunpack.c.0.s8 %v5955
      %v5957 = vlaneseq
      %v5958 = vshrl.u32 %v5957, 7
      %v5959 = vsub.s32 %v5956, %v5958
      %v5960 = vrot.slane %v5914, %v5959
      %5961 = vrot.lane.b32.xlu0 %v5927, 46
      %v5962 = vpop.permute.xlu0 %5961
      %5963 = vrot.lane.b32.xlu0 %v5935, 46
      %v5964 = vpop.permute.xlu0 %5963
      %5965 = vrot.lane.b32.xlu0 %v5934, 46
      %v5966 = vpop.permute.xlu0 %5965
      %5967 = vrot.lane.b32.xlu0 %v5936, 46
      %v5968 = vpop.permute.xlu0 %5967
      %5969 = vrot.lane.b32.xlu0 %v5944, 46
      %v5970 = vpop.permute.xlu0 %5969
      %5971 = vrot.lane.b32.xlu0 %v5952, 46
      %v5972 = vpop.permute.xlu0 %5971
      %5973 = vrot.lane.b32.xlu0 %v5951, 46
      %v5974 = vpop.permute.xlu0 %5973
      %5975 = vrot.lane.b32.xlu0 %v5953, 46
      %v5976 = vpop.permute.xlu0 %5975
      %5977 = vrot.lane.b32.xlu0 %v5960, 46
      %v5978 = vpop.permute.xlu0 %5977
      %vm5979 = vcmask 375808
      %v5980 = vsel %vm5979, %v5962, %v5964
      %v5981 = vsel %vm5979, %v5964, %v5966
      %v5982 = vsel %vm5979, %v5966, %v5968
      %v5983 = vsel %vm5979, %v5968, %v5970
      %v5984 = vsel %vm5979, %v5970, %v5972
      %v5985 = vsel %vm5979, %v5972, %v5974
      %v5986 = vsel %vm5979, %v5974, %v5976
      %v5987 = vsel %vm5979, %v5976, %v5978
      %v5989 = vsel %vm303, %v5916, 0
      %v5992 = vsel %vm307, %v5980, 0
      %v5995 = vsel %vm307, %v5981, 0
      %v5998 = vsel %vm307, %v5982, 0
      %v6001 = vsel %vm307, %v5983, 0
      %v6004 = vsel %vm307, %v5984, 0
      %v6007 = vsel %vm307, %v5985, 0
      %v6010 = vsel %vm307, %v5986, 0
      %v6013 = vsel %vm307, %v5987, 0
      %6015 = vmatprep.subr.bf16.mxu0 %v5995
      %6016 = vmatpush1.bf16.msra.mxu0 %v5992
      %6017 = vmatprep.subr.bf16.mxu0 0
      %6018 = vmatpush1.bf16.msra.mxu0 0
      %6019 = vmatprep.subr.bf16.mxu0 0
      %6020 = vmatpush1.bf16.msra.mxu0 0
      %6021 = vmatprep.subr.bf16.mxu0 0
      %6022 = vmatpush1.bf16.msra.mxu0 0
      %6023 = vmatprep.subr.bf16.mxu0 0
      %6024 = vmatpush1.bf16.msra.mxu0 0
      %6025 = vmatprep.subr.bf16.mxu0 0
      %6026 = vmatpush1.bf16.msra.mxu0 0
      %6027 = vmatprep.subr.bf16.mxu0 0
      %6028 = vmatpush1.bf16.msra.mxu0 0
      %6029 = vmatprep.subr.bf16.mxu0 0
      %6030 = vmatpush1.bf16.msra.mxu0 0
      %6031 = vmatprep.subr.bf16.mxu0 0
      %6032 = vmatpush1.bf16.msra.mxu0 0
      %6033 = vmatprep.subr.bf16.mxu0 0
      %6034 = vmatpush1.bf16.msra.mxu0 0
      %6035 = vmatprep.subr.bf16.mxu0 0
      %6036 = vmatpush1.bf16.msra.mxu0 0
      %6037 = vmatprep.subr.bf16.mxu0 0
      %6038 = vmatpush1.bf16.msra.mxu0 0
      %6039 = vmatprep.subr.bf16.mxu0 0
      %6040 = vmatpush1.bf16.msra.mxu0 0
      %6041 = vmatprep.subr.bf16.mxu0 0
      %6042 = vmatpush1.bf16.msra.mxu0 0
      %6043 = vmatprep.subr.bf16.mxu0 0
      %6044 = vmatpush1.bf16.msra.mxu0 0
      %6045 = vmatprep.subr.bf16.mxu0 0
      %6046 = vmatpush1.bf16.msra.mxu0 0
      %6047 = vmatprep.mubr.bf16.mxu0 0
      %6048 = vmatmul.mubr.bf16.gmra.mrb[0].mxu0 %v5989
      %v6049 = vpop.f32.mrb[0].mxu0
      %v6050 = vadd.f32 0.0, %v6049
      %v6051 = vpop.f32.mrb[0].mxu0
      %v6052 = vadd.f32 0.0, %v6051
      %v6053 = vpop.f32.mrb[0].mxu0
      %v6054 = vpop.f32.mrb[0].mxu0
      %6055 = vdwg.mxu0
      %6056 = vmatprep.subr.bf16.mxu0 %v6001
      %6057 = vmatpush1.bf16.msra.mxu0 %v5998
      %6058 = vmatprep.subr.bf16.mxu0 0
      %6059 = vmatpush1.bf16.msra.mxu0 0
      %6060 = vmatprep.subr.bf16.mxu0 0
      %6061 = vmatpush1.bf16.msra.mxu0 0
      %6062 = vmatprep.subr.bf16.mxu0 0
      %6063 = vmatpush1.bf16.msra.mxu0 0
      %6064 = vmatprep.subr.bf16.mxu0 0
      %6065 = vmatpush1.bf16.msra.mxu0 0
      %6066 = vmatprep.subr.bf16.mxu0 0
      %6067 = vmatpush1.bf16.msra.mxu0 0
      %6068 = vmatprep.subr.bf16.mxu0 0
      %6069 = vmatpush1.bf16.msra.mxu0 0
      %6070 = vmatprep.subr.bf16.mxu0 0
      %6071 = vmatpush1.bf16.msra.mxu0 0
      %6072 = vmatprep.subr.bf16.mxu0 0
      %6073 = vmatpush1.bf16.msra.mxu0 0
      %6074 = vmatprep.subr.bf16.mxu0 0
      %6075 = vmatpush1.bf16.msra.mxu0 0
      %6076 = vmatprep.subr.bf16.mxu0 0
      %6077 = vmatpush1.bf16.msra.mxu0 0
      %6078 = vmatprep.subr.bf16.mxu0 0
      %6079 = vmatpush1.bf16.msra.mxu0 0
      %6080 = vmatprep.subr.bf16.mxu0 0
      %6081 = vmatpush1.bf16.msra.mxu0 0
      %6082 = vmatprep.subr.bf16.mxu0 0
      %6083 = vmatpush1.bf16.msra.mxu0 0
      %6084 = vmatprep.subr.bf16.mxu0 0
      %6085 = vmatpush1.bf16.msra.mxu0 0
      %6086 = vmatprep.subr.bf16.mxu0 0
      %6087 = vmatpush1.bf16.msra.mxu0 0
      %6088 = vmatprep.mubr.bf16.mxu0 0
      %6089 = vmatmul.mubr.bf16.gmra.mrb[0].mxu0 %v5989
      %v6090 = vpop.f32.mrb[0].mxu0
      %v6091 = vadd.f32 0.0, %v6090
      %v6092 = vpop.f32.mrb[0].mxu0
      %v6093 = vadd.f32 0.0, %v6092
      %v6094 = vpop.f32.mrb[0].mxu0
      %v6095 = vpop.f32.mrb[0].mxu0
      %6096 = vdwg.mxu0
      %6097 = vmatprep.subr.bf16.mxu0 %v6007
      %6098 = vmatpush1.bf16.msra.mxu0 %v6004
      %6099 = vmatprep.subr.bf16.mxu0 0
      %6100 = vmatpush1.bf16.msra.mxu0 0
      %6101 = vmatprep.subr.bf16.mxu0 0
      %6102 = vmatpush1.bf16.msra.mxu0 0
      %6103 = vmatprep.subr.bf16.mxu0 0
      %6104 = vmatpush1.bf16.msra.mxu0 0
      %6105 = vmatprep.subr.bf16.mxu0 0
      %6106 = vmatpush1.bf16.msra.mxu0 0
      %6107 = vmatprep.subr.bf16.mxu0 0
      %6108 = vmatpush1.bf16.msra.mxu0 0
      %6109 = vmatprep.subr.bf16.mxu0 0
      %6110 = vmatpush1.bf16.msra.mxu0 0
      %6111 = vmatprep.subr.bf16.mxu0 0
      %6112 = vmatpush1.bf16.msra.mxu0 0
      %6113 = vmatprep.subr.bf16.mxu0 0
      %6114 = vmatpush1.bf16.msra.mxu0 0
      %6115 = vmatprep.subr.bf16.mxu0 0
      %6116 = vmatpush1.bf16.msra.mxu0 0
      %6117 = vmatprep.subr.bf16.mxu0 0
      %6118 = vmatpush1.bf16.msra.mxu0 0
      %6119 = vmatprep.subr.bf16.mxu0 0
      %6120 = vmatpush1.bf16.msra.mxu0 0
      %6121 = vmatprep.subr.bf16.mxu0 0
      %6122 = vmatpush1.bf16.msra.mxu0 0
      %6123 = vmatprep.subr.bf16.mxu0 0
      %6124 = vmatpush1.bf16.msra.mxu0 0
      %6125 = vmatprep.subr.bf16.mxu0 0
      %6126 = vmatpush1.bf16.msra.mxu0 0
      %6127 = vmatprep.subr.bf16.mxu0 0
      %6128 = vmatpush1.bf16.msra.mxu0 0
      %6129 = vmatprep.mubr.bf16.mxu0 0
      %6130 = vmatmul.mubr.bf16.gmra.mrb[0].mxu0 %v5989
      %v6131 = vpop.f32.mrb[0].mxu0
      %v6132 = vadd.f32 0.0, %v6131
      %v6133 = vpop.f32.mrb[0].mxu0
      %v6134 = vadd.f32 0.0, %v6133
      %v6135 = vpop.f32.mrb[0].mxu0
      %v6136 = vpop.f32.mrb[0].mxu0
      %6137 = vdwg.mxu0
      %6138 = vmatprep.subr.bf16.mxu0 %v6013
      %6139 = vmatpush1.bf16.msra.mxu0 %v6010
      %6140 = vmatprep.subr.bf16.mxu0 0
      %6141 = vmatpush1.bf16.msra.mxu0 0
      %6142 = vmatprep.subr.bf16.mxu0 0
      %6143 = vmatpush1.bf16.msra.mxu0 0
      %6144 = vmatprep.subr.bf16.mxu0 0
      %6145 = vmatpush1.bf16.msra.mxu0 0
      %6146 = vmatprep.subr.bf16.mxu0 0
      %6147 = vmatpush1.bf16.msra.mxu0 0
      %6148 = vmatprep.subr.bf16.mxu0 0
      %6149 = vmatpush1.bf16.msra.mxu0 0
      %6150 = vmatprep.subr.bf16.mxu0 0
      %6151 = vmatpush1.bf16.msra.mxu0 0
      %6152 = vmatprep.subr.bf16.mxu0 0
      %6153 = vmatpush1.bf16.msra.mxu0 0
      %6154 = vmatprep.subr.bf16.mxu0 0
      %6155 = vmatpush1.bf16.msra.mxu0 0
      %6156 = vmatprep.subr.bf16.mxu0 0
      %6157 = vmatpush1.bf16.msra.mxu0 0
      %6158 = vmatprep.subr.bf16.mxu0 0
      %6159 = vmatpush1.bf16.msra.mxu0 0
      %6160 = vmatprep.subr.bf16.mxu0 0
      %6161 = vmatpush1.bf16.msra.mxu0 0
      %6162 = vmatprep.subr.bf16.mxu0 0
      %6163 = vmatpush1.bf16.msra.mxu0 0
      %6164 = vmatprep.subr.bf16.mxu0 0
      %6165 = vmatpush1.bf16.msra.mxu0 0
      %6166 = vmatprep.subr.bf16.mxu0 0
      %6167 = vmatpush1.bf16.msra.mxu0 0
      %6168 = vmatprep.subr.bf16.mxu0 0
      %6169 = vmatpush1.bf16.msra.mxu0 0
      %6170 = vmatprep.mubr.bf16.mxu0 0
      %6171 = vmatmul.mubr.bf16.gmra.mrb[0].mxu0 %v5989
      %v6172 = vpop.f32.mrb[0].mxu0
      %v6173 = vadd.f32 0.0, %v6172
      %v6174 = vpop.f32.mrb[0].mxu0
      %v6175 = vadd.f32 0.0, %v6174
      %v6176 = vpop.f32.mrb[0].mxu0
      %v6177 = vpop.f32.mrb[0].mxu0
      %6178 = vdwg.mxu0
      %v6179 = vadd.f32 %v5904, %v6050
      %v6180 = vadd.f32 %v5905, %v6052
      %v6181 = vadd.f32 %v5906, %v6091
      %v6182 = vadd.f32 %v5907, %v6093
      %v6183 = vadd.f32 %v5908, %v6132
      %v6184 = vadd.f32 %v5909, %v6134
      %v6185 = vadd.f32 %v5910, %v6173
      %v6186 = vadd.f32 %v5911, %v6175
      %v6187 = vld [vmem:[%s219 + $0x2] sm:$0xff]
      %v6188 = vld [vmem:[%s219 + $0xa] sm:$0xff]
      %v6189 = vld [vmem:[%s219 + $0x12] sm:$0x3]
      %s6190 = scalar_lea.vmem %s1, 88
      %v6191 = vld [vmem:[%s6190] sm:$0xf]
      %v6195 = vcombine.high %v6187, %v6187
      %v6197 = vunpack.c.l.s4 1983009808
      %v6198 = vunpack.c.0.s8 %v6197
      %v6199 = vlaneseq
      %v6200 = vshrl.u32 %v6199, 7
      %v6201 = vsub.s32 %v6198, %v6200
      %v6202 = vrot.slane %v6187, %v6201
      %v6204 = vunpack.c.l.s4 1983009808
      %v6205 = vunpack.c.0.s8 %v6204
      %v6206 = vlaneseq
      %v6207 = vshrl.u32 %v6206, 7
      %v6208 = vsub.s32 %v6205, %v6207
      %v6209 = vrot.slane %v6195, %v6208
      %v6210 = vcombine.high %v6202, %v6202
      %v6211 = vcombine.high %v6209, %v6209
      %v6212 = vcombine.high %v6188, %v6188
      %v6214 = vunpack.c.l.s4 1983009808
      %v6215 = vunpack.c.0.s8 %v6214
      %v6216 = vlaneseq
      %v6217 = vshrl.u32 %v6216, 7
      %v6218 = vsub.s32 %v6215, %v6217
      %v6219 = vrot.slane %v6188, %v6218
      %v6221 = vunpack.c.l.s4 1983009808
      %v6222 = vunpack.c.0.s8 %v6221
      %v6223 = vlaneseq
      %v6224 = vshrl.u32 %v6223, 7
      %v6225 = vsub.s32 %v6222, %v6224
      %v6226 = vrot.slane %v6212, %v6225
      %v6227 = vcombine.high %v6219, %v6219
      %v6228 = vcombine.high %v6226, %v6226
      %v6230 = vunpack.c.l.s4 1983009808
      %v6231 = vunpack.c.0.s8 %v6230
      %v6232 = vlaneseq
      %v6233 = vshrl.u32 %v6232, 7
      %v6234 = vsub.s32 %v6231, %v6233
      %v6235 = vrot.slane %v6189, %v6234
      %6236 = vrot.lane.b32.xlu0 %v6202, 45
      %v6237 = vpop.permute.xlu0 %6236
      %6238 = vrot.lane.b32.xlu0 %v6210, 45
      %v6239 = vpop.permute.xlu0 %6238
      %6240 = vrot.lane.b32.xlu0 %v6209, 45
      %v6241 = vpop.permute.xlu0 %6240
      %6242 = vrot.lane.b32.xlu0 %v6211, 45
      %v6243 = vpop.permute.xlu0 %6242
      %6244 = vrot.lane.b32.xlu0 %v6219, 45
      %v6245 = vpop.permute.xlu0 %6244
      %6246 = vrot.lane.b32.xlu0 %v6227, 45
      %v6247 = vpop.permute.xlu0 %6246
      %6248 = vrot.lane.b32.xlu0 %v6226, 45
      %v6249 = vpop.permute.xlu0 %6248
      %6250 = vrot.lane.b32.xlu0 %v6228, 45
      %v6251 = vpop.permute.xlu0 %6250
      %6252 = vrot.lane.b32.xlu0 %v6235, 45
      %v6253 = vpop.permute.xlu0 %6252
      %vm6254 = vcmask 367616
      %v6255 = vsel %vm6254, %v6237, %v6239
      %v6256 = vsel %vm6254, %v6239, %v6241
      %v6257 = vsel %vm6254, %v6241, %v6243
      %v6258 = vsel %vm6254, %v6243, %v6245
      %v6259 = vsel %vm6254, %v6245, %v6247
      %v6260 = vsel %vm6254, %v6247, %v6249
      %v6261 = vsel %vm6254, %v6249, %v6251
      %v6262 = vsel %vm6254, %v6251, %v6253
      %v6264 = vsel %vm303, %v6191, 0
      %v6267 = vsel %vm307, %v6255, 0
      %v6270 = vsel %vm307, %v6256, 0
      %v6273 = vsel %vm307, %v6257, 0
      %v6276 = vsel %vm307, %v6258, 0
      %v6279 = vsel %vm307, %v6259, 0
      %v6282 = vsel %vm307, %v6260, 0
      %v6285 = vsel %vm307, %v6261, 0
      %v6288 = vsel %vm307, %v6262, 0
      %6290 = vmatprep.subr.bf16.mxu0 %v6270
      %6291 = vmatpush1.bf16.msra.mxu0 %v6267
      %6292 = vmatprep.subr.bf16.mxu0 0
      %6293 = vmatpush1.bf16.msra.mxu0 0
      %6294 = vmatprep.subr.bf16.mxu0 0
      %6295 = vmatpush1.bf16.msra.mxu0 0
      %6296 = vmatprep.subr.bf16.mxu0 0
      %6297 = vmatpush1.bf16.msra.mxu0 0
      %6298 = vmatprep.subr.bf16.mxu0 0
      %6299 = vmatpush1.bf16.msra.mxu0 0
      %6300 = vmatprep.subr.bf16.mxu0 0
      %6301 = vmatpush1.bf16.msra.mxu0 0
      %6302 = vmatprep.subr.bf16.mxu0 0
      %6303 = vmatpush1.bf16.msra.mxu0 0
      %6304 = vmatprep.subr.bf16.mxu0 0
      %6305 = vmatpush1.bf16.msra.mxu0 0
      %6306 = vmatprep.subr.bf16.mxu0 0
      %6307 = vmatpush1.bf16.msra.mxu0 0
      %6308 = vmatprep.subr.bf16.mxu0 0
      %6309 = vmatpush1.bf16.msra.mxu0 0
      %6310 = vmatprep.subr.bf16.mxu0 0
      %6311 = vmatpush1.bf16.msra.mxu0 0
      %6312 = vmatprep.subr.bf16.mxu0 0
      %6313 = vmatpush1.bf16.msra.mxu0 0
      %6314 = vmatprep.subr.bf16.mxu0 0
      %6315 = vmatpush1.bf16.msra.mxu0 0
      %6316 = vmatprep.subr.bf16.mxu0 0
      %6317 = vmatpush1.bf16.msra.mxu0 0
      %6318 = vmatprep.subr.bf16.mxu0 0
      %6319 = vmatpush1.bf16.msra.mxu0 0
      %6320 = vmatprep.subr.bf16.mxu0 0
      %6321 = vmatpush1.bf16.msra.mxu0 0
      %6322 = vmatprep.mubr.bf16.mxu0 0
      %6323 = vmatmul.mubr.bf16.gmra.mrb[0].mxu0 %v6264
      %v6324 = vpop.f32.mrb[0].mxu0
      %v6325 = vadd.f32 0.0, %v6324
      %v6326 = vpop.f32.mrb[0].mxu0
      %v6327 = vadd.f32 0.0, %v6326
      %v6328 = vpop.f32.mrb[0].mxu0
      %v6329 = vpop.f32.mrb[0].mxu0
      %6330 = vdwg.mxu0
      %6331 = vmatprep.subr.bf16.mxu0 %v6276
      %6332 = vmatpush1.bf16.msra.mxu0 %v6273
      %6333 = vmatprep.subr.bf16.mxu0 0
      %6334 = vmatpush1.bf16.msra.mxu0 0
      %6335 = vmatprep.subr.bf16.mxu0 0
      %6336 = vmatpush1.bf16.msra.mxu0 0
      %6337 = vmatprep.subr.bf16.mxu0 0
      %6338 = vmatpush1.bf16.msra.mxu0 0
      %6339 = vmatprep.subr.bf16.mxu0 0
      %6340 = vmatpush1.bf16.msra.mxu0 0
      %6341 = vmatprep.subr.bf16.mxu0 0
      %6342 = vmatpush1.bf16.msra.mxu0 0
      %6343 = vmatprep.subr.bf16.mxu0 0
      %6344 = vmatpush1.bf16.msra.mxu0 0
      %6345 = vmatprep.subr.bf16.mxu0 0
      %6346 = vmatpush1.bf16.msra.mxu0 0
      %6347 = vmatprep.subr.bf16.mxu0 0
      %6348 = vmatpush1.bf16.msra.mxu0 0
      %6349 = vmatprep.subr.bf16.mxu0 0
      %6350 = vmatpush1.bf16.msra.mxu0 0
      %6351 = vmatprep.subr.bf16.mxu0 0
      %6352 = vmatpush1.bf16.msra.mxu0 0
      %6353 = vmatprep.subr.bf16.mxu0 0
      %6354 = vmatpush1.bf16.msra.mxu0 0
      %6355 = vmatprep.subr.bf16.mxu0 0
      %6356 = vmatpush1.bf16.msra.mxu0 0
      %6357 = vmatprep.subr.bf16.mxu0 0
      %6358 = vmatpush1.bf16.msra.mxu0 0
      %6359 = vmatprep.subr.bf16.mxu0 0
      %6360 = vmatpush1.bf16.msra.mxu0 0
      %6361 = vmatprep.subr.bf16.mxu0 0
      %6362 = vmatpush1.bf16.msra.mxu0 0
      %6363 = vmatprep.mubr.bf16.mxu0 0
      %6364 = vmatmul.mubr.bf16.gmra.mrb[0].mxu0 %v6264
      %v6365 = vpop.f32.mrb[0].mxu0
      %v6366 = vadd.f32 0.0, %v6365
      %v6367 = vpop.f32.mrb[0].mxu0
      %v6368 = vadd.f32 0.0, %v6367
      %v6369 = vpop.f32.mrb[0].mxu0
      %v6370 = vpop.f32.mrb[0].mxu0
      %6371 = vdwg.mxu0
      %6372 = vmatprep.subr.bf16.mxu0 %v6282
      %6373 = vmatpush1.bf16.msra.mxu0 %v6279
      %6374 = vmatprep.subr.bf16.mxu0 0
      %6375 = vmatpush1.bf16.msra.mxu0 0
      %6376 = vmatprep.subr.bf16.mxu0 0
      %6377 = vmatpush1.bf16.msra.mxu0 0
      %6378 = vmatprep.subr.bf16.mxu0 0
      %6379 = vmatpush1.bf16.msra.mxu0 0
      %6380 = vmatprep.subr.bf16.mxu0 0
      %6381 = vmatpush1.bf16.msra.mxu0 0
      %6382 = vmatprep.subr.bf16.mxu0 0
      %6383 = vmatpush1.bf16.msra.mxu0 0
      %6384 = vmatprep.subr.bf16.mxu0 0
      %6385 = vmatpush1.bf16.msra.mxu0 0
      %6386 = vmatprep.subr.bf16.mxu0 0
      %6387 = vmatpush1.bf16.msra.mxu0 0
      %6388 = vmatprep.subr.bf16.mxu0 0
      %6389 = vmatpush1.bf16.msra.mxu0 0
      %6390 = vmatprep.subr.bf16.mxu0 0
      %6391 = vmatpush1.bf16.msra.mxu0 0
      %6392 = vmatprep.subr.bf16.mxu0 0
      %6393 = vmatpush1.bf16.msra.mxu0 0
      %6394 = vmatprep.subr.bf16.mxu0 0
      %6395 = vmatpush1.bf16.msra.mxu0 0
      %6396 = vmatprep.subr.bf16.mxu0 0
      %6397 = vmatpush1.bf16.msra.mxu0 0
      %6398 = vmatprep.subr.bf16.mxu0 0
      %6399 = vmatpush1.bf16.msra.mxu0 0
      %6400 = vmatprep.subr.bf16.mxu0 0
      %6401 = vmatpush1.bf16.msra.mxu0 0
      %6402 = vmatprep.subr.bf16.mxu0 0
      %6403 = vmatpush1.bf16.msra.mxu0 0
      %6404 = vmatprep.mubr.bf16.mxu0 0
      %6405 = vmatmul.mubr.bf16.gmra.mrb[0].mxu0 %v6264
      %v6406 = vpop.f32.mrb[0].mxu0
      %v6407 = vadd.f32 0.0, %v6406
      %v6408 = vpop.f32.mrb[0].mxu0
      %v6409 = vadd.f32 0.0, %v6408
      %v6410 = vpop.f32.mrb[0].mxu0
      %v6411 = vpop.f32.mrb[0].mxu0
      %6412 = vdwg.mxu0
      %6413 = vmatprep.subr.bf16.mxu0 %v6288
      %6414 = vmatpush1.bf16.msra.mxu0 %v6285
      %6415 = vmatprep.subr.bf16.mxu0 0
      %6416 = vmatpush1.bf16.msra.mxu0 0
      %6417 = vmatprep.subr.bf16.mxu0 0
      %6418 = vmatpush1.bf16.msra.mxu0 0
      %6419 = vmatprep.subr.bf16.mxu0 0
      %6420 = vmatpush1.bf16.msra.mxu0 0
      %6421 = vmatprep.subr.bf16.mxu0 0
      %6422 = vmatpush1.bf16.msra.mxu0 0
      %6423 = vmatprep.subr.bf16.mxu0 0
      %6424 = vmatpush1.bf16.msra.mxu0 0
      %6425 = vmatprep.subr.bf16.mxu0 0
      %6426 = vmatpush1.bf16.msra.mxu0 0
      %6427 = vmatprep.subr.bf16.mxu0 0
      %6428 = vmatpush1.bf16.msra.mxu0 0
      %6429 = vmatprep.subr.bf16.mxu0 0
      %6430 = vmatpush1.bf16.msra.mxu0 0
      %6431 = vmatprep.subr.bf16.mxu0 0
      %6432 = vmatpush1.bf16.msra.mxu0 0
      %6433 = vmatprep.subr.bf16.mxu0 0
      %6434 = vmatpush1.bf16.msra.mxu0 0
      %6435 = vmatprep.subr.bf16.mxu0 0
      %6436 = vmatpush1.bf16.msra.mxu0 0
      %6437 = vmatprep.subr.bf16.mxu0 0
      %6438 = vmatpush1.bf16.msra.mxu0 0
      %6439 = vmatprep.subr.bf16.mxu0 0
      %6440 = vmatpush1.bf16.msra.mxu0 0
      %6441 = vmatprep.subr.bf16.mxu0 0
      %6442 = vmatpush1.bf16.msra.mxu0 0
      %6443 = vmatprep.subr.bf16.mxu0 0
      %6444 = vmatpush1.bf16.msra.mxu0 0
      %6445 = vmatprep.mubr.bf16.mxu0 0
      %6446 = vmatmul.mubr.bf16.gmra.mrb[0].mxu0 %v6264
      %v6447 = vpop.f32.mrb[0].mxu0
      %v6448 = vadd.f32 0.0, %v6447
      %v6449 = vpop.f32.mrb[0].mxu0
      %v6450 = vadd.f32 0.0, %v6449
      %v6451 = vpop.f32.mrb[0].mxu0
      %v6452 = vpop.f32.mrb[0].mxu0
      %6453 = vdwg.mxu0
      %v6454 = vadd.f32 %v6179, %v6325
      %v6455 = vadd.f32 %v6180, %v6327
      %v6456 = vadd.f32 %v6181, %v6366
      %v6457 = vadd.f32 %v6182, %v6368
      %v6458 = vadd.f32 %v6183, %v6407
      %v6459 = vadd.f32 %v6184, %v6409
      %v6460 = vadd.f32 %v6185, %v6448
      %v6461 = vadd.f32 %v6186, %v6450
      %v6462 = vld [vmem:[%s219 + $0x2] sm:$0xff]
      %v6463 = vld [vmem:[%s219 + $0xa] sm:$0xff]
      %v6464 = vld [vmem:[%s219 + $0x12] sm:$0x3]
      %s6465 = scalar_lea.vmem %s1, 92
      %v6466 = vld [vmem:[%s6465] sm:$0xf]
      %v6470 = vcombine.high %v6462, %v6462
      %v6472 = vunpack.c.l.s4 1983009808
      %v6473 = vunpack.c.0.s8 %v6472
      %v6474 = vlaneseq
      %v6475 = vshrl.u32 %v6474, 7
      %v6476 = vsub.s32 %v6473, %v6475
      %v6477 = vrot.slane %v6462, %v6476
      %v6479 = vunpack.c.l.s4 1983009808
      %v6480 = vunpack.c.0.s8 %v6479
      %v6481 = vlaneseq
      %v6482 = vshrl.u32 %v6481, 7
      %v6483 = vsub.s32 %v6480, %v6482
      %v6484 = vrot.slane %v6470, %v6483
      %v6485 = vcombine.high %v6477, %v6477
      %v6486 = vcombine.high %v6484, %v6484
      %v6487 = vcombine.high %v6463, %v6463
      %v6489 = vunpack.c.l.s4 1983009808
      %v6490 = vunpack.c.0.s8 %v6489
      %v6491 = vlaneseq
      %v6492 = vshrl.u32 %v6491, 7
      %v6493 = vsub.s32 %v6490, %v6492
      %v6494 = vrot.slane %v6463, %v6493
      %v6496 = vunpack.c.l.s4 1983009808
      %v6497 = vunpack.c.0.s8 %v6496
      %v6498 = vlaneseq
      %v6499 = vshrl.u32 %v6498, 7
      %v6500 = vsub.s32 %v6497, %v6499
      %v6501 = vrot.slane %v6487, %v6500
      %v6502 = vcombine.high %v6494, %v6494
      %v6503 = vcombine.high %v6501, %v6501
      %v6505 = vunpack.c.l.s4 1983009808
      %v6506 = vunpack.c.0.s8 %v6505
      %v6507 = vlaneseq
      %v6508 = vshrl.u32 %v6507, 7
      %v6509 = vsub.s32 %v6506, %v6508
      %v6510 = vrot.slane %v6464, %v6509
      %6511 = vrot.lane.b32.xlu0 %v6477, 44
      %v6512 = vpop.permute.xlu0 %6511
      %6513 = vrot.lane.b32.xlu0 %v6485, 44
      %v6514 = vpop.permute.xlu0 %6513
      %6515 = vrot.lane.b32.xlu0 %v6484, 44
      %v6516 = vpop.permute.xlu0 %6515
      %6517 = vrot.lane.b32.xlu0 %v6486, 44
      %v6518 = vpop.permute.xlu0 %6517
      %6519 = vrot.lane.b32.xlu0 %v6494, 44
      %v6520 = vpop.permute.xlu0 %6519
      %6521 = vrot.lane.b32.xlu0 %v6502, 44
      %v6522 = vpop.permute.xlu0 %6521
      %6523 = vrot.lane.b32.xlu0 %v6501, 44
      %v6524 = vpop.permute.xlu0 %6523
      %6525 = vrot.lane.b32.xlu0 %v6503, 44
      %v6526 = vpop.permute.xlu0 %6525
      %6527 = vrot.lane.b32.xlu0 %v6510, 44
      %v6528 = vpop.permute.xlu0 %6527
      %vm6529 = vcmask 359424
      %v6530 = vsel %vm6529, %v6512, %v6514
      %v6531 = vsel %vm6529, %v6514, %v6516
      %v6532 = vsel %vm6529, %v6516, %v6518
      %v6533 = vsel %vm6529, %v6518, %v6520
      %v6534 = vsel %vm6529, %v6520, %v6522
      %v6535 = vsel %vm6529, %v6522, %v6524
      %v6536 = vsel %vm6529, %v6524, %v6526
      %v6537 = vsel %vm6529, %v6526, %v6528
      %v6539 = vsel %vm303, %v6466, 0
      %v6542 = vsel %vm307, %v6530, 0
      %v6545 = vsel %vm307, %v6531, 0
      %v6548 = vsel %vm307, %v6532, 0
      %v6551 = vsel %vm307, %v6533, 0
      %v6554 = vsel %vm307, %v6534, 0
      %v6557 = vsel %vm307, %v6535, 0
      %v6560 = vsel %vm307, %v6536, 0
      %v6563 = vsel %vm307, %v6537, 0
      %6565 = vmatprep.subr.bf16.mxu0 %v6545
      %6566 = vmatpush1.bf16.msra.mxu0 %v6542
      %6567 = vmatprep.subr.bf16.mxu0 0
      %6568 = vmatpush1.bf16.msra.mxu0 0
      %6569 = vmatprep.subr.bf16.mxu0 0
      %6570 = vmatpush1.bf16.msra.mxu0 0
      %6571 = vmatprep.subr.bf16.mxu0 0
      %6572 = vmatpush1.bf16.msra.mxu0 0
      %6573 = vmatprep.subr.bf16.mxu0 0
      %6574 = vmatpush1.bf16.msra.mxu0 0
      %6575 = vmatprep.subr.bf16.mxu0 0
      %6576 = vmatpush1.bf16.msra.mxu0 0
      %6577 = vmatprep.subr.bf16.mxu0 0
      %6578 = vmatpush1.bf16.msra.mxu0 0
      %6579 = vmatprep.subr.bf16.mxu0 0
      %6580 = vmatpush1.bf16.msra.mxu0 0
      %6581 = vmatprep.subr.bf16.mxu0 0
      %6582 = vmatpush1.bf16.msra.mxu0 0
      %6583 = vmatprep.subr.bf16.mxu0 0
      %6584 = vmatpush1.bf16.msra.mxu0 0
      %6585 = vmatprep.subr.bf16.mxu0 0
      %6586 = vmatpush1.bf16.msra.mxu0 0
      %6587 = vmatprep.subr.bf16.mxu0 0
      %6588 = vmatpush1.bf16.msra.mxu0 0
      %6589 = vmatprep.subr.bf16.mxu0 0
      %6590 = vmatpush1.bf16.msra.mxu0 0
      %6591 = vmatprep.subr.bf16.mxu0 0
      %6592 = vmatpush1.bf16.msra.mxu0 0
      %6593 = vmatprep.subr.bf16.mxu0 0
      %6594 = vmatpush1.bf16.msra.mxu0 0
      %6595 = vmatprep.subr.bf16.mxu0 0
      %6596 = vmatpush1.bf16.msra.mxu0 0
      %6597 = vmatprep.mubr.bf16.mxu0 0
      %6598 = vmatmul.mubr.bf16.gmra.mrb[0].mxu0 %v6539
      %v6599 = vpop.f32.mrb[0].mxu0
      %v6600 = vadd.f32 0.0, %v6599
      %v6601 = vpop.f32.mrb[0].mxu0
      %v6602 = vadd.f32 0.0, %v6601
      %v6603 = vpop.f32.mrb[0].mxu0
      %v6604 = vpop.f32.mrb[0].mxu0
      %6605 = vdwg.mxu0
      %6606 = vmatprep.subr.bf16.mxu0 %v6551
      %6607 = vmatpush1.bf16.msra.mxu0 %v6548
      %6608 = vmatprep.subr.bf16.mxu0 0
      %6609 = vmatpush1.bf16.msra.mxu0 0
      %6610 = vmatprep.subr.bf16.mxu0 0
      %6611 = vmatpush1.bf16.msra.mxu0 0
      %6612 = vmatprep.subr.bf16.mxu0 0
      %6613 = vmatpush1.bf16.msra.mxu0 0
      %6614 = vmatprep.subr.bf16.mxu0 0
      %6615 = vmatpush1.bf16.msra.mxu0 0
      %6616 = vmatprep.subr.bf16.mxu0 0
      %6617 = vmatpush1.bf16.msra.mxu0 0
      %6618 = vmatprep.subr.bf16.mxu0 0
      %6619 = vmatpush1.bf16.msra.mxu0 0
      %6620 = vmatprep.subr.bf16.mxu0 0
      %6621 = vmatpush1.bf16.msra.mxu0 0
      %6622 = vmatprep.subr.bf16.mxu0 0
      %6623 = vmatpush1.bf16.msra.mxu0 0
      %6624 = vmatprep.subr.bf16.mxu0 0
      %6625 = vmatpush1.bf16.msra.mxu0 0
      %6626 = vmatprep.subr.bf16.mxu0 0
      %6627 = vmatpush1.bf16.msra.mxu0 0
      %6628 = vmatprep.subr.bf16.mxu0 0
      %6629 = vmatpush1.bf16.msra.mxu0 0
      %6630 = vmatprep.subr.bf16.mxu0 0
      %6631 = vmatpush1.bf16.msra.mxu0 0
      %6632 = vmatprep.subr.bf16.mxu0 0
      %6633 = vmatpush1.bf16.msra.mxu0 0
      %6634 = vmatprep.subr.bf16.mxu0 0
      %6635 = vmatpush1.bf16.msra.mxu0 0
      %6636 = vmatprep.subr.bf16.mxu0 0
      %6637 = vmatpush1.bf16.msra.mxu0 0
      %6638 = vmatprep.mubr.bf16.mxu0 0
      %6639 = vmatmul.mubr.bf16.gmra.mrb[0].mxu0 %v6539
      %v6640 = vpop.f32.mrb[0].mxu0
      %v6641 = vadd.f32 0.0, %v6640
      %v6642 = vpop.f32.mrb[0].mxu0
      %v6643 = vadd.f32 0.0, %v6642
      %v6644 = vpop.f32.mrb[0].mxu0
      %v6645 = vpop.f32.mrb[0].mxu0
      %6646 = vdwg.mxu0
      %6647 = vmatprep.subr.bf16.mxu0 %v6557
      %6648 = vmatpush1.bf16.msra.mxu0 %v6554
      %6649 = vmatprep.subr.bf16.mxu0 0
      %6650 = vmatpush1.bf16.msra.mxu0 0
      %6651 = vmatprep.subr.bf16.mxu0 0
      %6652 = vmatpush1.bf16.msra.mxu0 0
      %6653 = vmatprep.subr.bf16.mxu0 0
      %6654 = vmatpush1.bf16.msra.mxu0 0
      %6655 = vmatprep.subr.bf16.mxu0 0
      %6656 = vmatpush1.bf16.msra.mxu0 0
      %6657 = vmatprep.subr.bf16.mxu0 0
      %6658 = vmatpush1.bf16.msra.mxu0 0
      %6659 = vmatprep.subr.bf16.mxu0 0
      %6660 = vmatpush1.bf16.msra.mxu0 0
      %6661 = vmatprep.subr.bf16.mxu0 0
      %6662 = vmatpush1.bf16.msra.mxu0 0
      %6663 = vmatprep.subr.bf16.mxu0 0
      %6664 = vmatpush1.bf16.msra.mxu0 0
      %6665 = vmatprep.subr.bf16.mxu0 0
      %6666 = vmatpush1.bf16.msra.mxu0 0
      %6667 = vmatprep.subr.bf16.mxu0 0
      %6668 = vmatpush1.bf16.msra.mxu0 0
      %6669 = vmatprep.subr.bf16.mxu0 0
      %6670 = vmatpush1.bf16.msra.mxu0 0
      %6671 = vmatprep.subr.bf16.mxu0 0
      %6672 = vmatpush1.bf16.msra.mxu0 0
      %6673 = vmatprep.subr.bf16.mxu0 0
      %6674 = vmatpush1.bf16.msra.mxu0 0
      %6675 = vmatprep.subr.bf16.mxu0 0
      %6676 = vmatpush1.bf16.msra.mxu0 0
      %6677 = vmatprep.subr.bf16.mxu0 0
      %6678 = vmatpush1.bf16.msra.mxu0 0
      %6679 = vmatprep.mubr.bf16.mxu0 0
      %6680 = vmatmul.mubr.bf16.gmra.mrb[0].mxu0 %v6539
      %v6681 = vpop.f32.mrb[0].mxu0
      %v6682 = vadd.f32 0.0, %v6681
      %v6683 = vpop.f32.mrb[0].mxu0
      %v6684 = vadd.f32 0.0, %v6683
      %v6685 = vpop.f32.mrb[0].mxu0
      %v6686 = vpop.f32.mrb[0].mxu0
      %6687 = vdwg.mxu0
      %6688 = vmatprep.subr.bf16.mxu0 %v6563
      %6689 = vmatpush1.bf16.msra.mxu0 %v6560
      %6690 = vmatprep.subr.bf16.mxu0 0
      %6691 = vmatpush1.bf16.msra.mxu0 0
      %6692 = vmatprep.subr.bf16.mxu0 0
      %6693 = vmatpush1.bf16.msra.mxu0 0
      %6694 = vmatprep.subr.bf16.mxu0 0
      %6695 = vmatpush1.bf16.msra.mxu0 0
      %6696 = vmatprep.subr.bf16.mxu0 0
      %6697 = vmatpush1.bf16.msra.mxu0 0
      %6698 = vmatprep.subr.bf16.mxu0 0
      %6699 = vmatpush1.bf16.msra.mxu0 0
      %6700 = vmatprep.subr.bf16.mxu0 0
      %6701 = vmatpush1.bf16.msra.mxu0 0
      %6702 = vmatprep.subr.bf16.mxu0 0
      %6703 = vmatpush1.bf16.msra.mxu0 0
      %6704 = vmatprep.subr.bf16.mxu0 0
      %6705 = vmatpush1.bf16.msra.mxu0 0
      %6706 = vmatprep.subr.bf16.mxu0 0
      %6707 = vmatpush1.bf16.msra.mxu0 0
      %6708 = vmatprep.subr.bf16.mxu0 0
      %6709 = vmatpush1.bf16.msra.mxu0 0
      %6710 = vmatprep.subr.bf16.mxu0 0
      %6711 = vmatpush1.bf16.msra.mxu0 0
      %6712 = vmatprep.subr.bf16.mxu0 0
      %6713 = vmatpush1.bf16.msra.mxu0 0
      %6714 = vmatprep.subr.bf16.mxu0 0
      %6715 = vmatpush1.bf16.msra.mxu0 0
      %6716 = vmatprep.subr.bf16.mxu0 0
      %6717 = vmatpush1.bf16.msra.mxu0 0
      %6718 = vmatprep.subr.bf16.mxu0 0
      %6719 = vmatpush1.bf16.msra.mxu0 0
      %6720 = vmatprep.mubr.bf16.mxu0 0
      %6721 = vmatmul.mubr.bf16.gmra.mrb[0].mxu0 %v6539
      %v6722 = vpop.f32.mrb[0].mxu0
      %v6723 = vadd.f32 0.0, %v6722
      %v6724 = vpop.f32.mrb[0].mxu0
      %v6725 = vadd.f32 0.0, %v6724
      %v6726 = vpop.f32.mrb[0].mxu0
      %v6727 = vpop.f32.mrb[0].mxu0
      %6728 = vdwg.mxu0
      %v6729 = vadd.f32 %v6454, %v6600
      %v6730 = vadd.f32 %v6455, %v6602
      %v6731 = vadd.f32 %v6456, %v6641
      %v6732 = vadd.f32 %v6457, %v6643
      %v6733 = vadd.f32 %v6458, %v6682
      %v6734 = vadd.f32 %v6459, %v6684
      %v6735 = vadd.f32 %v6460, %v6723
      %v6736 = vadd.f32 %v6461, %v6725
      %v6737 = vld [vmem:[%s219 + $0x2] sm:$0xff]
      %v6738 = vld [vmem:[%s219 + $0xa] sm:$0xff]
      %v6739 = vld [vmem:[%s219 + $0x12] sm:$0x3]
      %s6740 = scalar_lea.vmem %s1, 96
      %v6741 = vld [vmem:[%s6740] sm:$0xf]
      %v6745 = vcombine.high %v6737, %v6737
      %v6747 = vunpack.c.l.s4 1983009808
      %v6748 = vunpack.c.0.s8 %v6747
      %v6749 = vlaneseq
      %v6750 = vshrl.u32 %v6749, 7
      %v6751 = vsub.s32 %v6748, %v6750
      %v6752 = vrot.slane %v6737, %v6751
      %v6754 = vunpack.c.l.s4 1983009808
      %v6755 = vunpack.c.0.s8 %v6754
      %v6756 = vlaneseq
      %v6757 = vshrl.u32 %v6756, 7
      %v6758 = vsub.s32 %v6755, %v6757
      %v6759 = vrot.slane %v6745, %v6758
      %v6760 = vcombine.high %v6752, %v6752
      %v6761 = vcombine.high %v6759, %v6759
      %v6762 = vcombine.high %v6738, %v6738
      %v6764 = vunpack.c.l.s4 1983009808
      %v6765 = vunpack.c.0.s8 %v6764
      %v6766 = vlaneseq
      %v6767 = vshrl.u32 %v6766, 7
      %v6768 = vsub.s32 %v6765, %v6767
      %v6769 = vrot.slane %v6738, %v6768
      %v6771 = vunpack.c.l.s4 1983009808
      %v6772 = vunpack.c.0.s8 %v6771
      %v6773 = vlaneseq
      %v6774 = vshrl.u32 %v6773, 7
      %v6775 = vsub.s32 %v6772, %v6774
      %v6776 = vrot.slane %v6762, %v6775
      %v6777 = vcombine.high %v6769, %v6769
      %v6778 = vcombine.high %v6776, %v6776
      %v6780 = vunpack.c.l.s4 1983009808
      %v6781 = vunpack.c.0.s8 %v6780
      %v6782 = vlaneseq
      %v6783 = vshrl.u32 %v6782, 7
      %v6784 = vsub.s32 %v6781, %v6783
      %v6785 = vrot.slane %v6739, %v6784
      %6786 = vrot.lane.b32.xlu0 %v6752, 36
      %v6787 = vpop.permute.xlu0 %6786
      %6788 = vrot.lane.b32.xlu0 %v6760, 36
      %v6789 = vpop.permute.xlu0 %6788
      %6790 = vrot.lane.b32.xlu0 %v6759, 36
      %v6791 = vpop.permute.xlu0 %6790
      %6792 = vrot.lane.b32.xlu0 %v6761, 36
      %v6793 = vpop.permute.xlu0 %6792
      %6794 = vrot.lane.b32.xlu0 %v6769, 36
      %v6795 = vpop.permute.xlu0 %6794
      %6796 = vrot.lane.b32.xlu0 %v6777, 36
      %v6797 = vpop.permute.xlu0 %6796
      %6798 = vrot.lane.b32.xlu0 %v6776, 36
      %v6799 = vpop.permute.xlu0 %6798
      %6800 = vrot.lane.b32.xlu0 %v6778, 36
      %v6801 = vpop.permute.xlu0 %6800
      %6802 = vrot.lane.b32.xlu0 %v6785, 36
      %v6803 = vpop.permute.xlu0 %6802
      %vm6804 = vcmask 293888
      %v6805 = vsel %vm6804, %v6787, %v6789
      %v6806 = vsel %vm6804, %v6789, %v6791
      %v6807 = vsel %vm6804, %v6791, %v6793
      %v6808 = vsel %vm6804, %v6793, %v6795
      %v6809 = vsel %vm6804, %v6795, %v6797
      %v6810 = vsel %vm6804, %v6797, %v6799
      %v6811 = vsel %vm6804, %v6799, %v6801
      %v6812 = vsel %vm6804, %v6801, %v6803
      %v6814 = vsel %vm303, %v6741, 0
      %v6817 = vsel %vm307, %v6805, 0
      %v6820 = vsel %vm307, %v6806, 0
      %v6823 = vsel %vm307, %v6807, 0
      %v6826 = vsel %vm307, %v6808, 0
      %v6829 = vsel %vm307, %v6809, 0
      %v6832 = vsel %vm307, %v6810, 0
      %v6835 = vsel %vm307, %v6811, 0
      %v6838 = vsel %vm307, %v6812, 0
      %6840 = vmatprep.subr.bf16.mxu0 %v6820
      %6841 = vmatpush1.bf16.msra.mxu0 %v6817
      %6842 = vmatprep.subr.bf16.mxu0 0
      %6843 = vmatpush1.bf16.msra.mxu0 0
      %6844 = vmatprep.subr.bf16.mxu0 0
      %6845 = vmatpush1.bf16.msra.mxu0 0
      %6846 = vmatprep.subr.bf16.mxu0 0
      %6847 = vmatpush1.bf16.msra.mxu0 0
      %6848 = vmatprep.subr.bf16.mxu0 0
      %6849 = vmatpush1.bf16.msra.mxu0 0
      %6850 = vmatprep.subr.bf16.mxu0 0
      %6851 = vmatpush1.bf16.msra.mxu0 0
      %6852 = vmatprep.subr.bf16.mxu0 0
      %6853 = vmatpush1.bf16.msra.mxu0 0
      %6854 = vmatprep.subr.bf16.mxu0 0
      %6855 = vmatpush1.bf16.msra.mxu0 0
      %6856 = vmatprep.subr.bf16.mxu0 0
      %6857 = vmatpush1.bf16.msra.mxu0 0
      %6858 = vmatprep.subr.bf16.mxu0 0
      %6859 = vmatpush1.bf16.msra.mxu0 0
      %6860 = vmatprep.subr.bf16.mxu0 0
      %6861 = vmatpush1.bf16.msra.mxu0 0
      %6862 = vmatprep.subr.bf16.mxu0 0
      %6863 = vmatpush1.bf16.msra.mxu0 0
      %6864 = vmatprep.subr.bf16.mxu0 0
      %6865 = vmatpush1.bf16.msra.mxu0 0
      %6866 = vmatprep.subr.bf16.mxu0 0
      %6867 = vmatpush1.bf16.msra.mxu0 0
      %6868 = vmatprep.subr.bf16.mxu0 0
      %6869 = vmatpush1.bf16.msra.mxu0 0
      %6870 = vmatprep.subr.bf16.mxu0 0
      %6871 = vmatpush1.bf16.msra.mxu0 0
      %6872 = vmatprep.mubr.bf16.mxu0 0
      %6873 = vmatmul.mubr.bf16.gmra.mrb[0].mxu0 %v6814
      %v6874 = vpop.f32.mrb[0].mxu0
      %v6875 = vadd.f32 0.0, %v6874
      %v6876 = vpop.f32.mrb[0].mxu0
      %v6877 = vadd.f32 0.0, %v6876
      %v6878 = vpop.f32.mrb[0].mxu0
      %v6879 = vpop.f32.mrb[0].mxu0
      %6880 = vdwg.mxu0
      %6881 = vmatprep.subr.bf16.mxu0 %v6826
      %6882 = vmatpush1.bf16.msra.mxu0 %v6823
      %6883 = vmatprep.subr.bf16.mxu0 0
      %6884 = vmatpush1.bf16.msra.mxu0 0
      %6885 = vmatprep.subr.bf16.mxu0 0
      %6886 = vmatpush1.bf16.msra.mxu0 0
      %6887 = vmatprep.subr.bf16.mxu0 0
      %6888 = vmatpush1.bf16.msra.mxu0 0
      %6889 = vmatprep.subr.bf16.mxu0 0
      %6890 = vmatpush1.bf16.msra.mxu0 0
      %6891 = vmatprep.subr.bf16.mxu0 0
      %6892 = vmatpush1.bf16.msra.mxu0 0
      %6893 = vmatprep.subr.bf16.mxu0 0
      %6894 = vmatpush1.bf16.msra.mxu0 0
      %6895 = vmatprep.subr.bf16.mxu0 0
      %6896 = vmatpush1.bf16.msra.mxu0 0
      %6897 = vmatprep.subr.bf16.mxu0 0
      %6898 = vmatpush1.bf16.msra.mxu0 0
      %6899 = vmatprep.subr.bf16.mxu0 0
      %6900 = vmatpush1.bf16.msra.mxu0 0
      %6901 = vmatprep.subr.bf16.mxu0 0
      %6902 = vmatpush1.bf16.msra.mxu0 0
      %6903 = vmatprep.subr.bf16.mxu0 0
      %6904 = vmatpush1.bf16.msra.mxu0 0
      %6905 = vmatprep.subr.bf16.mxu0 0
      %6906 = vmatpush1.bf16.msra.mxu0 0
      %6907 = vmatprep.subr.bf16.mxu0 0
      %6908 = vmatpush1.bf16.msra.mxu0 0
      %6909 = vmatprep.subr.bf16.mxu0 0
      %6910 = vmatpush1.bf16.msra.mxu0 0
      %6911 = vmatprep.subr.bf16.mxu0 0
      %6912 = vmatpush1.bf16.msra.mxu0 0
      %6913 = vmatprep.mubr.bf16.mxu0 0
      %6914 = vmatmul.mubr.bf16.gmra.mrb[0].mxu0 %v6814
      %v6915 = vpop.f32.mrb[0].mxu0
      %v6916 = vadd.f32 0.0, %v6915
      %v6917 = vpop.f32.mrb[0].mxu0
      %v6918 = vadd.f32 0.0, %v6917
      %v6919 = vpop.f32.mrb[0].mxu0
      %v6920 = vpop.f32.mrb[0].mxu0
      %6921 = vdwg.mxu0
      %6922 = vmatprep.subr.bf16.mxu0 %v6832
      %6923 = vmatpush1.bf16.msra.mxu0 %v6829
      %6924 = vmatprep.subr.bf16.mxu0 0
      %6925 = vmatpush1.bf16.msra.mxu0 0
      %6926 = vmatprep.subr.bf16.mxu0 0
      %6927 = vmatpush1.bf16.msra.mxu0 0
      %6928 = vmatprep.subr.bf16.mxu0 0
      %6929 = vmatpush1.bf16.msra.mxu0 0
      %6930 = vmatprep.subr.bf16.mxu0 0
      %6931 = vmatpush1.bf16.msra.mxu0 0
      %6932 = vmatprep.subr.bf16.mxu0 0
      %6933 = vmatpush1.bf16.msra.mxu0 0
      %6934 = vmatprep.subr.bf16.mxu0 0
      %6935 = vmatpush1.bf16.msra.mxu0 0
      %6936 = vmatprep.subr.bf16.mxu0 0
      %6937 = vmatpush1.bf16.msra.mxu0 0
      %6938 = vmatprep.subr.bf16.mxu0 0
      %6939 = vmatpush1.bf16.msra.mxu0 0
      %6940 = vmatprep.subr.bf16.mxu0 0
      %6941 = vmatpush1.bf16.msra.mxu0 0
      %6942 = vmatprep.subr.bf16.mxu0 0
      %6943 = vmatpush1.bf16.msra.mxu0 0
      %6944 = vmatprep.subr.bf16.mxu0 0
      %6945 = vmatpush1.bf16.msra.mxu0 0
      %6946 = vmatprep.subr.bf16.mxu0 0
      %6947 = vmatpush1.bf16.msra.mxu0 0
      %6948 = vmatprep.subr.bf16.mxu0 0
      %6949 = vmatpush1.bf16.msra.mxu0 0
      %6950 = vmatprep.subr.bf16.mxu0 0
      %6951 = vmatpush1.bf16.msra.mxu0 0
      %6952 = vmatprep.subr.bf16.mxu0 0
      %6953 = vmatpush1.bf16.msra.mxu0 0
      %6954 = vmatprep.mubr.bf16.mxu0 0
      %6955 = vmatmul.mubr.bf16.gmra.mrb[0].mxu0 %v6814
      %v6956 = vpop.f32.mrb[0].mxu0
      %v6957 = vadd.f32 0.0, %v6956
      %v6958 = vpop.f32.mrb[0].mxu0
      %v6959 = vadd.f32 0.0, %v6958
      %v6960 = vpop.f32.mrb[0].mxu0
      %v6961 = vpop.f32.mrb[0].mxu0
      %6962 = vdwg.mxu0
      %6963 = vmatprep.subr.bf16.mxu0 %v6838
      %6964 = vmatpush1.bf16.msra.mxu0 %v6835
      %6965 = vmatprep.subr.bf16.mxu0 0
      %6966 = vmatpush1.bf16.msra.mxu0 0
      %6967 = vmatprep.subr.bf16.mxu0 0
      %6968 = vmatpush1.bf16.msra.mxu0 0
      %6969 = vmatprep.subr.bf16.mxu0 0
      %6970 = vmatpush1.bf16.msra.mxu0 0
      %6971 = vmatprep.subr.bf16.mxu0 0
      %6972 = vmatpush1.bf16.msra.mxu0 0
      %6973 = vmatprep.subr.bf16.mxu0 0
      %6974 = vmatpush1.bf16.msra.mxu0 0
      %6975 = vmatprep.subr.bf16.mxu0 0
      %6976 = vmatpush1.bf16.msra.mxu0 0
      %6977 = vmatprep.subr.bf16.mxu0 0
      %6978 = vmatpush1.bf16.msra.mxu0 0
      %6979 = vmatprep.subr.bf16.mxu0 0
      %6980 = vmatpush1.bf16.msra.mxu0 0
      %6981 = vmatprep.subr.bf16.mxu0 0
      %6982 = vmatpush1.bf16.msra.mxu0 0
      %6983 = vmatprep.subr.bf16.mxu0 0
      %6984 = vmatpush1.bf16.msra.mxu0 0
      %6985 = vmatprep.subr.bf16.mxu0 0
      %6986 = vmatpush1.bf16.msra.mxu0 0
      %6987 = vmatprep.subr.bf16.mxu0 0
      %6988 = vmatpush1.bf16.msra.mxu0 0
      %6989 = vmatprep.subr.bf16.mxu0 0
      %6990 = vmatpush1.bf16.msra.mxu0 0
      %6991 = vmatprep.subr.bf16.mxu0 0
      %6992 = vmatpush1.bf16.msra.mxu0 0
      %6993 = vmatprep.subr.bf16.mxu0 0
      %6994 = vmatpush1.bf16.msra.mxu0 0
      %6995 = vmatprep.mubr.bf16.mxu0 0
      %6996 = vmatmul.mubr.bf16.gmra.mrb[0].mxu0 %v6814
      %v6997 = vpop.f32.mrb[0].mxu0
      %v6998 = vadd.f32 0.0, %v6997
      %v6999 = vpop.f32.mrb[0].mxu0
      %v7000 = vadd.f32 0.0, %v6999
      %v7001 = vpop.f32.mrb[0].mxu0
      %v7002 = vpop.f32.mrb[0].mxu0
      %7003 = vdwg.mxu0
      %v7004 = vadd.f32 %v6729, %v6875
      %v7005 = vadd.f32 %v6730, %v6877
      %v7006 = vadd.f32 %v6731, %v6916
      %v7007 = vadd.f32 %v6732, %v6918
      %v7008 = vadd.f32 %v6733, %v6957
      %v7009 = vadd.f32 %v6734, %v6959
      %v7010 = vadd.f32 %v6735, %v6998
      %v7011 = vadd.f32 %v6736, %v7000
      %v7012 = vld [vmem:[%s219 + $0x2] sm:$0xff]
      %v7013 = vld [vmem:[%s219 + $0xa] sm:$0xff]
      %v7014 = vld [vmem:[%s219 + $0x12] sm:$0x3]
      %s7015 = scalar_lea.vmem %s1, 100
      %v7016 = vld [vmem:[%s7015] sm:$0xf]
      %v7020 = vcombine.high %v7012, %v7012
      %v7022 = vunpack.c.l.s4 1983009808
      %v7023 = vunpack.c.0.s8 %v7022
      %v7024 = vlaneseq
      %v7025 = vshrl.u32 %v7024, 7
      %v7026 = vsub.s32 %v7023, %v7025
      %v7027 = vrot.slane %v7012, %v7026
      %v7029 = vunpack.c.l.s4 1983009808
      %v7030 = vunpack.c.0.s8 %v7029
      %v7031 = vlaneseq
      %v7032 = vshrl.u32 %v7031, 7
      %v7033 = vsub.s32 %v7030, %v7032
      %v7034 = vrot.slane %v7020, %v7033
      %v7035 = vcombine.high %v7027, %v7027
      %v7036 = vcombine.high %v7034, %v7034
      %v7037 = vcombine.high %v7013, %v7013
      %v7039 = vunpack.c.l.s4 1983009808
      %v7040 = vunpack.c.0.s8 %v7039
      %v7041 = vlaneseq
      %v7042 = vshrl.u32 %v7041, 7
      %v7043 = vsub.s32 %v7040, %v7042
      %v7044 = vrot.slane %v7013, %v7043
      %v7046 = vunpack.c.l.s4 1983009808
      %v7047 = vunpack.c.0.s8 %v7046
      %v7048 = vlaneseq
      %v7049 = vshrl.u32 %v7048, 7
      %v7050 = vsub.s32 %v7047, %v7049
      %v7051 = vrot.slane %v7037, %v7050
      %v7052 = vcombine.high %v7044, %v7044
      %v7053 = vcombine.high %v7051, %v7051
      %v7055 = vunpack.c.l.s4 1983009808
      %v7056 = vunpack.c.0.s8 %v7055
      %v7057 = vlaneseq
      %v7058 = vshrl.u32 %v7057, 7
      %v7059 = vsub.s32 %v7056, %v7058
      %v7060 = vrot.slane %v7014, %v7059
      %7061 = vrot.lane.b32.xlu0 %v7027, 35
      %v7062 = vpop.permute.xlu0 %7061
      %7063 = vrot.lane.b32.xlu0 %v7035, 35
      %v7064 = vpop.permute.xlu0 %7063
      %7065 = vrot.lane.b32.xlu0 %v7034, 35
      %v7066 = vpop.permute.xlu0 %7065
      %7067 = vrot.lane.b32.xlu0 %v7036, 35
      %v7068 = vpop.permute.xlu0 %7067
      %7069 = vrot.lane.b32.xlu0 %v7044, 35
      %v7070 = vpop.permute.xlu0 %7069
      %7071 = vrot.lane.b32.xlu0 %v7052, 35
      %v7072 = vpop.permute.xlu0 %7071
      %7073 = vrot.lane.b32.xlu0 %v7051, 35
      %v7074 = vpop.permute.xlu0 %7073
      %7075 = vrot.lane.b32.xlu0 %v7053, 35
      %v7076 = vpop.permute.xlu0 %7075
      %7077 = vrot.lane.b32.xlu0 %v7060, 35
      %v7078 = vpop.permute.xlu0 %7077
      %vm7079 = vcmask 285696
      %v7080 = vsel %vm7079, %v7062, %v7064
      %v7081 = vsel %vm7079, %v7064, %v7066
      %v7082 = vsel %vm7079, %v7066, %v7068
      %v7083 = vsel %vm7079, %v7068, %v7070
      %v7084 = vsel %vm7079, %v7070, %v7072
      %v7085 = vsel %vm7079, %v7072, %v7074
      %v7086 = vsel %vm7079, %v7074, %v7076
      %v7087 = vsel %vm7079, %v7076, %v7078
      %v7089 = vsel %vm303, %v7016, 0
      %v7092 = vsel %vm307, %v7080, 0
      %v7095 = vsel %vm307, %v7081, 0
      %v7098 = vsel %vm307, %v7082, 0
      %v7101 = vsel %vm307, %v7083, 0
      %v7104 = vsel %vm307, %v7084, 0
      %v7107 = vsel %vm307, %v7085, 0
      %v7110 = vsel %vm307, %v7086, 0
      %v7113 = vsel %vm307, %v7087, 0
      %7115 = vmatprep.subr.bf16.mxu0 %v7095
      %7116 = vmatpush1.bf16.msra.mxu0 %v7092
      %7117 = vmatprep.subr.bf16.mxu0 0
      %7118 = vmatpush1.bf16.msra.mxu0 0
      %7119 = vmatprep.subr.bf16.mxu0 0
      %7120 = vmatpush1.bf16.msra.mxu0 0
      %7121 = vmatprep.subr.bf16.mxu0 0
      %7122 = vmatpush1.bf16.msra.mxu0 0
      %7123 = vmatprep.subr.bf16.mxu0 0
      %7124 = vmatpush1.bf16.msra.mxu0 0
      %7125 = vmatprep.subr.bf16.mxu0 0
      %7126 = vmatpush1.bf16.msra.mxu0 0
      %7127 = vmatprep.subr.bf16.mxu0 0
      %7128 = vmatpush1.bf16.msra.mxu0 0
      %7129 = vmatprep.subr.bf16.mxu0 0
      %7130 = vmatpush1.bf16.msra.mxu0 0
      %7131 = vmatprep.subr.bf16.mxu0 0
      %7132 = vmatpush1.bf16.msra.mxu0 0
      %7133 = vmatprep.subr.bf16.mxu0 0
      %7134 = vmatpush1.bf16.msra.mxu0 0
      %7135 = vmatprep.subr.bf16.mxu0 0
      %7136 = vmatpush1.bf16.msra.mxu0 0
      %7137 = vmatprep.subr.bf16.mxu0 0
      %7138 = vmatpush1.bf16.msra.mxu0 0
      %7139 = vmatprep.subr.bf16.mxu0 0
      %7140 = vmatpush1.bf16.msra.mxu0 0
      %7141 = vmatprep.subr.bf16.mxu0 0
      %7142 = vmatpush1.bf16.msra.mxu0 0
      %7143 = vmatprep.subr.bf16.mxu0 0
      %7144 = vmatpush1.bf16.msra.mxu0 0
      %7145 = vmatprep.subr.bf16.mxu0 0
      %7146 = vmatpush1.bf16.msra.mxu0 0
      %7147 = vmatprep.mubr.bf16.mxu0 0
      %7148 = vmatmul.mubr.bf16.gmra.mrb[0].mxu0 %v7089
      %v7149 = vpop.f32.mrb[0].mxu0
      %v7150 = vadd.f32 0.0, %v7149
      %v7151 = vpop.f32.mrb[0].mxu0
      %v7152 = vadd.f32 0.0, %v7151
      %v7153 = vpop.f32.mrb[0].mxu0
      %v7154 = vpop.f32.mrb[0].mxu0
      %7155 = vdwg.mxu0
      %7156 = vmatprep.subr.bf16.mxu0 %v7101
      %7157 = vmatpush1.bf16.msra.mxu0 %v7098
      %7158 = vmatprep.subr.bf16.mxu0 0
      %7159 = vmatpush1.bf16.msra.mxu0 0
      %7160 = vmatprep.subr.bf16.mxu0 0
      %7161 = vmatpush1.bf16.msra.mxu0 0
      %7162 = vmatprep.subr.bf16.mxu0 0
      %7163 = vmatpush1.bf16.msra.mxu0 0
      %7164 = vmatprep.subr.bf16.mxu0 0
      %7165 = vmatpush1.bf16.msra.mxu0 0
      %7166 = vmatprep.subr.bf16.mxu0 0
      %7167 = vmatpush1.bf16.msra.mxu0 0
      %7168 = vmatprep.subr.bf16.mxu0 0
      %7169 = vmatpush1.bf16.msra.mxu0 0
      %7170 = vmatprep.subr.bf16.mxu0 0
      %7171 = vmatpush1.bf16.msra.mxu0 0
      %7172 = vmatprep.subr.bf16.mxu0 0
      %7173 = vmatpush1.bf16.msra.mxu0 0
      %7174 = vmatprep.subr.bf16.mxu0 0
      %7175 = vmatpush1.bf16.msra.mxu0 0
      %7176 = vmatprep.subr.bf16.mxu0 0
      %7177 = vmatpush1.bf16.msra.mxu0 0
      %7178 = vmatprep.subr.bf16.mxu0 0
      %7179 = vmatpush1.bf16.msra.mxu0 0
      %7180 = vmatprep.subr.bf16.mxu0 0
      %7181 = vmatpush1.bf16.msra.mxu0 0
      %7182 = vmatprep.subr.bf16.mxu0 0
      %7183 = vmatpush1.bf16.msra.mxu0 0
      %7184 = vmatprep.subr.bf16.mxu0 0
      %7185 = vmatpush1.bf16.msra.mxu0 0
      %7186 = vmatprep.subr.bf16.mxu0 0
      %7187 = vmatpush1.bf16.msra.mxu0 0
      %7188 = vmatprep.mubr.bf16.mxu0 0
      %7189 = vmatmul.mubr.bf16.gmra.mrb[0].mxu0 %v7089
      %v7190 = vpop.f32.mrb[0].mxu0
      %v7191 = vadd.f32 0.0, %v7190
      %v7192 = vpop.f32.mrb[0].mxu0
      %v7193 = vadd.f32 0.0, %v7192
      %v7194 = vpop.f32.mrb[0].mxu0
      %v7195 = vpop.f32.mrb[0].mxu0
      %7196 = vdwg.mxu0
      %7197 = vmatprep.subr.bf16.mxu0 %v7107
      %7198 = vmatpush1.bf16.msra.mxu0 %v7104
      %7199 = vmatprep.subr.bf16.mxu0 0
      %7200 = vmatpush1.bf16.msra.mxu0 0
      %7201 = vmatprep.subr.bf16.mxu0 0
      %7202 = vmatpush1.bf16.msra.mxu0 0
      %7203 = vmatprep.subr.bf16.mxu0 0
      %7204 = vmatpush1.bf16.msra.mxu0 0
      %7205 = vmatprep.subr.bf16.mxu0 0
      %7206 = vmatpush1.bf16.msra.mxu0 0
      %7207 = vmatprep.subr.bf16.mxu0 0
      %7208 = vmatpush1.bf16.msra.mxu0 0
      %7209 = vmatprep.subr.bf16.mxu0 0
      %7210 = vmatpush1.bf16.msra.mxu0 0
      %7211 = vmatprep.subr.bf16.mxu0 0
      %7212 = vmatpush1.bf16.msra.mxu0 0
      %7213 = vmatprep.subr.bf16.mxu0 0
      %7214 = vmatpush1.bf16.msra.mxu0 0
      %7215 = vmatprep.subr.bf16.mxu0 0
      %7216 = vmatpush1.bf16.msra.mxu0 0
      %7217 = vmatprep.subr.bf16.mxu0 0
      %7218 = vmatpush1.bf16.msra.mxu0 0
      %7219 = vmatprep.subr.bf16.mxu0 0
      %7220 = vmatpush1.bf16.msra.mxu0 0
      %7221 = vmatprep.subr.bf16.mxu0 0
      %7222 = vmatpush1.bf16.msra.mxu0 0
      %7223 = vmatprep.subr.bf16.mxu0 0
      %7224 = vmatpush1.bf16.msra.mxu0 0
      %7225 = vmatprep.subr.bf16.mxu0 0
      %7226 = vmatpush1.bf16.msra.mxu0 0
      %7227 = vmatprep.subr.bf16.mxu0 0
      %7228 = vmatpush1.bf16.msra.mxu0 0
      %7229 = vmatprep.mubr.bf16.mxu0 0
      %7230 = vmatmul.mubr.bf16.gmra.mrb[0].mxu0 %v7089
      %v7231 = vpop.f32.mrb[0].mxu0
      %v7232 = vadd.f32 0.0, %v7231
      %v7233 = vpop.f32.mrb[0].mxu0
      %v7234 = vadd.f32 0.0, %v7233
      %v7235 = vpop.f32.mrb[0].mxu0
      %v7236 = vpop.f32.mrb[0].mxu0
      %7237 = vdwg.mxu0
      %7238 = vmatprep.subr.bf16.mxu0 %v7113
      %7239 = vmatpush1.bf16.msra.mxu0 %v7110
      %7240 = vmatprep.subr.bf16.mxu0 0
      %7241 = vmatpush1.bf16.msra.mxu0 0
      %7242 = vmatprep.subr.bf16.mxu0 0
      %7243 = vmatpush1.bf16.msra.mxu0 0
      %7244 = vmatprep.subr.bf16.mxu0 0
      %7245 = vmatpush1.bf16.msra.mxu0 0
      %7246 = vmatprep.subr.bf16.mxu0 0
      %7247 = vmatpush1.bf16.msra.mxu0 0
      %7248 = vmatprep.subr.bf16.mxu0 0
      %7249 = vmatpush1.bf16.msra.mxu0 0
      %7250 = vmatprep.subr.bf16.mxu0 0
      %7251 = vmatpush1.bf16.msra.mxu0 0
      %7252 = vmatprep.subr.bf16.mxu0 0
      %7253 = vmatpush1.bf16.msra.mxu0 0
      %7254 = vmatprep.subr.bf16.mxu0 0
      %7255 = vmatpush1.bf16.msra.mxu0 0
      %7256 = vmatprep.subr.bf16.mxu0 0
      %7257 = vmatpush1.bf16.msra.mxu0 0
      %7258 = vmatprep.subr.bf16.mxu0 0
      %7259 = vmatpush1.bf16.msra.mxu0 0
      %7260 = vmatprep.subr.bf16.mxu0 0
      %7261 = vmatpush1.bf16.msra.mxu0 0
      %7262 = vmatprep.subr.bf16.mxu0 0
      %7263 = vmatpush1.bf16.msra.mxu0 0
      %7264 = vmatprep.subr.bf16.mxu0 0
      %7265 = vmatpush1.bf16.msra.mxu0 0
      %7266 = vmatprep.subr.bf16.mxu0 0
      %7267 = vmatpush1.bf16.msra.mxu0 0
      %7268 = vmatprep.subr.bf16.mxu0 0
      %7269 = vmatpush1.bf16.msra.mxu0 0
      %7270 = vmatprep.mubr.bf16.mxu0 0
      %7271 = vmatmul.mubr.bf16.gmra.mrb[0].mxu0 %v7089
      %v7272 = vpop.f32.mrb[0].mxu0
      %v7273 = vadd.f32 0.0, %v7272
      %v7274 = vpop.f32.mrb[0].mxu0
      %v7275 = vadd.f32 0.0, %v7274
      %v7276 = vpop.f32.mrb[0].mxu0
      %v7277 = vpop.f32.mrb[0].mxu0
      %7278 = vdwg.mxu0
      %v7279 = vadd.f32 %v7004, %v7150
      %v7280 = vadd.f32 %v7005, %v7152
      %v7281 = vadd.f32 %v7006, %v7191
      %v7282 = vadd.f32 %v7007, %v7193
      %v7283 = vadd.f32 %v7008, %v7232
      %v7284 = vadd.f32 %v7009, %v7234
      %v7285 = vadd.f32 %v7010, %v7273
      %v7286 = vadd.f32 %v7011, %v7275
      %v7287 = vld [vmem:[%s219 + $0x2] sm:$0xff]
      %v7288 = vld [vmem:[%s219 + $0xa] sm:$0xff]
      %v7289 = vld [vmem:[%s219 + $0x12] sm:$0x3]
      %s7290 = scalar_lea.vmem %s1, 104
      %v7291 = vld [vmem:[%s7290] sm:$0xf]
      %v7295 = vcombine.high %v7287, %v7287
      %v7297 = vunpack.c.l.s4 1983009808
      %v7298 = vunpack.c.0.s8 %v7297
      %v7299 = vlaneseq
      %v7300 = vshrl.u32 %v7299, 7
      %v7301 = vsub.s32 %v7298, %v7300
      %v7302 = vrot.slane %v7287, %v7301
      %v7304 = vunpack.c.l.s4 1983009808
      %v7305 = vunpack.c.0.s8 %v7304
      %v7306 = vlaneseq
      %v7307 = vshrl.u32 %v7306, 7
      %v7308 = vsub.s32 %v7305, %v7307
      %v7309 = vrot.slane %v7295, %v7308
      %v7310 = vcombine.high %v7302, %v7302
      %v7311 = vcombine.high %v7309, %v7309
      %v7312 = vcombine.high %v7288, %v7288
      %v7314 = vunpack.c.l.s4 1983009808
      %v7315 = vunpack.c.0.s8 %v7314
      %v7316 = vlaneseq
      %v7317 = vshrl.u32 %v7316, 7
      %v7318 = vsub.s32 %v7315, %v7317
      %v7319 = vrot.slane %v7288, %v7318
      %v7321 = vunpack.c.l.s4 1983009808
      %v7322 = vunpack.c.0.s8 %v7321
      %v7323 = vlaneseq
      %v7324 = vshrl.u32 %v7323, 7
      %v7325 = vsub.s32 %v7322, %v7324
      %v7326 = vrot.slane %v7312, %v7325
      %v7327 = vcombine.high %v7319, %v7319
      %v7328 = vcombine.high %v7326, %v7326
      %v7330 = vunpack.c.l.s4 1983009808
      %v7331 = vunpack.c.0.s8 %v7330
      %v7332 = vlaneseq
      %v7333 = vshrl.u32 %v7332, 7
      %v7334 = vsub.s32 %v7331, %v7333
      %v7335 = vrot.slane %v7289, %v7334
      %7336 = vrot.lane.b32.xlu0 %v7302, 34
      %v7337 = vpop.permute.xlu0 %7336
      %7338 = vrot.lane.b32.xlu0 %v7310, 34
      %v7339 = vpop.permute.xlu0 %7338
      %7340 = vrot.lane.b32.xlu0 %v7309, 34
      %v7341 = vpop.permute.xlu0 %7340
      %7342 = vrot.lane.b32.xlu0 %v7311, 34
      %v7343 = vpop.permute.xlu0 %7342
      %7344 = vrot.lane.b32.xlu0 %v7319, 34
      %v7345 = vpop.permute.xlu0 %7344
      %7346 = vrot.lane.b32.xlu0 %v7327, 34
      %v7347 = vpop.permute.xlu0 %7346
      %7348 = vrot.lane.b32.xlu0 %v7326, 34
      %v7349 = vpop.permute.xlu0 %7348
      %7350 = vrot.lane.b32.xlu0 %v7328, 34
      %v7351 = vpop.permute.xlu0 %7350
      %7352 = vrot.lane.b32.xlu0 %v7335, 34
      %v7353 = vpop.permute.xlu0 %7352
      %vm7354 = vcmask 277504
      %v7355 = vsel %vm7354, %v7337, %v7339
      %v7356 = vsel %vm7354, %v7339, %v7341
      %v7357 = vsel %vm7354, %v7341, %v7343
      %v7358 = vsel %vm7354, %v7343, %v7345
      %v7359 = vsel %vm7354, %v7345, %v7347
      %v7360 = vsel %vm7354, %v7347, %v7349
      %v7361 = vsel %vm7354, %v7349, %v7351
      %v7362 = vsel %vm7354, %v7351, %v7353
      %v7364 = vsel %vm303, %v7291, 0
      %v7367 = vsel %vm307, %v7355, 0
      %v7370 = vsel %vm307, %v7356, 0
      %v7373 = vsel %vm307, %v7357, 0
      %v7376 = vsel %vm307, %v7358, 0
      %v7379 = vsel %vm307, %v7359, 0
      %v7382 = vsel %vm307, %v7360, 0
      %v7385 = vsel %vm307, %v7361, 0
      %v7388 = vsel %vm307, %v7362, 0
      %7390 = vmatprep.subr.bf16.mxu0 %v7370
      %7391 = vmatpush1.bf16.msra.mxu0 %v7367
      %7392 = vmatprep.subr.bf16.mxu0 0
      %7393 = vmatpush1.bf16.msra.mxu0 0
      %7394 = vmatprep.subr.bf16.mxu0 0
      %7395 = vmatpush1.bf16.msra.mxu0 0
      %7396 = vmatprep.subr.bf16.mxu0 0
      %7397 = vmatpush1.bf16.msra.mxu0 0
      %7398 = vmatprep.subr.bf16.mxu0 0
      %7399 = vmatpush1.bf16.msra.mxu0 0
      %7400 = vmatprep.subr.bf16.mxu0 0
      %7401 = vmatpush1.bf16.msra.mxu0 0
      %7402 = vmatprep.subr.bf16.mxu0 0
      %7403 = vmatpush1.bf16.msra.mxu0 0
      %7404 = vmatprep.subr.bf16.mxu0 0
      %7405 = vmatpush1.bf16.msra.mxu0 0
      %7406 = vmatprep.subr.bf16.mxu0 0
      %7407 = vmatpush1.bf16.msra.mxu0 0
      %7408 = vmatprep.subr.bf16.mxu0 0
      %7409 = vmatpush1.bf16.msra.mxu0 0
      %7410 = vmatprep.subr.bf16.mxu0 0
      %7411 = vmatpush1.bf16.msra.mxu0 0
      %7412 = vmatprep.subr.bf16.mxu0 0
      %7413 = vmatpush1.bf16.msra.mxu0 0
      %7414 = vmatprep.subr.bf16.mxu0 0
      %7415 = vmatpush1.bf16.msra.mxu0 0
      %7416 = vmatprep.subr.bf16.mxu0 0
      %7417 = vmatpush1.bf16.msra.mxu0 0
      %7418 = vmatprep.subr.bf16.mxu0 0
      %7419 = vmatpush1.bf16.msra.mxu0 0
      %7420 = vmatprep.subr.bf16.mxu0 0
      %7421 = vmatpush1.bf16.msra.mxu0 0
      %7422 = vmatprep.mubr.bf16.mxu0 0
      %7423 = vmatmul.mubr.bf16.gmra.mrb[0].mxu0 %v7364
      %v7424 = vpop.f32.mrb[0].mxu0
      %v7425 = vadd.f32 0.0, %v7424
      %v7426 = vpop.f32.mrb[0].mxu0
      %v7427 = vadd.f32 0.0, %v7426
      %v7428 = vpop.f32.mrb[0].mxu0
      %v7429 = vpop.f32.mrb[0].mxu0
      %7430 = vdwg.mxu0
      %7431 = vmatprep.subr.bf16.mxu0 %v7376
      %7432 = vmatpush1.bf16.msra.mxu0 %v7373
      %7433 = vmatprep.subr.bf16.mxu0 0
      %7434 = vmatpush1.bf16.msra.mxu0 0
      %7435 = vmatprep.subr.bf16.mxu0 0
      %7436 = vmatpush1.bf16.msra.mxu0 0
      %7437 = vmatprep.subr.bf16.mxu0 0
      %7438 = vmatpush1.bf16.msra.mxu0 0
      %7439 = vmatprep.subr.bf16.mxu0 0
      %7440 = vmatpush1.bf16.msra.mxu0 0
      %7441 = vmatprep.subr.bf16.mxu0 0
      %7442 = vmatpush1.bf16.msra.mxu0 0
      %7443 = vmatprep.subr.bf16.mxu0 0
      %7444 = vmatpush1.bf16.msra.mxu0 0
      %7445 = vmatprep.subr.bf16.mxu0 0
      %7446 = vmatpush1.bf16.msra.mxu0 0
      %7447 = vmatprep.subr.bf16.mxu0 0
      %7448 = vmatpush1.bf16.msra.mxu0 0
      %7449 = vmatprep.subr.bf16.mxu0 0
      %7450 = vmatpush1.bf16.msra.mxu0 0
      %7451 = vmatprep.subr.bf16.mxu0 0
      %7452 = vmatpush1.bf16.msra.mxu0 0
      %7453 = vmatprep.subr.bf16.mxu0 0
      %7454 = vmatpush1.bf16.msra.mxu0 0
      %7455 = vmatprep.subr.bf16.mxu0 0
      %7456 = vmatpush1.bf16.msra.mxu0 0
      %7457 = vmatprep.subr.bf16.mxu0 0
      %7458 = vmatpush1.bf16.msra.mxu0 0
      %7459 = vmatprep.subr.bf16.mxu0 0
      %7460 = vmatpush1.bf16.msra.mxu0 0
      %7461 = vmatprep.subr.bf16.mxu0 0
      %7462 = vmatpush1.bf16.msra.mxu0 0
      %7463 = vmatprep.mubr.bf16.mxu0 0
      %7464 = vmatmul.mubr.bf16.gmra.mrb[0].mxu0 %v7364
      %v7465 = vpop.f32.mrb[0].mxu0
      %v7466 = vadd.f32 0.0, %v7465
      %v7467 = vpop.f32.mrb[0].mxu0
      %v7468 = vadd.f32 0.0, %v7467
      %v7469 = vpop.f32.mrb[0].mxu0
      %v7470 = vpop.f32.mrb[0].mxu0
      %7471 = vdwg.mxu0
      %7472 = vmatprep.subr.bf16.mxu0 %v7382
      %7473 = vmatpush1.bf16.msra.mxu0 %v7379
      %7474 = vmatprep.subr.bf16.mxu0 0
      %7475 = vmatpush1.bf16.msra.mxu0 0
      %7476 = vmatprep.subr.bf16.mxu0 0
      %7477 = vmatpush1.bf16.msra.mxu0 0
      %7478 = vmatprep.subr.bf16.mxu0 0
      %7479 = vmatpush1.bf16.msra.mxu0 0
      %7480 = vmatprep.subr.bf16.mxu0 0
      %7481 = vmatpush1.bf16.msra.mxu0 0
      %7482 = vmatprep.subr.bf16.mxu0 0
      %7483 = vmatpush1.bf16.msra.mxu0 0
      %7484 = vmatprep.subr.bf16.mxu0 0
      %7485 = vmatpush1.bf16.msra.mxu0 0
      %7486 = vmatprep.subr.bf16.mxu0 0
      %7487 = vmatpush1.bf16.msra.mxu0 0
      %7488 = vmatprep.subr.bf16.mxu0 0
      %7489 = vmatpush1.bf16.msra.mxu0 0
      %7490 = vmatprep.subr.bf16.mxu0 0
      %7491 = vmatpush1.bf16.msra.mxu0 0
      %7492 = vmatprep.subr.bf16.mxu0 0
      %7493 = vmatpush1.bf16.msra.mxu0 0
      %7494 = vmatprep.subr.bf16.mxu0 0
      %7495 = vmatpush1.bf16.msra.mxu0 0
      %7496 = vmatprep.subr.bf16.mxu0 0
      %7497 = vmatpush1.bf16.msra.mxu0 0
      %7498 = vmatprep.subr.bf16.mxu0 0
      %7499 = vmatpush1.bf16.msra.mxu0 0
      %7500 = vmatprep.subr.bf16.mxu0 0
      %7501 = vmatpush1.bf16.msra.mxu0 0
      %7502 = vmatprep.subr.bf16.mxu0 0
      %7503 = vmatpush1.bf16.msra.mxu0 0
      %7504 = vmatprep.mubr.bf16.mxu0 0
      %7505 = vmatmul.mubr.bf16.gmra.mrb[0].mxu0 %v7364
      %v7506 = vpop.f32.mrb[0].mxu0
      %v7507 = vadd.f32 0.0, %v7506
      %v7508 = vpop.f32.mrb[0].mxu0
      %v7509 = vadd.f32 0.0, %v7508
      %v7510 = vpop.f32.mrb[0].mxu0
      %v7511 = vpop.f32.mrb[0].mxu0
      %7512 = vdwg.mxu0
      %7513 = vmatprep.subr.bf16.mxu0 %v7388
      %7514 = vmatpush1.bf16.msra.mxu0 %v7385
      %7515 = vmatprep.subr.bf16.mxu0 0
      %7516 = vmatpush1.bf16.msra.mxu0 0
      %7517 = vmatprep.subr.bf16.mxu0 0
      %7518 = vmatpush1.bf16.msra.mxu0 0
      %7519 = vmatprep.subr.bf16.mxu0 0
      %7520 = vmatpush1.bf16.msra.mxu0 0
      %7521 = vmatprep.subr.bf16.mxu0 0
      %7522 = vmatpush1.bf16.msra.mxu0 0
      %7523 = vmatprep.subr.bf16.mxu0 0
      %7524 = vmatpush1.bf16.msra.mxu0 0
      %7525 = vmatprep.subr.bf16.mxu0 0
      %7526 = vmatpush1.bf16.msra.mxu0 0
      %7527 = vmatprep.subr.bf16.mxu0 0
      %7528 = vmatpush1.bf16.msra.mxu0 0
      %7529 = vmatprep.subr.bf16.mxu0 0
      %7530 = vmatpush1.bf16.msra.mxu0 0
      %7531 = vmatprep.subr.bf16.mxu0 0
      %7532 = vmatpush1.bf16.msra.mxu0 0
      %7533 = vmatprep.subr.bf16.mxu0 0
      %7534 = vmatpush1.bf16.msra.mxu0 0
      %7535 = vmatprep.subr.bf16.mxu0 0
      %7536 = vmatpush1.bf16.msra.mxu0 0
      %7537 = vmatprep.subr.bf16.mxu0 0
      %7538 = vmatpush1.bf16.msra.mxu0 0
      %7539 = vmatprep.subr.bf16.mxu0 0
      %7540 = vmatpush1.bf16.msra.mxu0 0
      %7541 = vmatprep.subr.bf16.mxu0 0
      %7542 = vmatpush1.bf16.msra.mxu0 0
      %7543 = vmatprep.subr.bf16.mxu0 0
      %7544 = vmatpush1.bf16.msra.mxu0 0
      %7545 = vmatprep.mubr.bf16.mxu0 0
      %7546 = vmatmul.mubr.bf16.gmra.mrb[0].mxu0 %v7364
      %v7547 = vpop.f32.mrb[0].mxu0
      %v7548 = vadd.f32 0.0, %v7547
      %v7549 = vpop.f32.mrb[0].mxu0
      %v7550 = vadd.f32 0.0, %v7549
      %v7551 = vpop.f32.mrb[0].mxu0
      %v7552 = vpop.f32.mrb[0].mxu0
      %7553 = vdwg.mxu0
      %v7554 = vadd.f32 %v7279, %v7425
      %v7555 = vadd.f32 %v7280, %v7427
      %v7556 = vadd.f32 %v7281, %v7466
      %v7557 = vadd.f32 %v7282, %v7468
      %v7558 = vadd.f32 %v7283, %v7507
      %v7559 = vadd.f32 %v7284, %v7509
      %v7560 = vadd.f32 %v7285, %v7548
      %v7561 = vadd.f32 %v7286, %v7550
      %v7562 = vld [vmem:[%s4] sm:$0xff]
      %v7571 = vcombine.low %v7554, %v7555
      %v7572 = vcombine.high %v7554, %v7555
      %v7573 = vcombine.low %v7556, %v7557
      %v7574 = vcombine.high %v7556, %v7557
      %v7575 = vcombine.low %v7558, %v7559
      %v7576 = vcombine.high %v7558, %v7559
      %v7577 = vcombine.low %v7560, %v7561
      %v7578 = vcombine.high %v7560, %v7561
      %v7588 = vlaneseq
      %v7589 = vshrl.u32 %v7588, 7
      %v7590 = vsub.s32 0, %v7589
      %v7591 = vrot.slane %v7562, %v7590
      %v7592 = vlaneseq
      %v7593 = vshrl.u32 %v7592, 7
      %v7594 = vsub.s32 1, %v7593
      %v7595 = vrot.slane %v7562, %v7594
      %v7596 = vlaneseq
      %v7597 = vshrl.u32 %v7596, 7
      %v7598 = vsub.s32 2, %v7597
      %v7599 = vrot.slane %v7562, %v7598
      %v7600 = vlaneseq
      %v7601 = vshrl.u32 %v7600, 7
      %v7602 = vsub.s32 3, %v7601
      %v7603 = vrot.slane %v7562, %v7602
      %v7604 = vlaneseq
      %v7605 = vshrl.u32 %v7604, 7
      %v7606 = vsub.s32 4, %v7605
      %v7607 = vrot.slane %v7562, %v7606
      %v7608 = vlaneseq
      %v7609 = vshrl.u32 %v7608, 7
      %v7610 = vsub.s32 5, %v7609
      %v7611 = vrot.slane %v7562, %v7610
      %v7612 = vlaneseq
      %v7613 = vshrl.u32 %v7612, 7
      %v7614 = vsub.s32 6, %v7613
      %v7615 = vrot.slane %v7562, %v7614
      %v7616 = vlaneseq
      %v7617 = vshrl.u32 %v7616, 7
      %v7618 = vsub.s32 7, %v7617
      %v7619 = vrot.slane %v7562, %v7618
      %v7620 = vcombine.low %v7591, %v7595
      %v7621 = vcombine.low %v7599, %v7603
      %v7622 = vcombine.low %v7607, %v7611
      %v7623 = vcombine.low %v7615, %v7619
      %v7628 = vmul.f32 %v7571, %v7620
      %v7629 = vmul.f32 %v7573, %v7621
      %v7630 = vmul.f32 %v7575, %v7622
      %v7631 = vmul.f32 %v7577, %v7623
      %v7632 = vmul.f32 %v7572, %v7620
      %v7633 = vmul.f32 %v7574, %v7621
      %v7634 = vmul.f32 %v7576, %v7622
      %v7635 = vmul.f32 %v7578, %v7623
      %v7644 = vcombine.high %v7628, %v7628
      %v7645 = vcombine.high %v7629, %v7629
      %v7646 = vcombine.high %v7630, %v7630
      %v7647 = vcombine.high %v7631, %v7631
      %v7648 = vcombine.high %v7632, %v7632
      %v7649 = vcombine.high %v7633, %v7633
      %v7650 = vcombine.high %v7634, %v7634
      %v7651 = vcombine.high %v7635, %v7635
      %vm7660 = vcmask 1043456
      %v7661 = vsel %vm7660, %v7628, 0.0
      %v7662 = vsel %vm7660, %v7644, 0.0
      %v7663 = vadd.f32 %v7661, %v7662
      %v7664 = vsel %vm7660, %v7629, 0.0
      %v7665 = vadd.f32 %v7663, %v7664
      %v7666 = vsel %vm7660, %v7645, 0.0
      %v7667 = vadd.f32 %v7665, %v7666
      %v7668 = vsel %vm7660, %v7630, 0.0
      %v7669 = vadd.f32 %v7667, %v7668
      %v7670 = vsel %vm7660, %v7646, 0.0
      %v7671 = vadd.f32 %v7669, %v7670
      %v7672 = vsel %vm7660, %v7631, 0.0
      %v7673 = vadd.f32 %v7671, %v7672
      %v7674 = vsel %vm7660, %v7647, 0.0
      %v7675 = vadd.f32 %v7673, %v7674
      %7676 = vadd.xlane.f32.xlu0 %v7675
      %v7677 = vpop.xlane.xlu0 %7676
      %v7678 = vsel %vm7660, %v7632, 0.0
      %v7679 = vsel %vm7660, %v7648, 0.0
      %v7680 = vadd.f32 %v7678, %v7679
      %v7681 = vsel %vm7660, %v7633, 0.0
      %v7682 = vadd.f32 %v7680, %v7681
      %v7683 = vsel %vm7660, %v7649, 0.0
      %v7684 = vadd.f32 %v7682, %v7683
      %v7685 = vsel %vm7660, %v7634, 0.0
      %v7686 = vadd.f32 %v7684, %v7685
      %v7687 = vsel %vm7660, %v7650, 0.0
      %v7688 = vadd.f32 %v7686, %v7687
      %v7689 = vsel %vm7660, %v7635, 0.0
      %v7690 = vadd.f32 %v7688, %v7689
      %v7691 = vsel %vm7660, %v7651, 0.0
      %v7692 = vadd.f32 %v7690, %v7691
      %7693 = vadd.xlane.f32.xlu0 %v7692
      %v7694 = vpop.xlane.xlu0 %7693
      %v7695 = vsel %vm7660, %v7677, 0.0
      %v7696 = vrot.slane %v7695, 4
      %v7697 = vadd.f32 %v7695, %v7696
      %v7698 = vrot.slane %v7697, 2
      %v7699 = vadd.f32 %v7697, %v7698
      %v7700 = vrot.slane %v7699, 1
      %v7701 = vadd.f32 %v7699, %v7700
      %v7702 = vsel %vm7660, %v7694, 0.0
      %v7703 = vrot.slane %v7702, 4
      %v7704 = vadd.f32 %v7702, %v7703
      %v7705 = vrot.slane %v7704, 2
      %v7706 = vadd.f32 %v7704, %v7705
      %v7707 = vrot.slane %v7706, 1
      %v7708 = vadd.f32 %v7706, %v7707
      %v7709 = vmul.f32 %v7701, 0.00048828125
      %v7710 = vmul.f32 %v7708, 0.00048828125
      %v7711 = vsub.f32 %v7571, %v7709
      %v7712 = vsub.f32 %v7573, %v7709
      %v7713 = vsub.f32 %v7575, %v7709
      %v7714 = vsub.f32 %v7577, %v7709
      %v7715 = vsub.f32 %v7572, %v7710
      %v7716 = vsub.f32 %v7574, %v7710
      %v7717 = vsub.f32 %v7576, %v7710
      %v7718 = vsub.f32 %v7578, %v7710
      %v7719 = vmul.f32 %v7711, %v7620
      %v7720 = vmul.f32 %v7712, %v7621
      %v7721 = vmul.f32 %v7713, %v7622
      %v7722 = vmul.f32 %v7714, %v7623
      %v7723 = vmul.f32 %v7715, %v7620
      %v7724 = vmul.f32 %v7716, %v7621
      %v7725 = vmul.f32 %v7717, %v7622
      %v7726 = vmul.f32 %v7718, %v7623
      %v7727 = vmul.f32 %v7719, %v7719
      %v7728 = vmul.f32 %v7720, %v7720
      %v7729 = vmul.f32 %v7721, %v7721
      %v7730 = vmul.f32 %v7722, %v7722
      %v7731 = vmul.f32 %v7723, %v7723
      %v7732 = vmul.f32 %v7724, %v7724
      %v7733 = vmul.f32 %v7725, %v7725
      %v7734 = vmul.f32 %v7726, %v7726
      %v7743 = vcombine.high %v7727, %v7727
      %v7744 = vcombine.high %v7728, %v7728
      %v7745 = vcombine.high %v7729, %v7729
      %v7746 = vcombine.high %v7730, %v7730
      %v7747 = vcombine.high %v7731, %v7731
      %v7748 = vcombine.high %v7732, %v7732
      %v7749 = vcombine.high %v7733, %v7733
      %v7750 = vcombine.high %v7734, %v7734
      %v7759 = vsel %vm7660, %v7727, 0.0
      %v7760 = vsel %vm7660, %v7743, 0.0
      %v7761 = vadd.f32 %v7759, %v7760
      %v7762 = vsel %vm7660, %v7728, 0.0
      %v7763 = vadd.f32 %v7761, %v7762
      %v7764 = vsel %vm7660, %v7744, 0.0
      %v7765 = vadd.f32 %v7763, %v7764
      %v7766 = vsel %vm7660, %v7729, 0.0
      %v7767 = vadd.f32 %v7765, %v7766
      %v7768 = vsel %vm7660, %v7745, 0.0
      %v7769 = vadd.f32 %v7767, %v7768
      %v7770 = vsel %vm7660, %v7730, 0.0
      %v7771 = vadd.f32 %v7769, %v7770
      %v7772 = vsel %vm7660, %v7746, 0.0
      %v7773 = vadd.f32 %v7771, %v7772
      %7774 = vadd.xlane.f32.xlu0 %v7773
      %v7775 = vpop.xlane.xlu0 %7774
      %v7776 = vsel %vm7660, %v7731, 0.0
      %v7777 = vsel %vm7660, %v7747, 0.0
      %v7778 = vadd.f32 %v7776, %v7777
      %v7779 = vsel %vm7660, %v7732, 0.0
      %v7780 = vadd.f32 %v7778, %v7779
      %v7781 = vsel %vm7660, %v7748, 0.0
      %v7782 = vadd.f32 %v7780, %v7781
      %v7783 = vsel %vm7660, %v7733, 0.0
      %v7784 = vadd.f32 %v7782, %v7783
      %v7785 = vsel %vm7660, %v7749, 0.0
      %v7786 = vadd.f32 %v7784, %v7785
      %v7787 = vsel %vm7660, %v7734, 0.0
      %v7788 = vadd.f32 %v7786, %v7787
      %v7789 = vsel %vm7660, %v7750, 0.0
      %v7790 = vadd.f32 %v7788, %v7789
      %7791 = vadd.xlane.f32.xlu0 %v7790
      %v7792 = vpop.xlane.xlu0 %7791
      %v7793 = vsel %vm7660, %v7775, 0.0
      %v7794 = vrot.slane %v7793, 4
      %v7795 = vadd.f32 %v7793, %v7794
      %v7796 = vrot.slane %v7795, 2
      %v7797 = vadd.f32 %v7795, %v7796
      %v7798 = vrot.slane %v7797, 1
      %v7799 = vadd.f32 %v7797, %v7798
      %v7800 = vsel %vm7660, %v7792, 0.0
      %v7801 = vrot.slane %v7800, 4
      %v7802 = vadd.f32 %v7800, %v7801
      %v7803 = vrot.slane %v7802, 2
      %v7804 = vadd.f32 %v7802, %v7803
      %v7805 = vrot.slane %v7804, 1
      %v7806 = vadd.f32 %v7804, %v7805
      %v7807 = vmul.f32 %v7799, 0.00048828125
      %v7808 = vmul.f32 %v7806, 0.00048828125
      %v7809 = vadd.f32 %v7807, 1e-05
      %v7810 = vadd.f32 %v7808, 1e-05
      %v7811 = vrsqrt.pop %v7809
      %v7812 = vrsqrt.pop %v7810
      %v7813 = vmul.f32 %v7711, %v7811
      %v7814 = vmul.f32 %v7712, %v7811
      %v7815 = vmul.f32 %v7713, %v7811
      %v7816 = vmul.f32 %v7714, %v7811
      %v7817 = vmul.f32 %v7715, %v7812
      %v7818 = vmul.f32 %v7716, %v7812
      %v7819 = vmul.f32 %v7717, %v7812
      %v7820 = vmul.f32 %v7718, %v7812
      %v7821 = vld [vmem:[%s2] sm:$0xff]
      %7823 = vset.pattern.permute.xlu0 0
      %7824 = vperm.xlu0 %7823, %v7821
      %v7825 = vpop.permute.xlu0 %7824
      %v7827 = vunpack.c.l.s4 839922192
      %v7828 = vunpack.c.0.s8 %v7827
      %v7829 = vlaneseq
      %v7830 = vshrl.u32 %v7829, 7
      %v7831 = vsub.s32 %v7828, %v7830
      %v7832 = vrot.slane %v7825, %v7831
      %v7834 = vunpack.c.l.s4 1985246804
      %v7835 = vunpack.c.0.s8 %v7834
      %v7836 = vlaneseq
      %v7837 = vshrl.u32 %v7836, 7
      %v7838 = vsub.s32 %v7835, %v7837
      %v7839 = vrot.slane %v7825, %v7838
      %v7842 = vmul.f32 %v7813, %v7832
      %v7843 = vmul.f32 %v7814, %v7832
      %v7844 = vmul.f32 %v7815, %v7832
      %v7845 = vmul.f32 %v7816, %v7832
      %v7846 = vmul.f32 %v7817, %v7839
      %v7847 = vmul.f32 %v7818, %v7839
      %v7848 = vmul.f32 %v7819, %v7839
      %v7849 = vmul.f32 %v7820, %v7839
      %v7850 = vld [vmem:[%s3] sm:$0xff]
      %7852 = vset.pattern.permute.xlu0 0
      %7853 = vperm.xlu0 %7852, %v7850
      %v7854 = vpop.permute.xlu0 %7853
      %v7856 = vunpack.c.l.s4 839922192
      %v7857 = vunpack.c.0.s8 %v7856
      %v7858 = vlaneseq
      %v7859 = vshrl.u32 %v7858, 7
      %v7860 = vsub.s32 %v7857, %v7859
      %v7861 = vrot.slane %v7854, %v7860
      %v7863 = vunpack.c.l.s4 1985246804
      %v7864 = vunpack.c.0.s8 %v7863
      %v7865 = vlaneseq
      %v7866 = vshrl.u32 %v7865, 7
      %v7867 = vsub.s32 %v7864, %v7866
      %v7868 = vrot.slane %v7854, %v7867
      %v7871 = vadd.f32 %v7842, %v7861
      %v7872 = vadd.f32 %v7843, %v7861
      %v7873 = vadd.f32 %v7844, %v7861
      %v7874 = vadd.f32 %v7845, %v7861
      %v7875 = vadd.f32 %v7846, %v7868
      %v7876 = vadd.f32 %v7847, %v7868
      %v7877 = vadd.f32 %v7848, %v7868
      %v7878 = vadd.f32 %v7849, %v7868
      %v7879 = vmax.f32 %v7871, 0.0
      %v7880 = vmax.f32 %v7872, 0.0
      %v7881 = vmax.f32 %v7873, 0.0
      %v7882 = vmax.f32 %v7874, 0.0
      %v7883 = vmax.f32 %v7875, 0.0
      %v7884 = vmax.f32 %v7876, 0.0
      %v7885 = vmax.f32 %v7877, 0.0
      %v7886 = vmax.f32 %v7878, 0.0
      %v7895 = vcombine.low %v7879, %v7883
      %v7896 = vcombine.high %v7879, %v7883
      %v7897 = vcombine.low %v7880, %v7884
      %v7898 = vcombine.high %v7880, %v7884
      %v7899 = vcombine.low %v7881, %v7885
      %v7900 = vcombine.high %v7881, %v7885
      %v7901 = vcombine.low %v7882, %v7886
      %v7902 = vcombine.high %v7882, %v7886
      %7911 = vst [vmem:[%s224] sm:$0xff] %v7895
      %7912 = vst [vmem:[%s224 + $0x8] sm:$0xff] %v7896
      %7913 = vst [vmem:[%s224 + $0x10] sm:$0xff] %v7897
      %7914 = vst [vmem:[%s224 + $0x18] sm:$0xff] %v7898
      %7915 = vst [vmem:[%s224 + $0x20] sm:$0xff] %v7899
      %7916 = vst [vmem:[%s224 + $0x28] sm:$0xff] %v7900
      %7917 = vst [vmem:[%s224 + $0x30] sm:$0xff] %v7901
      %7918 = vst [vmem:[%s224 + $0x38] sm:$0xff] %v7902
      %p7919 = scmp.lt.s32.totalorder %s16, 1
      %s7920 = scalar_select %p7919, %s16, 1
      %s7921 = smul.addr %s7920, 8
      %s7922 = smul.addr %s7921, 8
      %s7923 = scalar_lea.vmem %s5, %s7922
      // Predicated region
      $region41: #{conv_block.1} parent=39 // pred_check
        %p7924 = pneg %p144
      $region42: #{conv_block.1} parent=39 // pred_check_branch
        %7926 = sbr.rel (%p7924) target = $region44
      $region43: #{conv_block.1} parent=39 // pred_region
        _
      $region44: #{conv_block.1} parent=39 // pred_fallthru
        _
    $region40: #{conv_block.1} parent=5 // pred_fallthru
      _
    %p7927 = scmp.le.s32.totalorder 2, %s11
    // Predicated region
    $region45: #{conv_block.1} parent=5 // pred_check
      %p7928 = pneg %p7927
    $region46: #{conv_block.1} parent=5 // pred_check_branch
      %7930 = sbr.rel (%p7928) target = $region48
    $region47: #{conv_block.1} parent=5 // pred_region
      %s7931 = ssub.s32 %s11, 2
      // Predicated region
      $region49: #{conv_block.1} parent=47 // pred_check
        %p7932 = pneg %p150
      $region50: #{conv_block.1} parent=47 // pred_check_branch
        %7934 = sbr.rel (%p7932) target = $region52
      $region51: #{conv_block.1} parent=47 // pred_region
        %p7935 = scmp.lt.s32.totalorder %s17, 1
        %s7936 = scalar_select %p7935, %s17, 1
        %s7937 = smul.addr %s7936, 8
        %s7938 = smul.addr %s7937, 8
        %s7939 = scalar_lea.vmem %s5, %s7938
      $region52: #{conv_block.1} parent=47 // pred_fallthru
        _
    $region48: #{conv_block.1} parent=5 // pred_fallthru
      _
  $region6: #{conv_block.1} parent=0 // loop_footer
    %s15 = sadd.s32 1, %s11
  $region7: #{conv_block.1} parent=0 // loop_footer_branch
    %10 = sbr.rel target = $region3
  $region8: #{conv_block.1} parent=0 // loop_exit
    _

</llo_original>
